<compile_context>
chip_gen: v7x
topology: tpu7x:2x2x1
jax: 0.10.0
libtpu: 0.0.40
codegen_flags: <defaults>
</compile_context>

<pallas_src>
import numpy as np
import jax
import jax.numpy as jnp
from jax.experimental import pallas as pl
from jax.experimental.pallas import tpu as pltpu

EPS = 1e-5                              # F.layer_norm default eps
VMEM_LIMIT = 48 * 1024 * 1024           # conservative: fits v7x's 64 MiB with headroom
                                        # TODO(synk): derive TQ / vmem limit per generation
                                        # (v6e can take TQ=256 and a larger limit).


def _layer_norm(x, gamma):
    # F.layer_norm over the last dim, biased variance, beta == 0 (rsqrt -> EUP).
    mu = jnp.mean(x, axis=-1, keepdims=True)
    var = jnp.mean((x - mu) ** 2, axis=-1, keepdims=True)
    return (x - mu) * jax.lax.rsqrt(var + EPS) * gamma


# ---------------------------------------------------------------------------
# Kernel 1: PreNorm + fused QKV projection -> per-head (B, H, N, DH) slabs
# ---------------------------------------------------------------------------
def make_qkv_kernel(H, DH):
    HDH = H * DH
    f32, bf16 = jnp.float32, jnp.bfloat16

    def kernel(x_ref, g1_ref, wqkv_ref, qh_ref, kh_ref, vh_ref):
        x = x_ref[0].astype(f32)                                   # (TQ, D)
        hn = _layer_norm(x, g1_ref[0]).astype(bf16)                # (TQ, D)
        # Single head-fused projection: (TQ, D) @ (D, 3*H*DH), scale already in Q cols.
        qkv = jnp.dot(hn, wqkv_ref[...],
                      preferred_element_type=f32).astype(bf16)     # (TQ, 3*H*DH)
        # Split the fused output into per-head slabs (cheap lane slices; only in the
        # prologue, never in the hot attention loop).
        for h in range(H):
            qh_ref[0, h] = qkv[:, h * DH:(h + 1) * DH]
            kh_ref[0, h] = qkv[:, HDH + h * DH:HDH + (h + 1) * DH]
            vh_ref[0, h] = qkv[:, 2 * HDH + h * DH:2 * HDH + (h + 1) * DH]

    return kernel


# ---------------------------------------------------------------------------
# Kernel 2: attention + output proj + to_out LN + residual + SwiGLU FF + residual
#           (+ fused final LayerNorm for the last layer)
# ---------------------------------------------------------------------------
def make_layer_kernel(FF, fuse_final_norm):
    f32, bf16 = jnp.float32, jnp.bfloat16

    def kernel(x_ref, qh_ref, kh_ref, vh_ref, gao_ref, wout_ref,
               g2_ref, wff_ref, gff_ref, w2_ref, *rest):
        if fuse_final_norm:
            gout_ref, o_ref = rest
        else:
            (o_ref,) = rest

        xt = x_ref[0].astype(f32)                                  # (TQ, D) residual

        # ---------------- attention (PreNorm already applied in prologue) ----------
        q = qh_ref[0]                                              # (H, TQ, DH) bf16
        k = kh_ref[0]                                              # (H, N,  DH) bf16
        v = vh_ref[0]                                              # (H, N,  DH) bf16

        # NT-form batched matmul (no transpose op), f32 accumulation.
        # TODO(synk): for large N, switch to a flash-style pl.loop over K/V chunks
        # with online max/sum to bound the (H, TQ, N) temporaries.
        sim = jnp.einsum('hte,hne->htn', q, k, preferred_element_type=f32)
        sim = sim - jnp.max(sim, axis=-1, keepdims=True)
        p = jnp.exp(sim)                                           # f32 (v5e-safe)
        l = jnp.sum(p, axis=-1, keepdims=True)
        attn = (p * pl.reciprocal(l, approx=True)).astype(bf16)

        outh = jnp.einsum('htn,hne->hte', attn, v,
                          preferred_element_type=f32)              # (H, TQ, DH)
        # Output projection: per-head batched matmul (D-wide lane-dense outputs)
        # reduced over heads == concat(heads) @ W_out without in-kernel lane relayout.
        proj = jnp.einsum('hte,hed->htd', outh.astype(bf16), wout_ref[...],
                          preferred_element_type=f32)              # (H, TQ, D)
        attn_out = jnp.sum(proj, axis=0)                           # (TQ, D)
        xt = xt + _layer_norm(attn_out, gao_ref[0])                # to_out LN + residual

        # ---------------- feed-forward (PreNorm, SwiGLU) ----------------
        h2 = _layer_norm(xt, g2_ref[0]).astype(bf16)               # (TQ, D)
        ff = jnp.dot(h2, wff_ref[...], preferred_element_type=f32) # (TQ, 2*FF) fused val|gate
        a = ff[:, :FF]
        g = ff[:, FF:]
        s = a * (g * jax.nn.sigmoid(g))                            # SwiGLU in f32
        s = _layer_norm(s, gff_ref[0]).astype(bf16)
        xt = xt + jnp.dot(s, w2_ref[...], preferred_element_type=f32)

        if fuse_final_norm:
            xt = _layer_norm(xt, gout_ref[0])                      # fused norm_out

        o_ref[0] = xt.astype(o_ref.dtype)

    return kernel


# ---------------------------------------------------------------------------
# Wrappers
# ---------------------------------------------------------------------------
def _const_spec(shape):
    n = len(shape)
    return pl.BlockSpec(shape, lambda b, qi, _n=n: (0,) * _n)


def _pick_tq(N):
    # Largest q-tile <= 128 that divides N and gives >= 2 grid steps (pipelining / megacore).
    for t in (128, 64, 32, 16, 8):
        if N % t == 0 and N // t >= 2:
            return t
    return N


def transformer_layer(x, lp, H, DH, FF, gamma_out=None):
    B, N, D = x.shape
    TQ = _pick_tq(N)
    NQ = N // TQ
    HDH = H * DH

    # ----- prologue: LN + fused QKV projection into per-head HBM slabs -----
    qh, kh, vh = pl.pallas_call(
        make_qkv_kernel(H, DH),
        out_shape=[jax.ShapeDtypeStruct((B, H, N, DH), jnp.bfloat16)] * 3,
        grid=(B, NQ),
        in_specs=[pl.BlockSpec((1, TQ, D), lambda b, qi: (b, qi, 0)),
                  _const_spec((1, D)),
                  _const_spec((D, 3 * HDH))],
        out_specs=[pl.BlockSpec((1, H, TQ, DH), lambda b, qi: (b, 0, qi, 0))] * 3,
        compiler_params=pltpu.CompilerParams(
            dimension_semantics=("parallel", "parallel"),
            vmem_limit_bytes=VMEM_LIMIT),
    )(x, lp["g1"], lp["wqkv"])

    # ----- main kernel: attention + FF + residuals (+ fused final LN) -----
    fuse = gamma_out is not None
    operands = [x, qh, kh, vh, lp["gao"], lp["wout"], lp["g2"],
                lp["wff"], lp["gff"], lp["w2"]]
    in_specs = [
        pl.BlockSpec((1, TQ, D), lambda b, qi: (b, qi, 0)),        # x tile (residual)
        pl.BlockSpec((1, H, TQ, DH), lambda b, qi: (b, 0, qi, 0)), # Q tile
        pl.BlockSpec((1, H, N, DH), lambda b, qi: (b, 0, 0, 0)),   # K full (resident per b)
        pl.BlockSpec((1, H, N, DH), lambda b, qi: (b, 0, 0, 0)),   # V full (resident per b)
        _const_spec((1, D)),            # gao
        _const_spec((H, DH, D)),        # wout
        _const_spec((1, D)),            # g2
        _const_spec((D, 2 * FF)),       # wff (val|gate fused)
        _const_spec((1, FF)),           # gff
        _const_spec((FF, D)),           # w2
        # TODO(synk): single-buffer the constant-index weight blocks
        # (pipeline_mode=pl.Buffered(1)) when weight VMEM becomes the limiter.
    ]
    if fuse:
        operands.append(gamma_out)
        in_specs.append(_const_spec((1, D)))

    return pl.pallas_call(
        make_layer_kernel(FF, fuse),
        out_shape=jax.ShapeDtypeStruct((B, N, D), x.dtype),
        grid=(B, NQ),
        in_specs=in_specs,
        out_specs=pl.BlockSpec((1, TQ, D), lambda b, qi: (b, qi, 0)),
        input_output_aliases={0: 0},   # residual stream updated in place
        compiler_params=pltpu.CompilerParams(
            dimension_semantics=("parallel", "parallel"),
            vmem_limit_bytes=VMEM_LIMIT),
    )(*operands)


def transformer_forward(x, kparams, kgamma_out, H, DH, FF):
    depth = len(kparams)
    for li, lp in enumerate(kparams):
        x = transformer_layer(
            x, lp, H, DH, FF,
            gamma_out=kgamma_out if li == depth - 1 else None)  # final LN fused in last layer
    return x


# ---------------------------------------------------------------------------
# Parameters: module-style f32 weights + conversion to kernel layouts
# ---------------------------------------------------------------------------
def init_module_params(key, depth, D, H, DH, FF):
    std = 0.05
    HDH = H * DH
    params = []
    for _ in range(depth):
        key, kqkv, ko, kff, k2 = jax.random.split(key, 5)
        params.append(dict(
            g1=jnp.ones((D,), jnp.float32),
            wqkv=jax.random.normal(kqkv, (D, 3 * HDH), jnp.float32) * std,   # to_qkv
            wout=jax.random.normal(ko, (HDH, D), jnp.float32) * std,         # to_out linear
            gao=jnp.ones((D,), jnp.float32),                                 # to_out LN gamma
            g2=jnp.ones((D,), jnp.float32),
            wff=jax.random.normal(kff, (D, 2 * FF), jnp.float32) * std,      # val|gate
            gff=jnp.ones((FF,), jnp.float32),
            w2=jax.random.normal(k2, (FF, D), jnp.float32) * std,
        ))
    gamma_out = jnp.ones((D,), jnp.float32)
    return params, gamma_out


def to_kernel_params(mparams, gamma_out, H, DH):
    bf16 = jnp.bfloat16
    HDH = H * DH
    scale = DH ** (-0.5)
    kparams = []
    for p in mparams:
        D = p["g1"].shape[0]
        FF = p["gff"].shape[0]
        # fold the attention scale into the Q columns of the fused QKV weight
        wqkv = jnp.concatenate([p["wqkv"][:, :HDH] * scale, p["wqkv"][:, HDH:]], axis=1)
        kparams.append(dict(
            g1=p["g1"].reshape(1, D),
            wqkv=wqkv.astype(bf16),                               # (D, 3*H*DH)
            wout=p["wout"].reshape(H, DH, D).astype(bf16),        # per-head out proj
            gao=p["gao"].reshape(1, D),
            g2=p["g2"].reshape(1, D),
            wff=p["wff"].astype(bf16),                            # (D, 2*FF)
            gff=p["gff"].reshape(1, FF),
            w2=p["w2"].astype(bf16),                              # (FF, D)
        ))
    return kparams, gamma_out.reshape(1, -1)


# ---------------------------------------------------------------------------
# Pure-JAX f32 reference (mirrors the PyTorch module math)
# ---------------------------------------------------------------------------
def reference_forward(x, mparams, gamma_out, H, DH, FF):
    scale = DH ** (-0.5)
    B, N, D = x.shape
    HDH = H * DH
    x = x.astype(jnp.float32)
    for p in mparams:
        h = _layer_norm(x, p["g1"])
        qkv = h @ p["wqkv"]
        q, k, v = qkv[..., :HDH], qkv[..., HDH:2 * HDH], qkv[..., 2 * HDH:]
        split = lambda t: t.reshape(B, N, H, DH).transpose(0, 2, 1, 3)
        q, k, v = split(q) * scale, split(k), split(v)
        sim = jnp.einsum('bhie,bhje->bhij', q, k)
        sim = sim - jnp.max(sim, axis=-1, keepdims=True)
        attn = jax.nn.softmax(sim, axis=-1)
        out = jnp.einsum('bhij,bhje->bhie', attn, v)
        out = out.transpose(0, 2, 1, 3).reshape(B, N, HDH)
        x = x + _layer_norm(out @ p["wout"], p["gao"])

        h2 = _layer_norm(x, p["g2"])
        ff = h2 @ p["wff"]
        a, g = ff[..., :FF], ff[..., FF:]
        s = _layer_norm(a * jax.nn.silu(g), p["gff"])
        x = x + s @ p["w2"]
    return _layer_norm(x, gamma_out)


if __name__ == "__main__":
    # Small, lane-dense shapes: dim=128, heads=2, dim_head=64 (module default), ff_mult=4.
    B, N, D = 2, 128, 128
    H, DH = 2, 64
    FF = D * 4            # ff inner dim = 512
    depth = 2

    key = jax.random.PRNGKey(0)
    key, kx = jax.random.split(key)
    x = jax.random.normal(kx, (B, N, D), jnp.float32)
    mparams, gamma_out = init_module_params(key, depth, D, H, DH, FF)
    kparams, kgamma_out = to_kernel_params(mparams, gamma_out, H, DH)

    # TODO(synk): rotary_pos_emb, attention mask and dropout paths not implemented
    # (they are None / 0.0 in the reference forward call).
    fwd = jax.jit(lambda x_, p_, g_: transformer_forward(x_, p_, g_, H, DH, FF))
    out = jax.block_until_ready(fwd(x, kparams, kgamma_out))

    ref = reference_forward(x, mparams, gamma_out, H, DH, FF)
    # bf16 weights + bf16 matmul inputs (f32 accumulation) vs f32 reference across depth=2.
    np.testing.assert_allclose(np.asarray(out, dtype=np.float32),
                               np.asarray(ref, dtype=np.float32),
                               atol=7e-2, rtol=7e-2)

    print("KERNEL_OK")
</pallas_src>

<mosaic_0001>
module attributes {stable_mosaic.version = 11 : i64} {
  func.func @kernel(%arg0: i32, %arg1: i32, %arg2: memref<1x64x128xf32, #tpu.memory_space<vmem>>, %arg3: memref<1x128xf32, #tpu.memory_space<vmem>>, %arg4: memref<128x384xbf16, #tpu.memory_space<vmem>>, %arg5: memref<1x2x64x64xbf16, #tpu.memory_space<vmem>>, %arg6: memref<1x2x64x64xbf16, #tpu.memory_space<vmem>>, %arg7: memref<1x2x64x64xbf16, #tpu.memory_space<vmem>>) attributes {dimension_semantics = [#tpu.dimension_semantics<parallel>, #tpu.dimension_semantics<parallel>], iteration_bounds = array<i64: 2, 2>, scalar_prefetch = 0 : i64, scratch_operands = 0 : i64, tpu.core_type = #tpu.core_type<tc>, window_params = [{transform_indices = @transform_0, window_bounds = array<i64: 1, 64, 128>}, {pipeline_mode = #tpu.pipeline_mode<synchronous>, transform_indices = @transform_1, window_bounds = array<i64: 1, 128>}, {pipeline_mode = #tpu.pipeline_mode<synchronous>, transform_indices = @transform_2, window_bounds = array<i64: 128, 384>}, {transform_indices = @transform_3, window_bounds = array<i64: 1, 2, 64, 64>}, {transform_indices = @transform_4, window_bounds = array<i64: 1, 2, 64, 64>}, {transform_indices = @transform_5, window_bounds = array<i64: 1, 2, 64, 64>}]} {
    %c0 = arith.constant 0 : index
    %c0_0 = arith.constant 0 : index
    %c0_1 = arith.constant 0 : index
    %0 = vector.load %arg2[%c0, %c0_0, %c0_1] : memref<1x64x128xf32, #tpu.memory_space<vmem>>, vector<1x64x128xf32>
    %1 = vector.shape_cast %0 : vector<1x64x128xf32> to vector<64x128xf32>
    %c0_2 = arith.constant 0 : index
    %c0_3 = arith.constant 0 : index
    %2 = vector.load %arg3[%c0_2, %c0_3] : memref<1x128xf32, #tpu.memory_space<vmem>>, vector<1x128xf32>
    %3 = vector.shape_cast %2 : vector<1x128xf32> to vector<128xf32>
    %cst = arith.constant dense<0.000000e+00> : vector<64xf32>
    %4 = vector.multi_reduction <add>, %1, %cst [1] : vector<64x128xf32> to vector<64xf32>
    %5 = vector.shape_cast %4 : vector<64xf32> to vector<64x1xf32>
    %cst_4 = arith.constant 1.280000e+02 : f32
    %6 = vector.broadcast %cst_4 : f32 to vector<64x1xf32>
    %7 = arith.divf %5, %6 : vector<64x1xf32>
    %8 = vector.broadcast %7 : vector<64x1xf32> to vector<64x128xf32>
    %9 = arith.subf %1, %8 : vector<64x128xf32>
    %10 = arith.mulf %9, %9 : vector<64x128xf32>
    %cst_5 = arith.constant dense<0.000000e+00> : vector<64xf32>
    %11 = vector.multi_reduction <add>, %10, %cst_5 [1] : vector<64x128xf32> to vector<64xf32>
    %12 = vector.shape_cast %11 : vector<64xf32> to vector<64x1xf32>
    %cst_6 = arith.constant 1.280000e+02 : f32
    %13 = vector.broadcast %cst_6 : f32 to vector<64x1xf32>
    %14 = arith.divf %12, %13 : vector<64x1xf32>
    %15 = vector.broadcast %7 : vector<64x1xf32> to vector<64x128xf32>
    %16 = arith.subf %1, %15 : vector<64x128xf32>
    %cst_7 = arith.constant 9.99999974E-6 : f32
    %17 = vector.broadcast %cst_7 : f32 to vector<64x1xf32>
    %18 = arith.addf %14, %17 : vector<64x1xf32>
    %19 = math.rsqrt %18 : vector<64x1xf32>
    %20 = vector.broadcast %19 : vector<64x1xf32> to vector<64x128xf32>
    %21 = arith.mulf %16, %20 : vector<64x128xf32>
    %22 = vector.shape_cast %3 : vector<128xf32> to vector<1x128xf32>
    %23 = vector.broadcast %22 : vector<1x128xf32> to vector<64x128xf32>
    %24 = arith.mulf %21, %23 : vector<64x128xf32>
    %25 = arith.truncf %24 : vector<64x128xf32> to vector<64x128xbf16>
    %c0_8 = arith.constant 0 : index
    %c0_9 = arith.constant 0 : index
    %26 = vector.load %arg4[%c0_8, %c0_9] : memref<128x384xbf16, #tpu.memory_space<vmem>>, vector<128x384xbf16>
    %cst_10 = arith.constant dense<0.000000e+00> : vector<64x384xf32>
    %27 = tpu.matmul %25, %26, %cst_10 {dimension_numbers = #tpu.dot_dimension_numbers<[1], [0], [0], [1], [0, 0, 1, 1], [], []>} : vector<64x128xbf16>, vector<128x384xbf16>, vector<64x384xf32> -> vector<64x384xf32>
    %28 = arith.truncf %27 : vector<64x384xf32> to vector<64x384xbf16>
    %29 = vector.extract_strided_slice %28 {offsets = [0, 0], sizes = [64, 64], strides = [1, 1]} : vector<64x384xbf16> to vector<64x64xbf16>
    %c0_11 = arith.constant 0 : index
    %c0_12 = arith.constant 0 : index
    %c0_13 = arith.constant 0 : index
    %c0_14 = arith.constant 0 : index
    %30 = vector.load %arg5[%c0_11, %c0_12, %c0_13, %c0_14] : memref<1x2x64x64xbf16, #tpu.memory_space<vmem>>, vector<1x1x64x64xbf16>
    %31 = vector.shape_cast %30 : vector<1x1x64x64xbf16> to vector<64x64xbf16>
    %32 = vector.shape_cast %29 : vector<64x64xbf16> to vector<1x1x64x64xbf16>
    tpu.vector_store %arg5[%c0_11, %c0_12, %c0_13, %c0_14], %32 {strides = array<i32>} : memref<1x2x64x64xbf16, #tpu.memory_space<vmem>>, vector<1x1x64x64xbf16>,
    %33 = vector.extract_strided_slice %28 {offsets = [0, 128], sizes = [64, 64], strides = [1, 1]} : vector<64x384xbf16> to vector<64x64xbf16>
    %c0_15 = arith.constant 0 : index
    %c0_16 = arith.constant 0 : index
    %c0_17 = arith.constant 0 : index
    %c0_18 = arith.constant 0 : index
    %34 = vector.load %arg6[%c0_15, %c0_16, %c0_17, %c0_18] : memref<1x2x64x64xbf16, #tpu.memory_space<vmem>>, vector<1x1x64x64xbf16>
    %35 = vector.shape_cast %34 : vector<1x1x64x64xbf16> to vector<64x64xbf16>
    %36 = vector.shape_cast %33 : vector<64x64xbf16> to vector<1x1x64x64xbf16>
    tpu.vector_store %arg6[%c0_15, %c0_16, %c0_17, %c0_18], %36 {strides = array<i32>} : memref<1x2x64x64xbf16, #tpu.memory_space<vmem>>, vector<1x1x64x64xbf16>,
    %37 = vector.extract_strided_slice %28 {offsets = [0, 256], sizes = [64, 64], strides = [1, 1]} : vector<64x384xbf16> to vector<64x64xbf16>
    %c0_19 = arith.constant 0 : index
    %c0_20 = arith.constant 0 : index
    %c0_21 = arith.constant 0 : index
    %c0_22 = arith.constant 0 : index
    %38 = vector.load %arg7[%c0_19, %c0_20, %c0_21, %c0_22] : memref<1x2x64x64xbf16, #tpu.memory_space<vmem>>, vector<1x1x64x64xbf16>
    %39 = vector.shape_cast %38 : vector<1x1x64x64xbf16> to vector<64x64xbf16>
    %40 = vector.shape_cast %37 : vector<64x64xbf16> to vector<1x1x64x64xbf16>
    tpu.vector_store %arg7[%c0_19, %c0_20, %c0_21, %c0_22], %40 {strides = array<i32>} : memref<1x2x64x64xbf16, #tpu.memory_space<vmem>>, vector<1x1x64x64xbf16>,
    %41 = vector.extract_strided_slice %28 {offsets = [0, 64], sizes = [64, 64], strides = [1, 1]} : vector<64x384xbf16> to vector<64x64xbf16>
    %c0_23 = arith.constant 0 : index
    %c1 = arith.constant 1 : index
    %c0_24 = arith.constant 0 : index
    %c0_25 = arith.constant 0 : index
    %42 = vector.load %arg5[%c0_23, %c1, %c0_24, %c0_25] : memref<1x2x64x64xbf16, #tpu.memory_space<vmem>>, vector<1x1x64x64xbf16>
    %43 = vector.shape_cast %42 : vector<1x1x64x64xbf16> to vector<64x64xbf16>
    %44 = vector.shape_cast %41 : vector<64x64xbf16> to vector<1x1x64x64xbf16>
    tpu.vector_store %arg5[%c0_23, %c1, %c0_24, %c0_25], %44 {strides = array<i32>} : memref<1x2x64x64xbf16, #tpu.memory_space<vmem>>, vector<1x1x64x64xbf16>,
    %45 = vector.extract_strided_slice %28 {offsets = [0, 192], sizes = [64, 64], strides = [1, 1]} : vector<64x384xbf16> to vector<64x64xbf16>
    %c0_26 = arith.constant 0 : index
    %c1_27 = arith.constant 1 : index
    %c0_28 = arith.constant 0 : index
    %c0_29 = arith.constant 0 : index
    %46 = vector.load %arg6[%c0_26, %c1_27, %c0_28, %c0_29] : memref<1x2x64x64xbf16, #tpu.memory_space<vmem>>, vector<1x1x64x64xbf16>
    %47 = vector.shape_cast %46 : vector<1x1x64x64xbf16> to vector<64x64xbf16>
    %48 = vector.shape_cast %45 : vector<64x64xbf16> to vector<1x1x64x64xbf16>
    tpu.vector_store %arg6[%c0_26, %c1_27, %c0_28, %c0_29], %48 {strides = array<i32>} : memref<1x2x64x64xbf16, #tpu.memory_space<vmem>>, vector<1x1x64x64xbf16>,
    %49 = vector.extract_strided_slice %28 {offsets = [0, 320], sizes = [64, 64], strides = [1, 1]} : vector<64x384xbf16> to vector<64x64xbf16>
    %c0_30 = arith.constant 0 : index
    %c1_31 = arith.constant 1 : index
    %c0_32 = arith.constant 0 : index
    %c0_33 = arith.constant 0 : index
    %50 = vector.load %arg7[%c0_30, %c1_31, %c0_32, %c0_33] : memref<1x2x64x64xbf16, #tpu.memory_space<vmem>>, vector<1x1x64x64xbf16>
    %51 = vector.shape_cast %50 : vector<1x1x64x64xbf16> to vector<64x64xbf16>
    %52 = vector.shape_cast %49 : vector<64x64xbf16> to vector<1x1x64x64xbf16>
    tpu.vector_store %arg7[%c0_30, %c1_31, %c0_32, %c0_33], %52 {strides = array<i32>} : memref<1x2x64x64xbf16, #tpu.memory_space<vmem>>, vector<1x1x64x64xbf16>,
    return
  }
  func.func @transform_0(%arg0: i32, %arg1: i32) -> (i32, i32, i32) {
    %c0_i32 = arith.constant 0 : i32
    %c0_i32_0 = arith.constant 0 : i32
    return %arg0, %arg1, %c0_i32 : i32, i32, i32
  }
  func.func @transform_1(%arg0: i32, %arg1: i32) -> (i32, i32) {
    %c0_i32 = arith.constant 0 : i32
    %c0_i32_0 = arith.constant 0 : i32
    %c0_i32_1 = arith.constant 0 : i32
    return %c0_i32, %c0_i32_0 : i32, i32
  }
  func.func @transform_2(%arg0: i32, %arg1: i32) -> (i32, i32) {
    %c0_i32 = arith.constant 0 : i32
    %c0_i32_0 = arith.constant 0 : i32
    %c0_i32_1 = arith.constant 0 : i32
    return %c0_i32, %c0_i32_0 : i32, i32
  }
  func.func @transform_3(%arg0: i32, %arg1: i32) -> (i32, i32, i32, i32) {
    %c0_i32 = arith.constant 0 : i32
    %c0_i32_0 = arith.constant 0 : i32
    %c0_i32_1 = arith.constant 0 : i32
    return %arg0, %c0_i32, %arg1, %c0_i32_0 : i32, i32, i32, i32
  }
  func.func @transform_4(%arg0: i32, %arg1: i32) -> (i32, i32, i32, i32) {
    %c0_i32 = arith.constant 0 : i32
    %c0_i32_0 = arith.constant 0 : i32
    %c0_i32_1 = arith.constant 0 : i32
    return %arg0, %c0_i32, %arg1, %c0_i32_0 : i32, i32, i32, i32
  }
  func.func @transform_5(%arg0: i32, %arg1: i32) -> (i32, i32, i32, i32) {
    %c0_i32 = arith.constant 0 : i32
    %c0_i32_0 = arith.constant 0 : i32
    %c0_i32_1 = arith.constant 0 : i32
    return %arg0, %c0_i32, %arg1, %c0_i32_0 : i32, i32, i32, i32
  }
}

module attributes {stable_mosaic.version = 11 : i64} {
  func.func @kernel(%arg0: i32, %arg1: i32, %arg2: memref<1x64x128xf32, #tpu.memory_space<vmem>>, %arg3: memref<1x2x64x64xbf16, #tpu.memory_space<vmem>>, %arg4: memref<1x2x128x64xbf16, #tpu.memory_space<vmem>>, %arg5: memref<1x2x128x64xbf16, #tpu.memory_space<vmem>>, %arg6: memref<1x128xf32, #tpu.memory_space<vmem>>, %arg7: memref<2x64x128xbf16, #tpu.memory_space<vmem>>, %arg8: memref<1x128xf32, #tpu.memory_space<vmem>>, %arg9: memref<128x1024xbf16, #tpu.memory_space<vmem>>, %arg10: memref<1x512xf32, #tpu.memory_space<vmem>>, %arg11: memref<512x128xbf16, #tpu.memory_space<vmem>>, %arg12: memref<1x64x128xf32, #tpu.memory_space<vmem>>) attributes {dimension_semantics = [#tpu.dimension_semantics<parallel>, #tpu.dimension_semantics<parallel>], iteration_bounds = array<i64: 2, 2>, scalar_prefetch = 0 : i64, scratch_operands = 0 : i64, tpu.core_type = #tpu.core_type<tc>, window_params = [{transform_indices = @transform_0, window_bounds = array<i64: 1, 64, 128>}, {transform_indices = @transform_1, window_bounds = array<i64: 1, 2, 64, 64>}, {transform_indices = @transform_2, window_bounds = array<i64: 1, 2, 128, 64>}, {transform_indices = @transform_3, window_bounds = array<i64: 1, 2, 128, 64>}, {pipeline_mode = #tpu.pipeline_mode<synchronous>, transform_indices = @transform_4, window_bounds = array<i64: 1, 128>}, {pipeline_mode = #tpu.pipeline_mode<synchronous>, transform_indices = @transform_5, window_bounds = array<i64: 2, 64, 128>}, {pipeline_mode = #tpu.pipeline_mode<synchronous>, transform_indices = @transform_6, window_bounds = array<i64: 1, 128>}, {pipeline_mode = #tpu.pipeline_mode<synchronous>, transform_indices = @transform_7, window_bounds = array<i64: 128, 1024>}, {pipeline_mode = #tpu.pipeline_mode<synchronous>, transform_indices = @transform_8, window_bounds = array<i64: 1, 512>}, {pipeline_mode = #tpu.pipeline_mode<synchronous>, transform_indices = @transform_9, window_bounds = array<i64: 512, 128>}, {transform_indices = @transform_10, window_bounds = array<i64: 1, 64, 128>}]} {
    %c0 = arith.constant 0 : index
    %c0_0 = arith.constant 0 : index
    %c0_1 = arith.constant 0 : index
    %0 = vector.load %arg2[%c0, %c0_0, %c0_1] : memref<1x64x128xf32, #tpu.memory_space<vmem>>, vector<1x64x128xf32>
    %1 = vector.shape_cast %0 : vector<1x64x128xf32> to vector<64x128xf32>
    %c0_2 = arith.constant 0 : index
    %c0_3 = arith.constant 0 : index
    %c0_4 = arith.constant 0 : index
    %c0_5 = arith.constant 0 : index
    %2 = vector.load %arg3[%c0_2, %c0_3, %c0_4, %c0_5] : memref<1x2x64x64xbf16, #tpu.memory_space<vmem>>, vector<1x2x64x64xbf16>
    %3 = vector.shape_cast %2 : vector<1x2x64x64xbf16> to vector<2x64x64xbf16>
    %c0_6 = arith.constant 0 : index
    %c0_7 = arith.constant 0 : index
    %c0_8 = arith.constant 0 : index
    %c0_9 = arith.constant 0 : index
    %4 = vector.load %arg4[%c0_6, %c0_7, %c0_8, %c0_9] : memref<1x2x128x64xbf16, #tpu.memory_space<vmem>>, vector<1x2x128x64xbf16>
    %5 = vector.shape_cast %4 : vector<1x2x128x64xbf16> to vector<2x128x64xbf16>
    %c0_10 = arith.constant 0 : index
    %c0_11 = arith.constant 0 : index
    %c0_12 = arith.constant 0 : index
    %c0_13 = arith.constant 0 : index
    %6 = vector.load %arg5[%c0_10, %c0_11, %c0_12, %c0_13] : memref<1x2x128x64xbf16, #tpu.memory_space<vmem>>, vector<1x2x128x64xbf16>
    %7 = vector.shape_cast %6 : vector<1x2x128x64xbf16> to vector<2x128x64xbf16>
    "tpu.trace_start"() <{level = 10 : i32, message = "hte,hne->htn"}> : () -> ()
    %cst = arith.constant dense<0.000000e+00> : vector<2x64x128xf32>
    %8 = tpu.matmul %3, %5, %cst {dimension_numbers = #tpu.dot_dimension_numbers<[2], [2], [1], [1], [0, 0, 0, 1, 1, 1], [0], [0]>} : vector<2x64x64xbf16>, vector<2x128x64xbf16>, vector<2x64x128xf32> -> vector<2x64x128xf32>
    "tpu.trace_stop"() : () -> ()
    %cst_14 = arith.constant dense<0xFF800000> : vector<2x64xf32>
    %9 = vector.multi_reduction <maximumf>, %8, %cst_14 [2] : vector<2x64x128xf32> to vector<2x64xf32>
    %10 = vector.shape_cast %9 : vector<2x64xf32> to vector<2x64x1xf32>
    %11 = vector.broadcast %10 : vector<2x64x1xf32> to vector<2x64x128xf32>
    %12 = arith.subf %8, %11 : vector<2x64x128xf32>
    %13 = math.exp %12 : vector<2x64x128xf32>
    %cst_15 = arith.constant dense<0.000000e+00> : vector<2x64xf32>
    %14 = vector.multi_reduction <add>, %13, %cst_15 [2] : vector<2x64x128xf32> to vector<2x64xf32>
    %15 = vector.shape_cast %14 : vector<2x64xf32> to vector<2x64x1xf32>
    %16 = tpu.reciprocal %15 {approx = true} : vector<2x64x1xf32> -> vector<2x64x1xf32>
    %17 = vector.broadcast %16 : vector<2x64x1xf32> to vector<2x64x128xf32>
    %18 = arith.mulf %13, %17 : vector<2x64x128xf32>
    %19 = arith.truncf %18 : vector<2x64x128xf32> to vector<2x64x128xbf16>
    "tpu.trace_start"() <{level = 10 : i32, message = "htn,hne->hte"}> : () -> ()
    %cst_16 = arith.constant dense<0.000000e+00> : vector<2x64x64xf32>
    %20 = tpu.matmul %19, %7, %cst_16 {dimension_numbers = #tpu.dot_dimension_numbers<[2], [1], [1], [2], [0, 0, 0, 1, 1, 2], [0], [0]>} : vector<2x64x128xbf16>, vector<2x128x64xbf16>, vector<2x64x64xf32> -> vector<2x64x64xf32>
    "tpu.trace_stop"() : () -> ()
    %21 = arith.truncf %20 : vector<2x64x64xf32> to vector<2x64x64xbf16>
    %c0_17 = arith.constant 0 : index
    %c0_18 = arith.constant 0 : index
    %c0_19 = arith.constant 0 : index
    %22 = vector.load %arg7[%c0_17, %c0_18, %c0_19] : memref<2x64x128xbf16, #tpu.memory_space<vmem>>, vector<2x64x128xbf16>
    "tpu.trace_start"() <{level = 10 : i32, message = "hte,hed->htd"}> : () -> ()
    %cst_20 = arith.constant dense<0.000000e+00> : vector<2x64x128xf32>
    %23 = tpu.matmul %21, %22, %cst_20 {dimension_numbers = #tpu.dot_dimension_numbers<[2], [1], [1], [2], [0, 0, 0, 1, 1, 2], [0], [0]>} : vector<2x64x64xbf16>, vector<2x64x128xbf16>, vector<2x64x128xf32> -> vector<2x64x128xf32>
    "tpu.trace_stop"() : () -> ()
    %cst_21 = arith.constant dense<0.000000e+00> : vector<64x128xf32>
    %24 = vector.multi_reduction <add>, %23, %cst_21 [0] : vector<2x64x128xf32> to vector<64x128xf32>
    %c0_22 = arith.constant 0 : index
    %c0_23 = arith.constant 0 : index
    %25 = vector.load %arg6[%c0_22, %c0_23] : memref<1x128xf32, #tpu.memory_space<vmem>>, vector<1x128xf32>
    %26 = vector.shape_cast %25 : vector<1x128xf32> to vector<128xf32>
    %cst_24 = arith.constant dense<0.000000e+00> : vector<64xf32>
    %27 = vector.multi_reduction <add>, %24, %cst_24 [1] : vector<64x128xf32> to vector<64xf32>
    %28 = vector.shape_cast %27 : vector<64xf32> to vector<64x1xf32>
    %cst_25 = arith.constant 1.280000e+02 : f32
    %29 = vector.broadcast %cst_25 : f32 to vector<64x1xf32>
    %30 = arith.divf %28, %29 : vector<64x1xf32>
    %31 = vector.broadcast %30 : vector<64x1xf32> to vector<64x128xf32>
    %32 = arith.subf %24, %31 : vector<64x128xf32>
    %33 = arith.mulf %32, %32 : vector<64x128xf32>
    %cst_26 = arith.constant dense<0.000000e+00> : vector<64xf32>
    %34 = vector.multi_reduction <add>, %33, %cst_26 [1] : vector<64x128xf32> to vector<64xf32>
    %35 = vector.shape_cast %34 : vector<64xf32> to vector<64x1xf32>
    %cst_27 = arith.constant 1.280000e+02 : f32
    %36 = vector.broadcast %cst_27 : f32 to vector<64x1xf32>
    %37 = arith.divf %35, %36 : vector<64x1xf32>
    %38 = vector.broadcast %30 : vector<64x1xf32> to vector<64x128xf32>
    %39 = arith.subf %24, %38 : vector<64x128xf32>
    %cst_28 = arith.constant 9.99999974E-6 : f32
    %40 = vector.broadcast %cst_28 : f32 to vector<64x1xf32>
    %41 = arith.addf %37, %40 : vector<64x1xf32>
    %42 = math.rsqrt %41 : vector<64x1xf32>
    %43 = vector.broadcast %42 : vector<64x1xf32> to vector<64x128xf32>
    %44 = arith.mulf %39, %43 : vector<64x128xf32>
    %45 = vector.shape_cast %26 : vector<128xf32> to vector<1x128xf32>
    %46 = vector.broadcast %45 : vector<1x128xf32> to vector<64x128xf32>
    %47 = arith.mulf %44, %46 : vector<64x128xf32>
    %48 = arith.addf %1, %47 : vector<64x128xf32>
    %c0_29 = arith.constant 0 : index
    %c0_30 = arith.constant 0 : index
    %49 = vector.load %arg8[%c0_29, %c0_30] : memref<1x128xf32, #tpu.memory_space<vmem>>, vector<1x128xf32>
    %50 = vector.shape_cast %49 : vector<1x128xf32> to vector<128xf32>
    %cst_31 = arith.constant dense<0.000000e+00> : vector<64xf32>
    %51 = vector.multi_reduction <add>, %48, %cst_31 [1] : vector<64x128xf32> to vector<64xf32>
    %52 = vector.shape_cast %51 : vector<64xf32> to vector<64x1xf32>
    %cst_32 = arith.constant 1.280000e+02 : f32
    %53 = vector.broadcast %cst_32 : f32 to vector<64x1xf32>
    %54 = arith.divf %52, %53 : vector<64x1xf32>
    %55 = vector.broadcast %54 : vector<64x1xf32> to vector<64x128xf32>
    %56 = arith.subf %48, %55 : vector<64x128xf32>
    %57 = arith.mulf %56, %56 : vector<64x128xf32>
    %cst_33 = arith.constant dense<0.000000e+00> : vector<64xf32>
    %58 = vector.multi_reduction <add>, %57, %cst_33 [1] : vector<64x128xf32> to vector<64xf32>
    %59 = vector.shape_cast %58 : vector<64xf32> to vector<64x1xf32>
    %cst_34 = arith.constant 1.280000e+02 : f32
    %60 = vector.broadcast %cst_34 : f32 to vector<64x1xf32>
    %61 = arith.divf %59, %60 : vector<64x1xf32>
    %62 = vector.broadcast %54 : vector<64x1xf32> to vector<64x128xf32>
    %63 = arith.subf %48, %62 : vector<64x128xf32>
    %cst_35 = arith.constant 9.99999974E-6 : f32
    %64 = vector.broadcast %cst_35 : f32 to vector<64x1xf32>
    %65 = arith.addf %61, %64 : vector<64x1xf32>
    %66 = math.rsqrt %65 : vector<64x1xf32>
    %67 = vector.broadcast %66 : vector<64x1xf32> to vector<64x128xf32>
    %68 = arith.mulf %63, %67 : vector<64x128xf32>
    %69 = vector.shape_cast %50 : vector<128xf32> to vector<1x128xf32>
    %70 = vector.broadcast %69 : vector<1x128xf32> to vector<64x128xf32>
    %71 = arith.mulf %68, %70 : vector<64x128xf32>
    %72 = arith.truncf %71 : vector<64x128xf32> to vector<64x128xbf16>
    %c0_36 = arith.constant 0 : index
    %c0_37 = arith.constant 0 : index
    %73 = vector.load %arg9[%c0_36, %c0_37] : memref<128x1024xbf16, #tpu.memory_space<vmem>>, vector<128x1024xbf16>
    %cst_38 = arith.constant dense<0.000000e+00> : vector<64x1024xf32>
    %74 = tpu.matmul %72, %73, %cst_38 {dimension_numbers = #tpu.dot_dimension_numbers<[1], [0], [0], [1], [0, 0, 1, 1], [], []>} : vector<64x128xbf16>, vector<128x1024xbf16>, vector<64x1024xf32> -> vector<64x1024xf32>
    %75 = vector.extract_strided_slice %74 {offsets = [0, 0], sizes = [64, 512], strides = [1, 1]} : vector<64x1024xf32> to vector<64x512xf32>
    %76 = vector.extract_strided_slice %74 {offsets = [0, 512], sizes = [64, 512], strides = [1, 1]} : vector<64x1024xf32> to vector<64x512xf32>
    %77 = arith.negf %76 : vector<64x512xf32>
    %78 = math.exp %77 : vector<64x512xf32>
    %cst_39 = arith.constant 1.000000e+00 : f32
    %79 = vector.broadcast %cst_39 : f32 to vector<64x512xf32>
    %80 = arith.addf %79, %78 : vector<64x512xf32>
    %81 = arith.divf %79, %80 : vector<64x512xf32>
    %82 = arith.mulf %76, %81 : vector<64x512xf32>
    %83 = arith.mulf %75, %82 : vector<64x512xf32>
    %c0_40 = arith.constant 0 : index
    %c0_41 = arith.constant 0 : index
    %84 = vector.load %arg10[%c0_40, %c0_41] : memref<1x512xf32, #tpu.memory_space<vmem>>, vector<1x512xf32>
    %85 = vector.shape_cast %84 : vector<1x512xf32> to vector<512xf32>
    %cst_42 = arith.constant dense<0.000000e+00> : vector<64xf32>
    %86 = vector.multi_reduction <add>, %83, %cst_42 [1] : vector<64x512xf32> to vector<64xf32>
    %87 = vector.shape_cast %86 : vector<64xf32> to vector<64x1xf32>
    %cst_43 = arith.constant 5.120000e+02 : f32
    %88 = vector.broadcast %cst_43 : f32 to vector<64x1xf32>
    %89 = arith.divf %87, %88 : vector<64x1xf32>
    %90 = vector.broadcast %89 : vector<64x1xf32> to vector<64x512xf32>
    %91 = arith.subf %83, %90 : vector<64x512xf32>
    %92 = arith.mulf %91, %91 : vector<64x512xf32>
    %cst_44 = arith.constant dense<0.000000e+00> : vector<64xf32>
    %93 = vector.multi_reduction <add>, %92, %cst_44 [1] : vector<64x512xf32> to vector<64xf32>
    %94 = vector.shape_cast %93 : vector<64xf32> to vector<64x1xf32>
    %cst_45 = arith.constant 5.120000e+02 : f32
    %95 = vector.broadcast %cst_45 : f32 to vector<64x1xf32>
    %96 = arith.divf %94, %95 : vector<64x1xf32>
    %97 = vector.broadcast %89 : vector<64x1xf32> to vector<64x512xf32>
    %98 = arith.subf %83, %97 : vector<64x512xf32>
    %cst_46 = arith.constant 9.99999974E-6 : f32
    %99 = vector.broadcast %cst_46 : f32 to vector<64x1xf32>
    %100 = arith.addf %96, %99 : vector<64x1xf32>
    %101 = math.rsqrt %100 : vector<64x1xf32>
    %102 = vector.broadcast %101 : vector<64x1xf32> to vector<64x512xf32>
    %103 = arith.mulf %98, %102 : vector<64x512xf32>
    %104 = vector.shape_cast %85 : vector<512xf32> to vector<1x512xf32>
    %105 = vector.broadcast %104 : vector<1x512xf32> to vector<64x512xf32>
    %106 = arith.mulf %103, %105 : vector<64x512xf32>
    %107 = arith.truncf %106 : vector<64x512xf32> to vector<64x512xbf16>
    %c0_47 = arith.constant 0 : index
    %c0_48 = arith.constant 0 : index
    %108 = vector.load %arg11[%c0_47, %c0_48] : memref<512x128xbf16, #tpu.memory_space<vmem>>, vector<512x128xbf16>
    %cst_49 = arith.constant dense<0.000000e+00> : vector<64x128xf32>
    %109 = tpu.matmul %107, %108, %cst_49 {dimension_numbers = #tpu.dot_dimension_numbers<[1], [0], [0], [1], [0, 0, 1, 1], [], []>} : vector<64x512xbf16>, vector<512x128xbf16>, vector<64x128xf32> -> vector<64x128xf32>
    %110 = arith.addf %48, %109 : vector<64x128xf32>
    %c0_50 = arith.constant 0 : index
    %c0_51 = arith.constant 0 : index
    %c0_52 = arith.constant 0 : index
    %111 = vector.load %arg12[%c0_50, %c0_51, %c0_52] : memref<1x64x128xf32, #tpu.memory_space<vmem>>, vector<1x64x128xf32>
    %112 = vector.shape_cast %111 : vector<1x64x128xf32> to vector<64x128xf32>
    %113 = vector.shape_cast %110 : vector<64x128xf32> to vector<1x64x128xf32>
    tpu.vector_store %arg12[%c0_50, %c0_51, %c0_52], %113 {strides = array<i32>} : memref<1x64x128xf32, #tpu.memory_space<vmem>>, vector<1x64x128xf32>,
    return
  }
  func.func @transform_0(%arg0: i32, %arg1: i32) -> (i32, i32, i32) {
    %c0_i32 = arith.constant 0 : i32
    %c0_i32_0 = arith.constant 0 : i32
    return %arg0, %arg1, %c0_i32 : i32, i32, i32
  }
  func.func @transform_1(%arg0: i32, %arg1: i32) -> (i32, i32, i32, i32) {
    %c0_i32 = arith.constant 0 : i32
    %c0_i32_0 = arith.constant 0 : i32
    %c0_i32_1 = arith.constant 0 : i32
    return %arg0, %c0_i32, %arg1, %c0_i32_0 : i32, i32, i32, i32
  }
  func.func @transform_2(%arg0: i32, %arg1: i32) -> (i32, i32, i32, i32) {
    %c0_i32 = arith.constant 0 : i32
    %c0_i32_0 = arith.constant 0 : i32
    %c0_i32_1 = arith.constant 0 : i32
    %c0_i32_2 = arith.constant 0 : i32
    return %arg0, %c0_i32, %c0_i32_0, %c0_i32_1 : i32, i32, i32, i32
  }
  func.func @transform_3(%arg0: i32, %arg1: i32) -> (i32, i32, i32, i32) {
    %c0_i32 = arith.constant 0 : i32
    %c0_i32_0 = arith.constant 0 : i32
    %c0_i32_1 = arith.constant 0 : i32
    %c0_i32_2 = arith.constant 0 : i32
    return %arg0, %c0_i32, %c0_i32_0, %c0_i32_1 : i32, i32, i32, i32
  }
  func.func @transform_4(%arg0: i32, %arg1: i32) -> (i32, i32) {
    %c0_i32 = arith.constant 0 : i32
    %c0_i32_0 = arith.constant 0 : i32
    %c0_i32_1 = arith.constant 0 : i32
    return %c0_i32, %c0_i32_0 : i32, i32
  }
  func.func @transform_5(%arg0: i32, %arg1: i32) -> (i32, i32, i32) {
    %c0_i32 = arith.constant 0 : i32
    %c0_i32_0 = arith.constant 0 : i32
    %c0_i32_1 = arith.constant 0 : i32
    %c0_i32_2 = arith.constant 0 : i32
    return %c0_i32, %c0_i32_0, %c0_i32_1 : i32, i32, i32
  }
  func.func @transform_6(%arg0: i32, %arg1: i32) -> (i32, i32) {
    %c0_i32 = arith.constant 0 : i32
    %c0_i32_0 = arith.constant 0 : i32
    %c0_i32_1 = arith.constant 0 : i32
    return %c0_i32, %c0_i32_0 : i32, i32
  }
  func.func @transform_7(%arg0: i32, %arg1: i32) -> (i32, i32) {
    %c0_i32 = arith.constant 0 : i32
    %c0_i32_0 = arith.constant 0 : i32
    %c0_i32_1 = arith.constant 0 : i32
    return %c0_i32, %c0_i32_0 : i32, i32
  }
  func.func @transform_8(%arg0: i32, %arg1: i32) -> (i32, i32) {
    %c0_i32 = arith.constant 0 : i32
    %c0_i32_0 = arith.constant 0 : i32
    %c0_i32_1 = arith.constant 0 : i32
    return %c0_i32, %c0_i32_0 : i32, i32
  }
  func.func @transform_9(%arg0: i32, %arg1: i32) -> (i32, i32) {
    %c0_i32 = arith.constant 0 : i32
    %c0_i32_0 = arith.constant 0 : i32
    %c0_i32_1 = arith.constant 0 : i32
    return %c0_i32, %c0_i32_0 : i32, i32
  }
  func.func @transform_10(%arg0: i32, %arg1: i32) -> (i32, i32, i32) {
    %c0_i32 = arith.constant 0 : i32
    %c0_i32_0 = arith.constant 0 : i32
    return %arg0, %arg1, %c0_i32 : i32, i32, i32
  }
}

module attributes {stable_mosaic.version = 11 : i64} {
  func.func @kernel(%arg0: i32, %arg1: i32, %arg2: memref<1x64x128xf32, #tpu.memory_space<vmem>>, %arg3: memref<1x128xf32, #tpu.memory_space<vmem>>, %arg4: memref<128x384xbf16, #tpu.memory_space<vmem>>, %arg5: memref<1x2x64x64xbf16, #tpu.memory_space<vmem>>, %arg6: memref<1x2x64x64xbf16, #tpu.memory_space<vmem>>, %arg7: memref<1x2x64x64xbf16, #tpu.memory_space<vmem>>) attributes {dimension_semantics = [#tpu.dimension_semantics<parallel>, #tpu.dimension_semantics<parallel>], iteration_bounds = array<i64: 2, 2>, scalar_prefetch = 0 : i64, scratch_operands = 0 : i64, tpu.core_type = #tpu.core_type<tc>, window_params = [{transform_indices = @transform_0, window_bounds = array<i64: 1, 64, 128>}, {pipeline_mode = #tpu.pipeline_mode<synchronous>, transform_indices = @transform_1, window_bounds = array<i64: 1, 128>}, {pipeline_mode = #tpu.pipeline_mode<synchronous>, transform_indices = @transform_2, window_bounds = array<i64: 128, 384>}, {transform_indices = @transform_3, window_bounds = array<i64: 1, 2, 64, 64>}, {transform_indices = @transform_4, window_bounds = array<i64: 1, 2, 64, 64>}, {transform_indices = @transform_5, window_bounds = array<i64: 1, 2, 64, 64>}]} {
    %c0 = arith.constant 0 : index
    %c0_0 = arith.constant 0 : index
    %c0_1 = arith.constant 0 : index
    %0 = vector.load %arg2[%c0, %c0_0, %c0_1] : memref<1x64x128xf32, #tpu.memory_space<vmem>>, vector<1x64x128xf32>
    %1 = vector.shape_cast %0 : vector<1x64x128xf32> to vector<64x128xf32>
    %c0_2 = arith.constant 0 : index
    %c0_3 = arith.constant 0 : index
    %2 = vector.load %arg3[%c0_2, %c0_3] : memref<1x128xf32, #tpu.memory_space<vmem>>, vector<1x128xf32>
    %3 = vector.shape_cast %2 : vector<1x128xf32> to vector<128xf32>
    %cst = arith.constant dense<0.000000e+00> : vector<64xf32>
    %4 = vector.multi_reduction <add>, %1, %cst [1] : vector<64x128xf32> to vector<64xf32>
    %5 = vector.shape_cast %4 : vector<64xf32> to vector<64x1xf32>
    %cst_4 = arith.constant 1.280000e+02 : f32
    %6 = vector.broadcast %cst_4 : f32 to vector<64x1xf32>
    %7 = arith.divf %5, %6 : vector<64x1xf32>
    %8 = vector.broadcast %7 : vector<64x1xf32> to vector<64x128xf32>
    %9 = arith.subf %1, %8 : vector<64x128xf32>
    %10 = arith.mulf %9, %9 : vector<64x128xf32>
    %cst_5 = arith.constant dense<0.000000e+00> : vector<64xf32>
    %11 = vector.multi_reduction <add>, %10, %cst_5 [1] : vector<64x128xf32> to vector<64xf32>
    %12 = vector.shape_cast %11 : vector<64xf32> to vector<64x1xf32>
    %cst_6 = arith.constant 1.280000e+02 : f32
    %13 = vector.broadcast %cst_6 : f32 to vector<64x1xf32>
    %14 = arith.divf %12, %13 : vector<64x1xf32>
    %15 = vector.broadcast %7 : vector<64x1xf32> to vector<64x128xf32>
    %16 = arith.subf %1, %15 : vector<64x128xf32>
    %cst_7 = arith.constant 9.99999974E-6 : f32
    %17 = vector.broadcast %cst_7 : f32 to vector<64x1xf32>
    %18 = arith.addf %14, %17 : vector<64x1xf32>
    %19 = math.rsqrt %18 : vector<64x1xf32>
    %20 = vector.broadcast %19 : vector<64x1xf32> to vector<64x128xf32>
    %21 = arith.mulf %16, %20 : vector<64x128xf32>
    %22 = vector.shape_cast %3 : vector<128xf32> to vector<1x128xf32>
    %23 = vector.broadcast %22 : vector<1x128xf32> to vector<64x128xf32>
    %24 = arith.mulf %21, %23 : vector<64x128xf32>
    %25 = arith.truncf %24 : vector<64x128xf32> to vector<64x128xbf16>
    %c0_8 = arith.constant 0 : index
    %c0_9 = arith.constant 0 : index
    %26 = vector.load %arg4[%c0_8, %c0_9] : memref<128x384xbf16, #tpu.memory_space<vmem>>, vector<128x384xbf16>
    %cst_10 = arith.constant dense<0.000000e+00> : vector<64x384xf32>
    %27 = tpu.matmul %25, %26, %cst_10 {dimension_numbers = #tpu.dot_dimension_numbers<[1], [0], [0], [1], [0, 0, 1, 1], [], []>} : vector<64x128xbf16>, vector<128x384xbf16>, vector<64x384xf32> -> vector<64x384xf32>
    %28 = arith.truncf %27 : vector<64x384xf32> to vector<64x384xbf16>
    %29 = vector.extract_strided_slice %28 {offsets = [0, 0], sizes = [64, 64], strides = [1, 1]} : vector<64x384xbf16> to vector<64x64xbf16>
    %c0_11 = arith.constant 0 : index
    %c0_12 = arith.constant 0 : index
    %c0_13 = arith.constant 0 : index
    %c0_14 = arith.constant 0 : index
    %30 = vector.load %arg5[%c0_11, %c0_12, %c0_13, %c0_14] : memref<1x2x64x64xbf16, #tpu.memory_space<vmem>>, vector<1x1x64x64xbf16>
    %31 = vector.shape_cast %30 : vector<1x1x64x64xbf16> to vector<64x64xbf16>
    %32 = vector.shape_cast %29 : vector<64x64xbf16> to vector<1x1x64x64xbf16>
    tpu.vector_store %arg5[%c0_11, %c0_12, %c0_13, %c0_14], %32 {strides = array<i32>} : memref<1x2x64x64xbf16, #tpu.memory_space<vmem>>, vector<1x1x64x64xbf16>,
    %33 = vector.extract_strided_slice %28 {offsets = [0, 128], sizes = [64, 64], strides = [1, 1]} : vector<64x384xbf16> to vector<64x64xbf16>
    %c0_15 = arith.constant 0 : index
    %c0_16 = arith.constant 0 : index
    %c0_17 = arith.constant 0 : index
    %c0_18 = arith.constant 0 : index
    %34 = vector.load %arg6[%c0_15, %c0_16, %c0_17, %c0_18] : memref<1x2x64x64xbf16, #tpu.memory_space<vmem>>, vector<1x1x64x64xbf16>
    %35 = vector.shape_cast %34 : vector<1x1x64x64xbf16> to vector<64x64xbf16>
    %36 = vector.shape_cast %33 : vector<64x64xbf16> to vector<1x1x64x64xbf16>
    tpu.vector_store %arg6[%c0_15, %c0_16, %c0_17, %c0_18], %36 {strides = array<i32>} : memref<1x2x64x64xbf16, #tpu.memory_space<vmem>>, vector<1x1x64x64xbf16>,
    %37 = vector.extract_strided_slice %28 {offsets = [0, 256], sizes = [64, 64], strides = [1, 1]} : vector<64x384xbf16> to vector<64x64xbf16>
    %c0_19 = arith.constant 0 : index
    %c0_20 = arith.constant 0 : index
    %c0_21 = arith.constant 0 : index
    %c0_22 = arith.constant 0 : index
    %38 = vector.load %arg7[%c0_19, %c0_20, %c0_21, %c0_22] : memref<1x2x64x64xbf16, #tpu.memory_space<vmem>>, vector<1x1x64x64xbf16>
    %39 = vector.shape_cast %38 : vector<1x1x64x64xbf16> to vector<64x64xbf16>
    %40 = vector.shape_cast %37 : vector<64x64xbf16> to vector<1x1x64x64xbf16>
    tpu.vector_store %arg7[%c0_19, %c0_20, %c0_21, %c0_22], %40 {strides = array<i32>} : memref<1x2x64x64xbf16, #tpu.memory_space<vmem>>, vector<1x1x64x64xbf16>,
    %41 = vector.extract_strided_slice %28 {offsets = [0, 64], sizes = [64, 64], strides = [1, 1]} : vector<64x384xbf16> to vector<64x64xbf16>
    %c0_23 = arith.constant 0 : index
    %c1 = arith.constant 1 : index
    %c0_24 = arith.constant 0 : index
    %c0_25 = arith.constant 0 : index
    %42 = vector.load %arg5[%c0_23, %c1, %c0_24, %c0_25] : memref<1x2x64x64xbf16, #tpu.memory_space<vmem>>, vector<1x1x64x64xbf16>
    %43 = vector.shape_cast %42 : vector<1x1x64x64xbf16> to vector<64x64xbf16>
    %44 = vector.shape_cast %41 : vector<64x64xbf16> to vector<1x1x64x64xbf16>
    tpu.vector_store %arg5[%c0_23, %c1, %c0_24, %c0_25], %44 {strides = array<i32>} : memref<1x2x64x64xbf16, #tpu.memory_space<vmem>>, vector<1x1x64x64xbf16>,
    %45 = vector.extract_strided_slice %28 {offsets = [0, 192], sizes = [64, 64], strides = [1, 1]} : vector<64x384xbf16> to vector<64x64xbf16>
    %c0_26 = arith.constant 0 : index
    %c1_27 = arith.constant 1 : index
    %c0_28 = arith.constant 0 : index
    %c0_29 = arith.constant 0 : index
    %46 = vector.load %arg6[%c0_26, %c1_27, %c0_28, %c0_29] : memref<1x2x64x64xbf16, #tpu.memory_space<vmem>>, vector<1x1x64x64xbf16>
    %47 = vector.shape_cast %46 : vector<1x1x64x64xbf16> to vector<64x64xbf16>
    %48 = vector.shape_cast %45 : vector<64x64xbf16> to vector<1x1x64x64xbf16>
    tpu.vector_store %arg6[%c0_26, %c1_27, %c0_28, %c0_29], %48 {strides = array<i32>} : memref<1x2x64x64xbf16, #tpu.memory_space<vmem>>, vector<1x1x64x64xbf16>,
    %49 = vector.extract_strided_slice %28 {offsets = [0, 320], sizes = [64, 64], strides = [1, 1]} : vector<64x384xbf16> to vector<64x64xbf16>
    %c0_30 = arith.constant 0 : index
    %c1_31 = arith.constant 1 : index
    %c0_32 = arith.constant 0 : index
    %c0_33 = arith.constant 0 : index
    %50 = vector.load %arg7[%c0_30, %c1_31, %c0_32, %c0_33] : memref<1x2x64x64xbf16, #tpu.memory_space<vmem>>, vector<1x1x64x64xbf16>
    %51 = vector.shape_cast %50 : vector<1x1x64x64xbf16> to vector<64x64xbf16>
    %52 = vector.shape_cast %49 : vector<64x64xbf16> to vector<1x1x64x64xbf16>
    tpu.vector_store %arg7[%c0_30, %c1_31, %c0_32, %c0_33], %52 {strides = array<i32>} : memref<1x2x64x64xbf16, #tpu.memory_space<vmem>>, vector<1x1x64x64xbf16>,
    return
  }
  func.func @transform_0(%arg0: i32, %arg1: i32) -> (i32, i32, i32) {
    %c0_i32 = arith.constant 0 : i32
    %c0_i32_0 = arith.constant 0 : i32
    return %arg0, %arg1, %c0_i32 : i32, i32, i32
  }
  func.func @transform_1(%arg0: i32, %arg1: i32) -> (i32, i32) {
    %c0_i32 = arith.constant 0 : i32
    %c0_i32_0 = arith.constant 0 : i32
    %c0_i32_1 = arith.constant 0 : i32
    return %c0_i32, %c0_i32_0 : i32, i32
  }
  func.func @transform_2(%arg0: i32, %arg1: i32) -> (i32, i32) {
    %c0_i32 = arith.constant 0 : i32
    %c0_i32_0 = arith.constant 0 : i32
    %c0_i32_1 = arith.constant 0 : i32
    return %c0_i32, %c0_i32_0 : i32, i32
  }
  func.func @transform_3(%arg0: i32, %arg1: i32) -> (i32, i32, i32, i32) {
    %c0_i32 = arith.constant 0 : i32
    %c0_i32_0 = arith.constant 0 : i32
    %c0_i32_1 = arith.constant 0 : i32
    return %arg0, %c0_i32, %arg1, %c0_i32_0 : i32, i32, i32, i32
  }
  func.func @transform_4(%arg0: i32, %arg1: i32) -> (i32, i32, i32, i32) {
    %c0_i32 = arith.constant 0 : i32
    %c0_i32_0 = arith.constant 0 : i32
    %c0_i32_1 = arith.constant 0 : i32
    return %arg0, %c0_i32, %arg1, %c0_i32_0 : i32, i32, i32, i32
  }
  func.func @transform_5(%arg0: i32, %arg1: i32) -> (i32, i32, i32, i32) {
    %c0_i32 = arith.constant 0 : i32
    %c0_i32_0 = arith.constant 0 : i32
    %c0_i32_1 = arith.constant 0 : i32
    return %arg0, %c0_i32, %arg1, %c0_i32_0 : i32, i32, i32, i32
  }
}

module attributes {stable_mosaic.version = 11 : i64} {
  func.func @kernel(%arg0: i32, %arg1: i32, %arg2: memref<1x64x128xf32, #tpu.memory_space<vmem>>, %arg3: memref<1x2x64x64xbf16, #tpu.memory_space<vmem>>, %arg4: memref<1x2x128x64xbf16, #tpu.memory_space<vmem>>, %arg5: memref<1x2x128x64xbf16, #tpu.memory_space<vmem>>, %arg6: memref<1x128xf32, #tpu.memory_space<vmem>>, %arg7: memref<2x64x128xbf16, #tpu.memory_space<vmem>>, %arg8: memref<1x128xf32, #tpu.memory_space<vmem>>, %arg9: memref<128x1024xbf16, #tpu.memory_space<vmem>>, %arg10: memref<1x512xf32, #tpu.memory_space<vmem>>, %arg11: memref<512x128xbf16, #tpu.memory_space<vmem>>, %arg12: memref<1x128xf32, #tpu.memory_space<vmem>>, %arg13: memref<1x64x128xf32, #tpu.memory_space<vmem>>) attributes {dimension_semantics = [#tpu.dimension_semantics<parallel>, #tpu.dimension_semantics<parallel>], iteration_bounds = array<i64: 2, 2>, scalar_prefetch = 0 : i64, scratch_operands = 0 : i64, tpu.core_type = #tpu.core_type<tc>, window_params = [{transform_indices = @transform_0, window_bounds = array<i64: 1, 64, 128>}, {transform_indices = @transform_1, window_bounds = array<i64: 1, 2, 64, 64>}, {transform_indices = @transform_2, window_bounds = array<i64: 1, 2, 128, 64>}, {transform_indices = @transform_3, window_bounds = array<i64: 1, 2, 128, 64>}, {pipeline_mode = #tpu.pipeline_mode<synchronous>, transform_indices = @transform_4, window_bounds = array<i64: 1, 128>}, {pipeline_mode = #tpu.pipeline_mode<synchronous>, transform_indices = @transform_5, window_bounds = array<i64: 2, 64, 128>}, {pipeline_mode = #tpu.pipeline_mode<synchronous>, transform_indices = @transform_6, window_bounds = array<i64: 1, 128>}, {pipeline_mode = #tpu.pipeline_mode<synchronous>, transform_indices = @transform_7, window_bounds = array<i64: 128, 1024>}, {pipeline_mode = #tpu.pipeline_mode<synchronous>, transform_indices = @transform_8, window_bounds = array<i64: 1, 512>}, {pipeline_mode = #tpu.pipeline_mode<synchronous>, transform_indices = @transform_9, window_bounds = array<i64: 512, 128>}, {pipeline_mode = #tpu.pipeline_mode<synchronous>, transform_indices = @transform_10, window_bounds = array<i64: 1, 128>}, {transform_indices = @transform_11, window_bounds = array<i64: 1, 64, 128>}]} {
    %c0 = arith.constant 0 : index
    %c0_0 = arith.constant 0 : index
    %c0_1 = arith.constant 0 : index
    %0 = vector.load %arg2[%c0, %c0_0, %c0_1] : memref<1x64x128xf32, #tpu.memory_space<vmem>>, vector<1x64x128xf32>
    %1 = vector.shape_cast %0 : vector<1x64x128xf32> to vector<64x128xf32>
    %c0_2 = arith.constant 0 : index
    %c0_3 = arith.constant 0 : index
    %c0_4 = arith.constant 0 : index
    %c0_5 = arith.constant 0 : index
    %2 = vector.load %arg3[%c0_2, %c0_3, %c0_4, %c0_5] : memref<1x2x64x64xbf16, #tpu.memory_space<vmem>>, vector<1x2x64x64xbf16>
    %3 = vector.shape_cast %2 : vector<1x2x64x64xbf16> to vector<2x64x64xbf16>
    %c0_6 = arith.constant 0 : index
    %c0_7 = arith.constant 0 : index
    %c0_8 = arith.constant 0 : index
    %c0_9 = arith.constant 0 : index
    %4 = vector.load %arg4[%c0_6, %c0_7, %c0_8, %c0_9] : memref<1x2x128x64xbf16, #tpu.memory_space<vmem>>, vector<1x2x128x64xbf16>
    %5 = vector.shape_cast %4 : vector<1x2x128x64xbf16> to vector<2x128x64xbf16>
    %c0_10 = arith.constant 0 : index
    %c0_11 = arith.constant 0 : index
    %c0_12 = arith.constant 0 : index
    %c0_13 = arith.constant 0 : index
    %6 = vector.load %arg5[%c0_10, %c0_11, %c0_12, %c0_13] : memref<1x2x128x64xbf16, #tpu.memory_space<vmem>>, vector<1x2x128x64xbf16>
    %7 = vector.shape_cast %6 : vector<1x2x128x64xbf16> to vector<2x128x64xbf16>
    "tpu.trace_start"() <{level = 10 : i32, message = "hte,hne->htn"}> : () -> ()
    %cst = arith.constant dense<0.000000e+00> : vector<2x64x128xf32>
    %8 = tpu.matmul %3, %5, %cst {dimension_numbers = #tpu.dot_dimension_numbers<[2], [2], [1], [1], [0, 0, 0, 1, 1, 1], [0], [0]>} : vector<2x64x64xbf16>, vector<2x128x64xbf16>, vector<2x64x128xf32> -> vector<2x64x128xf32>
    "tpu.trace_stop"() : () -> ()
    %cst_14 = arith.constant dense<0xFF800000> : vector<2x64xf32>
    %9 = vector.multi_reduction <maximumf>, %8, %cst_14 [2] : vector<2x64x128xf32> to vector<2x64xf32>
    %10 = vector.shape_cast %9 : vector<2x64xf32> to vector<2x64x1xf32>
    %11 = vector.broadcast %10 : vector<2x64x1xf32> to vector<2x64x128xf32>
    %12 = arith.subf %8, %11 : vector<2x64x128xf32>
    %13 = math.exp %12 : vector<2x64x128xf32>
    %cst_15 = arith.constant dense<0.000000e+00> : vector<2x64xf32>
    %14 = vector.multi_reduction <add>, %13, %cst_15 [2] : vector<2x64x128xf32> to vector<2x64xf32>
    %15 = vector.shape_cast %14 : vector<2x64xf32> to vector<2x64x1xf32>
    %16 = tpu.reciprocal %15 {approx = true} : vector<2x64x1xf32> -> vector<2x64x1xf32>
    %17 = vector.broadcast %16 : vector<2x64x1xf32> to vector<2x64x128xf32>
    %18 = arith.mulf %13, %17 : vector<2x64x128xf32>
    %19 = arith.truncf %18 : vector<2x64x128xf32> to vector<2x64x128xbf16>
    "tpu.trace_start"() <{level = 10 : i32, message = "htn,hne->hte"}> : () -> ()
    %cst_16 = arith.constant dense<0.000000e+00> : vector<2x64x64xf32>
    %20 = tpu.matmul %19, %7, %cst_16 {dimension_numbers = #tpu.dot_dimension_numbers<[2], [1], [1], [2], [0, 0, 0, 1, 1, 2], [0], [0]>} : vector<2x64x128xbf16>, vector<2x128x64xbf16>, vector<2x64x64xf32> -> vector<2x64x64xf32>
    "tpu.trace_stop"() : () -> ()
    %21 = arith.truncf %20 : vector<2x64x64xf32> to vector<2x64x64xbf16>
    %c0_17 = arith.constant 0 : index
    %c0_18 = arith.constant 0 : index
    %c0_19 = arith.constant 0 : index
    %22 = vector.load %arg7[%c0_17, %c0_18, %c0_19] : memref<2x64x128xbf16, #tpu.memory_space<vmem>>, vector<2x64x128xbf16>
    "tpu.trace_start"() <{level = 10 : i32, message = "hte,hed->htd"}> : () -> ()
    %cst_20 = arith.constant dense<0.000000e+00> : vector<2x64x128xf32>
    %23 = tpu.matmul %21, %22, %cst_20 {dimension_numbers = #tpu.dot_dimension_numbers<[2], [1], [1], [2], [0, 0, 0, 1, 1, 2], [0], [0]>} : vector<2x64x64xbf16>, vector<2x64x128xbf16>, vector<2x64x128xf32> -> vector<2x64x128xf32>
    "tpu.trace_stop"() : () -> ()
    %cst_21 = arith.constant dense<0.000000e+00> : vector<64x128xf32>
    %24 = vector.multi_reduction <add>, %23, %cst_21 [0] : vector<2x64x128xf32> to vector<64x128xf32>
    %c0_22 = arith.constant 0 : index
    %c0_23 = arith.constant 0 : index
    %25 = vector.load %arg6[%c0_22, %c0_23] : memref<1x128xf32, #tpu.memory_space<vmem>>, vector<1x128xf32>
    %26 = vector.shape_cast %25 : vector<1x128xf32> to vector<128xf32>
    %cst_24 = arith.constant dense<0.000000e+00> : vector<64xf32>
    %27 = vector.multi_reduction <add>, %24, %cst_24 [1] : vector<64x128xf32> to vector<64xf32>
    %28 = vector.shape_cast %27 : vector<64xf32> to vector<64x1xf32>
    %cst_25 = arith.constant 1.280000e+02 : f32
    %29 = vector.broadcast %cst_25 : f32 to vector<64x1xf32>
    %30 = arith.divf %28, %29 : vector<64x1xf32>
    %31 = vector.broadcast %30 : vector<64x1xf32> to vector<64x128xf32>
    %32 = arith.subf %24, %31 : vector<64x128xf32>
    %33 = arith.mulf %32, %32 : vector<64x128xf32>
    %cst_26 = arith.constant dense<0.000000e+00> : vector<64xf32>
    %34 = vector.multi_reduction <add>, %33, %cst_26 [1] : vector<64x128xf32> to vector<64xf32>
    %35 = vector.shape_cast %34 : vector<64xf32> to vector<64x1xf32>
    %cst_27 = arith.constant 1.280000e+02 : f32
    %36 = vector.broadcast %cst_27 : f32 to vector<64x1xf32>
    %37 = arith.divf %35, %36 : vector<64x1xf32>
    %38 = vector.broadcast %30 : vector<64x1xf32> to vector<64x128xf32>
    %39 = arith.subf %24, %38 : vector<64x128xf32>
    %cst_28 = arith.constant 9.99999974E-6 : f32
    %40 = vector.broadcast %cst_28 : f32 to vector<64x1xf32>
    %41 = arith.addf %37, %40 : vector<64x1xf32>
    %42 = math.rsqrt %41 : vector<64x1xf32>
    %43 = vector.broadcast %42 : vector<64x1xf32> to vector<64x128xf32>
    %44 = arith.mulf %39, %43 : vector<64x128xf32>
    %45 = vector.shape_cast %26 : vector<128xf32> to vector<1x128xf32>
    %46 = vector.broadcast %45 : vector<1x128xf32> to vector<64x128xf32>
    %47 = arith.mulf %44, %46 : vector<64x128xf32>
    %48 = arith.addf %1, %47 : vector<64x128xf32>
    %c0_29 = arith.constant 0 : index
    %c0_30 = arith.constant 0 : index
    %49 = vector.load %arg8[%c0_29, %c0_30] : memref<1x128xf32, #tpu.memory_space<vmem>>, vector<1x128xf32>
    %50 = vector.shape_cast %49 : vector<1x128xf32> to vector<128xf32>
    %cst_31 = arith.constant dense<0.000000e+00> : vector<64xf32>
    %51 = vector.multi_reduction <add>, %48, %cst_31 [1] : vector<64x128xf32> to vector<64xf32>
    %52 = vector.shape_cast %51 : vector<64xf32> to vector<64x1xf32>
    %cst_32 = arith.constant 1.280000e+02 : f32
    %53 = vector.broadcast %cst_32 : f32 to vector<64x1xf32>
    %54 = arith.divf %52, %53 : vector<64x1xf32>
    %55 = vector.broadcast %54 : vector<64x1xf32> to vector<64x128xf32>
    %56 = arith.subf %48, %55 : vector<64x128xf32>
    %57 = arith.mulf %56, %56 : vector<64x128xf32>
    %cst_33 = arith.constant dense<0.000000e+00> : vector<64xf32>
    %58 = vector.multi_reduction <add>, %57, %cst_33 [1] : vector<64x128xf32> to vector<64xf32>
    %59 = vector.shape_cast %58 : vector<64xf32> to vector<64x1xf32>
    %cst_34 = arith.constant 1.280000e+02 : f32
    %60 = vector.broadcast %cst_34 : f32 to vector<64x1xf32>
    %61 = arith.divf %59, %60 : vector<64x1xf32>
    %62 = vector.broadcast %54 : vector<64x1xf32> to vector<64x128xf32>
    %63 = arith.subf %48, %62 : vector<64x128xf32>
    %cst_35 = arith.constant 9.99999974E-6 : f32
    %64 = vector.broadcast %cst_35 : f32 to vector<64x1xf32>
    %65 = arith.addf %61, %64 : vector<64x1xf32>
    %66 = math.rsqrt %65 : vector<64x1xf32>
    %67 = vector.broadcast %66 : vector<64x1xf32> to vector<64x128xf32>
    %68 = arith.mulf %63, %67 : vector<64x128xf32>
    %69 = vector.shape_cast %50 : vector<128xf32> to vector<1x128xf32>
    %70 = vector.broadcast %69 : vector<1x128xf32> to vector<64x128xf32>
    %71 = arith.mulf %68, %70 : vector<64x128xf32>
    %72 = arith.truncf %71 : vector<64x128xf32> to vector<64x128xbf16>
    %c0_36 = arith.constant 0 : index
    %c0_37 = arith.constant 0 : index
    %73 = vector.load %arg9[%c0_36, %c0_37] : memref<128x1024xbf16, #tpu.memory_space<vmem>>, vector<128x1024xbf16>
    %cst_38 = arith.constant dense<0.000000e+00> : vector<64x1024xf32>
    %74 = tpu.matmul %72, %73, %cst_38 {dimension_numbers = #tpu.dot_dimension_numbers<[1], [0], [0], [1], [0, 0, 1, 1], [], []>} : vector<64x128xbf16>, vector<128x1024xbf16>, vector<64x1024xf32> -> vector<64x1024xf32>
    %75 = vector.extract_strided_slice %74 {offsets = [0, 0], sizes = [64, 512], strides = [1, 1]} : vector<64x1024xf32> to vector<64x512xf32>
    %76 = vector.extract_strided_slice %74 {offsets = [0, 512], sizes = [64, 512], strides = [1, 1]} : vector<64x1024xf32> to vector<64x512xf32>
    %77 = arith.negf %76 : vector<64x512xf32>
    %78 = math.exp %77 : vector<64x512xf32>
    %cst_39 = arith.constant 1.000000e+00 : f32
    %79 = vector.broadcast %cst_39 : f32 to vector<64x512xf32>
    %80 = arith.addf %79, %78 : vector<64x512xf32>
    %81 = arith.divf %79, %80 : vector<64x512xf32>
    %82 = arith.mulf %76, %81 : vector<64x512xf32>
    %83 = arith.mulf %75, %82 : vector<64x512xf32>
    %c0_40 = arith.constant 0 : index
    %c0_41 = arith.constant 0 : index
    %84 = vector.load %arg10[%c0_40, %c0_41] : memref<1x512xf32, #tpu.memory_space<vmem>>, vector<1x512xf32>
    %85 = vector.shape_cast %84 : vector<1x512xf32> to vector<512xf32>
    %cst_42 = arith.constant dense<0.000000e+00> : vector<64xf32>
    %86 = vector.multi_reduction <add>, %83, %cst_42 [1] : vector<64x512xf32> to vector<64xf32>
    %87 = vector.shape_cast %86 : vector<64xf32> to vector<64x1xf32>
    %cst_43 = arith.constant 5.120000e+02 : f32
    %88 = vector.broadcast %cst_43 : f32 to vector<64x1xf32>
    %89 = arith.divf %87, %88 : vector<64x1xf32>
    %90 = vector.broadcast %89 : vector<64x1xf32> to vector<64x512xf32>
    %91 = arith.subf %83, %90 : vector<64x512xf32>
    %92 = arith.mulf %91, %91 : vector<64x512xf32>
    %cst_44 = arith.constant dense<0.000000e+00> : vector<64xf32>
    %93 = vector.multi_reduction <add>, %92, %cst_44 [1] : vector<64x512xf32> to vector<64xf32>
    %94 = vector.shape_cast %93 : vector<64xf32> to vector<64x1xf32>
    %cst_45 = arith.constant 5.120000e+02 : f32
    %95 = vector.broadcast %cst_45 : f32 to vector<64x1xf32>
    %96 = arith.divf %94, %95 : vector<64x1xf32>
    %97 = vector.broadcast %89 : vector<64x1xf32> to vector<64x512xf32>
    %98 = arith.subf %83, %97 : vector<64x512xf32>
    %cst_46 = arith.constant 9.99999974E-6 : f32
    %99 = vector.broadcast %cst_46 : f32 to vector<64x1xf32>
    %100 = arith.addf %96, %99 : vector<64x1xf32>
    %101 = math.rsqrt %100 : vector<64x1xf32>
    %102 = vector.broadcast %101 : vector<64x1xf32> to vector<64x512xf32>
    %103 = arith.mulf %98, %102 : vector<64x512xf32>
    %104 = vector.shape_cast %85 : vector<512xf32> to vector<1x512xf32>
    %105 = vector.broadcast %104 : vector<1x512xf32> to vector<64x512xf32>
    %106 = arith.mulf %103, %105 : vector<64x512xf32>
    %107 = arith.truncf %106 : vector<64x512xf32> to vector<64x512xbf16>
    %c0_47 = arith.constant 0 : index
    %c0_48 = arith.constant 0 : index
    %108 = vector.load %arg11[%c0_47, %c0_48] : memref<512x128xbf16, #tpu.memory_space<vmem>>, vector<512x128xbf16>
    %cst_49 = arith.constant dense<0.000000e+00> : vector<64x128xf32>
    %109 = tpu.matmul %107, %108, %cst_49 {dimension_numbers = #tpu.dot_dimension_numbers<[1], [0], [0], [1], [0, 0, 1, 1], [], []>} : vector<64x512xbf16>, vector<512x128xbf16>, vector<64x128xf32> -> vector<64x128xf32>
    %110 = arith.addf %48, %109 : vector<64x128xf32>
    %c0_50 = arith.constant 0 : index
    %c0_51 = arith.constant 0 : index
    %111 = vector.load %arg12[%c0_50, %c0_51] : memref<1x128xf32, #tpu.memory_space<vmem>>, vector<1x128xf32>
    %112 = vector.shape_cast %111 : vector<1x128xf32> to vector<128xf32>
    %cst_52 = arith.constant dense<0.000000e+00> : vector<64xf32>
    %113 = vector.multi_reduction <add>, %110, %cst_52 [1] : vector<64x128xf32> to vector<64xf32>
    %114 = vector.shape_cast %113 : vector<64xf32> to vector<64x1xf32>
    %cst_53 = arith.constant 1.280000e+02 : f32
    %115 = vector.broadcast %cst_53 : f32 to vector<64x1xf32>
    %116 = arith.divf %114, %115 : vector<64x1xf32>
    %117 = vector.broadcast %116 : vector<64x1xf32> to vector<64x128xf32>
    %118 = arith.subf %110, %117 : vector<64x128xf32>
    %119 = arith.mulf %118, %118 : vector<64x128xf32>
    %cst_54 = arith.constant dense<0.000000e+00> : vector<64xf32>
    %120 = vector.multi_reduction <add>, %119, %cst_54 [1] : vector<64x128xf32> to vector<64xf32>
    %121 = vector.shape_cast %120 : vector<64xf32> to vector<64x1xf32>
    %cst_55 = arith.constant 1.280000e+02 : f32
    %122 = vector.broadcast %cst_55 : f32 to vector<64x1xf32>
    %123 = arith.divf %121, %122 : vector<64x1xf32>
    %124 = vector.broadcast %116 : vector<64x1xf32> to vector<64x128xf32>
    %125 = arith.subf %110, %124 : vector<64x128xf32>
    %cst_56 = arith.constant 9.99999974E-6 : f32
    %126 = vector.broadcast %cst_56 : f32 to vector<64x1xf32>
    %127 = arith.addf %123, %126 : vector<64x1xf32>
    %128 = math.rsqrt %127 : vector<64x1xf32>
    %129 = vector.broadcast %128 : vector<64x1xf32> to vector<64x128xf32>
    %130 = arith.mulf %125, %129 : vector<64x128xf32>
    %131 = vector.shape_cast %112 : vector<128xf32> to vector<1x128xf32>
    %132 = vector.broadcast %131 : vector<1x128xf32> to vector<64x128xf32>
    %133 = arith.mulf %130, %132 : vector<64x128xf32>
    %c0_57 = arith.constant 0 : index
    %c0_58 = arith.constant 0 : index
    %c0_59 = arith.constant 0 : index
    %134 = vector.load %arg13[%c0_57, %c0_58, %c0_59] : memref<1x64x128xf32, #tpu.memory_space<vmem>>, vector<1x64x128xf32>
    %135 = vector.shape_cast %134 : vector<1x64x128xf32> to vector<64x128xf32>
    %136 = vector.shape_cast %133 : vector<64x128xf32> to vector<1x64x128xf32>
    tpu.vector_store %arg13[%c0_57, %c0_58, %c0_59], %136 {strides = array<i32>} : memref<1x64x128xf32, #tpu.memory_space<vmem>>, vector<1x64x128xf32>,
    return
  }
  func.func @transform_0(%arg0: i32, %arg1: i32) -> (i32, i32, i32) {
    %c0_i32 = arith.constant 0 : i32
    %c0_i32_0 = arith.constant 0 : i32
    return %arg0, %arg1, %c0_i32 : i32, i32, i32
  }
  func.func @transform_1(%arg0: i32, %arg1: i32) -> (i32, i32, i32, i32) {
    %c0_i32 = arith.constant 0 : i32
    %c0_i32_0 = arith.constant 0 : i32
    %c0_i32_1 = arith.constant 0 : i32
    return %arg0, %c0_i32, %arg1, %c0_i32_0 : i32, i32, i32, i32
  }
  func.func @transform_2(%arg0: i32, %arg1: i32) -> (i32, i32, i32, i32) {
    %c0_i32 = arith.constant 0 : i32
    %c0_i32_0 = arith.constant 0 : i32
    %c0_i32_1 = arith.constant 0 : i32
    %c0_i32_2 = arith.constant 0 : i32
    return %arg0, %c0_i32, %c0_i32_0, %c0_i32_1 : i32, i32, i32, i32
  }
  func.func @transform_3(%arg0: i32, %arg1: i32) -> (i32, i32, i32, i32) {
    %c0_i32 = arith.constant 0 : i32
    %c0_i32_0 = arith.constant 0 : i32
    %c0_i32_1 = arith.constant 0 : i32
    %c0_i32_2 = arith.constant 0 : i32
    return %arg0, %c0_i32, %c0_i32_0, %c0_i32_1 : i32, i32, i32, i32
  }
  func.func @transform_4(%arg0: i32, %arg1: i32) -> (i32, i32) {
    %c0_i32 = arith.constant 0 : i32
    %c0_i32_0 = arith.constant 0 : i32
    %c0_i32_1 = arith.constant 0 : i32
    return %c0_i32, %c0_i32_0 : i32, i32
  }
  func.func @transform_5(%arg0: i32, %arg1: i32) -> (i32, i32, i32) {
    %c0_i32 = arith.constant 0 : i32
    %c0_i32_0 = arith.constant 0 : i32
    %c0_i32_1 = arith.constant 0 : i32
    %c0_i32_2 = arith.constant 0 : i32
    return %c0_i32, %c0_i32_0, %c0_i32_1 : i32, i32, i32
  }
  func.func @transform_6(%arg0: i32, %arg1: i32) -> (i32, i32) {
    %c0_i32 = arith.constant 0 : i32
    %c0_i32_0 = arith.constant 0 : i32
    %c0_i32_1 = arith.constant 0 : i32
    return %c0_i32, %c0_i32_0 : i32, i32
  }
  func.func @transform_7(%arg0: i32, %arg1: i32) -> (i32, i32) {
    %c0_i32 = arith.constant 0 : i32
    %c0_i32_0 = arith.constant 0 : i32
    %c0_i32_1 = arith.constant 0 : i32
    return %c0_i32, %c0_i32_0 : i32, i32
  }
  func.func @transform_8(%arg0: i32, %arg1: i32) -> (i32, i32) {
    %c0_i32 = arith.constant 0 : i32
    %c0_i32_0 = arith.constant 0 : i32
    %c0_i32_1 = arith.constant 0 : i32
    return %c0_i32, %c0_i32_0 : i32, i32
  }
  func.func @transform_9(%arg0: i32, %arg1: i32) -> (i32, i32) {
    %c0_i32 = arith.constant 0 : i32
    %c0_i32_0 = arith.constant 0 : i32
    %c0_i32_1 = arith.constant 0 : i32
    return %c0_i32, %c0_i32_0 : i32, i32
  }
  func.func @transform_10(%arg0: i32, %arg1: i32) -> (i32, i32) {
    %c0_i32 = arith.constant 0 : i32
    %c0_i32_0 = arith.constant 0 : i32
    %c0_i32_1 = arith.constant 0 : i32
    return %c0_i32, %c0_i32_0 : i32, i32
  }
  func.func @transform_11(%arg0: i32, %arg1: i32) -> (i32, i32, i32) {
    %c0_i32 = arith.constant 0 : i32
    %c0_i32_0 = arith.constant 0 : i32
    return %arg0, %arg1, %c0_i32 : i32, i32, i32
  }
}

</mosaic_0001>

<llo_original>
// kernel: _lambda_.4
$region0: #{_lambda_.4}
  #allocation0 [shape = 'u32[]', space=smem, size = 0x4, offset = 0x4, fixed_abs, tag = 'smem constant byte address 0x4 - core index']
  #allocation1 [shape = 'u32[144,128]{1,0:T(1,128)}', space=vmem, size = 0x12000, scoped, tag = 'internal scratch']
  %s0 = inlined_call_operand.vmem [shape: f32[2,128,128], index: 0, kind: input, shape index: {}]
  %s1 = inlined_call_operand.hbm [shape: f32[1,128], index: 1, kind: input, shape index: {}]
  %s2 = inlined_call_operand.vmem [shape: bf16[128,384], index: 2, kind: input, shape index: {}]
  %s3 = inlined_call_operand.vmem [shape: bf16[2,2,128,64], index: 3, kind: output, shape index: {0}]
  %s4 = inlined_call_operand.vmem [shape: bf16[2,2,128,64], index: 4, kind: output, shape index: {1}]
  %s5 = inlined_call_operand.vmem [shape: bf16[2,2,128,64], index: 5, kind: output, shape index: {2}]
  %6 = xla_tuple %s3, %s4, %s5
  %s7 = sld [smem:[#allocation0]]
  $region176: #{_lambda_.4} parent=0
    _
  %s9 = ssub.s32 1, %s7
  %s10 = scalar_select 0, %s9, %s7
  $region1: #{_lambda_.4} parent=0
    #allocation2 [shape = 'u8[512]{0}', space=vmem, size = 0x400, scoped, tag = 'input window, operand 1, single buffered']
    #allocation3 [shape = 's32[2]{0}', space=sflag, size = 0x8, scoped, tag = 'scoped memory for _lambda_.4']
    #allocation4 [shape = 'u8[65536]{0}', space=vmem, size = 0x10000, scoped, tag = 'output window, operand 0']
    #allocation5 [shape = 'u8[65536]{0}', space=vmem, size = 0x10000, scoped, tag = 'output window, operand 1']
    #allocation6 [shape = 'u8[65536]{0}', space=vmem, size = 0x10000, scoped, tag = 'output window, operand 2']
    %11 = vsyncpa [#allocation3], 0
    loop: start=0, step=1, limit=6
    $region2: #{_lambda_.4} parent=1 // loop_pre_header
      _
    $region3: #{_lambda_.4} parent=1 // loop_header
      %s13 = sphi 0, %s17
      %p14 = scmp.ge.s32.totalorder %s13, 6
      %s20 = sphi 0, %s32
      %s21 = sphi 0, %s28
      %s22 = sphi 0, %s20
      %s23 = sphi 0, %s21
      %s24 = sphi 0, %s22
      %s25 = sphi 0, %s23
      %s37 = sphi 0, %s39
      %s40 = sphi 0, %s37
      %s41 = sphi 0, %s40
      %s57 = sphi 0, %s41
      %s61 = sphi 0, %s61
      %s63 = sphi 0, %s61
      %s64 = sphi 0, %s63
      %s78 = sphi 0, %s64
      %s82 = sphi 0, %s82
      %s84 = sphi 0, %s82
      %s85 = sphi 0, %s84
      %s99 = sphi 0, %s85
      %s107 = sphi 0, %s109
      %s110 = sphi 0, %s107
      %s111 = sphi 0, %s110
      %s127 = sphi 0, %s111
      %s135 = sphi 0, %s137
      %s138 = sphi 0, %s135
      %s139 = sphi 0, %s138
      %s155 = sphi 0, %s139
      %s163 = sphi 0, %s165
      %s166 = sphi 0, %s163
      %s167 = sphi 0, %s166
      %s183 = sphi 0, %s167
    $region4: #{_lambda_.4} parent=1 // loop_header_branch
      %16 = sbr.rel (%p14) target = $region8
    $region5: #{_lambda_.4} parent=1 // loop_body
      %s18 = ssub.s32 %s13, 1
      %s19 = ssub.s32 %s13, 2
      %s26 = sadd.s32 1, %s21
      %p27 = scmp.ge.s32.totalorder %s26, 2
      %s28 = scalar_select %p27, 0, %s26
      %s29 = sadd.s32 1, %s20
      %s30 = scalar_select %p27, %s29, %s20
      %p31 = scmp.ge.s32.totalorder %s30, 2
      %s32 = scalar_select %p31, 0, %s30
      %s33 = ssub.s32 %s20, %s32
      %s34 = ssub.s32 %s21, %s28
      %s35 = sor.u32 %s33, %s34
      %p36 = scmp.eq.s32.totalorder %s35, 0
      %s38 = sadd.s32 %s37, 1
      %s39 = scalar_select %p36, %s37, %s38
      %p42 = pneg %p36
      %p43 = scmp.eq.s32.totalorder %s13, 3
      %p44 = por %p42, %p43
      %p45 = scmp.ne.s32.totalorder %s37, %s40
      %p46 = scmp.eq.s32.totalorder %s13, 0
      %p47 = por %p45, %p46
      %p48 = scmp.ne.s32.totalorder %s37, %s40
      %p49 = scmp.eq.s32.totalorder %s18, 3
      %p50 = por %p48, %p49
      %p51 = scmp.ne.s32.totalorder %s40, %s41
      %p52 = scmp.eq.s32.totalorder %s18, 0
      %p53 = por %p51, %p52
      %p54 = scmp.ne.s32.totalorder %s40, %s41
      %p55 = scmp.eq.s32.totalorder %s19, 3
      %p56 = por %p54, %p55
      %p58 = scmp.ne.s32.totalorder %s41, %s57
      %p59 = scmp.eq.s32.totalorder %s19, 0
      %p60 = por %p58, %p59
      %s62 = sadd.s32 %s61, 1
      %p65 = scmp.eq.s32.totalorder %s13, 3
      %p66 = scmp.ne.s32.totalorder %s61, %s63
      %p67 = scmp.eq.s32.totalorder %s13, 0
      %p68 = por %p66, %p67
      %p69 = scmp.ne.s32.totalorder %s61, %s63
      %p70 = scmp.eq.s32.totalorder %s18, 3
      %p71 = por %p69, %p70
      %p72 = scmp.ne.s32.totalorder %s63, %s64
      %p73 = scmp.eq.s32.totalorder %s18, 0
      %p74 = por %p72, %p73
      %p75 = scmp.ne.s32.totalorder %s63, %s64
      %p76 = scmp.eq.s32.totalorder %s19, 3
      %p77 = por %p75, %p76
      %p79 = scmp.ne.s32.totalorder %s64, %s78
      %p80 = scmp.eq.s32.totalorder %s19, 0
      %p81 = por %p79, %p80
      %s83 = sadd.s32 %s82, 1
      %p86 = scmp.eq.s32.totalorder %s13, 3
      %p87 = scmp.ne.s32.totalorder %s82, %s84
      %p88 = scmp.eq.s32.totalorder %s13, 0
      %p89 = por %p87, %p88
      %p90 = scmp.ne.s32.totalorder %s82, %s84
      %p91 = scmp.eq.s32.totalorder %s18, 3
      %p92 = por %p90, %p91
      %p93 = scmp.ne.s32.totalorder %s84, %s85
      %p94 = scmp.eq.s32.totalorder %s18, 0
      %p95 = por %p93, %p94
      %p96 = scmp.ne.s32.totalorder %s84, %s85
      %p97 = scmp.eq.s32.totalorder %s19, 3
      %p98 = por %p96, %p97
      %p100 = scmp.ne.s32.totalorder %s85, %s99
      %p101 = scmp.eq.s32.totalorder %s19, 0
      %p102 = por %p100, %p101
      %s103 = ssub.s32 %s20, %s32
      %s104 = ssub.s32 %s21, %s28
      %s105 = sor.u32 %s103, %s104
      %p106 = scmp.eq.s32.totalorder %s105, 0
      %s108 = sadd.s32 %s107, 1
      %s109 = scalar_select %p106, %s107, %s108
      %p112 = pneg %p106
      %p113 = scmp.eq.s32.totalorder %s13, 3
      %p114 = por %p112, %p113
      %p115 = scmp.ne.s32.totalorder %s107, %s110
      %p116 = scmp.eq.s32.totalorder %s13, 0
      %p117 = por %p115, %p116
      %p118 = scmp.ne.s32.totalorder %s107, %s110
      %p119 = scmp.eq.s32.totalorder %s18, 3
      %p120 = por %p118, %p119
      %p121 = scmp.ne.s32.totalorder %s110, %s111
      %p122 = scmp.eq.s32.totalorder %s18, 0
      %p123 = por %p121, %p122
      %p124 = scmp.ne.s32.totalorder %s110, %s111
      %p125 = scmp.eq.s32.totalorder %s19, 3
      %p126 = por %p124, %p125
      %p128 = scmp.ne.s32.totalorder %s111, %s127
      %p129 = scmp.eq.s32.totalorder %s19, 0
      %p130 = por %p128, %p129
      %s131 = ssub.s32 %s20, %s32
      %s132 = ssub.s32 %s21, %s28
      %s133 = sor.u32 %s131, %s132
      %p134 = scmp.eq.s32.totalorder %s133, 0
      %s136 = sadd.s32 %s135, 1
      %s137 = scalar_select %p134, %s135, %s136
      %p140 = pneg %p134
      %p141 = scmp.eq.s32.totalorder %s13, 3
      %p142 = por %p140, %p141
      %p143 = scmp.ne.s32.totalorder %s135, %s138
      %p144 = scmp.eq.s32.totalorder %s13, 0
      %p145 = por %p143, %p144
      %p146 = scmp.ne.s32.totalorder %s135, %s138
      %p147 = scmp.eq.s32.totalorder %s18, 3
      %p148 = por %p146, %p147
      %p149 = scmp.ne.s32.totalorder %s138, %s139
      %p150 = scmp.eq.s32.totalorder %s18, 0
      %p151 = por %p149, %p150
      %p152 = scmp.ne.s32.totalorder %s138, %s139
      %p153 = scmp.eq.s32.totalorder %s19, 3
      %p154 = por %p152, %p153
      %p156 = scmp.ne.s32.totalorder %s139, %s155
      %p157 = scmp.eq.s32.totalorder %s19, 0
      %p158 = por %p156, %p157
      %s159 = ssub.s32 %s20, %s32
      %s160 = ssub.s32 %s21, %s28
      %s161 = sor.u32 %s159, %s160
      %p162 = scmp.eq.s32.totalorder %s161, 0
      %s164 = sadd.s32 %s163, 1
      %s165 = scalar_select %p162, %s163, %s164
      %p168 = pneg %p162
      %p169 = scmp.eq.s32.totalorder %s13, 3
      %p170 = por %p168, %p169
      %p171 = scmp.ne.s32.totalorder %s163, %s166
      %p172 = scmp.eq.s32.totalorder %s13, 0
      %p173 = por %p171, %p172
      %p174 = scmp.ne.s32.totalorder %s163, %s166
      %p175 = scmp.eq.s32.totalorder %s18, 3
      %p176 = por %p174, %p175
      %p177 = scmp.ne.s32.totalorder %s166, %s167
      %p178 = scmp.eq.s32.totalorder %s18, 0
      %p179 = por %p177, %p178
      %p180 = scmp.ne.s32.totalorder %s166, %s167
      %p181 = scmp.eq.s32.totalorder %s19, 3
      %p182 = por %p180, %p181
      %p184 = scmp.ne.s32.totalorder %s167, %s183
      %p185 = scmp.eq.s32.totalorder %s19, 0
      %p186 = por %p184, %p185
      %p187 = scmp.le.s32.totalorder 1, %s13
      %p188 = scmp.lt.s32.totalorder %s13, 5
      %p189 = pnand %p187, %p188
      %p190 = pneg %p189
      // Predicated region
      $region9: #{_lambda_.4} parent=5 // pred_check
        _
      $region10: #{_lambda_.4} parent=5 // pred_check_branch
        %192 = sbr.rel (%p189) target = $region12
      $region11: #{_lambda_.4} parent=5 // pred_region
        %s193 = ssub.s32 %s13, 1
        // Predicated region
        $region13: #{_lambda_.4} parent=11 // pred_check
          %p194 = pneg %p74
        $region14: #{_lambda_.4} parent=11 // pred_check_branch
          %196 = sbr.rel (%p194) target = $region16
        $region15: #{_lambda_.4} parent=11 // pred_region
          %s198 = ssub.s32 16, 16
          %199 = vsyncadd [#allocation3], %s198
          %s201 = sshll.u32 [#allocation2], 4
          %s202 = int_to_ptr.vmem [resolvable:$true] %s201
          %204 = dma.hbm_to_vmem [thread:$0]  %s1, 16, %s202, [#allocation3]
        $region16: #{_lambda_.4} parent=11 // pred_fallthru
          _
        // Predicated region
        $region17: #{_lambda_.4} parent=11 // pred_check
          %p205 = pneg %p95
        $region18: #{_lambda_.4} parent=11 // pred_check_branch
          %207 = sbr.rel (%p205) target = $region20
        $region19: #{_lambda_.4} parent=11 // pred_region
          _
        $region20: #{_lambda_.4} parent=11 // pred_fallthru
          _
      $region12: #{_lambda_.4} parent=5 // pred_fallthru
        _
      %p208 = scmp.lt.s32.totalorder %s13, 4
      // Predicated region
      $region21: #{_lambda_.4} parent=5 // pred_check
        %p209 = pneg %p208
      $region22: #{_lambda_.4} parent=5 // pred_check_branch
        %211 = sbr.rel (%p209) target = $region24
      $region23: #{_lambda_.4} parent=5 // pred_region
        // Predicated region
        $region25: #{_lambda_.4} parent=23 // pred_check
          %p212 = pneg %p47
        $region26: #{_lambda_.4} parent=23 // pred_check_branch
          %214 = sbr.rel (%p212) target = $region28
        $region27: #{_lambda_.4} parent=23 // pred_region
          %s215 = smul.u32 8, %s21
          %p216 = scmp.lt.s32.totalorder %s20, 1
          %s217 = scalar_select %p216, %s20, 1
          %p218 = scmp.lt.s32.totalorder %s215, 15
          %s219 = scalar_select %p218, %s215, 15
          %s220 = smul.addr %s217, 16
          %s221 = sadd.s32 %s219, %s220
          %s222 = smul.addr %s221, 8
          %s223 = scalar_lea.vmem %s0, %s222
          %s224 = smul.u32 8, %s21
        $region28: #{_lambda_.4} parent=23 // pred_fallthru
          _
      $region24: #{_lambda_.4} parent=5 // pred_fallthru
        _
      %p225 = scmp.le.s32.totalorder 1, %s13
      %p226 = scmp.lt.s32.totalorder %s13, 5
      %p227 = pnand %p225, %p226
      %p228 = pneg %p227
      // Predicated region
      $region29: #{_lambda_.4} parent=5 // pred_check
        _
      $region30: #{_lambda_.4} parent=5 // pred_check_branch
        %230 = sbr.rel (%p227) target = $region32
      $region31: #{_lambda_.4} parent=5 // pred_region
        %s231 = ssub.s32 %s13, 1
        // Predicated region
        $region33: #{_lambda_.4} parent=31 // pred_check
          %p232 = pneg %p74
        $region34: #{_lambda_.4} parent=31 // pred_check_branch
          %234 = sbr.rel (%p232) target = $region36
        $region35: #{_lambda_.4} parent=31 // pred_region
          %235 = dma.done [#allocation3], 16
        $region36: #{_lambda_.4} parent=31 // pred_fallthru
          _
        %s236 = smul.u32 8, %s23
        %p237 = scmp.lt.s32.totalorder %s22, 1
        %s238 = scalar_select %p237, %s22, 1
        %p239 = scmp.lt.s32.totalorder %s236, 15
        %s240 = scalar_select %p239, %s236, 15
        %s241 = smul.addr %s238, 16
        %s242 = sadd.s32 %s240, %s241
        %s243 = smul.addr %s242, 8
        %s244 = scalar_lea.vmem %s0, %s243
        %p245 = pneg %p53
        %p246 = pneg %p50
        %p247 = pneg %p74
        %p248 = pneg %p71
        %p249 = pneg %p95
        %p250 = pneg %p92
        %p251 = pneg %p123
        %p252 = pneg %p120
        %s253 = sand.u32 %s110, 1
        %s254 = sand.u32 %s110, 1
        %s255 = smul.addr %s254, 64
        %s256 = scalar_lea.vmem [#allocation4], %s255
        %p257 = pneg %p151
        %p258 = pneg %p148
        %s259 = sand.u32 %s138, 1
        %s260 = sand.u32 %s138, 1
        %s261 = smul.addr %s260, 64
        %s262 = scalar_lea.vmem [#allocation5], %s261
        %p263 = pneg %p179
        %p264 = pneg %p176
        %s265 = sand.u32 %s166, 1
        %s266 = sand.u32 %s166, 1
        %s267 = smul.addr %s266, 64
        %s268 = scalar_lea.vmem [#allocation6], %s267
        %s269 = smul.u32 8, %s23
        %p270 = scmp.lt.s32.totalorder %s22, 1
        %s271 = scalar_select %p270, %s22, 1
        %p272 = scmp.lt.s32.totalorder %s269, 15
        %s273 = scalar_select %p272, %s269, 15
        %s274 = smul.addr %s271, 16
        %s275 = sadd.s32 %s273, %s274
        %s276 = smul.addr %s275, 8
        %s277 = scalar_lea.vmem %s0, %s276
        %s278 = smul.u32 8, %s23
        %s279 = smul.u32 8, %s23
        %s280 = smul.u32 8, %s23
        %s281 = smul.u32 8, %s23
        %v283 = vld [vmem:[%s277] sm:$0xff]
        %v284 = vld [vmem:[%s277 + $0x8] sm:$0xff]
        %v285 = vld [vmem:[%s277 + $0x10] sm:$0xff]
        %v286 = vld [vmem:[%s277 + $0x18] sm:$0xff]
        %v287 = vld [vmem:[%s277 + $0x20] sm:$0xff]
        %v288 = vld [vmem:[%s277 + $0x28] sm:$0xff]
        %v289 = vld [vmem:[%s277 + $0x30] sm:$0xff]
        %v290 = vld [vmem:[%s277 + $0x38] sm:$0xff]
        %v291 = vld [vmem:[#allocation2] sm:$0x1]
        %292 = vadd.xlane.f32.xlu0 %v283
        %v293 = vpop.xlane.xlu0 %292
        %294 = vadd.xlane.f32.xlu0 %v284
        %v295 = vpop.xlane.xlu0 %294
        %296 = vadd.xlane.f32.xlu0 %v285
        %v297 = vpop.xlane.xlu0 %296
        %298 = vadd.xlane.f32.xlu0 %v286
        %v299 = vpop.xlane.xlu0 %298
        %300 = vadd.xlane.f32.xlu0 %v287
        %v301 = vpop.xlane.xlu0 %300
        %302 = vadd.xlane.f32.xlu0 %v288
        %v303 = vpop.xlane.xlu0 %302
        %304 = vadd.xlane.f32.xlu0 %v289
        %v305 = vpop.xlane.xlu0 %304
        %306 = vadd.xlane.f32.xlu0 %v290
        %v307 = vpop.xlane.xlu0 %306
        %v308 = vrcp.pop 128.0
        %v309 = vmul.f32 %v293, %v308
        %v310 = vmul.f32 %v295, %v308
        %v311 = vmul.f32 %v297, %v308
        %v312 = vmul.f32 %v299, %v308
        %v313 = vmul.f32 %v301, %v308
        %v314 = vmul.f32 %v303, %v308
        %v315 = vmul.f32 %v305, %v308
        %v316 = vmul.f32 %v307, %v308
        %v317 = vsub.f32 %v283, %v309
        %v318 = vsub.f32 %v284, %v310
        %v319 = vsub.f32 %v285, %v311
        %v320 = vsub.f32 %v286, %v312
        %v321 = vsub.f32 %v287, %v313
        %v322 = vsub.f32 %v288, %v314
        %v323 = vsub.f32 %v289, %v315
        %v324 = vsub.f32 %v290, %v316
        %v325 = vmul.f32 %v317, %v317
        %v326 = vmul.f32 %v318, %v318
        %v327 = vmul.f32 %v319, %v319
        %v328 = vmul.f32 %v320, %v320
        %v329 = vmul.f32 %v321, %v321
        %v330 = vmul.f32 %v322, %v322
        %v331 = vmul.f32 %v323, %v323
        %v332 = vmul.f32 %v324, %v324
        %333 = vadd.xlane.f32.xlu0 %v325
        %v334 = vpop.xlane.xlu0 %333
        %335 = vadd.xlane.f32.xlu0 %v326
        %v336 = vpop.xlane.xlu0 %335
        %337 = vadd.xlane.f32.xlu0 %v327
        %v338 = vpop.xlane.xlu0 %337
        %339 = vadd.xlane.f32.xlu0 %v328
        %v340 = vpop.xlane.xlu0 %339
        %341 = vadd.xlane.f32.xlu0 %v329
        %v342 = vpop.xlane.xlu0 %341
        %343 = vadd.xlane.f32.xlu0 %v330
        %v344 = vpop.xlane.xlu0 %343
        %345 = vadd.xlane.f32.xlu0 %v331
        %v346 = vpop.xlane.xlu0 %345
        %347 = vadd.xlane.f32.xlu0 %v332
        %v348 = vpop.xlane.xlu0 %347
        %v349 = vmul.f32 %v334, %v308
        %v350 = vmul.f32 %v336, %v308
        %v351 = vmul.f32 %v338, %v308
        %v352 = vmul.f32 %v340, %v308
        %v353 = vmul.f32 %v342, %v308
        %v354 = vmul.f32 %v344, %v308
        %v355 = vmul.f32 %v346, %v308
        %v356 = vmul.f32 %v348, %v308
        %v357 = vadd.f32 %v349, 1e-05
        %v358 = vadd.f32 %v350, 1e-05
        %v359 = vadd.f32 %v351, 1e-05
        %v360 = vadd.f32 %v352, 1e-05
        %v361 = vadd.f32 %v353, 1e-05
        %v362 = vadd.f32 %v354, 1e-05
        %v363 = vadd.f32 %v355, 1e-05
        %v364 = vadd.f32 %v356, 1e-05
        %v365 = vrsqrt.pop %v357
        %v366 = vrsqrt.pop %v358
        %v367 = vrsqrt.pop %v359
        %v368 = vrsqrt.pop %v360
        %v369 = vrsqrt.pop %v361
        %v370 = vrsqrt.pop %v362
        %v371 = vrsqrt.pop %v363
        %v372 = vrsqrt.pop %v364
        %v373 = vmul.f32 %v317, %v365
        %v374 = vmul.f32 %v318, %v366
        %v375 = vmul.f32 %v319, %v367
        %v376 = vmul.f32 %v320, %v368
        %v377 = vmul.f32 %v321, %v369
        %v378 = vmul.f32 %v322, %v370
        %v379 = vmul.f32 %v323, %v371
        %v380 = vmul.f32 %v324, %v372
        %v382 = vlaneseq
        %v383 = vshrl.u32 %v382, 7
        %v384 = vsub.s32 0, %v383
        %v385 = vrot.slane %v291, %v384
        %v387 = vmul.f32 %v373, %v385
        %v388 = vmul.f32 %v374, %v385
        %v389 = vmul.f32 %v375, %v385
        %v390 = vmul.f32 %v376, %v385
        %v391 = vmul.f32 %v377, %v385
        %v392 = vmul.f32 %v378, %v385
        %v393 = vmul.f32 %v379, %v385
        %v394 = vmul.f32 %v380, %v385
        %v395 = vpack.c.bf16 %v388, %v387
        %v396 = vpack.c.bf16 %v390, %v389
        %v397 = vpack.c.bf16 %v392, %v391
        %v398 = vpack.c.bf16 %v394, %v393
        %v399 = vld [vmem:[%s2] sm:$0xff]
        %v400 = vld [vmem:[%s2 + $0x8] sm:$0xf]
        %v401 = vld [vmem:[%s2 + $0xc] sm:$0xff]
        %v402 = vld [vmem:[%s2 + $0x14] sm:$0xf]
        %v403 = vld [vmem:[%s2 + $0x18] sm:$0xff]
        %v404 = vld [vmem:[%s2 + $0x20] sm:$0xf]
        %v405 = vld [vmem:[%s2 + $0x24] sm:$0xff]
        %v406 = vld [vmem:[%s2 + $0x2c] sm:$0xf]
        %v407 = vld [vmem:[%s2 + $0x30] sm:$0xff]
        %v408 = vld [vmem:[%s2 + $0x38] sm:$0xf]
        %v409 = vld [vmem:[%s2 + $0x3c] sm:$0xff]
        %v410 = vld [vmem:[%s2 + $0x44] sm:$0xf]
        %v411 = vld [vmem:[%s2 + $0x48] sm:$0xff]
        %v412 = vld [vmem:[%s2 + $0x50] sm:$0xf]
        %v413 = vld [vmem:[%s2 + $0x54] sm:$0xff]
        %v414 = vld [vmem:[%s2 + $0x5c] sm:$0xf]
        %v415 = vld [vmem:[%s2 + $0x60] sm:$0xff]
        %v416 = vld [vmem:[%s2 + $0x68] sm:$0xf]
        %v417 = vld [vmem:[%s2 + $0x6c] sm:$0xff]
        %v418 = vld [vmem:[%s2 + $0x74] sm:$0xf]
        %v419 = vld [vmem:[%s2 + $0x78] sm:$0xff]
        %v420 = vld [vmem:[%s2 + $0x80] sm:$0xf]
        %v421 = vld [vmem:[%s2 + $0x84] sm:$0xff]
        %v422 = vld [vmem:[%s2 + $0x8c] sm:$0xf]
        %v423 = vld [vmem:[%s2 + $0x90] sm:$0xff]
        %v424 = vld [vmem:[%s2 + $0x98] sm:$0xf]
        %v425 = vld [vmem:[%s2 + $0x9c] sm:$0xff]
        %v426 = vld [vmem:[%s2 + $0xa4] sm:$0xf]
        %v427 = vld [vmem:[%s2 + $0xa8] sm:$0xff]
        %v428 = vld [vmem:[%s2 + $0xb0] sm:$0xf]
        %v429 = vld [vmem:[%s2 + $0xb4] sm:$0xff]
        %v430 = vld [vmem:[%s2 + $0xbc] sm:$0xf]
        %v463 = vunpack.c.l.b16 %v399
        %v464 = vunpack.c.h.b16 %v399
        %v465 = vunpack.c.l.b16 %v400
        %v466 = vunpack.c.l.b16 %v401
        %v467 = vunpack.c.h.b16 %v401
        %v468 = vunpack.c.l.b16 %v402
        %v469 = vunpack.c.l.b16 %v403
        %v470 = vunpack.c.h.b16 %v403
        %v471 = vunpack.c.l.b16 %v404
        %v472 = vunpack.c.l.b16 %v405
        %v473 = vunpack.c.h.b16 %v405
        %v474 = vunpack.c.l.b16 %v406
        %v475 = vunpack.c.l.b16 %v407
        %v476 = vunpack.c.h.b16 %v407
        %v477 = vunpack.c.l.b16 %v408
        %v478 = vunpack.c.l.b16 %v409
        %v479 = vunpack.c.h.b16 %v409
        %v480 = vunpack.c.l.b16 %v410
        %v481 = vunpack.c.l.b16 %v411
        %v482 = vunpack.c.h.b16 %v411
        %v483 = vunpack.c.l.b16 %v412
        %v484 = vunpack.c.l.b16 %v413
        %v485 = vunpack.c.h.b16 %v413
        %v486 = vunpack.c.l.b16 %v414
        %v487 = vunpack.c.l.b16 %v415
        %v488 = vunpack.c.h.b16 %v415
        %v489 = vunpack.c.l.b16 %v416
        %v490 = vunpack.c.l.b16 %v417
        %v491 = vunpack.c.h.b16 %v417
        %v492 = vunpack.c.l.b16 %v418
        %v493 = vunpack.c.l.b16 %v419
        %v494 = vunpack.c.h.b16 %v419
        %v495 = vunpack.c.l.b16 %v420
        %v496 = vunpack.c.l.b16 %v421
        %v497 = vunpack.c.h.b16 %v421
        %v498 = vunpack.c.l.b16 %v422
        %v499 = vunpack.c.l.b16 %v423
        %v500 = vunpack.c.h.b16 %v423
        %v501 = vunpack.c.l.b16 %v424
        %v502 = vunpack.c.l.b16 %v425
        %v503 = vunpack.c.h.b16 %v425
        %v504 = vunpack.c.l.b16 %v426
        %v505 = vunpack.c.l.b16 %v427
        %v506 = vunpack.c.h.b16 %v427
        %v507 = vunpack.c.l.b16 %v428
        %v508 = vunpack.c.l.b16 %v429
        %v509 = vunpack.c.h.b16 %v429
        %v510 = vunpack.c.l.b16 %v430
        %v511 = vpack.c.b16 %v466, %v463
        %v512 = vpack.c.b16 %v467, %v464
        %v513 = vpack.c.b16 %v468, %v465
        %v514 = vpack.c.b16 %v472, %v469
        %v515 = vpack.c.b16 %v473, %v470
        %v516 = vpack.c.b16 %v474, %v471
        %v517 = vpack.c.b16 %v478, %v475
        %v518 = vpack.c.b16 %v479, %v476
        %v519 = vpack.c.b16 %v480, %v477
        %v520 = vpack.c.b16 %v484, %v481
        %v521 = vpack.c.b16 %v485, %v482
        %v522 = vpack.c.b16 %v486, %v483
        %v523 = vpack.c.b16 %v490, %v487
        %v524 = vpack.c.b16 %v491, %v488
        %v525 = vpack.c.b16 %v492, %v489
        %v526 = vpack.c.b16 %v496, %v493
        %v527 = vpack.c.b16 %v497, %v494
        %v528 = vpack.c.b16 %v498, %v495
        %v529 = vpack.c.b16 %v502, %v499
        %v530 = vpack.c.b16 %v503, %v500
        %v531 = vpack.c.b16 %v504, %v501
        %v532 = vpack.c.b16 %v508, %v505
        %v533 = vpack.c.b16 %v509, %v506
        %v534 = vpack.c.b16 %v510, %v507
        %559 = vmatprep.subr.bf16.mxu0 %v512
        %560 = vmatpush1.bf16.msra.mxu0 %v511
        %561 = vmatprep.subr.bf16.mxu0 %v515
        %562 = vmatpush1.bf16.msra.mxu0 %v514
        %563 = vmatprep.subr.bf16.mxu0 %v518
        %564 = vmatpush1.bf16.msra.mxu0 %v517
        %565 = vmatprep.subr.bf16.mxu0 %v521
        %566 = vmatpush1.bf16.msra.mxu0 %v520
        %567 = vmatprep.subr.bf16.mxu0 %v524
        %568 = vmatpush1.bf16.msra.mxu0 %v523
        %569 = vmatprep.subr.bf16.mxu0 %v527
        %570 = vmatpush1.bf16.msra.mxu0 %v526
        %571 = vmatprep.subr.bf16.mxu0 %v530
        %572 = vmatpush1.bf16.msra.mxu0 %v529
        %573 = vmatprep.subr.bf16.mxu0 %v533
        %574 = vmatpush1.bf16.msra.mxu0 %v532
        %575 = vmatprep.subr.bf16.mxu0 0
        %576 = vmatpush1.bf16.msra.mxu0 0
        %577 = vmatprep.subr.bf16.mxu0 0
        %578 = vmatpush1.bf16.msra.mxu0 0
        %579 = vmatprep.subr.bf16.mxu0 0
        %580 = vmatpush1.bf16.msra.mxu0 0
        %581 = vmatprep.subr.bf16.mxu0 0
        %582 = vmatpush1.bf16.msra.mxu0 0
        %583 = vmatprep.subr.bf16.mxu0 0
        %584 = vmatpush1.bf16.msra.mxu0 0
        %585 = vmatprep.subr.bf16.mxu0 0
        %586 = vmatpush1.bf16.msra.mxu0 0
        %587 = vmatprep.subr.bf16.mxu0 0
        %588 = vmatpush1.bf16.msra.mxu0 0
        %589 = vmatprep.subr.bf16.mxu0 0
        %590 = vmatpush1.bf16.msra.mxu0 0
        %591 = vmatprep.mubr.bf16.mxu0 0
        %592 = vmatmul.mubr.bf16.gmra.mrb[0].mxu0 %v395
        %v593 = vpop.f32.mrb[0].mxu0
        %v594 = vadd.f32 0.0, %v593
        %v595 = vpop.f32.mrb[0].mxu0
        %v596 = vadd.f32 0.0, %v595
        %v597 = vpop.f32.mrb[0].mxu0
        %v598 = vadd.f32 0.0, %v597
        %v599 = vpop.f32.mrb[0].mxu0
        %v600 = vadd.f32 0.0, %v599
        %601 = vmatprep.mubr.bf16.mxu0 0
        %602 = vmatmul.mubr.bf16.gmra.mrb[0].mxu0 %v396
        %v603 = vpop.f32.mrb[0].mxu0
        %v604 = vadd.f32 0.0, %v603
        %v605 = vpop.f32.mrb[0].mxu0
        %v606 = vadd.f32 0.0, %v605
        %v607 = vpop.f32.mrb[0].mxu0
        %v608 = vadd.f32 0.0, %v607
        %v609 = vpop.f32.mrb[0].mxu0
        %v610 = vadd.f32 0.0, %v609
        %611 = vmatprep.mubr.bf16.mxu0 0
        %612 = vmatmul.mubr.bf16.gmra.mrb[0].mxu0 %v397
        %v613 = vpop.f32.mrb[0].mxu0
        %v614 = vadd.f32 0.0, %v613
        %v615 = vpop.f32.mrb[0].mxu0
        %v616 = vadd.f32 0.0, %v615
        %v617 = vpop.f32.mrb[0].mxu0
        %v618 = vadd.f32 0.0, %v617
        %v619 = vpop.f32.mrb[0].mxu0
        %v620 = vadd.f32 0.0, %v619
        %621 = vmatprep.mubr.bf16.mxu0 0
        %622 = vmatmul.mubr.bf16.gmra.mrb[0].mxu0 %v398
        %v623 = vpop.f32.mrb[0].mxu0
        %v624 = vadd.f32 0.0, %v623
        %v625 = vpop.f32.mrb[0].mxu0
        %v626 = vadd.f32 0.0, %v625
        %v627 = vpop.f32.mrb[0].mxu0
        %v628 = vadd.f32 0.0, %v627
        %v629 = vpop.f32.mrb[0].mxu0
        %v630 = vadd.f32 0.0, %v629
        %631 = vdwg.mxu0
        %632 = vmatprep.subr.bf16.mxu0 0
        %633 = vmatpush1.bf16.msra.mxu0 %v513
        %634 = vmatprep.subr.bf16.mxu0 0
        %635 = vmatpush1.bf16.msra.mxu0 %v516
        %636 = vmatprep.subr.bf16.mxu0 0
        %637 = vmatpush1.bf16.msra.mxu0 %v519
        %638 = vmatprep.subr.bf16.mxu0 0
        %639 = vmatpush1.bf16.msra.mxu0 %v522
        %640 = vmatprep.subr.bf16.mxu0 0
        %641 = vmatpush1.bf16.msra.mxu0 %v525
        %642 = vmatprep.subr.bf16.mxu0 0
        %643 = vmatpush1.bf16.msra.mxu0 %v528
        %644 = vmatprep.subr.bf16.mxu0 0
        %645 = vmatpush1.bf16.msra.mxu0 %v531
        %646 = vmatprep.subr.bf16.mxu0 0
        %647 = vmatpush1.bf16.msra.mxu0 %v534
        %648 = vmatprep.subr.bf16.mxu0 0
        %649 = vmatpush1.bf16.msra.mxu0 0
        %650 = vmatprep.subr.bf16.mxu0 0
        %651 = vmatpush1.bf16.msra.mxu0 0
        %652 = vmatprep.subr.bf16.mxu0 0
        %653 = vmatpush1.bf16.msra.mxu0 0
        %654 = vmatprep.subr.bf16.mxu0 0
        %655 = vmatpush1.bf16.msra.mxu0 0
        %656 = vmatprep.subr.bf16.mxu0 0
        %657 = vmatpush1.bf16.msra.mxu0 0
        %658 = vmatprep.subr.bf16.mxu0 0
        %659 = vmatpush1.bf16.msra.mxu0 0
        %660 = vmatprep.subr.bf16.mxu0 0
        %661 = vmatpush1.bf16.msra.mxu0 0
        %662 = vmatprep.subr.bf16.mxu0 0
        %663 = vmatpush1.bf16.msra.mxu0 0
        %664 = vmatprep.mubr.bf16.mxu0 0
        %665 = vmatmul.mubr.bf16.gmra.mrb[0].mxu0 %v395
        %v666 = vpop.f32.mrb[0].mxu0
        %v667 = vadd.f32 0.0, %v666
        %v668 = vpop.f32.mrb[0].mxu0
        %v669 = vpop.f32.mrb[0].mxu0
        %v670 = vadd.f32 0.0, %v669
        %v671 = vpop.f32.mrb[0].mxu0
        %672 = vmatprep.mubr.bf16.mxu0 0
        %673 = vmatmul.mubr.bf16.gmra.mrb[0].mxu0 %v396
        %v674 = vpop.f32.mrb[0].mxu0
        %v675 = vadd.f32 0.0, %v674
        %v676 = vpop.f32.mrb[0].mxu0
        %v677 = vpop.f32.mrb[0].mxu0
        %v678 = vadd.f32 0.0, %v677
        %v679 = vpop.f32.mrb[0].mxu0
        %680 = vmatprep.mubr.bf16.mxu0 0
        %681 = vmatmul.mubr.bf16.gmra.mrb[0].mxu0 %v397
        %v682 = vpop.f32.mrb[0].mxu0
        %v683 = vadd.f32 0.0, %v682
        %v684 = vpop.f32.mrb[0].mxu0
        %v685 = vpop.f32.mrb[0].mxu0
        %v686 = vadd.f32 0.0, %v685
        %v687 = vpop.f32.mrb[0].mxu0
        %688 = vmatprep.mubr.bf16.mxu0 0
        %689 = vmatmul.mubr.bf16.gmra.mrb[0].mxu0 %v398
        %v690 = vpop.f32.mrb[0].mxu0
        %v691 = vadd.f32 0.0, %v690
        %v692 = vpop.f32.mrb[0].mxu0
        %v693 = vpop.f32.mrb[0].mxu0
        %v694 = vadd.f32 0.0, %v693
        %v695 = vpop.f32.mrb[0].mxu0
        %696 = vdwg.mxu0
        %v697 = vpack.c.bf16 %v598, %v594
        %v698 = vpack.c.bf16 %v600, %v596
        %v699 = vpack.c.bf16 %v670, %v667
        %v700 = vpack.c.bf16 %v608, %v604
        %v701 = vpack.c.bf16 %v610, %v606
        %v702 = vpack.c.bf16 %v678, %v675
        %v703 = vpack.c.bf16 %v618, %v614
        %v704 = vpack.c.bf16 %v620, %v616
        %v705 = vpack.c.bf16 %v686, %v683
        %v706 = vpack.c.bf16 %v628, %v624
        %v707 = vpack.c.bf16 %v630, %v626
        %v708 = vpack.c.bf16 %v694, %v691
        %v713 = vunpack.c.l.b16 %v697
        %v714 = vunpack.c.h.b16 %v697
        %v715 = vunpack.c.l.b16 %v700
        %v716 = vunpack.c.h.b16 %v700
        %v717 = vunpack.c.l.b16 %v703
        %v718 = vunpack.c.h.b16 %v703
        %v719 = vunpack.c.l.b16 %v706
        %v720 = vunpack.c.h.b16 %v706
        %v721 = vpack.c.b16 %v713, %v713
        %v722 = vpack.c.b16 %v714, %v714
        %v723 = vpack.c.b16 %v715, %v715
        %v724 = vpack.c.b16 %v716, %v716
        %v725 = vpack.c.b16 %v717, %v717
        %v726 = vpack.c.b16 %v718, %v718
        %v727 = vpack.c.b16 %v719, %v719
        %v728 = vpack.c.b16 %v720, %v720
        %vm737 = vcmask 519168
        %738 = vst.msk [vmem:[%s256] sm:$0xf] %vm737, %v721
        %739 = vst.msk [vmem:[%s256 + $0x4] sm:$0xf] %vm737, %v722
        %740 = vst.msk [vmem:[%s256 + $0x8] sm:$0xf] %vm737, %v723
        %741 = vst.msk [vmem:[%s256 + $0xc] sm:$0xf] %vm737, %v724
        %742 = vst.msk [vmem:[%s256 + $0x10] sm:$0xf] %vm737, %v725
        %743 = vst.msk [vmem:[%s256 + $0x14] sm:$0xf] %vm737, %v726
        %744 = vst.msk [vmem:[%s256 + $0x18] sm:$0xf] %vm737, %v727
        %745 = vst.msk [vmem:[%s256 + $0x1c] sm:$0xf] %vm737, %v728
        %v750 = vunpack.c.l.b16 %v698
        %v751 = vunpack.c.h.b16 %v698
        %v752 = vunpack.c.l.b16 %v701
        %v753 = vunpack.c.h.b16 %v701
        %v754 = vunpack.c.l.b16 %v704
        %v755 = vunpack.c.h.b16 %v704
        %v756 = vunpack.c.l.b16 %v707
        %v757 = vunpack.c.h.b16 %v707
        %v758 = vpack.c.b16 %v750, %v750
        %v759 = vpack.c.b16 %v751, %v751
        %v760 = vpack.c.b16 %v752, %v752
        %v761 = vpack.c.b16 %v753, %v753
        %v762 = vpack.c.b16 %v754, %v754
        %v763 = vpack.c.b16 %v755, %v755
        %v764 = vpack.c.b16 %v756, %v756
        %v765 = vpack.c.b16 %v757, %v757
        %774 = vst.msk [vmem:[%s262] sm:$0xf] %vm737, %v758
        %775 = vst.msk [vmem:[%s262 + $0x4] sm:$0xf] %vm737, %v759
        %776 = vst.msk [vmem:[%s262 + $0x8] sm:$0xf] %vm737, %v760
        %777 = vst.msk [vmem:[%s262 + $0xc] sm:$0xf] %vm737, %v761
        %778 = vst.msk [vmem:[%s262 + $0x10] sm:$0xf] %vm737, %v762
        %779 = vst.msk [vmem:[%s262 + $0x14] sm:$0xf] %vm737, %v763
        %780 = vst.msk [vmem:[%s262 + $0x18] sm:$0xf] %vm737, %v764
        %781 = vst.msk [vmem:[%s262 + $0x1c] sm:$0xf] %vm737, %v765
        %v786 = vunpack.c.l.b16 %v699
        %v787 = vunpack.c.h.b16 %v699
        %v788 = vunpack.c.l.b16 %v702
        %v789 = vunpack.c.h.b16 %v702
        %v790 = vunpack.c.l.b16 %v705
        %v791 = vunpack.c.h.b16 %v705
        %v792 = vunpack.c.l.b16 %v708
        %v793 = vunpack.c.h.b16 %v708
        %v794 = vpack.c.b16 %v786, %v786
        %v795 = vpack.c.b16 %v787, %v787
        %v796 = vpack.c.b16 %v788, %v788
        %v797 = vpack.c.b16 %v789, %v789
        %v798 = vpack.c.b16 %v790, %v790
        %v799 = vpack.c.b16 %v791, %v791
        %v800 = vpack.c.b16 %v792, %v792
        %v801 = vpack.c.b16 %v793, %v793
        %810 = vst.msk [vmem:[%s268] sm:$0xf] %vm737, %v794
        %811 = vst.msk [vmem:[%s268 + $0x4] sm:$0xf] %vm737, %v795
        %812 = vst.msk [vmem:[%s268 + $0x8] sm:$0xf] %vm737, %v796
        %813 = vst.msk [vmem:[%s268 + $0xc] sm:$0xf] %vm737, %v797
        %814 = vst.msk [vmem:[%s268 + $0x10] sm:$0xf] %vm737, %v798
        %815 = vst.msk [vmem:[%s268 + $0x14] sm:$0xf] %vm737, %v799
        %816 = vst.msk [vmem:[%s268 + $0x18] sm:$0xf] %vm737, %v800
        %817 = vst.msk [vmem:[%s268 + $0x1c] sm:$0xf] %vm737, %v801
        %818 = vrot.lane.b32.xlu0 %v721, 64
        %v819 = vpop.permute.xlu0 %818
        %820 = vrot.lane.b32.xlu0 %v722, 64
        %v821 = vpop.permute.xlu0 %820
        %822 = vrot.lane.b32.xlu0 %v723, 64
        %v823 = vpop.permute.xlu0 %822
        %824 = vrot.lane.b32.xlu0 %v724, 64
        %v825 = vpop.permute.xlu0 %824
        %826 = vrot.lane.b32.xlu0 %v725, 64
        %v827 = vpop.permute.xlu0 %826
        %828 = vrot.lane.b32.xlu0 %v726, 64
        %v829 = vpop.permute.xlu0 %828
        %830 = vrot.lane.b32.xlu0 %v727, 64
        %v831 = vpop.permute.xlu0 %830
        %832 = vrot.lane.b32.xlu0 %v728, 64
        %v833 = vpop.permute.xlu0 %832
        %s842 = scalar_lea.vmem %s256, 32 [#allocation4]
        %843 = vst.msk [vmem:[%s842] sm:$0xf] %vm737, %v819
        %844 = vst.msk [vmem:[%s842 + $0x4] sm:$0xf] %vm737, %v821
        %845 = vst.msk [vmem:[%s842 + $0x8] sm:$0xf] %vm737, %v823
        %846 = vst.msk [vmem:[%s842 + $0xc] sm:$0xf] %vm737, %v825
        %847 = vst.msk [vmem:[%s842 + $0x10] sm:$0xf] %vm737, %v827
        %848 = vst.msk [vmem:[%s842 + $0x14] sm:$0xf] %vm737, %v829
        %849 = vst.msk [vmem:[%s842 + $0x18] sm:$0xf] %vm737, %v831
        %850 = vst.msk [vmem:[%s842 + $0x1c] sm:$0xf] %vm737, %v833
        %851 = vrot.lane.b32.xlu0 %v758, 64
        %v852 = vpop.permute.xlu0 %851
        %853 = vrot.lane.b32.xlu0 %v759, 64
        %v854 = vpop.permute.xlu0 %853
        %855 = vrot.lane.b32.xlu0 %v760, 64
        %v856 = vpop.permute.xlu0 %855
        %857 = vrot.lane.b32.xlu0 %v761, 64
        %v858 = vpop.permute.xlu0 %857
        %859 = vrot.lane.b32.xlu0 %v762, 64
        %v860 = vpop.permute.xlu0 %859
        %861 = vrot.lane.b32.xlu0 %v763, 64
        %v862 = vpop.permute.xlu0 %861
        %863 = vrot.lane.b32.xlu0 %v764, 64
        %v864 = vpop.permute.xlu0 %863
        %865 = vrot.lane.b32.xlu0 %v765, 64
        %v866 = vpop.permute.xlu0 %865
        %s875 = scalar_lea.vmem %s262, 32 [#allocation5]
        %876 = vst.msk [vmem:[%s875] sm:$0xf] %vm737, %v852
        %877 = vst.msk [vmem:[%s875 + $0x4] sm:$0xf] %vm737, %v854
        %878 = vst.msk [vmem:[%s875 + $0x8] sm:$0xf] %vm737, %v856
        %879 = vst.msk [vmem:[%s875 + $0xc] sm:$0xf] %vm737, %v858
        %880 = vst.msk [vmem:[%s875 + $0x10] sm:$0xf] %vm737, %v860
        %881 = vst.msk [vmem:[%s875 + $0x14] sm:$0xf] %vm737, %v862
        %882 = vst.msk [vmem:[%s875 + $0x18] sm:$0xf] %vm737, %v864
        %883 = vst.msk [vmem:[%s875 + $0x1c] sm:$0xf] %vm737, %v866
        %884 = vrot.lane.b32.xlu0 %v794, 64
        %v885 = vpop.permute.xlu0 %884
        %886 = vrot.lane.b32.xlu0 %v795, 64
        %v887 = vpop.permute.xlu0 %886
        %888 = vrot.lane.b32.xlu0 %v796, 64
        %v889 = vpop.permute.xlu0 %888
        %890 = vrot.lane.b32.xlu0 %v797, 64
        %v891 = vpop.permute.xlu0 %890
        %892 = vrot.lane.b32.xlu0 %v798, 64
        %v893 = vpop.permute.xlu0 %892
        %894 = vrot.lane.b32.xlu0 %v799, 64
        %v895 = vpop.permute.xlu0 %894
        %896 = vrot.lane.b32.xlu0 %v800, 64
        %v897 = vpop.permute.xlu0 %896
        %898 = vrot.lane.b32.xlu0 %v801, 64
        %v899 = vpop.permute.xlu0 %898
        %s908 = scalar_lea.vmem %s268, 32 [#allocation6]
        %909 = vst.msk [vmem:[%s908] sm:$0xf] %vm737, %v885
        %910 = vst.msk [vmem:[%s908 + $0x4] sm:$0xf] %vm737, %v887
        %911 = vst.msk [vmem:[%s908 + $0x8] sm:$0xf] %vm737, %v889
        %912 = vst.msk [vmem:[%s908 + $0xc] sm:$0xf] %vm737, %v891
        %913 = vst.msk [vmem:[%s908 + $0x10] sm:$0xf] %vm737, %v893
        %914 = vst.msk [vmem:[%s908 + $0x14] sm:$0xf] %vm737, %v895
        %915 = vst.msk [vmem:[%s908 + $0x18] sm:$0xf] %vm737, %v897
        %916 = vst.msk [vmem:[%s908 + $0x1c] sm:$0xf] %vm737, %v899
        %s917 = sand.u32 %s110, 1
        %s918 = sand.u32 %s110, 1
        %s919 = smul.addr %s918, 64
        %s920 = scalar_lea.vmem [#allocation4], %s919
        %s921 = sand.u32 %s138, 1
        %s922 = sand.u32 %s138, 1
        %s923 = smul.addr %s922, 64
        %s924 = scalar_lea.vmem [#allocation5], %s923
        %s925 = sand.u32 %s166, 1
        %s926 = sand.u32 %s166, 1
        %s927 = smul.addr %s926, 64
        %s928 = scalar_lea.vmem [#allocation6], %s927
        // Predicated region
        $region37: #{_lambda_.4} parent=31 // pred_check
          %p929 = pneg %p120
        $region38: #{_lambda_.4} parent=31 // pred_check_branch
          %931 = sbr.rel (%p929) target = $region40
        $region39: #{_lambda_.4} parent=31 // pred_region
          %s932 = smul.u32 8, %s23
          %s933 = smul.addr %s22, 32
          %s934 = sadd.s32 %s932, %s933
          %s935 = smul.addr %s934, 4
          %s936 = scalar_lea.vmem %s3, %s935
          // Predicated region
          $region41: #{_lambda_.4} parent=39 // pred_check
            _
          $region42: #{_lambda_.4} parent=39 // pred_check_branch
            %938 = sbr.rel (0) target = $region44
          $region43: #{_lambda_.4} parent=39 // pred_region
            // Predicated region
            $region45: #{_lambda_.4} parent=43 // pred_check
              _
            $region46: #{_lambda_.4} parent=43 // pred_check_branch
              %940 = sbr.rel target = $region48
            $region47: #{_lambda_.4} parent=43 // pred_region
              // Predicated region
              $region60: #{_lambda_.4} parent=47 // pred_check
                _
              $region61: #{_lambda_.4} parent=47 // pred_check_branch
                %985 = sbr.rel (0) target = $region63
              $region62: #{_lambda_.4} parent=47 // pred_region
                loop: start=0, step=1, limit=1
                $region64: #{_lambda_.4} parent=62 // loop_pre_header
                  _
                $region65: #{_lambda_.4} parent=62 // loop_header
                  %s987 = sphi 0, %s991
                  %p988 = scmp.ge.s32.totalorder %s987, 1
                  %s992 = sphi %s920, %s920
                  %s993 = sphi %s936, %s936
                $region66: #{_lambda_.4} parent=62 // loop_header_branch
                  %990 = sbr.rel (%p988) target = $region70
                $region67: #{_lambda_.4} parent=62 // loop_body
                  _
                $region68: #{_lambda_.4} parent=62 // loop_footer
                  %s991 = sadd.s32 1, %s987
                $region69: #{_lambda_.4} parent=62 // loop_footer_branch
                  %986 = sbr.rel target = $region65
                $region70: #{_lambda_.4} parent=62 // loop_exit
                  _
                loop: start=0, step=1, limit=1
                $region71: #{_lambda_.4} parent=62 // loop_pre_header
                  _
                $region72: #{_lambda_.4} parent=62 // loop_header
                  %s996 = sphi 0, %s1000
                  %p997 = scmp.ge.s32.totalorder %s996, 1
                  %s1001 = sphi %s920, %s920
                  %s1002 = sphi %s936, %s936
                $region73: #{_lambda_.4} parent=62 // loop_header_branch
                  %999 = sbr.rel (%p997) target = $region77
                $region74: #{_lambda_.4} parent=62 // loop_body
                  %v1003 = vld [vmem:[%s1001] sm:$0xf]
                  %1004 = vst [vmem:[%s1002] sm:$0xf] %v1003
                  %v1005 = vld [vmem:[%s1001 + $0x4] sm:$0xf]
                  %1006 = vst [vmem:[%s1002 + $0x4] sm:$0xf] %v1005
                  %v1007 = vld [vmem:[%s1001 + $0x8] sm:$0xf]
                  %1008 = vst [vmem:[%s1002 + $0x8] sm:$0xf] %v1007
                  %v1009 = vld [vmem:[%s1001 + $0xc] sm:$0xf]
                  %1010 = vst [vmem:[%s1002 + $0xc] sm:$0xf] %v1009
                  %v1011 = vld [vmem:[%s1001 + $0x10] sm:$0xf]
                  %1012 = vst [vmem:[%s1002 + $0x10] sm:$0xf] %v1011
                  %v1013 = vld [vmem:[%s1001 + $0x14] sm:$0xf]
                  %1014 = vst [vmem:[%s1002 + $0x14] sm:$0xf] %v1013
                  %v1015 = vld [vmem:[%s1001 + $0x18] sm:$0xf]
                  %1016 = vst [vmem:[%s1002 + $0x18] sm:$0xf] %v1015
                  %v1017 = vld [vmem:[%s1001 + $0x1c] sm:$0xf]
                  %1018 = vst [vmem:[%s1002 + $0x1c] sm:$0xf] %v1017
                  %v1019 = vld [vmem:[%s1001 + $0x20] sm:$0xf]
                  %1020 = vst [vmem:[%s1002 + $0x40] sm:$0xf] %v1019
                  %v1021 = vld [vmem:[%s1001 + $0x24] sm:$0xf]
                  %1022 = vst [vmem:[%s1002 + $0x44] sm:$0xf] %v1021
                  %v1023 = vld [vmem:[%s1001 + $0x28] sm:$0xf]
                  %1024 = vst [vmem:[%s1002 + $0x48] sm:$0xf] %v1023
                  %v1025 = vld [vmem:[%s1001 + $0x2c] sm:$0xf]
                  %1026 = vst [vmem:[%s1002 + $0x4c] sm:$0xf] %v1025
                  %v1027 = vld [vmem:[%s1001 + $0x30] sm:$0xf]
                  %1028 = vst [vmem:[%s1002 + $0x50] sm:$0xf] %v1027
                  %v1029 = vld [vmem:[%s1001 + $0x34] sm:$0xf]
                  %1030 = vst [vmem:[%s1002 + $0x54] sm:$0xf] %v1029
                  %v1031 = vld [vmem:[%s1001 + $0x38] sm:$0xf]
                  %1032 = vst [vmem:[%s1002 + $0x58] sm:$0xf] %v1031
                  %v1033 = vld [vmem:[%s1001 + $0x3c] sm:$0xf]
                  %1034 = vst [vmem:[%s1002 + $0x5c] sm:$0xf] %v1033
                $region75: #{_lambda_.4} parent=62 // loop_footer
                  %s1000 = sadd.s32 1, %s996
                $region76: #{_lambda_.4} parent=62 // loop_footer_branch
                  %995 = sbr.rel target = $region72
                $region77: #{_lambda_.4} parent=62 // loop_exit
                  _
              $region63: #{_lambda_.4} parent=47 // pred_fallthru
                _
            $region48: #{_lambda_.4} parent=43 // pred_fallthru
              _
            // Predicated region
            $region49: #{_lambda_.4} parent=43 // pred_check
              _
            $region50: #{_lambda_.4} parent=43 // pred_check_branch
              %942 = sbr.rel (0) target = $region52
            $region51: #{_lambda_.4} parent=43 // pred_region
              loop: start=0, step=1, limit=1
              $region53: #{_lambda_.4} parent=51 // loop_pre_header
                _
              $region54: #{_lambda_.4} parent=51 // loop_header
                %s945 = sphi 0, %s949
                %p946 = scmp.ge.s32.totalorder %s945, 1
                %s950 = sphi %s920, %s920
                %s951 = sphi %s936, %s936
              $region55: #{_lambda_.4} parent=51 // loop_header_branch
                %948 = sbr.rel (%p946) target = $region59
              $region56: #{_lambda_.4} parent=51 // loop_body
                %v952 = vld [vmem:[%s950] sm:$0xf]
                %953 = vst [vmem:[%s951] sm:$0xf] %v952
                %v954 = vld [vmem:[%s950 + $0x4] sm:$0xf]
                %955 = vst [vmem:[%s951 + $0x4] sm:$0xf] %v954
                %v956 = vld [vmem:[%s950 + $0x8] sm:$0xf]
                %957 = vst [vmem:[%s951 + $0x8] sm:$0xf] %v956
                %v958 = vld [vmem:[%s950 + $0xc] sm:$0xf]
                %959 = vst [vmem:[%s951 + $0xc] sm:$0xf] %v958
                %v960 = vld [vmem:[%s950 + $0x10] sm:$0xf]
                %961 = vst [vmem:[%s951 + $0x10] sm:$0xf] %v960
                %v962 = vld [vmem:[%s950 + $0x14] sm:$0xf]
                %963 = vst [vmem:[%s951 + $0x14] sm:$0xf] %v962
                %v964 = vld [vmem:[%s950 + $0x18] sm:$0xf]
                %965 = vst [vmem:[%s951 + $0x18] sm:$0xf] %v964
                %v966 = vld [vmem:[%s950 + $0x1c] sm:$0xf]
                %967 = vst [vmem:[%s951 + $0x1c] sm:$0xf] %v966
                %v968 = vld [vmem:[%s950 + $0x20] sm:$0xf]
                %969 = vst [vmem:[%s951 + $0x40] sm:$0xf] %v968
                %v970 = vld [vmem:[%s950 + $0x24] sm:$0xf]
                %971 = vst [vmem:[%s951 + $0x44] sm:$0xf] %v970
                %v972 = vld [vmem:[%s950 + $0x28] sm:$0xf]
                %973 = vst [vmem:[%s951 + $0x48] sm:$0xf] %v972
                %v974 = vld [vmem:[%s950 + $0x2c] sm:$0xf]
                %975 = vst [vmem:[%s951 + $0x4c] sm:$0xf] %v974
                %v976 = vld [vmem:[%s950 + $0x30] sm:$0xf]
                %977 = vst [vmem:[%s951 + $0x50] sm:$0xf] %v976
                %v978 = vld [vmem:[%s950 + $0x34] sm:$0xf]
                %979 = vst [vmem:[%s951 + $0x54] sm:$0xf] %v978
                %v980 = vld [vmem:[%s950 + $0x38] sm:$0xf]
                %981 = vst [vmem:[%s951 + $0x58] sm:$0xf] %v980
                %v982 = vld [vmem:[%s950 + $0x3c] sm:$0xf]
                %983 = vst [vmem:[%s951 + $0x5c] sm:$0xf] %v982
              $region57: #{_lambda_.4} parent=51 // loop_footer
                %s949 = sadd.s32 1, %s945
              $region58: #{_lambda_.4} parent=51 // loop_footer_branch
                %944 = sbr.rel target = $region54
              $region59: #{_lambda_.4} parent=51 // loop_exit
                _
            $region52: #{_lambda_.4} parent=43 // pred_fallthru
              _
          $region44: #{_lambda_.4} parent=39 // pred_fallthru
            _
          %1035 = vnop
        $region40: #{_lambda_.4} parent=31 // pred_fallthru
          _
        // Predicated region
        $region78: #{_lambda_.4} parent=31 // pred_check
          %p1036 = pneg %p148
        $region79: #{_lambda_.4} parent=31 // pred_check_branch
          %1038 = sbr.rel (%p1036) target = $region81
        $region80: #{_lambda_.4} parent=31 // pred_region
          %s1039 = smul.u32 8, %s23
          %s1040 = smul.addr %s22, 32
          %s1041 = sadd.s32 %s1039, %s1040
          %s1042 = smul.addr %s1041, 4
          %s1043 = scalar_lea.vmem %s4, %s1042
          // Predicated region
          $region82: #{_lambda_.4} parent=80 // pred_check
            _
          $region83: #{_lambda_.4} parent=80 // pred_check_branch
            %1045 = sbr.rel (0) target = $region85
          $region84: #{_lambda_.4} parent=80 // pred_region
            // Predicated region
            $region86: #{_lambda_.4} parent=84 // pred_check
              _
            $region87: #{_lambda_.4} parent=84 // pred_check_branch
              %1047 = sbr.rel target = $region89
            $region88: #{_lambda_.4} parent=84 // pred_region
              // Predicated region
              $region101: #{_lambda_.4} parent=88 // pred_check
                _
              $region102: #{_lambda_.4} parent=88 // pred_check_branch
                %1092 = sbr.rel (0) target = $region104
              $region103: #{_lambda_.4} parent=88 // pred_region
                loop: start=0, step=1, limit=1
                $region105: #{_lambda_.4} parent=103 // loop_pre_header
                  _
                $region106: #{_lambda_.4} parent=103 // loop_header
                  %s1094 = sphi 0, %s1098
                  %p1095 = scmp.ge.s32.totalorder %s1094, 1
                  %s1099 = sphi %s924, %s924
                  %s1100 = sphi %s1043, %s1043
                $region107: #{_lambda_.4} parent=103 // loop_header_branch
                  %1097 = sbr.rel (%p1095) target = $region111
                $region108: #{_lambda_.4} parent=103 // loop_body
                  _
                $region109: #{_lambda_.4} parent=103 // loop_footer
                  %s1098 = sadd.s32 1, %s1094
                $region110: #{_lambda_.4} parent=103 // loop_footer_branch
                  %1093 = sbr.rel target = $region106
                $region111: #{_lambda_.4} parent=103 // loop_exit
                  _
                loop: start=0, step=1, limit=1
                $region112: #{_lambda_.4} parent=103 // loop_pre_header
                  _
                $region113: #{_lambda_.4} parent=103 // loop_header
                  %s1103 = sphi 0, %s1107
                  %p1104 = scmp.ge.s32.totalorder %s1103, 1
                  %s1108 = sphi %s924, %s924
                  %s1109 = sphi %s1043, %s1043
                $region114: #{_lambda_.4} parent=103 // loop_header_branch
                  %1106 = sbr.rel (%p1104) target = $region118
                $region115: #{_lambda_.4} parent=103 // loop_body
                  %v1110 = vld [vmem:[%s1108] sm:$0xf]
                  %1111 = vst [vmem:[%s1109] sm:$0xf] %v1110
                  %v1112 = vld [vmem:[%s1108 + $0x4] sm:$0xf]
                  %1113 = vst [vmem:[%s1109 + $0x4] sm:$0xf] %v1112
                  %v1114 = vld [vmem:[%s1108 + $0x8] sm:$0xf]
                  %1115 = vst [vmem:[%s1109 + $0x8] sm:$0xf] %v1114
                  %v1116 = vld [vmem:[%s1108 + $0xc] sm:$0xf]
                  %1117 = vst [vmem:[%s1109 + $0xc] sm:$0xf] %v1116
                  %v1118 = vld [vmem:[%s1108 + $0x10] sm:$0xf]
                  %1119 = vst [vmem:[%s1109 + $0x10] sm:$0xf] %v1118
                  %v1120 = vld [vmem:[%s1108 + $0x14] sm:$0xf]
                  %1121 = vst [vmem:[%s1109 + $0x14] sm:$0xf] %v1120
                  %v1122 = vld [vmem:[%s1108 + $0x18] sm:$0xf]
                  %1123 = vst [vmem:[%s1109 + $0x18] sm:$0xf] %v1122
                  %v1124 = vld [vmem:[%s1108 + $0x1c] sm:$0xf]
                  %1125 = vst [vmem:[%s1109 + $0x1c] sm:$0xf] %v1124
                  %v1126 = vld [vmem:[%s1108 + $0x20] sm:$0xf]
                  %1127 = vst [vmem:[%s1109 + $0x40] sm:$0xf] %v1126
                  %v1128 = vld [vmem:[%s1108 + $0x24] sm:$0xf]
                  %1129 = vst [vmem:[%s1109 + $0x44] sm:$0xf] %v1128
                  %v1130 = vld [vmem:[%s1108 + $0x28] sm:$0xf]
                  %1131 = vst [vmem:[%s1109 + $0x48] sm:$0xf] %v1130
                  %v1132 = vld [vmem:[%s1108 + $0x2c] sm:$0xf]
                  %1133 = vst [vmem:[%s1109 + $0x4c] sm:$0xf] %v1132
                  %v1134 = vld [vmem:[%s1108 + $0x30] sm:$0xf]
                  %1135 = vst [vmem:[%s1109 + $0x50] sm:$0xf] %v1134
                  %v1136 = vld [vmem:[%s1108 + $0x34] sm:$0xf]
                  %1137 = vst [vmem:[%s1109 + $0x54] sm:$0xf] %v1136
                  %v1138 = vld [vmem:[%s1108 + $0x38] sm:$0xf]
                  %1139 = vst [vmem:[%s1109 + $0x58] sm:$0xf] %v1138
                  %v1140 = vld [vmem:[%s1108 + $0x3c] sm:$0xf]
                  %1141 = vst [vmem:[%s1109 + $0x5c] sm:$0xf] %v1140
                $region116: #{_lambda_.4} parent=103 // loop_footer
                  %s1107 = sadd.s32 1, %s1103
                $region117: #{_lambda_.4} parent=103 // loop_footer_branch
                  %1102 = sbr.rel target = $region113
                $region118: #{_lambda_.4} parent=103 // loop_exit
                  _
              $region104: #{_lambda_.4} parent=88 // pred_fallthru
                _
            $region89: #{_lambda_.4} parent=84 // pred_fallthru
              _
            // Predicated region
            $region90: #{_lambda_.4} parent=84 // pred_check
              _
            $region91: #{_lambda_.4} parent=84 // pred_check_branch
              %1049 = sbr.rel (0) target = $region93
            $region92: #{_lambda_.4} parent=84 // pred_region
              loop: start=0, step=1, limit=1
              $region94: #{_lambda_.4} parent=92 // loop_pre_header
                _
              $region95: #{_lambda_.4} parent=92 // loop_header
                %s1052 = sphi 0, %s1056
                %p1053 = scmp.ge.s32.totalorder %s1052, 1
                %s1057 = sphi %s924, %s924
                %s1058 = sphi %s1043, %s1043
              $region96: #{_lambda_.4} parent=92 // loop_header_branch
                %1055 = sbr.rel (%p1053) target = $region100
              $region97: #{_lambda_.4} parent=92 // loop_body
                %v1059 = vld [vmem:[%s1057] sm:$0xf]
                %1060 = vst [vmem:[%s1058] sm:$0xf] %v1059
                %v1061 = vld [vmem:[%s1057 + $0x4] sm:$0xf]
                %1062 = vst [vmem:[%s1058 + $0x4] sm:$0xf] %v1061
                %v1063 = vld [vmem:[%s1057 + $0x8] sm:$0xf]
                %1064 = vst [vmem:[%s1058 + $0x8] sm:$0xf] %v1063
                %v1065 = vld [vmem:[%s1057 + $0xc] sm:$0xf]
                %1066 = vst [vmem:[%s1058 + $0xc] sm:$0xf] %v1065
                %v1067 = vld [vmem:[%s1057 + $0x10] sm:$0xf]
                %1068 = vst [vmem:[%s1058 + $0x10] sm:$0xf] %v1067
                %v1069 = vld [vmem:[%s1057 + $0x14] sm:$0xf]
                %1070 = vst [vmem:[%s1058 + $0x14] sm:$0xf] %v1069
                %v1071 = vld [vmem:[%s1057 + $0x18] sm:$0xf]
                %1072 = vst [vmem:[%s1058 + $0x18] sm:$0xf] %v1071
                %v1073 = vld [vmem:[%s1057 + $0x1c] sm:$0xf]
                %1074 = vst [vmem:[%s1058 + $0x1c] sm:$0xf] %v1073
                %v1075 = vld [vmem:[%s1057 + $0x20] sm:$0xf]
                %1076 = vst [vmem:[%s1058 + $0x40] sm:$0xf] %v1075
                %v1077 = vld [vmem:[%s1057 + $0x24] sm:$0xf]
                %1078 = vst [vmem:[%s1058 + $0x44] sm:$0xf] %v1077
                %v1079 = vld [vmem:[%s1057 + $0x28] sm:$0xf]
                %1080 = vst [vmem:[%s1058 + $0x48] sm:$0xf] %v1079
                %v1081 = vld [vmem:[%s1057 + $0x2c] sm:$0xf]
                %1082 = vst [vmem:[%s1058 + $0x4c] sm:$0xf] %v1081
                %v1083 = vld [vmem:[%s1057 + $0x30] sm:$0xf]
                %1084 = vst [vmem:[%s1058 + $0x50] sm:$0xf] %v1083
                %v1085 = vld [vmem:[%s1057 + $0x34] sm:$0xf]
                %1086 = vst [vmem:[%s1058 + $0x54] sm:$0xf] %v1085
                %v1087 = vld [vmem:[%s1057 + $0x38] sm:$0xf]
                %1088 = vst [vmem:[%s1058 + $0x58] sm:$0xf] %v1087
                %v1089 = vld [vmem:[%s1057 + $0x3c] sm:$0xf]
                %1090 = vst [vmem:[%s1058 + $0x5c] sm:$0xf] %v1089
              $region98: #{_lambda_.4} parent=92 // loop_footer
                %s1056 = sadd.s32 1, %s1052
              $region99: #{_lambda_.4} parent=92 // loop_footer_branch
                %1051 = sbr.rel target = $region95
              $region100: #{_lambda_.4} parent=92 // loop_exit
                _
            $region93: #{_lambda_.4} parent=84 // pred_fallthru
              _
          $region85: #{_lambda_.4} parent=80 // pred_fallthru
            _
          %1142 = vnop
        $region81: #{_lambda_.4} parent=31 // pred_fallthru
          _
        // Predicated region
        $region119: #{_lambda_.4} parent=31 // pred_check
          %p1143 = pneg %p176
        $region120: #{_lambda_.4} parent=31 // pred_check_branch
          %1145 = sbr.rel (%p1143) target = $region122
        $region121: #{_lambda_.4} parent=31 // pred_region
          %s1146 = smul.u32 8, %s23
          %s1147 = smul.addr %s22, 32
          %s1148 = sadd.s32 %s1146, %s1147
          %s1149 = smul.addr %s1148, 4
          %s1150 = scalar_lea.vmem %s5, %s1149
          // Predicated region
          $region123: #{_lambda_.4} parent=121 // pred_check
            _
          $region124: #{_lambda_.4} parent=121 // pred_check_branch
            %1152 = sbr.rel (0) target = $region126
          $region125: #{_lambda_.4} parent=121 // pred_region
            // Predicated region
            $region127: #{_lambda_.4} parent=125 // pred_check
              _
            $region128: #{_lambda_.4} parent=125 // pred_check_branch
              %1154 = sbr.rel target = $region130
            $region129: #{_lambda_.4} parent=125 // pred_region
              // Predicated region
              $region142: #{_lambda_.4} parent=129 // pred_check
                _
              $region143: #{_lambda_.4} parent=129 // pred_check_branch
                %1199 = sbr.rel (0) target = $region145
              $region144: #{_lambda_.4} parent=129 // pred_region
                loop: start=0, step=1, limit=1
                $region146: #{_lambda_.4} parent=144 // loop_pre_header
                  _
                $region147: #{_lambda_.4} parent=144 // loop_header
                  %s1201 = sphi 0, %s1205
                  %p1202 = scmp.ge.s32.totalorder %s1201, 1
                  %s1206 = sphi %s928, %s928
                  %s1207 = sphi %s1150, %s1150
                $region148: #{_lambda_.4} parent=144 // loop_header_branch
                  %1204 = sbr.rel (%p1202) target = $region152
                $region149: #{_lambda_.4} parent=144 // loop_body
                  _
                $region150: #{_lambda_.4} parent=144 // loop_footer
                  %s1205 = sadd.s32 1, %s1201
                $region151: #{_lambda_.4} parent=144 // loop_footer_branch
                  %1200 = sbr.rel target = $region147
                $region152: #{_lambda_.4} parent=144 // loop_exit
                  _
                loop: start=0, step=1, limit=1
                $region153: #{_lambda_.4} parent=144 // loop_pre_header
                  _
                $region154: #{_lambda_.4} parent=144 // loop_header
                  %s1210 = sphi 0, %s1214
                  %p1211 = scmp.ge.s32.totalorder %s1210, 1
                  %s1215 = sphi %s928, %s928
                  %s1216 = sphi %s1150, %s1150
                $region155: #{_lambda_.4} parent=144 // loop_header_branch
                  %1213 = sbr.rel (%p1211) target = $region159
                $region156: #{_lambda_.4} parent=144 // loop_body
                  %v1217 = vld [vmem:[%s1215] sm:$0xf]
                  %1218 = vst [vmem:[%s1216] sm:$0xf] %v1217
                  %v1219 = vld [vmem:[%s1215 + $0x4] sm:$0xf]
                  %1220 = vst [vmem:[%s1216 + $0x4] sm:$0xf] %v1219
                  %v1221 = vld [vmem:[%s1215 + $0x8] sm:$0xf]
                  %1222 = vst [vmem:[%s1216 + $0x8] sm:$0xf] %v1221
                  %v1223 = vld [vmem:[%s1215 + $0xc] sm:$0xf]
                  %1224 = vst [vmem:[%s1216 + $0xc] sm:$0xf] %v1223
                  %v1225 = vld [vmem:[%s1215 + $0x10] sm:$0xf]
                  %1226 = vst [vmem:[%s1216 + $0x10] sm:$0xf] %v1225
                  %v1227 = vld [vmem:[%s1215 + $0x14] sm:$0xf]
                  %1228 = vst [vmem:[%s1216 + $0x14] sm:$0xf] %v1227
                  %v1229 = vld [vmem:[%s1215 + $0x18] sm:$0xf]
                  %1230 = vst [vmem:[%s1216 + $0x18] sm:$0xf] %v1229
                  %v1231 = vld [vmem:[%s1215 + $0x1c] sm:$0xf]
                  %1232 = vst [vmem:[%s1216 + $0x1c] sm:$0xf] %v1231
                  %v1233 = vld [vmem:[%s1215 + $0x20] sm:$0xf]
                  %1234 = vst [vmem:[%s1216 + $0x40] sm:$0xf] %v1233
                  %v1235 = vld [vmem:[%s1215 + $0x24] sm:$0xf]
                  %1236 = vst [vmem:[%s1216 + $0x44] sm:$0xf] %v1235
                  %v1237 = vld [vmem:[%s1215 + $0x28] sm:$0xf]
                  %1238 = vst [vmem:[%s1216 + $0x48] sm:$0xf] %v1237
                  %v1239 = vld [vmem:[%s1215 + $0x2c] sm:$0xf]
                  %1240 = vst [vmem:[%s1216 + $0x4c] sm:$0xf] %v1239
                  %v1241 = vld [vmem:[%s1215 + $0x30] sm:$0xf]
                  %1242 = vst [vmem:[%s1216 + $0x50] sm:$0xf] %v1241
                  %v1243 = vld [vmem:[%s1215 + $0x34] sm:$0xf]
                  %1244 = vst [vmem:[%s1216 + $0x54] sm:$0xf] %v1243
                  %v1245 = vld [vmem:[%s1215 + $0x38] sm:$0xf]
                  %1246 = vst [vmem:[%s1216 + $0x58] sm:$0xf] %v1245
                  %v1247 = vld [vmem:[%s1215 + $0x3c] sm:$0xf]
                  %1248 = vst [vmem:[%s1216 + $0x5c] sm:$0xf] %v1247
                $region157: #{_lambda_.4} parent=144 // loop_footer
                  %s1214 = sadd.s32 1, %s1210
                $region158: #{_lambda_.4} parent=144 // loop_footer_branch
                  %1209 = sbr.rel target = $region154
                $region159: #{_lambda_.4} parent=144 // loop_exit
                  _
              $region145: #{_lambda_.4} parent=129 // pred_fallthru
                _
            $region130: #{_lambda_.4} parent=125 // pred_fallthru
              _
            // Predicated region
            $region131: #{_lambda_.4} parent=125 // pred_check
              _
            $region132: #{_lambda_.4} parent=125 // pred_check_branch
              %1156 = sbr.rel (0) target = $region134
            $region133: #{_lambda_.4} parent=125 // pred_region
              loop: start=0, step=1, limit=1
              $region135: #{_lambda_.4} parent=133 // loop_pre_header
                _
              $region136: #{_lambda_.4} parent=133 // loop_header
                %s1159 = sphi 0, %s1163
                %p1160 = scmp.ge.s32.totalorder %s1159, 1
                %s1164 = sphi %s928, %s928
                %s1165 = sphi %s1150, %s1150
              $region137: #{_lambda_.4} parent=133 // loop_header_branch
                %1162 = sbr.rel (%p1160) target = $region141
              $region138: #{_lambda_.4} parent=133 // loop_body
                %v1166 = vld [vmem:[%s1164] sm:$0xf]
                %1167 = vst [vmem:[%s1165] sm:$0xf] %v1166
                %v1168 = vld [vmem:[%s1164 + $0x4] sm:$0xf]
                %1169 = vst [vmem:[%s1165 + $0x4] sm:$0xf] %v1168
                %v1170 = vld [vmem:[%s1164 + $0x8] sm:$0xf]
                %1171 = vst [vmem:[%s1165 + $0x8] sm:$0xf] %v1170
                %v1172 = vld [vmem:[%s1164 + $0xc] sm:$0xf]
                %1173 = vst [vmem:[%s1165 + $0xc] sm:$0xf] %v1172
                %v1174 = vld [vmem:[%s1164 + $0x10] sm:$0xf]
                %1175 = vst [vmem:[%s1165 + $0x10] sm:$0xf] %v1174
                %v1176 = vld [vmem:[%s1164 + $0x14] sm:$0xf]
                %1177 = vst [vmem:[%s1165 + $0x14] sm:$0xf] %v1176
                %v1178 = vld [vmem:[%s1164 + $0x18] sm:$0xf]
                %1179 = vst [vmem:[%s1165 + $0x18] sm:$0xf] %v1178
                %v1180 = vld [vmem:[%s1164 + $0x1c] sm:$0xf]
                %1181 = vst [vmem:[%s1165 + $0x1c] sm:$0xf] %v1180
                %v1182 = vld [vmem:[%s1164 + $0x20] sm:$0xf]
                %1183 = vst [vmem:[%s1165 + $0x40] sm:$0xf] %v1182
                %v1184 = vld [vmem:[%s1164 + $0x24] sm:$0xf]
                %1185 = vst [vmem:[%s1165 + $0x44] sm:$0xf] %v1184
                %v1186 = vld [vmem:[%s1164 + $0x28] sm:$0xf]
                %1187 = vst [vmem:[%s1165 + $0x48] sm:$0xf] %v1186
                %v1188 = vld [vmem:[%s1164 + $0x2c] sm:$0xf]
                %1189 = vst [vmem:[%s1165 + $0x4c] sm:$0xf] %v1188
                %v1190 = vld [vmem:[%s1164 + $0x30] sm:$0xf]
                %1191 = vst [vmem:[%s1165 + $0x50] sm:$0xf] %v1190
                %v1192 = vld [vmem:[%s1164 + $0x34] sm:$0xf]
                %1193 = vst [vmem:[%s1165 + $0x54] sm:$0xf] %v1192
                %v1194 = vld [vmem:[%s1164 + $0x38] sm:$0xf]
                %1195 = vst [vmem:[%s1165 + $0x58] sm:$0xf] %v1194
                %v1196 = vld [vmem:[%s1164 + $0x3c] sm:$0xf]
                %1197 = vst [vmem:[%s1165 + $0x5c] sm:$0xf] %v1196
              $region139: #{_lambda_.4} parent=133 // loop_footer
                %s1163 = sadd.s32 1, %s1159
              $region140: #{_lambda_.4} parent=133 // loop_footer_branch
                %1158 = sbr.rel target = $region136
              $region141: #{_lambda_.4} parent=133 // loop_exit
                _
            $region134: #{_lambda_.4} parent=125 // pred_fallthru
              _
          $region126: #{_lambda_.4} parent=121 // pred_fallthru
            _
          %1249 = vnop
        $region122: #{_lambda_.4} parent=31 // pred_fallthru
          _
      $region32: #{_lambda_.4} parent=5 // pred_fallthru
        _
      %p1250 = scmp.le.s32.totalorder 2, %s13
      // Predicated region
      $region160: #{_lambda_.4} parent=5 // pred_check
        %p1251 = pneg %p1250
      $region161: #{_lambda_.4} parent=5 // pred_check_branch
        %1253 = sbr.rel (%p1251) target = $region163
      $region162: #{_lambda_.4} parent=5 // pred_region
        %s1254 = ssub.s32 %s13, 2
        // Predicated region
        $region164: #{_lambda_.4} parent=162 // pred_check
          %p1255 = pneg %p126
        $region165: #{_lambda_.4} parent=162 // pred_check_branch
          %1257 = sbr.rel (%p1255) target = $region167
        $region166: #{_lambda_.4} parent=162 // pred_region
          %s1258 = sand.u32 %s111, 1
          %s1259 = sand.u32 %s111, 1
          %s1260 = smul.addr %s1259, 64
          %s1261 = scalar_lea.vmem [#allocation4], %s1260
        $region167: #{_lambda_.4} parent=162 // pred_fallthru
          _
        // Predicated region
        $region168: #{_lambda_.4} parent=162 // pred_check
          %p1262 = pneg %p154
        $region169: #{_lambda_.4} parent=162 // pred_check_branch
          %1264 = sbr.rel (%p1262) target = $region171
        $region170: #{_lambda_.4} parent=162 // pred_region
          %s1265 = sand.u32 %s139, 1
          %s1266 = sand.u32 %s139, 1
          %s1267 = smul.addr %s1266, 64
          %s1268 = scalar_lea.vmem [#allocation5], %s1267
        $region171: #{_lambda_.4} parent=162 // pred_fallthru
          _
        // Predicated region
        $region172: #{_lambda_.4} parent=162 // pred_check
          %p1269 = pneg %p182
        $region173: #{_lambda_.4} parent=162 // pred_check_branch
          %1271 = sbr.rel (%p1269) target = $region175
        $region174: #{_lambda_.4} parent=162 // pred_region
          %s1272 = sand.u32 %s167, 1
          %s1273 = sand.u32 %s167, 1
          %s1274 = smul.addr %s1273, 64
          %s1275 = scalar_lea.vmem [#allocation6], %s1274
        $region175: #{_lambda_.4} parent=162 // pred_fallthru
          _
      $region163: #{_lambda_.4} parent=5 // pred_fallthru
        _
    $region6: #{_lambda_.4} parent=1 // loop_footer
      %s17 = sadd.s32 1, %s13
    $region7: #{_lambda_.4} parent=1 // loop_footer_branch
      %12 = sbr.rel target = $region3
    $region8: #{_lambda_.4} parent=1 // loop_exit
      _
    %1276 = vsyncpa [#allocation3], 1
    %s1277 = scalar_lea.sflag [#allocation3], 1
    %1278 = vsyncpa %s1277, 1

// kernel: _lambda_.6
$region0: #{_lambda_.6}
  #allocation0 [shape = 'u32[]', space=smem, size = 0x4, offset = 0x4, fixed_abs, tag = 'smem constant byte address 0x4 - core index']
  #allocation1 [shape = 'u32[144,128]{1,0:T(1,128)}', space=vmem, size = 0x12000, scoped, tag = 'internal scratch']
  %s0 = inlined_call_operand.vmem [shape: f32[2,128,128], index: 0, kind: input, shape index: {}]
  %s1 = inlined_call_operand.vmem [shape: f32[1,128], index: 1, kind: input, shape index: {}]
  %s2 = inlined_call_operand.vmem [shape: bf16[128,384], index: 2, kind: input, shape index: {}]
  %s3 = inlined_call_operand.vmem [shape: bf16[2,2,128,64], index: 3, kind: output, shape index: {0}]
  %s4 = inlined_call_operand.vmem [shape: bf16[2,2,128,64], index: 4, kind: output, shape index: {1}]
  %s5 = inlined_call_operand.vmem [shape: bf16[2,2,128,64], index: 5, kind: output, shape index: {2}]
  %6 = xla_tuple %s3, %s4, %s5
  %s7 = sld [smem:[#allocation0]]
  $region172: #{_lambda_.6} parent=0
    _
  %s9 = ssub.s32 1, %s7
  %s10 = scalar_select 0, %s9, %s7
  $region1: #{_lambda_.6} parent=0
    #allocation2 [shape = 'u8[65536]{0}', space=vmem, size = 0x10000, scoped, tag = 'output window, operand 0']
    #allocation3 [shape = 'u8[65536]{0}', space=vmem, size = 0x10000, scoped, tag = 'output window, operand 1']
    #allocation4 [shape = 'u8[65536]{0}', space=vmem, size = 0x10000, scoped, tag = 'output window, operand 2']
    loop: start=0, step=1, limit=6
    $region2: #{_lambda_.6} parent=1 // loop_pre_header
      _
    $region3: #{_lambda_.6} parent=1 // loop_header
      %s12 = sphi 0, %s16
      %p13 = scmp.ge.s32.totalorder %s12, 6
      %s19 = sphi 0, %s31
      %s20 = sphi 0, %s27
      %s21 = sphi 0, %s19
      %s22 = sphi 0, %s20
      %s23 = sphi 0, %s21
      %s24 = sphi 0, %s22
      %s36 = sphi 0, %s38
      %s39 = sphi 0, %s36
      %s40 = sphi 0, %s39
      %s56 = sphi 0, %s40
      %s60 = sphi 0, %s60
      %s62 = sphi 0, %s60
      %s63 = sphi 0, %s62
      %s77 = sphi 0, %s63
      %s81 = sphi 0, %s81
      %s83 = sphi 0, %s81
      %s84 = sphi 0, %s83
      %s98 = sphi 0, %s84
      %s106 = sphi 0, %s108
      %s109 = sphi 0, %s106
      %s110 = sphi 0, %s109
      %s126 = sphi 0, %s110
      %s134 = sphi 0, %s136
      %s137 = sphi 0, %s134
      %s138 = sphi 0, %s137
      %s154 = sphi 0, %s138
      %s162 = sphi 0, %s164
      %s165 = sphi 0, %s162
      %s166 = sphi 0, %s165
      %s182 = sphi 0, %s166
    $region4: #{_lambda_.6} parent=1 // loop_header_branch
      %15 = sbr.rel (%p13) target = $region8
    $region5: #{_lambda_.6} parent=1 // loop_body
      %s17 = ssub.s32 %s12, 1
      %s18 = ssub.s32 %s12, 2
      %s25 = sadd.s32 1, %s20
      %p26 = scmp.ge.s32.totalorder %s25, 2
      %s27 = scalar_select %p26, 0, %s25
      %s28 = sadd.s32 1, %s19
      %s29 = scalar_select %p26, %s28, %s19
      %p30 = scmp.ge.s32.totalorder %s29, 2
      %s31 = scalar_select %p30, 0, %s29
      %s32 = ssub.s32 %s19, %s31
      %s33 = ssub.s32 %s20, %s27
      %s34 = sor.u32 %s32, %s33
      %p35 = scmp.eq.s32.totalorder %s34, 0
      %s37 = sadd.s32 %s36, 1
      %s38 = scalar_select %p35, %s36, %s37
      %p41 = pneg %p35
      %p42 = scmp.eq.s32.totalorder %s12, 3
      %p43 = por %p41, %p42
      %p44 = scmp.ne.s32.totalorder %s36, %s39
      %p45 = scmp.eq.s32.totalorder %s12, 0
      %p46 = por %p44, %p45
      %p47 = scmp.ne.s32.totalorder %s36, %s39
      %p48 = scmp.eq.s32.totalorder %s17, 3
      %p49 = por %p47, %p48
      %p50 = scmp.ne.s32.totalorder %s39, %s40
      %p51 = scmp.eq.s32.totalorder %s17, 0
      %p52 = por %p50, %p51
      %p53 = scmp.ne.s32.totalorder %s39, %s40
      %p54 = scmp.eq.s32.totalorder %s18, 3
      %p55 = por %p53, %p54
      %p57 = scmp.ne.s32.totalorder %s40, %s56
      %p58 = scmp.eq.s32.totalorder %s18, 0
      %p59 = por %p57, %p58
      %s61 = sadd.s32 %s60, 1
      %p64 = scmp.eq.s32.totalorder %s12, 3
      %p65 = scmp.ne.s32.totalorder %s60, %s62
      %p66 = scmp.eq.s32.totalorder %s12, 0
      %p67 = por %p65, %p66
      %p68 = scmp.ne.s32.totalorder %s60, %s62
      %p69 = scmp.eq.s32.totalorder %s17, 3
      %p70 = por %p68, %p69
      %p71 = scmp.ne.s32.totalorder %s62, %s63
      %p72 = scmp.eq.s32.totalorder %s17, 0
      %p73 = por %p71, %p72
      %p74 = scmp.ne.s32.totalorder %s62, %s63
      %p75 = scmp.eq.s32.totalorder %s18, 3
      %p76 = por %p74, %p75
      %p78 = scmp.ne.s32.totalorder %s63, %s77
      %p79 = scmp.eq.s32.totalorder %s18, 0
      %p80 = por %p78, %p79
      %s82 = sadd.s32 %s81, 1
      %p85 = scmp.eq.s32.totalorder %s12, 3
      %p86 = scmp.ne.s32.totalorder %s81, %s83
      %p87 = scmp.eq.s32.totalorder %s12, 0
      %p88 = por %p86, %p87
      %p89 = scmp.ne.s32.totalorder %s81, %s83
      %p90 = scmp.eq.s32.totalorder %s17, 3
      %p91 = por %p89, %p90
      %p92 = scmp.ne.s32.totalorder %s83, %s84
      %p93 = scmp.eq.s32.totalorder %s17, 0
      %p94 = por %p92, %p93
      %p95 = scmp.ne.s32.totalorder %s83, %s84
      %p96 = scmp.eq.s32.totalorder %s18, 3
      %p97 = por %p95, %p96
      %p99 = scmp.ne.s32.totalorder %s84, %s98
      %p100 = scmp.eq.s32.totalorder %s18, 0
      %p101 = por %p99, %p100
      %s102 = ssub.s32 %s19, %s31
      %s103 = ssub.s32 %s20, %s27
      %s104 = sor.u32 %s102, %s103
      %p105 = scmp.eq.s32.totalorder %s104, 0
      %s107 = sadd.s32 %s106, 1
      %s108 = scalar_select %p105, %s106, %s107
      %p111 = pneg %p105
      %p112 = scmp.eq.s32.totalorder %s12, 3
      %p113 = por %p111, %p112
      %p114 = scmp.ne.s32.totalorder %s106, %s109
      %p115 = scmp.eq.s32.totalorder %s12, 0
      %p116 = por %p114, %p115
      %p117 = scmp.ne.s32.totalorder %s106, %s109
      %p118 = scmp.eq.s32.totalorder %s17, 3
      %p119 = por %p117, %p118
      %p120 = scmp.ne.s32.totalorder %s109, %s110
      %p121 = scmp.eq.s32.totalorder %s17, 0
      %p122 = por %p120, %p121
      %p123 = scmp.ne.s32.totalorder %s109, %s110
      %p124 = scmp.eq.s32.totalorder %s18, 3
      %p125 = por %p123, %p124
      %p127 = scmp.ne.s32.totalorder %s110, %s126
      %p128 = scmp.eq.s32.totalorder %s18, 0
      %p129 = por %p127, %p128
      %s130 = ssub.s32 %s19, %s31
      %s131 = ssub.s32 %s20, %s27
      %s132 = sor.u32 %s130, %s131
      %p133 = scmp.eq.s32.totalorder %s132, 0
      %s135 = sadd.s32 %s134, 1
      %s136 = scalar_select %p133, %s134, %s135
      %p139 = pneg %p133
      %p140 = scmp.eq.s32.totalorder %s12, 3
      %p141 = por %p139, %p140
      %p142 = scmp.ne.s32.totalorder %s134, %s137
      %p143 = scmp.eq.s32.totalorder %s12, 0
      %p144 = por %p142, %p143
      %p145 = scmp.ne.s32.totalorder %s134, %s137
      %p146 = scmp.eq.s32.totalorder %s17, 3
      %p147 = por %p145, %p146
      %p148 = scmp.ne.s32.totalorder %s137, %s138
      %p149 = scmp.eq.s32.totalorder %s17, 0
      %p150 = por %p148, %p149
      %p151 = scmp.ne.s32.totalorder %s137, %s138
      %p152 = scmp.eq.s32.totalorder %s18, 3
      %p153 = por %p151, %p152
      %p155 = scmp.ne.s32.totalorder %s138, %s154
      %p156 = scmp.eq.s32.totalorder %s18, 0
      %p157 = por %p155, %p156
      %s158 = ssub.s32 %s19, %s31
      %s159 = ssub.s32 %s20, %s27
      %s160 = sor.u32 %s158, %s159
      %p161 = scmp.eq.s32.totalorder %s160, 0
      %s163 = sadd.s32 %s162, 1
      %s164 = scalar_select %p161, %s162, %s163
      %p167 = pneg %p161
      %p168 = scmp.eq.s32.totalorder %s12, 3
      %p169 = por %p167, %p168
      %p170 = scmp.ne.s32.totalorder %s162, %s165
      %p171 = scmp.eq.s32.totalorder %s12, 0
      %p172 = por %p170, %p171
      %p173 = scmp.ne.s32.totalorder %s162, %s165
      %p174 = scmp.eq.s32.totalorder %s17, 3
      %p175 = por %p173, %p174
      %p176 = scmp.ne.s32.totalorder %s165, %s166
      %p177 = scmp.eq.s32.totalorder %s17, 0
      %p178 = por %p176, %p177
      %p179 = scmp.ne.s32.totalorder %s165, %s166
      %p180 = scmp.eq.s32.totalorder %s18, 3
      %p181 = por %p179, %p180
      %p183 = scmp.ne.s32.totalorder %s166, %s182
      %p184 = scmp.eq.s32.totalorder %s18, 0
      %p185 = por %p183, %p184
      %p186 = scmp.le.s32.totalorder 1, %s12
      %p187 = scmp.lt.s32.totalorder %s12, 5
      %p188 = pnand %p186, %p187
      %p189 = pneg %p188
      // Predicated region
      $region9: #{_lambda_.6} parent=5 // pred_check
        _
      $region10: #{_lambda_.6} parent=5 // pred_check_branch
        %191 = sbr.rel (%p188) target = $region12
      $region11: #{_lambda_.6} parent=5 // pred_region
        %s192 = ssub.s32 %s12, 1
        // Predicated region
        $region13: #{_lambda_.6} parent=11 // pred_check
          %p193 = pneg %p73
        $region14: #{_lambda_.6} parent=11 // pred_check_branch
          %195 = sbr.rel (%p193) target = $region16
        $region15: #{_lambda_.6} parent=11 // pred_region
          _
        $region16: #{_lambda_.6} parent=11 // pred_fallthru
          _
        // Predicated region
        $region17: #{_lambda_.6} parent=11 // pred_check
          %p196 = pneg %p94
        $region18: #{_lambda_.6} parent=11 // pred_check_branch
          %198 = sbr.rel (%p196) target = $region20
        $region19: #{_lambda_.6} parent=11 // pred_region
          _
        $region20: #{_lambda_.6} parent=11 // pred_fallthru
          _
      $region12: #{_lambda_.6} parent=5 // pred_fallthru
        _
      %p199 = scmp.lt.s32.totalorder %s12, 4
      // Predicated region
      $region21: #{_lambda_.6} parent=5 // pred_check
        %p200 = pneg %p199
      $region22: #{_lambda_.6} parent=5 // pred_check_branch
        %202 = sbr.rel (%p200) target = $region24
      $region23: #{_lambda_.6} parent=5 // pred_region
        // Predicated region
        $region25: #{_lambda_.6} parent=23 // pred_check
          %p203 = pneg %p46
        $region26: #{_lambda_.6} parent=23 // pred_check_branch
          %205 = sbr.rel (%p203) target = $region28
        $region27: #{_lambda_.6} parent=23 // pred_region
          %s206 = smul.u32 8, %s20
          %p207 = scmp.lt.s32.totalorder %s19, 1
          %s208 = scalar_select %p207, %s19, 1
          %p209 = scmp.lt.s32.totalorder %s206, 15
          %s210 = scalar_select %p209, %s206, 15
          %s211 = smul.addr %s208, 16
          %s212 = sadd.s32 %s210, %s211
          %s213 = smul.addr %s212, 8
          %s214 = scalar_lea.vmem %s0, %s213
          %s215 = smul.u32 8, %s20
        $region28: #{_lambda_.6} parent=23 // pred_fallthru
          _
      $region24: #{_lambda_.6} parent=5 // pred_fallthru
        _
      %p216 = scmp.le.s32.totalorder 1, %s12
      %p217 = scmp.lt.s32.totalorder %s12, 5
      %p218 = pnand %p216, %p217
      %p219 = pneg %p218
      // Predicated region
      $region29: #{_lambda_.6} parent=5 // pred_check
        _
      $region30: #{_lambda_.6} parent=5 // pred_check_branch
        %221 = sbr.rel (%p218) target = $region32
      $region31: #{_lambda_.6} parent=5 // pred_region
        %s222 = ssub.s32 %s12, 1
        %s223 = smul.u32 8, %s22
        %p224 = scmp.lt.s32.totalorder %s21, 1
        %s225 = scalar_select %p224, %s21, 1
        %p226 = scmp.lt.s32.totalorder %s223, 15
        %s227 = scalar_select %p226, %s223, 15
        %s228 = smul.addr %s225, 16
        %s229 = sadd.s32 %s227, %s228
        %s230 = smul.addr %s229, 8
        %s231 = scalar_lea.vmem %s0, %s230
        %p232 = pneg %p52
        %p233 = pneg %p49
        %p234 = pneg %p73
        %p235 = pneg %p70
        %p236 = pneg %p94
        %p237 = pneg %p91
        %p238 = pneg %p122
        %p239 = pneg %p119
        %s240 = sand.u32 %s109, 1
        %s241 = sand.u32 %s109, 1
        %s242 = smul.addr %s241, 64
        %s243 = scalar_lea.vmem [#allocation2], %s242
        %p244 = pneg %p150
        %p245 = pneg %p147
        %s246 = sand.u32 %s137, 1
        %s247 = sand.u32 %s137, 1
        %s248 = smul.addr %s247, 64
        %s249 = scalar_lea.vmem [#allocation3], %s248
        %p250 = pneg %p178
        %p251 = pneg %p175
        %s252 = sand.u32 %s165, 1
        %s253 = sand.u32 %s165, 1
        %s254 = smul.addr %s253, 64
        %s255 = scalar_lea.vmem [#allocation4], %s254
        %s256 = smul.u32 8, %s22
        %p257 = scmp.lt.s32.totalorder %s21, 1
        %s258 = scalar_select %p257, %s21, 1
        %p259 = scmp.lt.s32.totalorder %s256, 15
        %s260 = scalar_select %p259, %s256, 15
        %s261 = smul.addr %s258, 16
        %s262 = sadd.s32 %s260, %s261
        %s263 = smul.addr %s262, 8
        %s264 = scalar_lea.vmem %s0, %s263
        %s265 = smul.u32 8, %s22
        %s266 = smul.u32 8, %s22
        %s267 = smul.u32 8, %s22
        %s268 = smul.u32 8, %s22
        %v270 = vld [vmem:[%s264] sm:$0xff]
        %v271 = vld [vmem:[%s264 + $0x8] sm:$0xff]
        %v272 = vld [vmem:[%s264 + $0x10] sm:$0xff]
        %v273 = vld [vmem:[%s264 + $0x18] sm:$0xff]
        %v274 = vld [vmem:[%s264 + $0x20] sm:$0xff]
        %v275 = vld [vmem:[%s264 + $0x28] sm:$0xff]
        %v276 = vld [vmem:[%s264 + $0x30] sm:$0xff]
        %v277 = vld [vmem:[%s264 + $0x38] sm:$0xff]
        %v278 = vld [vmem:[%s1] sm:$0x1]
        %279 = vadd.xlane.f32.xlu0 %v270
        %v280 = vpop.xlane.xlu0 %279
        %281 = vadd.xlane.f32.xlu0 %v271
        %v282 = vpop.xlane.xlu0 %281
        %283 = vadd.xlane.f32.xlu0 %v272
        %v284 = vpop.xlane.xlu0 %283
        %285 = vadd.xlane.f32.xlu0 %v273
        %v286 = vpop.xlane.xlu0 %285
        %287 = vadd.xlane.f32.xlu0 %v274
        %v288 = vpop.xlane.xlu0 %287
        %289 = vadd.xlane.f32.xlu0 %v275
        %v290 = vpop.xlane.xlu0 %289
        %291 = vadd.xlane.f32.xlu0 %v276
        %v292 = vpop.xlane.xlu0 %291
        %293 = vadd.xlane.f32.xlu0 %v277
        %v294 = vpop.xlane.xlu0 %293
        %v295 = vrcp.pop 128.0
        %v296 = vmul.f32 %v280, %v295
        %v297 = vmul.f32 %v282, %v295
        %v298 = vmul.f32 %v284, %v295
        %v299 = vmul.f32 %v286, %v295
        %v300 = vmul.f32 %v288, %v295
        %v301 = vmul.f32 %v290, %v295
        %v302 = vmul.f32 %v292, %v295
        %v303 = vmul.f32 %v294, %v295
        %v304 = vsub.f32 %v270, %v296
        %v305 = vsub.f32 %v271, %v297
        %v306 = vsub.f32 %v272, %v298
        %v307 = vsub.f32 %v273, %v299
        %v308 = vsub.f32 %v274, %v300
        %v309 = vsub.f32 %v275, %v301
        %v310 = vsub.f32 %v276, %v302
        %v311 = vsub.f32 %v277, %v303
        %v312 = vmul.f32 %v304, %v304
        %v313 = vmul.f32 %v305, %v305
        %v314 = vmul.f32 %v306, %v306
        %v315 = vmul.f32 %v307, %v307
        %v316 = vmul.f32 %v308, %v308
        %v317 = vmul.f32 %v309, %v309
        %v318 = vmul.f32 %v310, %v310
        %v319 = vmul.f32 %v311, %v311
        %320 = vadd.xlane.f32.xlu0 %v312
        %v321 = vpop.xlane.xlu0 %320
        %322 = vadd.xlane.f32.xlu0 %v313
        %v323 = vpop.xlane.xlu0 %322
        %324 = vadd.xlane.f32.xlu0 %v314
        %v325 = vpop.xlane.xlu0 %324
        %326 = vadd.xlane.f32.xlu0 %v315
        %v327 = vpop.xlane.xlu0 %326
        %328 = vadd.xlane.f32.xlu0 %v316
        %v329 = vpop.xlane.xlu0 %328
        %330 = vadd.xlane.f32.xlu0 %v317
        %v331 = vpop.xlane.xlu0 %330
        %332 = vadd.xlane.f32.xlu0 %v318
        %v333 = vpop.xlane.xlu0 %332
        %334 = vadd.xlane.f32.xlu0 %v319
        %v335 = vpop.xlane.xlu0 %334
        %v336 = vmul.f32 %v321, %v295
        %v337 = vmul.f32 %v323, %v295
        %v338 = vmul.f32 %v325, %v295
        %v339 = vmul.f32 %v327, %v295
        %v340 = vmul.f32 %v329, %v295
        %v341 = vmul.f32 %v331, %v295
        %v342 = vmul.f32 %v333, %v295
        %v343 = vmul.f32 %v335, %v295
        %v344 = vadd.f32 %v336, 1e-05
        %v345 = vadd.f32 %v337, 1e-05
        %v346 = vadd.f32 %v338, 1e-05
        %v347 = vadd.f32 %v339, 1e-05
        %v348 = vadd.f32 %v340, 1e-05
        %v349 = vadd.f32 %v341, 1e-05
        %v350 = vadd.f32 %v342, 1e-05
        %v351 = vadd.f32 %v343, 1e-05
        %v352 = vrsqrt.pop %v344
        %v353 = vrsqrt.pop %v345
        %v354 = vrsqrt.pop %v346
        %v355 = vrsqrt.pop %v347
        %v356 = vrsqrt.pop %v348
        %v357 = vrsqrt.pop %v349
        %v358 = vrsqrt.pop %v350
        %v359 = vrsqrt.pop %v351
        %v360 = vmul.f32 %v304, %v352
        %v361 = vmul.f32 %v305, %v353
        %v362 = vmul.f32 %v306, %v354
        %v363 = vmul.f32 %v307, %v355
        %v364 = vmul.f32 %v308, %v356
        %v365 = vmul.f32 %v309, %v357
        %v366 = vmul.f32 %v310, %v358
        %v367 = vmul.f32 %v311, %v359
        %v369 = vlaneseq
        %v370 = vshrl.u32 %v369, 7
        %v371 = vsub.s32 0, %v370
        %v372 = vrot.slane %v278, %v371
        %v374 = vmul.f32 %v360, %v372
        %v375 = vmul.f32 %v361, %v372
        %v376 = vmul.f32 %v362, %v372
        %v377 = vmul.f32 %v363, %v372
        %v378 = vmul.f32 %v364, %v372
        %v379 = vmul.f32 %v365, %v372
        %v380 = vmul.f32 %v366, %v372
        %v381 = vmul.f32 %v367, %v372
        %v382 = vpack.c.bf16 %v375, %v374
        %v383 = vpack.c.bf16 %v377, %v376
        %v384 = vpack.c.bf16 %v379, %v378
        %v385 = vpack.c.bf16 %v381, %v380
        %v386 = vld [vmem:[%s2] sm:$0xff]
        %v387 = vld [vmem:[%s2 + $0x8] sm:$0xf]
        %v388 = vld [vmem:[%s2 + $0xc] sm:$0xff]
        %v389 = vld [vmem:[%s2 + $0x14] sm:$0xf]
        %v390 = vld [vmem:[%s2 + $0x18] sm:$0xff]
        %v391 = vld [vmem:[%s2 + $0x20] sm:$0xf]
        %v392 = vld [vmem:[%s2 + $0x24] sm:$0xff]
        %v393 = vld [vmem:[%s2 + $0x2c] sm:$0xf]
        %v394 = vld [vmem:[%s2 + $0x30] sm:$0xff]
        %v395 = vld [vmem:[%s2 + $0x38] sm:$0xf]
        %v396 = vld [vmem:[%s2 + $0x3c] sm:$0xff]
        %v397 = vld [vmem:[%s2 + $0x44] sm:$0xf]
        %v398 = vld [vmem:[%s2 + $0x48] sm:$0xff]
        %v399 = vld [vmem:[%s2 + $0x50] sm:$0xf]
        %v400 = vld [vmem:[%s2 + $0x54] sm:$0xff]
        %v401 = vld [vmem:[%s2 + $0x5c] sm:$0xf]
        %v402 = vld [vmem:[%s2 + $0x60] sm:$0xff]
        %v403 = vld [vmem:[%s2 + $0x68] sm:$0xf]
        %v404 = vld [vmem:[%s2 + $0x6c] sm:$0xff]
        %v405 = vld [vmem:[%s2 + $0x74] sm:$0xf]
        %v406 = vld [vmem:[%s2 + $0x78] sm:$0xff]
        %v407 = vld [vmem:[%s2 + $0x80] sm:$0xf]
        %v408 = vld [vmem:[%s2 + $0x84] sm:$0xff]
        %v409 = vld [vmem:[%s2 + $0x8c] sm:$0xf]
        %v410 = vld [vmem:[%s2 + $0x90] sm:$0xff]
        %v411 = vld [vmem:[%s2 + $0x98] sm:$0xf]
        %v412 = vld [vmem:[%s2 + $0x9c] sm:$0xff]
        %v413 = vld [vmem:[%s2 + $0xa4] sm:$0xf]
        %v414 = vld [vmem:[%s2 + $0xa8] sm:$0xff]
        %v415 = vld [vmem:[%s2 + $0xb0] sm:$0xf]
        %v416 = vld [vmem:[%s2 + $0xb4] sm:$0xff]
        %v417 = vld [vmem:[%s2 + $0xbc] sm:$0xf]
        %v450 = vunpack.c.l.b16 %v386
        %v451 = vunpack.c.h.b16 %v386
        %v452 = vunpack.c.l.b16 %v387
        %v453 = vunpack.c.l.b16 %v388
        %v454 = vunpack.c.h.b16 %v388
        %v455 = vunpack.c.l.b16 %v389
        %v456 = vunpack.c.l.b16 %v390
        %v457 = vunpack.c.h.b16 %v390
        %v458 = vunpack.c.l.b16 %v391
        %v459 = vunpack.c.l.b16 %v392
        %v460 = vunpack.c.h.b16 %v392
        %v461 = vunpack.c.l.b16 %v393
        %v462 = vunpack.c.l.b16 %v394
        %v463 = vunpack.c.h.b16 %v394
        %v464 = vunpack.c.l.b16 %v395
        %v465 = vunpack.c.l.b16 %v396
        %v466 = vunpack.c.h.b16 %v396
        %v467 = vunpack.c.l.b16 %v397
        %v468 = vunpack.c.l.b16 %v398
        %v469 = vunpack.c.h.b16 %v398
        %v470 = vunpack.c.l.b16 %v399
        %v471 = vunpack.c.l.b16 %v400
        %v472 = vunpack.c.h.b16 %v400
        %v473 = vunpack.c.l.b16 %v401
        %v474 = vunpack.c.l.b16 %v402
        %v475 = vunpack.c.h.b16 %v402
        %v476 = vunpack.c.l.b16 %v403
        %v477 = vunpack.c.l.b16 %v404
        %v478 = vunpack.c.h.b16 %v404
        %v479 = vunpack.c.l.b16 %v405
        %v480 = vunpack.c.l.b16 %v406
        %v481 = vunpack.c.h.b16 %v406
        %v482 = vunpack.c.l.b16 %v407
        %v483 = vunpack.c.l.b16 %v408
        %v484 = vunpack.c.h.b16 %v408
        %v485 = vunpack.c.l.b16 %v409
        %v486 = vunpack.c.l.b16 %v410
        %v487 = vunpack.c.h.b16 %v410
        %v488 = vunpack.c.l.b16 %v411
        %v489 = vunpack.c.l.b16 %v412
        %v490 = vunpack.c.h.b16 %v412
        %v491 = vunpack.c.l.b16 %v413
        %v492 = vunpack.c.l.b16 %v414
        %v493 = vunpack.c.h.b16 %v414
        %v494 = vunpack.c.l.b16 %v415
        %v495 = vunpack.c.l.b16 %v416
        %v496 = vunpack.c.h.b16 %v416
        %v497 = vunpack.c.l.b16 %v417
        %v498 = vpack.c.b16 %v453, %v450
        %v499 = vpack.c.b16 %v454, %v451
        %v500 = vpack.c.b16 %v455, %v452
        %v501 = vpack.c.b16 %v459, %v456
        %v502 = vpack.c.b16 %v460, %v457
        %v503 = vpack.c.b16 %v461, %v458
        %v504 = vpack.c.b16 %v465, %v462
        %v505 = vpack.c.b16 %v466, %v463
        %v506 = vpack.c.b16 %v467, %v464
        %v507 = vpack.c.b16 %v471, %v468
        %v508 = vpack.c.b16 %v472, %v469
        %v509 = vpack.c.b16 %v473, %v470
        %v510 = vpack.c.b16 %v477, %v474
        %v511 = vpack.c.b16 %v478, %v475
        %v512 = vpack.c.b16 %v479, %v476
        %v513 = vpack.c.b16 %v483, %v480
        %v514 = vpack.c.b16 %v484, %v481
        %v515 = vpack.c.b16 %v485, %v482
        %v516 = vpack.c.b16 %v489, %v486
        %v517 = vpack.c.b16 %v490, %v487
        %v518 = vpack.c.b16 %v491, %v488
        %v519 = vpack.c.b16 %v495, %v492
        %v520 = vpack.c.b16 %v496, %v493
        %v521 = vpack.c.b16 %v497, %v494
        %546 = vmatprep.subr.bf16.mxu0 %v499
        %547 = vmatpush1.bf16.msra.mxu0 %v498
        %548 = vmatprep.subr.bf16.mxu0 %v502
        %549 = vmatpush1.bf16.msra.mxu0 %v501
        %550 = vmatprep.subr.bf16.mxu0 %v505
        %551 = vmatpush1.bf16.msra.mxu0 %v504
        %552 = vmatprep.subr.bf16.mxu0 %v508
        %553 = vmatpush1.bf16.msra.mxu0 %v507
        %554 = vmatprep.subr.bf16.mxu0 %v511
        %555 = vmatpush1.bf16.msra.mxu0 %v510
        %556 = vmatprep.subr.bf16.mxu0 %v514
        %557 = vmatpush1.bf16.msra.mxu0 %v513
        %558 = vmatprep.subr.bf16.mxu0 %v517
        %559 = vmatpush1.bf16.msra.mxu0 %v516
        %560 = vmatprep.subr.bf16.mxu0 %v520
        %561 = vmatpush1.bf16.msra.mxu0 %v519
        %562 = vmatprep.subr.bf16.mxu0 0
        %563 = vmatpush1.bf16.msra.mxu0 0
        %564 = vmatprep.subr.bf16.mxu0 0
        %565 = vmatpush1.bf16.msra.mxu0 0
        %566 = vmatprep.subr.bf16.mxu0 0
        %567 = vmatpush1.bf16.msra.mxu0 0
        %568 = vmatprep.subr.bf16.mxu0 0
        %569 = vmatpush1.bf16.msra.mxu0 0
        %570 = vmatprep.subr.bf16.mxu0 0
        %571 = vmatpush1.bf16.msra.mxu0 0
        %572 = vmatprep.subr.bf16.mxu0 0
        %573 = vmatpush1.bf16.msra.mxu0 0
        %574 = vmatprep.subr.bf16.mxu0 0
        %575 = vmatpush1.bf16.msra.mxu0 0
        %576 = vmatprep.subr.bf16.mxu0 0
        %577 = vmatpush1.bf16.msra.mxu0 0
        %578 = vmatprep.mubr.bf16.mxu0 0
        %579 = vmatmul.mubr.bf16.gmra.mrb[0].mxu0 %v382
        %v580 = vpop.f32.mrb[0].mxu0
        %v581 = vadd.f32 0.0, %v580
        %v582 = vpop.f32.mrb[0].mxu0
        %v583 = vadd.f32 0.0, %v582
        %v584 = vpop.f32.mrb[0].mxu0
        %v585 = vadd.f32 0.0, %v584
        %v586 = vpop.f32.mrb[0].mxu0
        %v587 = vadd.f32 0.0, %v586
        %588 = vmatprep.mubr.bf16.mxu0 0
        %589 = vmatmul.mubr.bf16.gmra.mrb[0].mxu0 %v383
        %v590 = vpop.f32.mrb[0].mxu0
        %v591 = vadd.f32 0.0, %v590
        %v592 = vpop.f32.mrb[0].mxu0
        %v593 = vadd.f32 0.0, %v592
        %v594 = vpop.f32.mrb[0].mxu0
        %v595 = vadd.f32 0.0, %v594
        %v596 = vpop.f32.mrb[0].mxu0
        %v597 = vadd.f32 0.0, %v596
        %598 = vmatprep.mubr.bf16.mxu0 0
        %599 = vmatmul.mubr.bf16.gmra.mrb[0].mxu0 %v384
        %v600 = vpop.f32.mrb[0].mxu0
        %v601 = vadd.f32 0.0, %v600
        %v602 = vpop.f32.mrb[0].mxu0
        %v603 = vadd.f32 0.0, %v602
        %v604 = vpop.f32.mrb[0].mxu0
        %v605 = vadd.f32 0.0, %v604
        %v606 = vpop.f32.mrb[0].mxu0
        %v607 = vadd.f32 0.0, %v606
        %608 = vmatprep.mubr.bf16.mxu0 0
        %609 = vmatmul.mubr.bf16.gmra.mrb[0].mxu0 %v385
        %v610 = vpop.f32.mrb[0].mxu0
        %v611 = vadd.f32 0.0, %v610
        %v612 = vpop.f32.mrb[0].mxu0
        %v613 = vadd.f32 0.0, %v612
        %v614 = vpop.f32.mrb[0].mxu0
        %v615 = vadd.f32 0.0, %v614
        %v616 = vpop.f32.mrb[0].mxu0
        %v617 = vadd.f32 0.0, %v616
        %618 = vdwg.mxu0
        %619 = vmatprep.subr.bf16.mxu0 0
        %620 = vmatpush1.bf16.msra.mxu0 %v500
        %621 = vmatprep.subr.bf16.mxu0 0
        %622 = vmatpush1.bf16.msra.mxu0 %v503
        %623 = vmatprep.subr.bf16.mxu0 0
        %624 = vmatpush1.bf16.msra.mxu0 %v506
        %625 = vmatprep.subr.bf16.mxu0 0
        %626 = vmatpush1.bf16.msra.mxu0 %v509
        %627 = vmatprep.subr.bf16.mxu0 0
        %628 = vmatpush1.bf16.msra.mxu0 %v512
        %629 = vmatprep.subr.bf16.mxu0 0
        %630 = vmatpush1.bf16.msra.mxu0 %v515
        %631 = vmatprep.subr.bf16.mxu0 0
        %632 = vmatpush1.bf16.msra.mxu0 %v518
        %633 = vmatprep.subr.bf16.mxu0 0
        %634 = vmatpush1.bf16.msra.mxu0 %v521
        %635 = vmatprep.subr.bf16.mxu0 0
        %636 = vmatpush1.bf16.msra.mxu0 0
        %637 = vmatprep.subr.bf16.mxu0 0
        %638 = vmatpush1.bf16.msra.mxu0 0
        %639 = vmatprep.subr.bf16.mxu0 0
        %640 = vmatpush1.bf16.msra.mxu0 0
        %641 = vmatprep.subr.bf16.mxu0 0
        %642 = vmatpush1.bf16.msra.mxu0 0
        %643 = vmatprep.subr.bf16.mxu0 0
        %644 = vmatpush1.bf16.msra.mxu0 0
        %645 = vmatprep.subr.bf16.mxu0 0
        %646 = vmatpush1.bf16.msra.mxu0 0
        %647 = vmatprep.subr.bf16.mxu0 0
        %648 = vmatpush1.bf16.msra.mxu0 0
        %649 = vmatprep.subr.bf16.mxu0 0
        %650 = vmatpush1.bf16.msra.mxu0 0
        %651 = vmatprep.mubr.bf16.mxu0 0
        %652 = vmatmul.mubr.bf16.gmra.mrb[0].mxu0 %v382
        %v653 = vpop.f32.mrb[0].mxu0
        %v654 = vadd.f32 0.0, %v653
        %v655 = vpop.f32.mrb[0].mxu0
        %v656 = vpop.f32.mrb[0].mxu0
        %v657 = vadd.f32 0.0, %v656
        %v658 = vpop.f32.mrb[0].mxu0
        %659 = vmatprep.mubr.bf16.mxu0 0
        %660 = vmatmul.mubr.bf16.gmra.mrb[0].mxu0 %v383
        %v661 = vpop.f32.mrb[0].mxu0
        %v662 = vadd.f32 0.0, %v661
        %v663 = vpop.f32.mrb[0].mxu0
        %v664 = vpop.f32.mrb[0].mxu0
        %v665 = vadd.f32 0.0, %v664
        %v666 = vpop.f32.mrb[0].mxu0
        %667 = vmatprep.mubr.bf16.mxu0 0
        %668 = vmatmul.mubr.bf16.gmra.mrb[0].mxu0 %v384
        %v669 = vpop.f32.mrb[0].mxu0
        %v670 = vadd.f32 0.0, %v669
        %v671 = vpop.f32.mrb[0].mxu0
        %v672 = vpop.f32.mrb[0].mxu0
        %v673 = vadd.f32 0.0, %v672
        %v674 = vpop.f32.mrb[0].mxu0
        %675 = vmatprep.mubr.bf16.mxu0 0
        %676 = vmatmul.mubr.bf16.gmra.mrb[0].mxu0 %v385
        %v677 = vpop.f32.mrb[0].mxu0
        %v678 = vadd.f32 0.0, %v677
        %v679 = vpop.f32.mrb[0].mxu0
        %v680 = vpop.f32.mrb[0].mxu0
        %v681 = vadd.f32 0.0, %v680
        %v682 = vpop.f32.mrb[0].mxu0
        %683 = vdwg.mxu0
        %v684 = vpack.c.bf16 %v585, %v581
        %v685 = vpack.c.bf16 %v587, %v583
        %v686 = vpack.c.bf16 %v657, %v654
        %v687 = vpack.c.bf16 %v595, %v591
        %v688 = vpack.c.bf16 %v597, %v593
        %v689 = vpack.c.bf16 %v665, %v662
        %v690 = vpack.c.bf16 %v605, %v601
        %v691 = vpack.c.bf16 %v607, %v603
        %v692 = vpack.c.bf16 %v673, %v670
        %v693 = vpack.c.bf16 %v615, %v611
        %v694 = vpack.c.bf16 %v617, %v613
        %v695 = vpack.c.bf16 %v681, %v678
        %v700 = vunpack.c.l.b16 %v684
        %v701 = vunpack.c.h.b16 %v684
        %v702 = vunpack.c.l.b16 %v687
        %v703 = vunpack.c.h.b16 %v687
        %v704 = vunpack.c.l.b16 %v690
        %v705 = vunpack.c.h.b16 %v690
        %v706 = vunpack.c.l.b16 %v693
        %v707 = vunpack.c.h.b16 %v693
        %v708 = vpack.c.b16 %v700, %v700
        %v709 = vpack.c.b16 %v701, %v701
        %v710 = vpack.c.b16 %v702, %v702
        %v711 = vpack.c.b16 %v703, %v703
        %v712 = vpack.c.b16 %v704, %v704
        %v713 = vpack.c.b16 %v705, %v705
        %v714 = vpack.c.b16 %v706, %v706
        %v715 = vpack.c.b16 %v707, %v707
        %vm724 = vcmask 519168
        %725 = vst.msk [vmem:[%s243] sm:$0xf] %vm724, %v708
        %726 = vst.msk [vmem:[%s243 + $0x4] sm:$0xf] %vm724, %v709
        %727 = vst.msk [vmem:[%s243 + $0x8] sm:$0xf] %vm724, %v710
        %728 = vst.msk [vmem:[%s243 + $0xc] sm:$0xf] %vm724, %v711
        %729 = vst.msk [vmem:[%s243 + $0x10] sm:$0xf] %vm724, %v712
        %730 = vst.msk [vmem:[%s243 + $0x14] sm:$0xf] %vm724, %v713
        %731 = vst.msk [vmem:[%s243 + $0x18] sm:$0xf] %vm724, %v714
        %732 = vst.msk [vmem:[%s243 + $0x1c] sm:$0xf] %vm724, %v715
        %v737 = vunpack.c.l.b16 %v685
        %v738 = vunpack.c.h.b16 %v685
        %v739 = vunpack.c.l.b16 %v688
        %v740 = vunpack.c.h.b16 %v688
        %v741 = vunpack.c.l.b16 %v691
        %v742 = vunpack.c.h.b16 %v691
        %v743 = vunpack.c.l.b16 %v694
        %v744 = vunpack.c.h.b16 %v694
        %v745 = vpack.c.b16 %v737, %v737
        %v746 = vpack.c.b16 %v738, %v738
        %v747 = vpack.c.b16 %v739, %v739
        %v748 = vpack.c.b16 %v740, %v740
        %v749 = vpack.c.b16 %v741, %v741
        %v750 = vpack.c.b16 %v742, %v742
        %v751 = vpack.c.b16 %v743, %v743
        %v752 = vpack.c.b16 %v744, %v744
        %761 = vst.msk [vmem:[%s249] sm:$0xf] %vm724, %v745
        %762 = vst.msk [vmem:[%s249 + $0x4] sm:$0xf] %vm724, %v746
        %763 = vst.msk [vmem:[%s249 + $0x8] sm:$0xf] %vm724, %v747
        %764 = vst.msk [vmem:[%s249 + $0xc] sm:$0xf] %vm724, %v748
        %765 = vst.msk [vmem:[%s249 + $0x10] sm:$0xf] %vm724, %v749
        %766 = vst.msk [vmem:[%s249 + $0x14] sm:$0xf] %vm724, %v750
        %767 = vst.msk [vmem:[%s249 + $0x18] sm:$0xf] %vm724, %v751
        %768 = vst.msk [vmem:[%s249 + $0x1c] sm:$0xf] %vm724, %v752
        %v773 = vunpack.c.l.b16 %v686
        %v774 = vunpack.c.h.b16 %v686
        %v775 = vunpack.c.l.b16 %v689
        %v776 = vunpack.c.h.b16 %v689
        %v777 = vunpack.c.l.b16 %v692
        %v778 = vunpack.c.h.b16 %v692
        %v779 = vunpack.c.l.b16 %v695
        %v780 = vunpack.c.h.b16 %v695
        %v781 = vpack.c.b16 %v773, %v773
        %v782 = vpack.c.b16 %v774, %v774
        %v783 = vpack.c.b16 %v775, %v775
        %v784 = vpack.c.b16 %v776, %v776
        %v785 = vpack.c.b16 %v777, %v777
        %v786 = vpack.c.b16 %v778, %v778
        %v787 = vpack.c.b16 %v779, %v779
        %v788 = vpack.c.b16 %v780, %v780
        %797 = vst.msk [vmem:[%s255] sm:$0xf] %vm724, %v781
        %798 = vst.msk [vmem:[%s255 + $0x4] sm:$0xf] %vm724, %v782
        %799 = vst.msk [vmem:[%s255 + $0x8] sm:$0xf] %vm724, %v783
        %800 = vst.msk [vmem:[%s255 + $0xc] sm:$0xf] %vm724, %v784
        %801 = vst.msk [vmem:[%s255 + $0x10] sm:$0xf] %vm724, %v785
        %802 = vst.msk [vmem:[%s255 + $0x14] sm:$0xf] %vm724, %v786
        %803 = vst.msk [vmem:[%s255 + $0x18] sm:$0xf] %vm724, %v787
        %804 = vst.msk [vmem:[%s255 + $0x1c] sm:$0xf] %vm724, %v788
        %805 = vrot.lane.b32.xlu0 %v708, 64
        %v806 = vpop.permute.xlu0 %805
        %807 = vrot.lane.b32.xlu0 %v709, 64
        %v808 = vpop.permute.xlu0 %807
        %809 = vrot.lane.b32.xlu0 %v710, 64
        %v810 = vpop.permute.xlu0 %809
        %811 = vrot.lane.b32.xlu0 %v711, 64
        %v812 = vpop.permute.xlu0 %811
        %813 = vrot.lane.b32.xlu0 %v712, 64
        %v814 = vpop.permute.xlu0 %813
        %815 = vrot.lane.b32.xlu0 %v713, 64
        %v816 = vpop.permute.xlu0 %815
        %817 = vrot.lane.b32.xlu0 %v714, 64
        %v818 = vpop.permute.xlu0 %817
        %819 = vrot.lane.b32.xlu0 %v715, 64
        %v820 = vpop.permute.xlu0 %819
        %s829 = scalar_lea.vmem %s243, 32 [#allocation2]
        %830 = vst.msk [vmem:[%s829] sm:$0xf] %vm724, %v806
        %831 = vst.msk [vmem:[%s829 + $0x4] sm:$0xf] %vm724, %v808
        %832 = vst.msk [vmem:[%s829 + $0x8] sm:$0xf] %vm724, %v810
        %833 = vst.msk [vmem:[%s829 + $0xc] sm:$0xf] %vm724, %v812
        %834 = vst.msk [vmem:[%s829 + $0x10] sm:$0xf] %vm724, %v814
        %835 = vst.msk [vmem:[%s829 + $0x14] sm:$0xf] %vm724, %v816
        %836 = vst.msk [vmem:[%s829 + $0x18] sm:$0xf] %vm724, %v818
        %837 = vst.msk [vmem:[%s829 + $0x1c] sm:$0xf] %vm724, %v820
        %838 = vrot.lane.b32.xlu0 %v745, 64
        %v839 = vpop.permute.xlu0 %838
        %840 = vrot.lane.b32.xlu0 %v746, 64
        %v841 = vpop.permute.xlu0 %840
        %842 = vrot.lane.b32.xlu0 %v747, 64
        %v843 = vpop.permute.xlu0 %842
        %844 = vrot.lane.b32.xlu0 %v748, 64
        %v845 = vpop.permute.xlu0 %844
        %846 = vrot.lane.b32.xlu0 %v749, 64
        %v847 = vpop.permute.xlu0 %846
        %848 = vrot.lane.b32.xlu0 %v750, 64
        %v849 = vpop.permute.xlu0 %848
        %850 = vrot.lane.b32.xlu0 %v751, 64
        %v851 = vpop.permute.xlu0 %850
        %852 = vrot.lane.b32.xlu0 %v752, 64
        %v853 = vpop.permute.xlu0 %852
        %s862 = scalar_lea.vmem %s249, 32 [#allocation3]
        %863 = vst.msk [vmem:[%s862] sm:$0xf] %vm724, %v839
        %864 = vst.msk [vmem:[%s862 + $0x4] sm:$0xf] %vm724, %v841
        %865 = vst.msk [vmem:[%s862 + $0x8] sm:$0xf] %vm724, %v843
        %866 = vst.msk [vmem:[%s862 + $0xc] sm:$0xf] %vm724, %v845
        %867 = vst.msk [vmem:[%s862 + $0x10] sm:$0xf] %vm724, %v847
        %868 = vst.msk [vmem:[%s862 + $0x14] sm:$0xf] %vm724, %v849
        %869 = vst.msk [vmem:[%s862 + $0x18] sm:$0xf] %vm724, %v851
        %870 = vst.msk [vmem:[%s862 + $0x1c] sm:$0xf] %vm724, %v853
        %871 = vrot.lane.b32.xlu0 %v781, 64
        %v872 = vpop.permute.xlu0 %871
        %873 = vrot.lane.b32.xlu0 %v782, 64
        %v874 = vpop.permute.xlu0 %873
        %875 = vrot.lane.b32.xlu0 %v783, 64
        %v876 = vpop.permute.xlu0 %875
        %877 = vrot.lane.b32.xlu0 %v784, 64
        %v878 = vpop.permute.xlu0 %877
        %879 = vrot.lane.b32.xlu0 %v785, 64
        %v880 = vpop.permute.xlu0 %879
        %881 = vrot.lane.b32.xlu0 %v786, 64
        %v882 = vpop.permute.xlu0 %881
        %883 = vrot.lane.b32.xlu0 %v787, 64
        %v884 = vpop.permute.xlu0 %883
        %885 = vrot.lane.b32.xlu0 %v788, 64
        %v886 = vpop.permute.xlu0 %885
        %s895 = scalar_lea.vmem %s255, 32 [#allocation4]
        %896 = vst.msk [vmem:[%s895] sm:$0xf] %vm724, %v872
        %897 = vst.msk [vmem:[%s895 + $0x4] sm:$0xf] %vm724, %v874
        %898 = vst.msk [vmem:[%s895 + $0x8] sm:$0xf] %vm724, %v876
        %899 = vst.msk [vmem:[%s895 + $0xc] sm:$0xf] %vm724, %v878
        %900 = vst.msk [vmem:[%s895 + $0x10] sm:$0xf] %vm724, %v880
        %901 = vst.msk [vmem:[%s895 + $0x14] sm:$0xf] %vm724, %v882
        %902 = vst.msk [vmem:[%s895 + $0x18] sm:$0xf] %vm724, %v884
        %903 = vst.msk [vmem:[%s895 + $0x1c] sm:$0xf] %vm724, %v886
        %s904 = sand.u32 %s109, 1
        %s905 = sand.u32 %s109, 1
        %s906 = smul.addr %s905, 64
        %s907 = scalar_lea.vmem [#allocation2], %s906
        %s908 = sand.u32 %s137, 1
        %s909 = sand.u32 %s137, 1
        %s910 = smul.addr %s909, 64
        %s911 = scalar_lea.vmem [#allocation3], %s910
        %s912 = sand.u32 %s165, 1
        %s913 = sand.u32 %s165, 1
        %s914 = smul.addr %s913, 64
        %s915 = scalar_lea.vmem [#allocation4], %s914
        // Predicated region
        $region33: #{_lambda_.6} parent=31 // pred_check
          %p916 = pneg %p119
        $region34: #{_lambda_.6} parent=31 // pred_check_branch
          %918 = sbr.rel (%p916) target = $region36
        $region35: #{_lambda_.6} parent=31 // pred_region
          %s919 = smul.u32 8, %s22
          %s920 = smul.addr %s21, 32
          %s921 = sadd.s32 %s919, %s920
          %s922 = smul.addr %s921, 4
          %s923 = scalar_lea.vmem %s3, %s922
          // Predicated region
          $region37: #{_lambda_.6} parent=35 // pred_check
            _
          $region38: #{_lambda_.6} parent=35 // pred_check_branch
            %925 = sbr.rel (0) target = $region40
          $region39: #{_lambda_.6} parent=35 // pred_region
            // Predicated region
            $region41: #{_lambda_.6} parent=39 // pred_check
              _
            $region42: #{_lambda_.6} parent=39 // pred_check_branch
              %927 = sbr.rel target = $region44
            $region43: #{_lambda_.6} parent=39 // pred_region
              // Predicated region
              $region56: #{_lambda_.6} parent=43 // pred_check
                _
              $region57: #{_lambda_.6} parent=43 // pred_check_branch
                %972 = sbr.rel (0) target = $region59
              $region58: #{_lambda_.6} parent=43 // pred_region
                loop: start=0, step=1, limit=1
                $region60: #{_lambda_.6} parent=58 // loop_pre_header
                  _
                $region61: #{_lambda_.6} parent=58 // loop_header
                  %s974 = sphi 0, %s978
                  %p975 = scmp.ge.s32.totalorder %s974, 1
                  %s979 = sphi %s907, %s907
                  %s980 = sphi %s923, %s923
                $region62: #{_lambda_.6} parent=58 // loop_header_branch
                  %977 = sbr.rel (%p975) target = $region66
                $region63: #{_lambda_.6} parent=58 // loop_body
                  _
                $region64: #{_lambda_.6} parent=58 // loop_footer
                  %s978 = sadd.s32 1, %s974
                $region65: #{_lambda_.6} parent=58 // loop_footer_branch
                  %973 = sbr.rel target = $region61
                $region66: #{_lambda_.6} parent=58 // loop_exit
                  _
                loop: start=0, step=1, limit=1
                $region67: #{_lambda_.6} parent=58 // loop_pre_header
                  _
                $region68: #{_lambda_.6} parent=58 // loop_header
                  %s983 = sphi 0, %s987
                  %p984 = scmp.ge.s32.totalorder %s983, 1
                  %s988 = sphi %s907, %s907
                  %s989 = sphi %s923, %s923
                $region69: #{_lambda_.6} parent=58 // loop_header_branch
                  %986 = sbr.rel (%p984) target = $region73
                $region70: #{_lambda_.6} parent=58 // loop_body
                  %v990 = vld [vmem:[%s988] sm:$0xf]
                  %991 = vst [vmem:[%s989] sm:$0xf] %v990
                  %v992 = vld [vmem:[%s988 + $0x4] sm:$0xf]
                  %993 = vst [vmem:[%s989 + $0x4] sm:$0xf] %v992
                  %v994 = vld [vmem:[%s988 + $0x8] sm:$0xf]
                  %995 = vst [vmem:[%s989 + $0x8] sm:$0xf] %v994
                  %v996 = vld [vmem:[%s988 + $0xc] sm:$0xf]
                  %997 = vst [vmem:[%s989 + $0xc] sm:$0xf] %v996
                  %v998 = vld [vmem:[%s988 + $0x10] sm:$0xf]
                  %999 = vst [vmem:[%s989 + $0x10] sm:$0xf] %v998
                  %v1000 = vld [vmem:[%s988 + $0x14] sm:$0xf]
                  %1001 = vst [vmem:[%s989 + $0x14] sm:$0xf] %v1000
                  %v1002 = vld [vmem:[%s988 + $0x18] sm:$0xf]
                  %1003 = vst [vmem:[%s989 + $0x18] sm:$0xf] %v1002
                  %v1004 = vld [vmem:[%s988 + $0x1c] sm:$0xf]
                  %1005 = vst [vmem:[%s989 + $0x1c] sm:$0xf] %v1004
                  %v1006 = vld [vmem:[%s988 + $0x20] sm:$0xf]
                  %1007 = vst [vmem:[%s989 + $0x40] sm:$0xf] %v1006
                  %v1008 = vld [vmem:[%s988 + $0x24] sm:$0xf]
                  %1009 = vst [vmem:[%s989 + $0x44] sm:$0xf] %v1008
                  %v1010 = vld [vmem:[%s988 + $0x28] sm:$0xf]
                  %1011 = vst [vmem:[%s989 + $0x48] sm:$0xf] %v1010
                  %v1012 = vld [vmem:[%s988 + $0x2c] sm:$0xf]
                  %1013 = vst [vmem:[%s989 + $0x4c] sm:$0xf] %v1012
                  %v1014 = vld [vmem:[%s988 + $0x30] sm:$0xf]
                  %1015 = vst [vmem:[%s989 + $0x50] sm:$0xf] %v1014
                  %v1016 = vld [vmem:[%s988 + $0x34] sm:$0xf]
                  %1017 = vst [vmem:[%s989 + $0x54] sm:$0xf] %v1016
                  %v1018 = vld [vmem:[%s988 + $0x38] sm:$0xf]
                  %1019 = vst [vmem:[%s989 + $0x58] sm:$0xf] %v1018
                  %v1020 = vld [vmem:[%s988 + $0x3c] sm:$0xf]
                  %1021 = vst [vmem:[%s989 + $0x5c] sm:$0xf] %v1020
                $region71: #{_lambda_.6} parent=58 // loop_footer
                  %s987 = sadd.s32 1, %s983
                $region72: #{_lambda_.6} parent=58 // loop_footer_branch
                  %982 = sbr.rel target = $region68
                $region73: #{_lambda_.6} parent=58 // loop_exit
                  _
              $region59: #{_lambda_.6} parent=43 // pred_fallthru
                _
            $region44: #{_lambda_.6} parent=39 // pred_fallthru
              _
            // Predicated region
            $region45: #{_lambda_.6} parent=39 // pred_check
              _
            $region46: #{_lambda_.6} parent=39 // pred_check_branch
              %929 = sbr.rel (0) target = $region48
            $region47: #{_lambda_.6} parent=39 // pred_region
              loop: start=0, step=1, limit=1
              $region49: #{_lambda_.6} parent=47 // loop_pre_header
                _
              $region50: #{_lambda_.6} parent=47 // loop_header
                %s932 = sphi 0, %s936
                %p933 = scmp.ge.s32.totalorder %s932, 1
                %s937 = sphi %s907, %s907
                %s938 = sphi %s923, %s923
              $region51: #{_lambda_.6} parent=47 // loop_header_branch
                %935 = sbr.rel (%p933) target = $region55
              $region52: #{_lambda_.6} parent=47 // loop_body
                %v939 = vld [vmem:[%s937] sm:$0xf]
                %940 = vst [vmem:[%s938] sm:$0xf] %v939
                %v941 = vld [vmem:[%s937 + $0x4] sm:$0xf]
                %942 = vst [vmem:[%s938 + $0x4] sm:$0xf] %v941
                %v943 = vld [vmem:[%s937 + $0x8] sm:$0xf]
                %944 = vst [vmem:[%s938 + $0x8] sm:$0xf] %v943
                %v945 = vld [vmem:[%s937 + $0xc] sm:$0xf]
                %946 = vst [vmem:[%s938 + $0xc] sm:$0xf] %v945
                %v947 = vld [vmem:[%s937 + $0x10] sm:$0xf]
                %948 = vst [vmem:[%s938 + $0x10] sm:$0xf] %v947
                %v949 = vld [vmem:[%s937 + $0x14] sm:$0xf]
                %950 = vst [vmem:[%s938 + $0x14] sm:$0xf] %v949
                %v951 = vld [vmem:[%s937 + $0x18] sm:$0xf]
                %952 = vst [vmem:[%s938 + $0x18] sm:$0xf] %v951
                %v953 = vld [vmem:[%s937 + $0x1c] sm:$0xf]
                %954 = vst [vmem:[%s938 + $0x1c] sm:$0xf] %v953
                %v955 = vld [vmem:[%s937 + $0x20] sm:$0xf]
                %956 = vst [vmem:[%s938 + $0x40] sm:$0xf] %v955
                %v957 = vld [vmem:[%s937 + $0x24] sm:$0xf]
                %958 = vst [vmem:[%s938 + $0x44] sm:$0xf] %v957
                %v959 = vld [vmem:[%s937 + $0x28] sm:$0xf]
                %960 = vst [vmem:[%s938 + $0x48] sm:$0xf] %v959
                %v961 = vld [vmem:[%s937 + $0x2c] sm:$0xf]
                %962 = vst [vmem:[%s938 + $0x4c] sm:$0xf] %v961
                %v963 = vld [vmem:[%s937 + $0x30] sm:$0xf]
                %964 = vst [vmem:[%s938 + $0x50] sm:$0xf] %v963
                %v965 = vld [vmem:[%s937 + $0x34] sm:$0xf]
                %966 = vst [vmem:[%s938 + $0x54] sm:$0xf] %v965
                %v967 = vld [vmem:[%s937 + $0x38] sm:$0xf]
                %968 = vst [vmem:[%s938 + $0x58] sm:$0xf] %v967
                %v969 = vld [vmem:[%s937 + $0x3c] sm:$0xf]
                %970 = vst [vmem:[%s938 + $0x5c] sm:$0xf] %v969
              $region53: #{_lambda_.6} parent=47 // loop_footer
                %s936 = sadd.s32 1, %s932
              $region54: #{_lambda_.6} parent=47 // loop_footer_branch
                %931 = sbr.rel target = $region50
              $region55: #{_lambda_.6} parent=47 // loop_exit
                _
            $region48: #{_lambda_.6} parent=39 // pred_fallthru
              _
          $region40: #{_lambda_.6} parent=35 // pred_fallthru
            _
          %1022 = vnop
        $region36: #{_lambda_.6} parent=31 // pred_fallthru
          _
        // Predicated region
        $region74: #{_lambda_.6} parent=31 // pred_check
          %p1023 = pneg %p147
        $region75: #{_lambda_.6} parent=31 // pred_check_branch
          %1025 = sbr.rel (%p1023) target = $region77
        $region76: #{_lambda_.6} parent=31 // pred_region
          %s1026 = smul.u32 8, %s22
          %s1027 = smul.addr %s21, 32
          %s1028 = sadd.s32 %s1026, %s1027
          %s1029 = smul.addr %s1028, 4
          %s1030 = scalar_lea.vmem %s4, %s1029
          // Predicated region
          $region78: #{_lambda_.6} parent=76 // pred_check
            _
          $region79: #{_lambda_.6} parent=76 // pred_check_branch
            %1032 = sbr.rel (0) target = $region81
          $region80: #{_lambda_.6} parent=76 // pred_region
            // Predicated region
            $region82: #{_lambda_.6} parent=80 // pred_check
              _
            $region83: #{_lambda_.6} parent=80 // pred_check_branch
              %1034 = sbr.rel target = $region85
            $region84: #{_lambda_.6} parent=80 // pred_region
              // Predicated region
              $region97: #{_lambda_.6} parent=84 // pred_check
                _
              $region98: #{_lambda_.6} parent=84 // pred_check_branch
                %1079 = sbr.rel (0) target = $region100
              $region99: #{_lambda_.6} parent=84 // pred_region
                loop: start=0, step=1, limit=1
                $region101: #{_lambda_.6} parent=99 // loop_pre_header
                  _
                $region102: #{_lambda_.6} parent=99 // loop_header
                  %s1081 = sphi 0, %s1085
                  %p1082 = scmp.ge.s32.totalorder %s1081, 1
                  %s1086 = sphi %s911, %s911
                  %s1087 = sphi %s1030, %s1030
                $region103: #{_lambda_.6} parent=99 // loop_header_branch
                  %1084 = sbr.rel (%p1082) target = $region107
                $region104: #{_lambda_.6} parent=99 // loop_body
                  _
                $region105: #{_lambda_.6} parent=99 // loop_footer
                  %s1085 = sadd.s32 1, %s1081
                $region106: #{_lambda_.6} parent=99 // loop_footer_branch
                  %1080 = sbr.rel target = $region102
                $region107: #{_lambda_.6} parent=99 // loop_exit
                  _
                loop: start=0, step=1, limit=1
                $region108: #{_lambda_.6} parent=99 // loop_pre_header
                  _
                $region109: #{_lambda_.6} parent=99 // loop_header
                  %s1090 = sphi 0, %s1094
                  %p1091 = scmp.ge.s32.totalorder %s1090, 1
                  %s1095 = sphi %s911, %s911
                  %s1096 = sphi %s1030, %s1030
                $region110: #{_lambda_.6} parent=99 // loop_header_branch
                  %1093 = sbr.rel (%p1091) target = $region114
                $region111: #{_lambda_.6} parent=99 // loop_body
                  %v1097 = vld [vmem:[%s1095] sm:$0xf]
                  %1098 = vst [vmem:[%s1096] sm:$0xf] %v1097
                  %v1099 = vld [vmem:[%s1095 + $0x4] sm:$0xf]
                  %1100 = vst [vmem:[%s1096 + $0x4] sm:$0xf] %v1099
                  %v1101 = vld [vmem:[%s1095 + $0x8] sm:$0xf]
                  %1102 = vst [vmem:[%s1096 + $0x8] sm:$0xf] %v1101
                  %v1103 = vld [vmem:[%s1095 + $0xc] sm:$0xf]
                  %1104 = vst [vmem:[%s1096 + $0xc] sm:$0xf] %v1103
                  %v1105 = vld [vmem:[%s1095 + $0x10] sm:$0xf]
                  %1106 = vst [vmem:[%s1096 + $0x10] sm:$0xf] %v1105
                  %v1107 = vld [vmem:[%s1095 + $0x14] sm:$0xf]
                  %1108 = vst [vmem:[%s1096 + $0x14] sm:$0xf] %v1107
                  %v1109 = vld [vmem:[%s1095 + $0x18] sm:$0xf]
                  %1110 = vst [vmem:[%s1096 + $0x18] sm:$0xf] %v1109
                  %v1111 = vld [vmem:[%s1095 + $0x1c] sm:$0xf]
                  %1112 = vst [vmem:[%s1096 + $0x1c] sm:$0xf] %v1111
                  %v1113 = vld [vmem:[%s1095 + $0x20] sm:$0xf]
                  %1114 = vst [vmem:[%s1096 + $0x40] sm:$0xf] %v1113
                  %v1115 = vld [vmem:[%s1095 + $0x24] sm:$0xf]
                  %1116 = vst [vmem:[%s1096 + $0x44] sm:$0xf] %v1115
                  %v1117 = vld [vmem:[%s1095 + $0x28] sm:$0xf]
                  %1118 = vst [vmem:[%s1096 + $0x48] sm:$0xf] %v1117
                  %v1119 = vld [vmem:[%s1095 + $0x2c] sm:$0xf]
                  %1120 = vst [vmem:[%s1096 + $0x4c] sm:$0xf] %v1119
                  %v1121 = vld [vmem:[%s1095 + $0x30] sm:$0xf]
                  %1122 = vst [vmem:[%s1096 + $0x50] sm:$0xf] %v1121
                  %v1123 = vld [vmem:[%s1095 + $0x34] sm:$0xf]
                  %1124 = vst [vmem:[%s1096 + $0x54] sm:$0xf] %v1123
                  %v1125 = vld [vmem:[%s1095 + $0x38] sm:$0xf]
                  %1126 = vst [vmem:[%s1096 + $0x58] sm:$0xf] %v1125
                  %v1127 = vld [vmem:[%s1095 + $0x3c] sm:$0xf]
                  %1128 = vst [vmem:[%s1096 + $0x5c] sm:$0xf] %v1127
                $region112: #{_lambda_.6} parent=99 // loop_footer
                  %s1094 = sadd.s32 1, %s1090
                $region113: #{_lambda_.6} parent=99 // loop_footer_branch
                  %1089 = sbr.rel target = $region109
                $region114: #{_lambda_.6} parent=99 // loop_exit
                  _
              $region100: #{_lambda_.6} parent=84 // pred_fallthru
                _
            $region85: #{_lambda_.6} parent=80 // pred_fallthru
              _
            // Predicated region
            $region86: #{_lambda_.6} parent=80 // pred_check
              _
            $region87: #{_lambda_.6} parent=80 // pred_check_branch
              %1036 = sbr.rel (0) target = $region89
            $region88: #{_lambda_.6} parent=80 // pred_region
              loop: start=0, step=1, limit=1
              $region90: #{_lambda_.6} parent=88 // loop_pre_header
                _
              $region91: #{_lambda_.6} parent=88 // loop_header
                %s1039 = sphi 0, %s1043
                %p1040 = scmp.ge.s32.totalorder %s1039, 1
                %s1044 = sphi %s911, %s911
                %s1045 = sphi %s1030, %s1030
              $region92: #{_lambda_.6} parent=88 // loop_header_branch
                %1042 = sbr.rel (%p1040) target = $region96
              $region93: #{_lambda_.6} parent=88 // loop_body
                %v1046 = vld [vmem:[%s1044] sm:$0xf]
                %1047 = vst [vmem:[%s1045] sm:$0xf] %v1046
                %v1048 = vld [vmem:[%s1044 + $0x4] sm:$0xf]
                %1049 = vst [vmem:[%s1045 + $0x4] sm:$0xf] %v1048
                %v1050 = vld [vmem:[%s1044 + $0x8] sm:$0xf]
                %1051 = vst [vmem:[%s1045 + $0x8] sm:$0xf] %v1050
                %v1052 = vld [vmem:[%s1044 + $0xc] sm:$0xf]
                %1053 = vst [vmem:[%s1045 + $0xc] sm:$0xf] %v1052
                %v1054 = vld [vmem:[%s1044 + $0x10] sm:$0xf]
                %1055 = vst [vmem:[%s1045 + $0x10] sm:$0xf] %v1054
                %v1056 = vld [vmem:[%s1044 + $0x14] sm:$0xf]
                %1057 = vst [vmem:[%s1045 + $0x14] sm:$0xf] %v1056
                %v1058 = vld [vmem:[%s1044 + $0x18] sm:$0xf]
                %1059 = vst [vmem:[%s1045 + $0x18] sm:$0xf] %v1058
                %v1060 = vld [vmem:[%s1044 + $0x1c] sm:$0xf]
                %1061 = vst [vmem:[%s1045 + $0x1c] sm:$0xf] %v1060
                %v1062 = vld [vmem:[%s1044 + $0x20] sm:$0xf]
                %1063 = vst [vmem:[%s1045 + $0x40] sm:$0xf] %v1062
                %v1064 = vld [vmem:[%s1044 + $0x24] sm:$0xf]
                %1065 = vst [vmem:[%s1045 + $0x44] sm:$0xf] %v1064
                %v1066 = vld [vmem:[%s1044 + $0x28] sm:$0xf]
                %1067 = vst [vmem:[%s1045 + $0x48] sm:$0xf] %v1066
                %v1068 = vld [vmem:[%s1044 + $0x2c] sm:$0xf]
                %1069 = vst [vmem:[%s1045 + $0x4c] sm:$0xf] %v1068
                %v1070 = vld [vmem:[%s1044 + $0x30] sm:$0xf]
                %1071 = vst [vmem:[%s1045 + $0x50] sm:$0xf] %v1070
                %v1072 = vld [vmem:[%s1044 + $0x34] sm:$0xf]
                %1073 = vst [vmem:[%s1045 + $0x54] sm:$0xf] %v1072
                %v1074 = vld [vmem:[%s1044 + $0x38] sm:$0xf]
                %1075 = vst [vmem:[%s1045 + $0x58] sm:$0xf] %v1074
                %v1076 = vld [vmem:[%s1044 + $0x3c] sm:$0xf]
                %1077 = vst [vmem:[%s1045 + $0x5c] sm:$0xf] %v1076
              $region94: #{_lambda_.6} parent=88 // loop_footer
                %s1043 = sadd.s32 1, %s1039
              $region95: #{_lambda_.6} parent=88 // loop_footer_branch
                %1038 = sbr.rel target = $region91
              $region96: #{_lambda_.6} parent=88 // loop_exit
                _
            $region89: #{_lambda_.6} parent=80 // pred_fallthru
              _
          $region81: #{_lambda_.6} parent=76 // pred_fallthru
            _
          %1129 = vnop
        $region77: #{_lambda_.6} parent=31 // pred_fallthru
          _
        // Predicated region
        $region115: #{_lambda_.6} parent=31 // pred_check
          %p1130 = pneg %p175
        $region116: #{_lambda_.6} parent=31 // pred_check_branch
          %1132 = sbr.rel (%p1130) target = $region118
        $region117: #{_lambda_.6} parent=31 // pred_region
          %s1133 = smul.u32 8, %s22
          %s1134 = smul.addr %s21, 32
          %s1135 = sadd.s32 %s1133, %s1134
          %s1136 = smul.addr %s1135, 4
          %s1137 = scalar_lea.vmem %s5, %s1136
          // Predicated region
          $region119: #{_lambda_.6} parent=117 // pred_check
            _
          $region120: #{_lambda_.6} parent=117 // pred_check_branch
            %1139 = sbr.rel (0) target = $region122
          $region121: #{_lambda_.6} parent=117 // pred_region
            // Predicated region
            $region123: #{_lambda_.6} parent=121 // pred_check
              _
            $region124: #{_lambda_.6} parent=121 // pred_check_branch
              %1141 = sbr.rel target = $region126
            $region125: #{_lambda_.6} parent=121 // pred_region
              // Predicated region
              $region138: #{_lambda_.6} parent=125 // pred_check
                _
              $region139: #{_lambda_.6} parent=125 // pred_check_branch
                %1186 = sbr.rel (0) target = $region141
              $region140: #{_lambda_.6} parent=125 // pred_region
                loop: start=0, step=1, limit=1
                $region142: #{_lambda_.6} parent=140 // loop_pre_header
                  _
                $region143: #{_lambda_.6} parent=140 // loop_header
                  %s1188 = sphi 0, %s1192
                  %p1189 = scmp.ge.s32.totalorder %s1188, 1
                  %s1193 = sphi %s915, %s915
                  %s1194 = sphi %s1137, %s1137
                $region144: #{_lambda_.6} parent=140 // loop_header_branch
                  %1191 = sbr.rel (%p1189) target = $region148
                $region145: #{_lambda_.6} parent=140 // loop_body
                  _
                $region146: #{_lambda_.6} parent=140 // loop_footer
                  %s1192 = sadd.s32 1, %s1188
                $region147: #{_lambda_.6} parent=140 // loop_footer_branch
                  %1187 = sbr.rel target = $region143
                $region148: #{_lambda_.6} parent=140 // loop_exit
                  _
                loop: start=0, step=1, limit=1
                $region149: #{_lambda_.6} parent=140 // loop_pre_header
                  _
                $region150: #{_lambda_.6} parent=140 // loop_header
                  %s1197 = sphi 0, %s1201
                  %p1198 = scmp.ge.s32.totalorder %s1197, 1
                  %s1202 = sphi %s915, %s915
                  %s1203 = sphi %s1137, %s1137
                $region151: #{_lambda_.6} parent=140 // loop_header_branch
                  %1200 = sbr.rel (%p1198) target = $region155
                $region152: #{_lambda_.6} parent=140 // loop_body
                  %v1204 = vld [vmem:[%s1202] sm:$0xf]
                  %1205 = vst [vmem:[%s1203] sm:$0xf] %v1204
                  %v1206 = vld [vmem:[%s1202 + $0x4] sm:$0xf]
                  %1207 = vst [vmem:[%s1203 + $0x4] sm:$0xf] %v1206
                  %v1208 = vld [vmem:[%s1202 + $0x8] sm:$0xf]
                  %1209 = vst [vmem:[%s1203 + $0x8] sm:$0xf] %v1208
                  %v1210 = vld [vmem:[%s1202 + $0xc] sm:$0xf]
                  %1211 = vst [vmem:[%s1203 + $0xc] sm:$0xf] %v1210
                  %v1212 = vld [vmem:[%s1202 + $0x10] sm:$0xf]
                  %1213 = vst [vmem:[%s1203 + $0x10] sm:$0xf] %v1212
                  %v1214 = vld [vmem:[%s1202 + $0x14] sm:$0xf]
                  %1215 = vst [vmem:[%s1203 + $0x14] sm:$0xf] %v1214
                  %v1216 = vld [vmem:[%s1202 + $0x18] sm:$0xf]
                  %1217 = vst [vmem:[%s1203 + $0x18] sm:$0xf] %v1216
                  %v1218 = vld [vmem:[%s1202 + $0x1c] sm:$0xf]
                  %1219 = vst [vmem:[%s1203 + $0x1c] sm:$0xf] %v1218
                  %v1220 = vld [vmem:[%s1202 + $0x20] sm:$0xf]
                  %1221 = vst [vmem:[%s1203 + $0x40] sm:$0xf] %v1220
                  %v1222 = vld [vmem:[%s1202 + $0x24] sm:$0xf]
                  %1223 = vst [vmem:[%s1203 + $0x44] sm:$0xf] %v1222
                  %v1224 = vld [vmem:[%s1202 + $0x28] sm:$0xf]
                  %1225 = vst [vmem:[%s1203 + $0x48] sm:$0xf] %v1224
                  %v1226 = vld [vmem:[%s1202 + $0x2c] sm:$0xf]
                  %1227 = vst [vmem:[%s1203 + $0x4c] sm:$0xf] %v1226
                  %v1228 = vld [vmem:[%s1202 + $0x30] sm:$0xf]
                  %1229 = vst [vmem:[%s1203 + $0x50] sm:$0xf] %v1228
                  %v1230 = vld [vmem:[%s1202 + $0x34] sm:$0xf]
                  %1231 = vst [vmem:[%s1203 + $0x54] sm:$0xf] %v1230
                  %v1232 = vld [vmem:[%s1202 + $0x38] sm:$0xf]
                  %1233 = vst [vmem:[%s1203 + $0x58] sm:$0xf] %v1232
                  %v1234 = vld [vmem:[%s1202 + $0x3c] sm:$0xf]
                  %1235 = vst [vmem:[%s1203 + $0x5c] sm:$0xf] %v1234
                $region153: #{_lambda_.6} parent=140 // loop_footer
                  %s1201 = sadd.s32 1, %s1197
                $region154: #{_lambda_.6} parent=140 // loop_footer_branch
                  %1196 = sbr.rel target = $region150
                $region155: #{_lambda_.6} parent=140 // loop_exit
                  _
              $region141: #{_lambda_.6} parent=125 // pred_fallthru
                _
            $region126: #{_lambda_.6} parent=121 // pred_fallthru
              _
            // Predicated region
            $region127: #{_lambda_.6} parent=121 // pred_check
              _
            $region128: #{_lambda_.6} parent=121 // pred_check_branch
              %1143 = sbr.rel (0) target = $region130
            $region129: #{_lambda_.6} parent=121 // pred_region
              loop: start=0, step=1, limit=1
              $region131: #{_lambda_.6} parent=129 // loop_pre_header
                _
              $region132: #{_lambda_.6} parent=129 // loop_header
                %s1146 = sphi 0, %s1150
                %p1147 = scmp.ge.s32.totalorder %s1146, 1
                %s1151 = sphi %s915, %s915
                %s1152 = sphi %s1137, %s1137
              $region133: #{_lambda_.6} parent=129 // loop_header_branch
                %1149 = sbr.rel (%p1147) target = $region137
              $region134: #{_lambda_.6} parent=129 // loop_body
                %v1153 = vld [vmem:[%s1151] sm:$0xf]
                %1154 = vst [vmem:[%s1152] sm:$0xf] %v1153
                %v1155 = vld [vmem:[%s1151 + $0x4] sm:$0xf]
                %1156 = vst [vmem:[%s1152 + $0x4] sm:$0xf] %v1155
                %v1157 = vld [vmem:[%s1151 + $0x8] sm:$0xf]
                %1158 = vst [vmem:[%s1152 + $0x8] sm:$0xf] %v1157
                %v1159 = vld [vmem:[%s1151 + $0xc] sm:$0xf]
                %1160 = vst [vmem:[%s1152 + $0xc] sm:$0xf] %v1159
                %v1161 = vld [vmem:[%s1151 + $0x10] sm:$0xf]
                %1162 = vst [vmem:[%s1152 + $0x10] sm:$0xf] %v1161
                %v1163 = vld [vmem:[%s1151 + $0x14] sm:$0xf]
                %1164 = vst [vmem:[%s1152 + $0x14] sm:$0xf] %v1163
                %v1165 = vld [vmem:[%s1151 + $0x18] sm:$0xf]
                %1166 = vst [vmem:[%s1152 + $0x18] sm:$0xf] %v1165
                %v1167 = vld [vmem:[%s1151 + $0x1c] sm:$0xf]
                %1168 = vst [vmem:[%s1152 + $0x1c] sm:$0xf] %v1167
                %v1169 = vld [vmem:[%s1151 + $0x20] sm:$0xf]
                %1170 = vst [vmem:[%s1152 + $0x40] sm:$0xf] %v1169
                %v1171 = vld [vmem:[%s1151 + $0x24] sm:$0xf]
                %1172 = vst [vmem:[%s1152 + $0x44] sm:$0xf] %v1171
                %v1173 = vld [vmem:[%s1151 + $0x28] sm:$0xf]
                %1174 = vst [vmem:[%s1152 + $0x48] sm:$0xf] %v1173
                %v1175 = vld [vmem:[%s1151 + $0x2c] sm:$0xf]
                %1176 = vst [vmem:[%s1152 + $0x4c] sm:$0xf] %v1175
                %v1177 = vld [vmem:[%s1151 + $0x30] sm:$0xf]
                %1178 = vst [vmem:[%s1152 + $0x50] sm:$0xf] %v1177
                %v1179 = vld [vmem:[%s1151 + $0x34] sm:$0xf]
                %1180 = vst [vmem:[%s1152 + $0x54] sm:$0xf] %v1179
                %v1181 = vld [vmem:[%s1151 + $0x38] sm:$0xf]
                %1182 = vst [vmem:[%s1152 + $0x58] sm:$0xf] %v1181
                %v1183 = vld [vmem:[%s1151 + $0x3c] sm:$0xf]
                %1184 = vst [vmem:[%s1152 + $0x5c] sm:$0xf] %v1183
              $region135: #{_lambda_.6} parent=129 // loop_footer
                %s1150 = sadd.s32 1, %s1146
              $region136: #{_lambda_.6} parent=129 // loop_footer_branch
                %1145 = sbr.rel target = $region132
              $region137: #{_lambda_.6} parent=129 // loop_exit
                _
            $region130: #{_lambda_.6} parent=121 // pred_fallthru
              _
          $region122: #{_lambda_.6} parent=117 // pred_fallthru
            _
          %1236 = vnop
        $region118: #{_lambda_.6} parent=31 // pred_fallthru
          _
      $region32: #{_lambda_.6} parent=5 // pred_fallthru
        _
      %p1237 = scmp.le.s32.totalorder 2, %s12
      // Predicated region
      $region156: #{_lambda_.6} parent=5 // pred_check
        %p1238 = pneg %p1237
      $region157: #{_lambda_.6} parent=5 // pred_check_branch
        %1240 = sbr.rel (%p1238) target = $region159
      $region158: #{_lambda_.6} parent=5 // pred_region
        %s1241 = ssub.s32 %s12, 2
        // Predicated region
        $region160: #{_lambda_.6} parent=158 // pred_check
          %p1242 = pneg %p125
        $region161: #{_lambda_.6} parent=158 // pred_check_branch
          %1244 = sbr.rel (%p1242) target = $region163
        $region162: #{_lambda_.6} parent=158 // pred_region
          %s1245 = sand.u32 %s110, 1
          %s1246 = sand.u32 %s110, 1
          %s1247 = smul.addr %s1246, 64
          %s1248 = scalar_lea.vmem [#allocation2], %s1247
        $region163: #{_lambda_.6} parent=158 // pred_fallthru
          _
        // Predicated region
        $region164: #{_lambda_.6} parent=158 // pred_check
          %p1249 = pneg %p153
        $region165: #{_lambda_.6} parent=158 // pred_check_branch
          %1251 = sbr.rel (%p1249) target = $region167
        $region166: #{_lambda_.6} parent=158 // pred_region
          %s1252 = sand.u32 %s138, 1
          %s1253 = sand.u32 %s138, 1
          %s1254 = smul.addr %s1253, 64
          %s1255 = scalar_lea.vmem [#allocation3], %s1254
        $region167: #{_lambda_.6} parent=158 // pred_fallthru
          _
        // Predicated region
        $region168: #{_lambda_.6} parent=158 // pred_check
          %p1256 = pneg %p181
        $region169: #{_lambda_.6} parent=158 // pred_check_branch
          %1258 = sbr.rel (%p1256) target = $region171
        $region170: #{_lambda_.6} parent=158 // pred_region
          %s1259 = sand.u32 %s166, 1
          %s1260 = sand.u32 %s166, 1
          %s1261 = smul.addr %s1260, 64
          %s1262 = scalar_lea.vmem [#allocation4], %s1261
        $region171: #{_lambda_.6} parent=158 // pred_fallthru
          _
      $region159: #{_lambda_.6} parent=5 // pred_fallthru
        _
    $region6: #{_lambda_.6} parent=1 // loop_footer
      %s16 = sadd.s32 1, %s12
    $region7: #{_lambda_.6} parent=1 // loop_footer_branch
      %11 = sbr.rel target = $region3
    $region8: #{_lambda_.6} parent=1 // loop_exit
      _

// kernel: _lambda_.5
$region0: #{_lambda_.5}
  #allocation0 [shape = 'u32[]', space=smem, size = 0x4, offset = 0x4, fixed_abs, tag = 'smem constant byte address 0x4 - core index']
  #allocation1 [shape = 'u32[144,128]{1,0:T(1,128)}', space=vmem, size = 0x12000, scoped, tag = 'internal scratch']
  %s0 = inlined_call_operand.vmem [shape: f32[2,128,128], index: 0, kind: input, shape index: {}, may-alias: {0,10}]
  %s1 = inlined_call_operand.vmem [shape: bf16[2,2,128,64], index: 1, kind: input, shape index: {}]
  %s2 = inlined_call_operand.vmem [shape: bf16[2,2,128,64], index: 2, kind: input, shape index: {}]
  %s3 = inlined_call_operand.vmem [shape: bf16[2,2,128,64], index: 3, kind: input, shape index: {}]
  %s4 = inlined_call_operand.vmem [shape: f32[1,128], index: 4, kind: input, shape index: {}]
  %s5 = inlined_call_operand.hbm [shape: bf16[2,64,128], index: 5, kind: input, shape index: {}]
  %s6 = inlined_call_operand.vmem [shape: f32[1,128], index: 6, kind: input, shape index: {}]
  %s7 = inlined_call_operand.vmem [shape: bf16[128,1024], index: 7, kind: input, shape index: {}]
  %s8 = inlined_call_operand.vmem [shape: f32[1,512], index: 8, kind: input, shape index: {}]
  %s9 = inlined_call_operand.vmem [shape: bf16[512,128], index: 9, kind: input, shape index: {}]
  %s10 = inlined_call_operand.vmem [shape: f32[2,128,128], index: 10, kind: output, shape index: {}, may-alias: {0,10}]
  %s11 = sld [smem:[#allocation0]]
  $region118: #{_lambda_.5} parent=0
    _
  %s13 = ssub.s32 1, %s11
  %s14 = scalar_select 0, %s13, %s11
  $region1: #{_lambda_.5} parent=0
    #allocation2 [shape = 'u8[65536]{0}', space=vmem, size = 0x10000, scoped, tag = 'input window, operand 1']
    #allocation3 [shape = 'u8[32768]{0}', space=vmem, size = 0x8000, scoped, tag = 'input window, operand 5, single buffered']
    #allocation4 [shape = 's32[2]{0}', space=sflag, size = 0x8, scoped, tag = 'scoped memory for _lambda_.5']
    %15 = vsyncpa [#allocation4], 0
    loop: start=0, step=1, limit=6
    $region2: #{_lambda_.5} parent=1 // loop_pre_header
      _
    $region3: #{_lambda_.5} parent=1 // loop_header
      %s17 = sphi 0, %s21
      %p18 = scmp.ge.s32.totalorder %s17, 6
      %s24 = sphi 0, %s36
      %s25 = sphi 0, %s32
      %s26 = sphi 0, %s24
      %s27 = sphi 0, %s25
      %s28 = sphi 0, %s26
      %s29 = sphi 0, %s27
      %s41 = sphi 0, %s43
      %s44 = sphi 0, %s41
      %s45 = sphi 0, %s44
      %s61 = sphi 0, %s45
      %s69 = sphi 0, %s71
      %s72 = sphi 0, %s69
      %s73 = sphi 0, %s72
      %s89 = sphi 0, %s73
      %s95 = sphi 0, %s97
      %s98 = sphi 0, %s95
      %s99 = sphi 0, %s98
      %s115 = sphi 0, %s99
      %s121 = sphi 0, %s123
      %s124 = sphi 0, %s121
      %s125 = sphi 0, %s124
      %s141 = sphi 0, %s125
      %s145 = sphi 0, %s145
      %s147 = sphi 0, %s145
      %s148 = sphi 0, %s147
      %s162 = sphi 0, %s148
      %s166 = sphi 0, %s166
      %s168 = sphi 0, %s166
      %s169 = sphi 0, %s168
      %s183 = sphi 0, %s169
      %s187 = sphi 0, %s187
      %s189 = sphi 0, %s187
      %s190 = sphi 0, %s189
      %s204 = sphi 0, %s190
      %s208 = sphi 0, %s208
      %s210 = sphi 0, %s208
      %s211 = sphi 0, %s210
      %s225 = sphi 0, %s211
      %s229 = sphi 0, %s229
      %s231 = sphi 0, %s229
      %s232 = sphi 0, %s231
      %s246 = sphi 0, %s232
      %s250 = sphi 0, %s250
      %s252 = sphi 0, %s250
      %s253 = sphi 0, %s252
      %s267 = sphi 0, %s253
      %s275 = sphi 0, %s277
      %s278 = sphi 0, %s275
      %s279 = sphi 0, %s278
      %s295 = sphi 0, %s279
    $region4: #{_lambda_.5} parent=1 // loop_header_branch
      %20 = sbr.rel (%p18) target = $region8
    $region5: #{_lambda_.5} parent=1 // loop_body
      %s22 = ssub.s32 %s17, 1
      %s23 = ssub.s32 %s17, 2
      %s30 = sadd.s32 1, %s25
      %p31 = scmp.ge.s32.totalorder %s30, 2
      %s32 = scalar_select %p31, 0, %s30
      %s33 = sadd.s32 1, %s24
      %s34 = scalar_select %p31, %s33, %s24
      %p35 = scmp.ge.s32.totalorder %s34, 2
      %s36 = scalar_select %p35, 0, %s34
      %s37 = ssub.s32 %s24, %s36
      %s38 = ssub.s32 %s25, %s32
      %s39 = sor.u32 %s37, %s38
      %p40 = scmp.eq.s32.totalorder %s39, 0
      %s42 = sadd.s32 %s41, 1
      %s43 = scalar_select %p40, %s41, %s42
      %p46 = pneg %p40
      %p47 = scmp.eq.s32.totalorder %s17, 3
      %p48 = por %p46, %p47
      %p49 = scmp.ne.s32.totalorder %s41, %s44
      %p50 = scmp.eq.s32.totalorder %s17, 0
      %p51 = por %p49, %p50
      %p52 = scmp.ne.s32.totalorder %s41, %s44
      %p53 = scmp.eq.s32.totalorder %s22, 3
      %p54 = por %p52, %p53
      %p55 = scmp.ne.s32.totalorder %s44, %s45
      %p56 = scmp.eq.s32.totalorder %s22, 0
      %p57 = por %p55, %p56
      %p58 = scmp.ne.s32.totalorder %s44, %s45
      %p59 = scmp.eq.s32.totalorder %s23, 3
      %p60 = por %p58, %p59
      %p62 = scmp.ne.s32.totalorder %s45, %s61
      %p63 = scmp.eq.s32.totalorder %s23, 0
      %p64 = por %p62, %p63
      %s65 = ssub.s32 %s24, %s36
      %s66 = ssub.s32 %s25, %s32
      %s67 = sor.u32 %s65, %s66
      %p68 = scmp.eq.s32.totalorder %s67, 0
      %s70 = sadd.s32 %s69, 1
      %s71 = scalar_select %p68, %s69, %s70
      %p74 = pneg %p68
      %p75 = scmp.eq.s32.totalorder %s17, 3
      %p76 = por %p74, %p75
      %p77 = scmp.ne.s32.totalorder %s69, %s72
      %p78 = scmp.eq.s32.totalorder %s17, 0
      %p79 = por %p77, %p78
      %p80 = scmp.ne.s32.totalorder %s69, %s72
      %p81 = scmp.eq.s32.totalorder %s22, 3
      %p82 = por %p80, %p81
      %p83 = scmp.ne.s32.totalorder %s72, %s73
      %p84 = scmp.eq.s32.totalorder %s22, 0
      %p85 = por %p83, %p84
      %p86 = scmp.ne.s32.totalorder %s72, %s73
      %p87 = scmp.eq.s32.totalorder %s23, 3
      %p88 = por %p86, %p87
      %p90 = scmp.ne.s32.totalorder %s73, %s89
      %p91 = scmp.eq.s32.totalorder %s23, 0
      %p92 = por %p90, %p91
      %s93 = ssub.s32 %s24, %s36
      %p94 = scmp.eq.s32.totalorder %s93, 0
      %s96 = sadd.s32 %s95, 1
      %s97 = scalar_select %p94, %s95, %s96
      %p100 = pneg %p94
      %p101 = scmp.eq.s32.totalorder %s17, 3
      %p102 = por %p100, %p101
      %p103 = scmp.ne.s32.totalorder %s95, %s98
      %p104 = scmp.eq.s32.totalorder %s17, 0
      %p105 = por %p103, %p104
      %p106 = scmp.ne.s32.totalorder %s95, %s98
      %p107 = scmp.eq.s32.totalorder %s22, 3
      %p108 = por %p106, %p107
      %p109 = scmp.ne.s32.totalorder %s98, %s99
      %p110 = scmp.eq.s32.totalorder %s22, 0
      %p111 = por %p109, %p110
      %p112 = scmp.ne.s32.totalorder %s98, %s99
      %p113 = scmp.eq.s32.totalorder %s23, 3
      %p114 = por %p112, %p113
      %p116 = scmp.ne.s32.totalorder %s99, %s115
      %p117 = scmp.eq.s32.totalorder %s23, 0
      %p118 = por %p116, %p117
      %s119 = ssub.s32 %s24, %s36
      %p120 = scmp.eq.s32.totalorder %s119, 0
      %s122 = sadd.s32 %s121, 1
      %s123 = scalar_select %p120, %s121, %s122
      %p126 = pneg %p120
      %p127 = scmp.eq.s32.totalorder %s17, 3
      %p128 = por %p126, %p127
      %p129 = scmp.ne.s32.totalorder %s121, %s124
      %p130 = scmp.eq.s32.totalorder %s17, 0
      %p131 = por %p129, %p130
      %p132 = scmp.ne.s32.totalorder %s121, %s124
      %p133 = scmp.eq.s32.totalorder %s22, 3
      %p134 = por %p132, %p133
      %p135 = scmp.ne.s32.totalorder %s124, %s125
      %p136 = scmp.eq.s32.totalorder %s22, 0
      %p137 = por %p135, %p136
      %p138 = scmp.ne.s32.totalorder %s124, %s125
      %p139 = scmp.eq.s32.totalorder %s23, 3
      %p140 = por %p138, %p139
      %p142 = scmp.ne.s32.totalorder %s125, %s141
      %p143 = scmp.eq.s32.totalorder %s23, 0
      %p144 = por %p142, %p143
      %s146 = sadd.s32 %s145, 1
      %p149 = scmp.eq.s32.totalorder %s17, 3
      %p150 = scmp.ne.s32.totalorder %s145, %s147
      %p151 = scmp.eq.s32.totalorder %s17, 0
      %p152 = por %p150, %p151
      %p153 = scmp.ne.s32.totalorder %s145, %s147
      %p154 = scmp.eq.s32.totalorder %s22, 3
      %p155 = por %p153, %p154
      %p156 = scmp.ne.s32.totalorder %s147, %s148
      %p157 = scmp.eq.s32.totalorder %s22, 0
      %p158 = por %p156, %p157
      %p159 = scmp.ne.s32.totalorder %s147, %s148
      %p160 = scmp.eq.s32.totalorder %s23, 3
      %p161 = por %p159, %p160
      %p163 = scmp.ne.s32.totalorder %s148, %s162
      %p164 = scmp.eq.s32.totalorder %s23, 0
      %p165 = por %p163, %p164
      %s167 = sadd.s32 %s166, 1
      %p170 = scmp.eq.s32.totalorder %s17, 3
      %p171 = scmp.ne.s32.totalorder %s166, %s168
      %p172 = scmp.eq.s32.totalorder %s17, 0
      %p173 = por %p171, %p172
      %p174 = scmp.ne.s32.totalorder %s166, %s168
      %p175 = scmp.eq.s32.totalorder %s22, 3
      %p176 = por %p174, %p175
      %p177 = scmp.ne.s32.totalorder %s168, %s169
      %p178 = scmp.eq.s32.totalorder %s22, 0
      %p179 = por %p177, %p178
      %p180 = scmp.ne.s32.totalorder %s168, %s169
      %p181 = scmp.eq.s32.totalorder %s23, 3
      %p182 = por %p180, %p181
      %p184 = scmp.ne.s32.totalorder %s169, %s183
      %p185 = scmp.eq.s32.totalorder %s23, 0
      %p186 = por %p184, %p185
      %s188 = sadd.s32 %s187, 1
      %p191 = scmp.eq.s32.totalorder %s17, 3
      %p192 = scmp.ne.s32.totalorder %s187, %s189
      %p193 = scmp.eq.s32.totalorder %s17, 0
      %p194 = por %p192, %p193
      %p195 = scmp.ne.s32.totalorder %s187, %s189
      %p196 = scmp.eq.s32.totalorder %s22, 3
      %p197 = por %p195, %p196
      %p198 = scmp.ne.s32.totalorder %s189, %s190
      %p199 = scmp.eq.s32.totalorder %s22, 0
      %p200 = por %p198, %p199
      %p201 = scmp.ne.s32.totalorder %s189, %s190
      %p202 = scmp.eq.s32.totalorder %s23, 3
      %p203 = por %p201, %p202
      %p205 = scmp.ne.s32.totalorder %s190, %s204
      %p206 = scmp.eq.s32.totalorder %s23, 0
      %p207 = por %p205, %p206
      %s209 = sadd.s32 %s208, 1
      %p212 = scmp.eq.s32.totalorder %s17, 3
      %p213 = scmp.ne.s32.totalorder %s208, %s210
      %p214 = scmp.eq.s32.totalorder %s17, 0
      %p215 = por %p213, %p214
      %p216 = scmp.ne.s32.totalorder %s208, %s210
      %p217 = scmp.eq.s32.totalorder %s22, 3
      %p218 = por %p216, %p217
      %p219 = scmp.ne.s32.totalorder %s210, %s211
      %p220 = scmp.eq.s32.totalorder %s22, 0
      %p221 = por %p219, %p220
      %p222 = scmp.ne.s32.totalorder %s210, %s211
      %p223 = scmp.eq.s32.totalorder %s23, 3
      %p224 = por %p222, %p223
      %p226 = scmp.ne.s32.totalorder %s211, %s225
      %p227 = scmp.eq.s32.totalorder %s23, 0
      %p228 = por %p226, %p227
      %s230 = sadd.s32 %s229, 1
      %p233 = scmp.eq.s32.totalorder %s17, 3
      %p234 = scmp.ne.s32.totalorder %s229, %s231
      %p235 = scmp.eq.s32.totalorder %s17, 0
      %p236 = por %p234, %p235
      %p237 = scmp.ne.s32.totalorder %s229, %s231
      %p238 = scmp.eq.s32.totalorder %s22, 3
      %p239 = por %p237, %p238
      %p240 = scmp.ne.s32.totalorder %s231, %s232
      %p241 = scmp.eq.s32.totalorder %s22, 0
      %p242 = por %p240, %p241
      %p243 = scmp.ne.s32.totalorder %s231, %s232
      %p244 = scmp.eq.s32.totalorder %s23, 3
      %p245 = por %p243, %p244
      %p247 = scmp.ne.s32.totalorder %s232, %s246
      %p248 = scmp.eq.s32.totalorder %s23, 0
      %p249 = por %p247, %p248
      %s251 = sadd.s32 %s250, 1
      %p254 = scmp.eq.s32.totalorder %s17, 3
      %p255 = scmp.ne.s32.totalorder %s250, %s252
      %p256 = scmp.eq.s32.totalorder %s17, 0
      %p257 = por %p255, %p256
      %p258 = scmp.ne.s32.totalorder %s250, %s252
      %p259 = scmp.eq.s32.totalorder %s22, 3
      %p260 = por %p258, %p259
      %p261 = scmp.ne.s32.totalorder %s252, %s253
      %p262 = scmp.eq.s32.totalorder %s22, 0
      %p263 = por %p261, %p262
      %p264 = scmp.ne.s32.totalorder %s252, %s253
      %p265 = scmp.eq.s32.totalorder %s23, 3
      %p266 = por %p264, %p265
      %p268 = scmp.ne.s32.totalorder %s253, %s267
      %p269 = scmp.eq.s32.totalorder %s23, 0
      %p270 = por %p268, %p269
      %s271 = ssub.s32 %s24, %s36
      %s272 = ssub.s32 %s25, %s32
      %s273 = sor.u32 %s271, %s272
      %p274 = scmp.eq.s32.totalorder %s273, 0
      %s276 = sadd.s32 %s275, 1
      %s277 = scalar_select %p274, %s275, %s276
      %p280 = pneg %p274
      %p281 = scmp.eq.s32.totalorder %s17, 3
      %p282 = por %p280, %p281
      %p283 = scmp.ne.s32.totalorder %s275, %s278
      %p284 = scmp.eq.s32.totalorder %s17, 0
      %p285 = por %p283, %p284
      %p286 = scmp.ne.s32.totalorder %s275, %s278
      %p287 = scmp.eq.s32.totalorder %s22, 3
      %p288 = por %p286, %p287
      %p289 = scmp.ne.s32.totalorder %s278, %s279
      %p290 = scmp.eq.s32.totalorder %s22, 0
      %p291 = por %p289, %p290
      %p292 = scmp.ne.s32.totalorder %s278, %s279
      %p293 = scmp.eq.s32.totalorder %s23, 3
      %p294 = por %p292, %p293
      %p296 = scmp.ne.s32.totalorder %s279, %s295
      %p297 = scmp.eq.s32.totalorder %s23, 0
      %p298 = por %p296, %p297
      %p299 = scmp.le.s32.totalorder 1, %s17
      %p300 = scmp.lt.s32.totalorder %s17, 5
      %p301 = pnand %p299, %p300
      %p302 = pneg %p301
      // Predicated region
      $region9: #{_lambda_.5} parent=5 // pred_check
        _
      $region10: #{_lambda_.5} parent=5 // pred_check_branch
        %304 = sbr.rel (%p301) target = $region12
      $region11: #{_lambda_.5} parent=5 // pred_region
        %s305 = ssub.s32 %s17, 1
        // Predicated region
        $region13: #{_lambda_.5} parent=11 // pred_check
          %p306 = pneg %p158
        $region14: #{_lambda_.5} parent=11 // pred_check_branch
          %308 = sbr.rel (%p306) target = $region16
        $region15: #{_lambda_.5} parent=11 // pred_region
          _
        $region16: #{_lambda_.5} parent=11 // pred_fallthru
          _
        // Predicated region
        $region17: #{_lambda_.5} parent=11 // pred_check
          %p309 = pneg %p179
        $region18: #{_lambda_.5} parent=11 // pred_check_branch
          %311 = sbr.rel (%p309) target = $region20
        $region19: #{_lambda_.5} parent=11 // pred_region
          %s313 = ssub.s32 1024, 1024
          %314 = vsyncadd [#allocation4], %s313
          %s315 = sshll.u32 [#allocation3], 4
          %s316 = int_to_ptr.vmem [resolvable:$true] %s315
          %321 = dma.hbm_to_vmem [thread:$0]  %s5, 1024, %s316, [#allocation4], 64, 64, 4
        $region20: #{_lambda_.5} parent=11 // pred_fallthru
          _
        // Predicated region
        $region21: #{_lambda_.5} parent=11 // pred_check
          %p322 = pneg %p200
        $region22: #{_lambda_.5} parent=11 // pred_check_branch
          %324 = sbr.rel (%p322) target = $region24
        $region23: #{_lambda_.5} parent=11 // pred_region
          _
        $region24: #{_lambda_.5} parent=11 // pred_fallthru
          _
        // Predicated region
        $region25: #{_lambda_.5} parent=11 // pred_check
          %p325 = pneg %p221
        $region26: #{_lambda_.5} parent=11 // pred_check_branch
          %327 = sbr.rel (%p325) target = $region28
        $region27: #{_lambda_.5} parent=11 // pred_region
          _
        $region28: #{_lambda_.5} parent=11 // pred_fallthru
          _
        // Predicated region
        $region29: #{_lambda_.5} parent=11 // pred_check
          %p328 = pneg %p242
        $region30: #{_lambda_.5} parent=11 // pred_check_branch
          %330 = sbr.rel (%p328) target = $region32
        $region31: #{_lambda_.5} parent=11 // pred_region
          _
        $region32: #{_lambda_.5} parent=11 // pred_fallthru
          _
        // Predicated region
        $region33: #{_lambda_.5} parent=11 // pred_check
          %p331 = pneg %p263
        $region34: #{_lambda_.5} parent=11 // pred_check_branch
          %333 = sbr.rel (%p331) target = $region36
        $region35: #{_lambda_.5} parent=11 // pred_region
          _
        $region36: #{_lambda_.5} parent=11 // pred_fallthru
          _
      $region12: #{_lambda_.5} parent=5 // pred_fallthru
        _
      %p334 = scmp.lt.s32.totalorder %s17, 4
      // Predicated region
      $region37: #{_lambda_.5} parent=5 // pred_check
        %p335 = pneg %p334
      $region38: #{_lambda_.5} parent=5 // pred_check_branch
        %337 = sbr.rel (%p335) target = $region40
      $region39: #{_lambda_.5} parent=5 // pred_region
        // Predicated region
        $region41: #{_lambda_.5} parent=39 // pred_check
          %p338 = pneg %p51
        $region42: #{_lambda_.5} parent=39 // pred_check_branch
          %340 = sbr.rel (%p338) target = $region44
        $region43: #{_lambda_.5} parent=39 // pred_region
          %s341 = smul.u32 8, %s25
          %p342 = scmp.lt.s32.totalorder %s24, 1
          %s343 = scalar_select %p342, %s24, 1
          %p344 = scmp.lt.s32.totalorder %s341, 15
          %s345 = scalar_select %p344, %s341, 15
          %s346 = smul.addr %s343, 16
          %s347 = sadd.s32 %s345, %s346
          %s348 = smul.addr %s347, 8
          %s349 = scalar_lea.vmem %s0, %s348
          %s350 = smul.u32 8, %s25
        $region44: #{_lambda_.5} parent=39 // pred_fallthru
          _
        // Predicated region
        $region45: #{_lambda_.5} parent=39 // pred_check
          %p351 = pneg %p79
        $region46: #{_lambda_.5} parent=39 // pred_check_branch
          %353 = sbr.rel (%p351) target = $region48
        $region47: #{_lambda_.5} parent=39 // pred_region
          %s354 = sand.u32 %s69, 1
          %s355 = sand.u32 %s69, 1
          %s356 = smul.addr %s355, 64
          %s357 = scalar_lea.vmem [#allocation2], %s356
          %s358 = smul.u32 8, %s25
          %s359 = smul.addr %s24, 32
          %s360 = sadd.s32 %s358, %s359
          %s361 = smul.addr %s360, 4
          %s362 = scalar_lea.vmem %s1, %s361
          // Predicated region
          $region49: #{_lambda_.5} parent=47 // pred_check
            _
          $region50: #{_lambda_.5} parent=47 // pred_check_branch
            %364 = sbr.rel (0) target = $region52
          $region51: #{_lambda_.5} parent=47 // pred_region
            // Predicated region
            $region53: #{_lambda_.5} parent=51 // pred_check
              _
            $region54: #{_lambda_.5} parent=51 // pred_check_branch
              %366 = sbr.rel target = $region56
            $region55: #{_lambda_.5} parent=51 // pred_region
              // Predicated region
              $region68: #{_lambda_.5} parent=55 // pred_check
                _
              $region69: #{_lambda_.5} parent=55 // pred_check_branch
                %411 = sbr.rel (0) target = $region71
              $region70: #{_lambda_.5} parent=55 // pred_region
                loop: start=0, step=1, limit=1
                $region72: #{_lambda_.5} parent=70 // loop_pre_header
                  _
                $region73: #{_lambda_.5} parent=70 // loop_header
                  %s413 = sphi 0, %s417
                  %p414 = scmp.ge.s32.totalorder %s413, 1
                  %s418 = sphi %s362, %s362
                  %s419 = sphi %s357, %s357
                $region74: #{_lambda_.5} parent=70 // loop_header_branch
                  %416 = sbr.rel (%p414) target = $region78
                $region75: #{_lambda_.5} parent=70 // loop_body
                  _
                $region76: #{_lambda_.5} parent=70 // loop_footer
                  %s417 = sadd.s32 1, %s413
                $region77: #{_lambda_.5} parent=70 // loop_footer_branch
                  %412 = sbr.rel target = $region73
                $region78: #{_lambda_.5} parent=70 // loop_exit
                  _
                loop: start=0, step=1, limit=1
                $region79: #{_lambda_.5} parent=70 // loop_pre_header
                  _
                $region80: #{_lambda_.5} parent=70 // loop_header
                  %s422 = sphi 0, %s426
                  %p423 = scmp.ge.s32.totalorder %s422, 1
                  %s427 = sphi %s362, %s362
                  %s428 = sphi %s357, %s357
                $region81: #{_lambda_.5} parent=70 // loop_header_branch
                  %425 = sbr.rel (%p423) target = $region85
                $region82: #{_lambda_.5} parent=70 // loop_body
                  %v429 = vld [vmem:[%s427] sm:$0xf]
                  %430 = vst [vmem:[%s428] sm:$0xf] %v429
                  %v431 = vld [vmem:[%s427 + $0x4] sm:$0xf]
                  %432 = vst [vmem:[%s428 + $0x4] sm:$0xf] %v431
                  %v433 = vld [vmem:[%s427 + $0x8] sm:$0xf]
                  %434 = vst [vmem:[%s428 + $0x8] sm:$0xf] %v433
                  %v435 = vld [vmem:[%s427 + $0xc] sm:$0xf]
                  %436 = vst [vmem:[%s428 + $0xc] sm:$0xf] %v435
                  %v437 = vld [vmem:[%s427 + $0x10] sm:$0xf]
                  %438 = vst [vmem:[%s428 + $0x10] sm:$0xf] %v437
                  %v439 = vld [vmem:[%s427 + $0x14] sm:$0xf]
                  %440 = vst [vmem:[%s428 + $0x14] sm:$0xf] %v439
                  %v441 = vld [vmem:[%s427 + $0x18] sm:$0xf]
                  %442 = vst [vmem:[%s428 + $0x18] sm:$0xf] %v441
                  %v443 = vld [vmem:[%s427 + $0x1c] sm:$0xf]
                  %444 = vst [vmem:[%s428 + $0x1c] sm:$0xf] %v443
                  %v445 = vld [vmem:[%s427 + $0x40] sm:$0xf]
                  %446 = vst [vmem:[%s428 + $0x20] sm:$0xf] %v445
                  %v447 = vld [vmem:[%s427 + $0x44] sm:$0xf]
                  %448 = vst [vmem:[%s428 + $0x24] sm:$0xf] %v447
                  %v449 = vld [vmem:[%s427 + $0x48] sm:$0xf]
                  %450 = vst [vmem:[%s428 + $0x28] sm:$0xf] %v449
                  %v451 = vld [vmem:[%s427 + $0x4c] sm:$0xf]
                  %452 = vst [vmem:[%s428 + $0x2c] sm:$0xf] %v451
                  %v453 = vld [vmem:[%s427 + $0x50] sm:$0xf]
                  %454 = vst [vmem:[%s428 + $0x30] sm:$0xf] %v453
                  %v455 = vld [vmem:[%s427 + $0x54] sm:$0xf]
                  %456 = vst [vmem:[%s428 + $0x34] sm:$0xf] %v455
                  %v457 = vld [vmem:[%s427 + $0x58] sm:$0xf]
                  %458 = vst [vmem:[%s428 + $0x38] sm:$0xf] %v457
                  %v459 = vld [vmem:[%s427 + $0x5c] sm:$0xf]
                  %460 = vst [vmem:[%s428 + $0x3c] sm:$0xf] %v459
                $region83: #{_lambda_.5} parent=70 // loop_footer
                  %s426 = sadd.s32 1, %s422
                $region84: #{_lambda_.5} parent=70 // loop_footer_branch
                  %421 = sbr.rel target = $region80
                $region85: #{_lambda_.5} parent=70 // loop_exit
                  _
              $region71: #{_lambda_.5} parent=55 // pred_fallthru
                _
            $region56: #{_lambda_.5} parent=51 // pred_fallthru
              _
            // Predicated region
            $region57: #{_lambda_.5} parent=51 // pred_check
              _
            $region58: #{_lambda_.5} parent=51 // pred_check_branch
              %368 = sbr.rel (0) target = $region60
            $region59: #{_lambda_.5} parent=51 // pred_region
              loop: start=0, step=1, limit=1
              $region61: #{_lambda_.5} parent=59 // loop_pre_header
                _
              $region62: #{_lambda_.5} parent=59 // loop_header
                %s371 = sphi 0, %s375
                %p372 = scmp.ge.s32.totalorder %s371, 1
                %s376 = sphi %s362, %s362
                %s377 = sphi %s357, %s357
              $region63: #{_lambda_.5} parent=59 // loop_header_branch
                %374 = sbr.rel (%p372) target = $region67
              $region64: #{_lambda_.5} parent=59 // loop_body
                %v378 = vld [vmem:[%s376] sm:$0xf]
                %379 = vst [vmem:[%s377] sm:$0xf] %v378
                %v380 = vld [vmem:[%s376 + $0x4] sm:$0xf]
                %381 = vst [vmem:[%s377 + $0x4] sm:$0xf] %v380
                %v382 = vld [vmem:[%s376 + $0x8] sm:$0xf]
                %383 = vst [vmem:[%s377 + $0x8] sm:$0xf] %v382
                %v384 = vld [vmem:[%s376 + $0xc] sm:$0xf]
                %385 = vst [vmem:[%s377 + $0xc] sm:$0xf] %v384
                %v386 = vld [vmem:[%s376 + $0x10] sm:$0xf]
                %387 = vst [vmem:[%s377 + $0x10] sm:$0xf] %v386
                %v388 = vld [vmem:[%s376 + $0x14] sm:$0xf]
                %389 = vst [vmem:[%s377 + $0x14] sm:$0xf] %v388
                %v390 = vld [vmem:[%s376 + $0x18] sm:$0xf]
                %391 = vst [vmem:[%s377 + $0x18] sm:$0xf] %v390
                %v392 = vld [vmem:[%s376 + $0x1c] sm:$0xf]
                %393 = vst [vmem:[%s377 + $0x1c] sm:$0xf] %v392
                %v394 = vld [vmem:[%s376 + $0x40] sm:$0xf]
                %395 = vst [vmem:[%s377 + $0x20] sm:$0xf] %v394
                %v396 = vld [vmem:[%s376 + $0x44] sm:$0xf]
                %397 = vst [vmem:[%s377 + $0x24] sm:$0xf] %v396
                %v398 = vld [vmem:[%s376 + $0x48] sm:$0xf]
                %399 = vst [vmem:[%s377 + $0x28] sm:$0xf] %v398
                %v400 = vld [vmem:[%s376 + $0x4c] sm:$0xf]
                %401 = vst [vmem:[%s377 + $0x2c] sm:$0xf] %v400
                %v402 = vld [vmem:[%s376 + $0x50] sm:$0xf]
                %403 = vst [vmem:[%s377 + $0x30] sm:$0xf] %v402
                %v404 = vld [vmem:[%s376 + $0x54] sm:$0xf]
                %405 = vst [vmem:[%s377 + $0x34] sm:$0xf] %v404
                %v406 = vld [vmem:[%s376 + $0x58] sm:$0xf]
                %407 = vst [vmem:[%s377 + $0x38] sm:$0xf] %v406
                %v408 = vld [vmem:[%s376 + $0x5c] sm:$0xf]
                %409 = vst [vmem:[%s377 + $0x3c] sm:$0xf] %v408
              $region65: #{_lambda_.5} parent=59 // loop_footer
                %s375 = sadd.s32 1, %s371
              $region66: #{_lambda_.5} parent=59 // loop_footer_branch
                %370 = sbr.rel target = $region62
              $region67: #{_lambda_.5} parent=59 // loop_exit
                _
            $region60: #{_lambda_.5} parent=51 // pred_fallthru
              _
          $region52: #{_lambda_.5} parent=47 // pred_fallthru
            _
          %461 = vnop
        $region48: #{_lambda_.5} parent=39 // pred_fallthru
          _
        // Predicated region
        $region86: #{_lambda_.5} parent=39 // pred_check
          %p462 = pneg %p105
        $region87: #{_lambda_.5} parent=39 // pred_check_branch
          %464 = sbr.rel (%p462) target = $region89
        $region88: #{_lambda_.5} parent=39 // pred_region
          %p465 = scmp.lt.s32.totalorder %s24, 1
          %s466 = scalar_select %p465, %s24, 1
          %s467 = smul.addr %s466, 32
          %s468 = smul.addr %s467, 4
          %s469 = scalar_lea.vmem %s2, %s468
        $region89: #{_lambda_.5} parent=39 // pred_fallthru
          _
        // Predicated region
        $region90: #{_lambda_.5} parent=39 // pred_check
          %p470 = pneg %p131
        $region91: #{_lambda_.5} parent=39 // pred_check_branch
          %472 = sbr.rel (%p470) target = $region93
        $region92: #{_lambda_.5} parent=39 // pred_region
          %p473 = scmp.lt.s32.totalorder %s24, 1
          %s474 = scalar_select %p473, %s24, 1
          %s475 = smul.addr %s474, 32
          %s476 = smul.addr %s475, 4
          %s477 = scalar_lea.vmem %s3, %s476
        $region93: #{_lambda_.5} parent=39 // pred_fallthru
          _
      $region40: #{_lambda_.5} parent=5 // pred_fallthru
        _
      %p478 = scmp.le.s32.totalorder 1, %s17
      %p479 = scmp.lt.s32.totalorder %s17, 5
      %p480 = pnand %p478, %p479
      %p481 = pneg %p480
      // Predicated region
      $region94: #{_lambda_.5} parent=5 // pred_check
        _
      $region95: #{_lambda_.5} parent=5 // pred_check_branch
        %483 = sbr.rel (%p480) target = $region97
      $region96: #{_lambda_.5} parent=5 // pred_region
        %s484 = ssub.s32 %s17, 1
        %s485 = sand.u32 %s72, 1
        %s486 = sand.u32 %s72, 1
        %s487 = smul.addr %s486, 64
        %s488 = scalar_lea.vmem [#allocation2], %s487
        // Predicated region
        $region98: #{_lambda_.5} parent=96 // pred_check
          %p489 = pneg %p85
        $region99: #{_lambda_.5} parent=96 // pred_check_branch
          %491 = sbr.rel (%p489) target = $region101
        $region100: #{_lambda_.5} parent=96 // pred_region
          _
        $region101: #{_lambda_.5} parent=96 // pred_fallthru
          _
        // Predicated region
        $region102: #{_lambda_.5} parent=96 // pred_check
          %p492 = pneg %p179
        $region103: #{_lambda_.5} parent=96 // pred_check_branch
          %494 = sbr.rel (%p492) target = $region105
        $region104: #{_lambda_.5} parent=96 // pred_region
          %495 = dma.done [#allocation4], 1024
        $region105: #{_lambda_.5} parent=96 // pred_fallthru
          _
        %s496 = smul.u32 8, %s27
        %p497 = scmp.lt.s32.totalorder %s26, 1
        %s498 = scalar_select %p497, %s26, 1
        %p499 = scmp.lt.s32.totalorder %s496, 15
        %s500 = scalar_select %p499, %s496, 15
        %s501 = smul.addr %s498, 16
        %s502 = sadd.s32 %s500, %s501
        %s503 = smul.addr %s502, 8
        %s504 = scalar_lea.vmem %s0, %s503
        %p505 = pneg %p57
        %p506 = pneg %p54
        %s507 = sand.u32 %s72, 1
        %s508 = sand.u32 %s72, 1
        %s509 = smul.addr %s508, 64
        %s510 = scalar_lea.vmem [#allocation2], %s509
        %p511 = pneg %p85
        %p512 = pneg %p82
        %p513 = scmp.lt.s32.totalorder %s26, 1
        %s514 = scalar_select %p513, %s26, 1
        %s515 = smul.addr %s514, 32
        %s516 = smul.addr %s515, 4
        %s517 = scalar_lea.vmem %s2, %s516
        %p518 = pneg %p111
        %p519 = pneg %p108
        %p520 = scmp.lt.s32.totalorder %s26, 1
        %s521 = scalar_select %p520, %s26, 1
        %s522 = smul.addr %s521, 32
        %s523 = smul.addr %s522, 4
        %s524 = scalar_lea.vmem %s3, %s523
        %p525 = pneg %p137
        %p526 = pneg %p134
        %p527 = pneg %p158
        %p528 = pneg %p155
        %p529 = pneg %p179
        %p530 = pneg %p176
        %p531 = pneg %p200
        %p532 = pneg %p197
        %p533 = pneg %p221
        %p534 = pneg %p218
        %p535 = pneg %p242
        %p536 = pneg %p239
        %p537 = pneg %p263
        %p538 = pneg %p260
        %p539 = pneg %p291
        %p540 = pneg %p288
        %s541 = smul.u32 8, %s27
        %p542 = scmp.lt.s32.totalorder %s26, 1
        %s543 = scalar_select %p542, %s26, 1
        %p544 = scmp.lt.s32.totalorder %s541, 15
        %s545 = scalar_select %p544, %s541, 15
        %s546 = smul.addr %s543, 16
        %s547 = sadd.s32 %s545, %s546
        %s548 = smul.addr %s547, 8
        %s549 = scalar_lea.vmem %s10, %s548
        %s550 = smul.u32 8, %s27
        %p551 = scmp.lt.s32.totalorder %s26, 1
        %s552 = scalar_select %p551, %s26, 1
        %p553 = scmp.lt.s32.totalorder %s550, 15
        %s554 = scalar_select %p553, %s550, 15
        %s555 = smul.addr %s552, 16
        %s556 = sadd.s32 %s554, %s555
        %s557 = smul.addr %s556, 8
        %s558 = scalar_lea.vmem %s0, %s557
        %s559 = smul.u32 8, %s27
        %s560 = smul.u32 8, %s27
        %p561 = scmp.lt.s32.totalorder %s26, 1
        %s562 = scalar_select %p561, %s26, 1
        %s563 = smul.addr %s562, 32
        %s564 = smul.addr %s563, 4
        %s565 = scalar_lea.vmem %s2, %s564
        %p566 = scmp.lt.s32.totalorder %s26, 1
        %s567 = scalar_select %p566, %s26, 1
        %s568 = smul.addr %s567, 32
        %s569 = smul.addr %s568, 4
        %s570 = scalar_lea.vmem %s3, %s569
        %s571 = smul.u32 8, %s27
        %p572 = scmp.lt.s32.totalorder %s26, 1
        %s573 = scalar_select %p572, %s26, 1
        %p574 = scmp.lt.s32.totalorder %s571, 15
        %s575 = scalar_select %p574, %s571, 15
        %s576 = smul.addr %s573, 16
        %s577 = sadd.s32 %s575, %s576
        %s578 = smul.addr %s577, 8
        %s579 = scalar_lea.vmem %s10, %s578
        %s580 = smul.u32 8, %s27
        %v582 = vld [vmem:[%s558] sm:$0xff]
        %v583 = vld [vmem:[%s558 + $0x8] sm:$0xff]
        %v584 = vld [vmem:[%s558 + $0x10] sm:$0xff]
        %v585 = vld [vmem:[%s558 + $0x18] sm:$0xff]
        %v586 = vld [vmem:[%s558 + $0x20] sm:$0xff]
        %v587 = vld [vmem:[%s558 + $0x28] sm:$0xff]
        %v588 = vld [vmem:[%s558 + $0x30] sm:$0xff]
        %v589 = vld [vmem:[%s558 + $0x38] sm:$0xff]
        %v590 = vld [vmem:[%s488] sm:$0xf]
        %v591 = vld [vmem:[%s488 + $0x4] sm:$0xf]
        %v592 = vld [vmem:[%s488 + $0x8] sm:$0xf]
        %v593 = vld [vmem:[%s488 + $0xc] sm:$0xf]
        %v594 = vld [vmem:[%s488 + $0x10] sm:$0xf]
        %v595 = vld [vmem:[%s488 + $0x14] sm:$0xf]
        %v596 = vld [vmem:[%s488 + $0x18] sm:$0xf]
        %v597 = vld [vmem:[%s488 + $0x1c] sm:$0xf]
        %v598 = vld [vmem:[%s488 + $0x20] sm:$0xf]
        %v599 = vld [vmem:[%s488 + $0x24] sm:$0xf]
        %v600 = vld [vmem:[%s488 + $0x28] sm:$0xf]
        %v601 = vld [vmem:[%s488 + $0x2c] sm:$0xf]
        %v602 = vld [vmem:[%s488 + $0x30] sm:$0xf]
        %v603 = vld [vmem:[%s488 + $0x34] sm:$0xf]
        %v604 = vld [vmem:[%s488 + $0x38] sm:$0xf]
        %v605 = vld [vmem:[%s488 + $0x3c] sm:$0xf]
        %v606 = vld [vmem:[%s565] sm:$0xf]
        %v607 = vld [vmem:[%s565 + $0x4] sm:$0xf]
        %v608 = vld [vmem:[%s565 + $0x8] sm:$0xf]
        %v609 = vld [vmem:[%s565 + $0xc] sm:$0xf]
        %v610 = vld [vmem:[%s565 + $0x10] sm:$0xf]
        %v611 = vld [vmem:[%s565 + $0x14] sm:$0xf]
        %v612 = vld [vmem:[%s565 + $0x18] sm:$0xf]
        %v613 = vld [vmem:[%s565 + $0x1c] sm:$0xf]
        %v614 = vld [vmem:[%s565 + $0x20] sm:$0xf]
        %v615 = vld [vmem:[%s565 + $0x24] sm:$0xf]
        %v616 = vld [vmem:[%s565 + $0x28] sm:$0xf]
        %v617 = vld [vmem:[%s565 + $0x2c] sm:$0xf]
        %v618 = vld [vmem:[%s565 + $0x30] sm:$0xf]
        %v619 = vld [vmem:[%s565 + $0x34] sm:$0xf]
        %v620 = vld [vmem:[%s565 + $0x38] sm:$0xf]
        %v621 = vld [vmem:[%s565 + $0x3c] sm:$0xf]
        %v622 = vld [vmem:[%s565 + $0x40] sm:$0xf]
        %v623 = vld [vmem:[%s565 + $0x44] sm:$0xf]
        %v624 = vld [vmem:[%s565 + $0x48] sm:$0xf]
        %v625 = vld [vmem:[%s565 + $0x4c] sm:$0xf]
        %v626 = vld [vmem:[%s565 + $0x50] sm:$0xf]
        %v627 = vld [vmem:[%s565 + $0x54] sm:$0xf]
        %v628 = vld [vmem:[%s565 + $0x58] sm:$0xf]
        %v629 = vld [vmem:[%s565 + $0x5c] sm:$0xf]
        %v630 = vld [vmem:[%s565 + $0x60] sm:$0xf]
        %v631 = vld [vmem:[%s565 + $0x64] sm:$0xf]
        %v632 = vld [vmem:[%s565 + $0x68] sm:$0xf]
        %v633 = vld [vmem:[%s565 + $0x6c] sm:$0xf]
        %v634 = vld [vmem:[%s565 + $0x70] sm:$0xf]
        %v635 = vld [vmem:[%s565 + $0x74] sm:$0xf]
        %v636 = vld [vmem:[%s565 + $0x78] sm:$0xf]
        %v637 = vld [vmem:[%s565 + $0x7c] sm:$0xf]
        %v638 = vld [vmem:[%s570] sm:$0xf]
        %v639 = vld [vmem:[%s570 + $0x4] sm:$0xf]
        %v640 = vld [vmem:[%s570 + $0x8] sm:$0xf]
        %v641 = vld [vmem:[%s570 + $0xc] sm:$0xf]
        %v642 = vld [vmem:[%s570 + $0x10] sm:$0xf]
        %v643 = vld [vmem:[%s570 + $0x14] sm:$0xf]
        %v644 = vld [vmem:[%s570 + $0x18] sm:$0xf]
        %v645 = vld [vmem:[%s570 + $0x1c] sm:$0xf]
        %v646 = vld [vmem:[%s570 + $0x20] sm:$0xf]
        %v647 = vld [vmem:[%s570 + $0x24] sm:$0xf]
        %v648 = vld [vmem:[%s570 + $0x28] sm:$0xf]
        %v649 = vld [vmem:[%s570 + $0x2c] sm:$0xf]
        %v650 = vld [vmem:[%s570 + $0x30] sm:$0xf]
        %v651 = vld [vmem:[%s570 + $0x34] sm:$0xf]
        %v652 = vld [vmem:[%s570 + $0x38] sm:$0xf]
        %v653 = vld [vmem:[%s570 + $0x3c] sm:$0xf]
        %v654 = vld [vmem:[%s570 + $0x40] sm:$0xf]
        %v655 = vld [vmem:[%s570 + $0x44] sm:$0xf]
        %v656 = vld [vmem:[%s570 + $0x48] sm:$0xf]
        %v657 = vld [vmem:[%s570 + $0x4c] sm:$0xf]
        %v658 = vld [vmem:[%s570 + $0x50] sm:$0xf]
        %v659 = vld [vmem:[%s570 + $0x54] sm:$0xf]
        %v660 = vld [vmem:[%s570 + $0x58] sm:$0xf]
        %v661 = vld [vmem:[%s570 + $0x5c] sm:$0xf]
        %v662 = vld [vmem:[%s570 + $0x60] sm:$0xf]
        %v663 = vld [vmem:[%s570 + $0x64] sm:$0xf]
        %v664 = vld [vmem:[%s570 + $0x68] sm:$0xf]
        %v665 = vld [vmem:[%s570 + $0x6c] sm:$0xf]
        %v666 = vld [vmem:[%s570 + $0x70] sm:$0xf]
        %v667 = vld [vmem:[%s570 + $0x74] sm:$0xf]
        %v668 = vld [vmem:[%s570 + $0x78] sm:$0xf]
        %v669 = vld [vmem:[%s570 + $0x7c] sm:$0xf]
        %v678 = vunpack.c.l.b16 %v590
        %v679 = vunpack.c.l.b16 %v591
        %v680 = vunpack.c.l.b16 %v592
        %v681 = vunpack.c.l.b16 %v593
        %v682 = vunpack.c.l.b16 %v594
        %v683 = vunpack.c.l.b16 %v595
        %v684 = vunpack.c.l.b16 %v596
        %v685 = vunpack.c.l.b16 %v597
        %v686 = vpack.c.b16 %v679, %v678
        %v687 = vpack.c.b16 %v681, %v680
        %v688 = vpack.c.b16 %v683, %v682
        %v689 = vpack.c.b16 %v685, %v684
        %v706 = vunpack.c.l.b16 %v606
        %v707 = vunpack.c.l.b16 %v607
        %v708 = vunpack.c.l.b16 %v608
        %v709 = vunpack.c.l.b16 %v609
        %v710 = vunpack.c.l.b16 %v610
        %v711 = vunpack.c.l.b16 %v611
        %v712 = vunpack.c.l.b16 %v612
        %v713 = vunpack.c.l.b16 %v613
        %v714 = vunpack.c.l.b16 %v614
        %v715 = vunpack.c.l.b16 %v615
        %v716 = vunpack.c.l.b16 %v616
        %v717 = vunpack.c.l.b16 %v617
        %v718 = vunpack.c.l.b16 %v618
        %v719 = vunpack.c.l.b16 %v619
        %v720 = vunpack.c.l.b16 %v620
        %v721 = vunpack.c.l.b16 %v621
        %v722 = vpack.c.b16 %v707, %v706
        %v723 = vpack.c.b16 %v709, %v708
        %v724 = vpack.c.b16 %v711, %v710
        %v725 = vpack.c.b16 %v713, %v712
        %v726 = vpack.c.b16 %v715, %v714
        %v727 = vpack.c.b16 %v717, %v716
        %v728 = vpack.c.b16 %v719, %v718
        %v729 = vpack.c.b16 %v721, %v720
        %vm730 = vcmask 523264
        %v732 = vsel %vm730, %v686, 0
        %v735 = vsel %vm730, %v687, 0
        %v738 = vsel %vm730, %v688, 0
        %v741 = vsel %vm730, %v689, 0
        %v744 = vsel %vm730, %v722, 0
        %v747 = vsel %vm730, %v723, 0
        %v750 = vsel %vm730, %v724, 0
        %v753 = vsel %vm730, %v725, 0
        %v756 = vsel %vm730, %v726, 0
        %v759 = vsel %vm730, %v727, 0
        %v762 = vsel %vm730, %v728, 0
        %v765 = vsel %vm730, %v729, 0
        %767 = vmatprep.subr.bf16.mxu0 0
        %768 = vmatpush1.bf16.xpose.msra.mxu0 %v744
        %769 = vmatprep.subr.bf16.mxu0 0
        %770 = vmatpush1.bf16.xpose.msra.mxu0 %v747
        %771 = vmatprep.subr.bf16.mxu0 0
        %772 = vmatpush1.bf16.xpose.msra.mxu0 %v750
        %773 = vmatprep.subr.bf16.mxu0 0
        %774 = vmatpush1.bf16.xpose.msra.mxu0 %v753
        %775 = vmatprep.subr.bf16.mxu0 0
        %776 = vmatpush1.bf16.xpose.msra.mxu0 %v756
        %777 = vmatprep.subr.bf16.mxu0 0
        %778 = vmatpush1.bf16.xpose.msra.mxu0 %v759
        %779 = vmatprep.subr.bf16.mxu0 0
        %780 = vmatpush1.bf16.xpose.msra.mxu0 %v762
        %781 = vmatprep.subr.bf16.mxu0 0
        %782 = vmatpush1.bf16.xpose.msra.mxu0 %v765
        %783 = vmatprep.subr.bf16.mxu0 0
        %784 = vmatpush1.bf16.xpose.msra.mxu0 0
        %785 = vmatprep.subr.bf16.mxu0 0
        %786 = vmatpush1.bf16.xpose.msra.mxu0 0
        %787 = vmatprep.subr.bf16.mxu0 0
        %788 = vmatpush1.bf16.xpose.msra.mxu0 0
        %789 = vmatprep.subr.bf16.mxu0 0
        %790 = vmatpush1.bf16.xpose.msra.mxu0 0
        %791 = vmatprep.subr.bf16.mxu0 0
        %792 = vmatpush1.bf16.xpose.msra.mxu0 0
        %793 = vmatprep.subr.bf16.mxu0 0
        %794 = vmatpush1.bf16.xpose.msra.mxu0 0
        %795 = vmatprep.subr.bf16.mxu0 0
        %796 = vmatpush1.bf16.xpose.msra.mxu0 0
        %797 = vmatprep.subr.bf16.mxu0 0
        %798 = vmatpush1.bf16.xpose.msra.mxu0 0
        %799 = vmatprep.mubr.bf16.mxu0 0
        %800 = vmatmul.mubr.bf16.gmra.mrb[0].mxu0 %v732
        %v801 = vpop.f32.mrb[0].mxu0
        %v802 = vadd.f32 0.0, %v801
        %v803 = vpop.f32.mrb[0].mxu0
        %v804 = vpop.f32.mrb[0].mxu0
        %v805 = vadd.f32 0.0, %v804
        %v806 = vpop.f32.mrb[0].mxu0
        %807 = vmatprep.mubr.bf16.mxu0 0
        %808 = vmatmul.mubr.bf16.gmra.mrb[0].mxu0 %v735
        %v809 = vpop.f32.mrb[0].mxu0
        %v810 = vadd.f32 0.0, %v809
        %v811 = vpop.f32.mrb[0].mxu0
        %v812 = vpop.f32.mrb[0].mxu0
        %v813 = vadd.f32 0.0, %v812
        %v814 = vpop.f32.mrb[0].mxu0
        %815 = vmatprep.mubr.bf16.mxu0 0
        %816 = vmatmul.mubr.bf16.gmra.mrb[0].mxu0 %v738
        %v817 = vpop.f32.mrb[0].mxu0
        %v818 = vadd.f32 0.0, %v817
        %v819 = vpop.f32.mrb[0].mxu0
        %v820 = vpop.f32.mrb[0].mxu0
        %v821 = vadd.f32 0.0, %v820
        %v822 = vpop.f32.mrb[0].mxu0
        %823 = vmatprep.mubr.bf16.mxu0 0
        %824 = vmatmul.mubr.bf16.gmra.mrb[0].mxu0 %v741
        %v825 = vpop.f32.mrb[0].mxu0
        %v826 = vadd.f32 0.0, %v825
        %v827 = vpop.f32.mrb[0].mxu0
        %v828 = vpop.f32.mrb[0].mxu0
        %v829 = vadd.f32 0.0, %v828
        %v830 = vpop.f32.mrb[0].mxu0
        %831 = vdwg.mxu0
        %v840 = vunpack.c.l.b16 %v598
        %v841 = vunpack.c.l.b16 %v599
        %v842 = vunpack.c.l.b16 %v600
        %v843 = vunpack.c.l.b16 %v601
        %v844 = vunpack.c.l.b16 %v602
        %v845 = vunpack.c.l.b16 %v603
        %v846 = vunpack.c.l.b16 %v604
        %v847 = vunpack.c.l.b16 %v605
        %v848 = vpack.c.b16 %v841, %v840
        %v849 = vpack.c.b16 %v843, %v842
        %v850 = vpack.c.b16 %v845, %v844
        %v851 = vpack.c.b16 %v847, %v846
        %v868 = vunpack.c.l.b16 %v622
        %v869 = vunpack.c.l.b16 %v623
        %v870 = vunpack.c.l.b16 %v624
        %v871 = vunpack.c.l.b16 %v625
        %v872 = vunpack.c.l.b16 %v626
        %v873 = vunpack.c.l.b16 %v627
        %v874 = vunpack.c.l.b16 %v628
        %v875 = vunpack.c.l.b16 %v629
        %v876 = vunpack.c.l.b16 %v630
        %v877 = vunpack.c.l.b16 %v631
        %v878 = vunpack.c.l.b16 %v632
        %v879 = vunpack.c.l.b16 %v633
        %v880 = vunpack.c.l.b16 %v634
        %v881 = vunpack.c.l.b16 %v635
        %v882 = vunpack.c.l.b16 %v636
        %v883 = vunpack.c.l.b16 %v637
        %v884 = vpack.c.b16 %v869, %v868
        %v885 = vpack.c.b16 %v871, %v870
        %v886 = vpack.c.b16 %v873, %v872
        %v887 = vpack.c.b16 %v875, %v874
        %v888 = vpack.c.b16 %v877, %v876
        %v889 = vpack.c.b16 %v879, %v878
        %v890 = vpack.c.b16 %v881, %v880
        %v891 = vpack.c.b16 %v883, %v882
        %v893 = vsel %vm730, %v848, 0
        %v896 = vsel %vm730, %v849, 0
        %v899 = vsel %vm730, %v850, 0
        %v902 = vsel %vm730, %v851, 0
        %v905 = vsel %vm730, %v884, 0
        %v908 = vsel %vm730, %v885, 0
        %v911 = vsel %vm730, %v886, 0
        %v914 = vsel %vm730, %v887, 0
        %v917 = vsel %vm730, %v888, 0
        %v920 = vsel %vm730, %v889, 0
        %v923 = vsel %vm730, %v890, 0
        %v926 = vsel %vm730, %v891, 0
        %928 = vmatprep.subr.bf16.mxu0 0
        %929 = vmatpush1.bf16.xpose.msra.mxu0 %v905
        %930 = vmatprep.subr.bf16.mxu0 0
        %931 = vmatpush1.bf16.xpose.msra.mxu0 %v908
        %932 = vmatprep.subr.bf16.mxu0 0
        %933 = vmatpush1.bf16.xpose.msra.mxu0 %v911
        %934 = vmatprep.subr.bf16.mxu0 0
        %935 = vmatpush1.bf16.xpose.msra.mxu0 %v914
        %936 = vmatprep.subr.bf16.mxu0 0
        %937 = vmatpush1.bf16.xpose.msra.mxu0 %v917
        %938 = vmatprep.subr.bf16.mxu0 0
        %939 = vmatpush1.bf16.xpose.msra.mxu0 %v920
        %940 = vmatprep.subr.bf16.mxu0 0
        %941 = vmatpush1.bf16.xpose.msra.mxu0 %v923
        %942 = vmatprep.subr.bf16.mxu0 0
        %943 = vmatpush1.bf16.xpose.msra.mxu0 %v926
        %944 = vmatprep.subr.bf16.mxu0 0
        %945 = vmatpush1.bf16.xpose.msra.mxu0 0
        %946 = vmatprep.subr.bf16.mxu0 0
        %947 = vmatpush1.bf16.xpose.msra.mxu0 0
        %948 = vmatprep.subr.bf16.mxu0 0
        %949 = vmatpush1.bf16.xpose.msra.mxu0 0
        %950 = vmatprep.subr.bf16.mxu0 0
        %951 = vmatpush1.bf16.xpose.msra.mxu0 0
        %952 = vmatprep.subr.bf16.mxu0 0
        %953 = vmatpush1.bf16.xpose.msra.mxu0 0
        %954 = vmatprep.subr.bf16.mxu0 0
        %955 = vmatpush1.bf16.xpose.msra.mxu0 0
        %956 = vmatprep.subr.bf16.mxu0 0
        %957 = vmatpush1.bf16.xpose.msra.mxu0 0
        %958 = vmatprep.subr.bf16.mxu0 0
        %959 = vmatpush1.bf16.xpose.msra.mxu0 0
        %960 = vmatprep.mubr.bf16.mxu0 0
        %961 = vmatmul.mubr.bf16.gmra.mrb[0].mxu0 %v893
        %v962 = vpop.f32.mrb[0].mxu0
        %v963 = vadd.f32 0.0, %v962
        %v964 = vpop.f32.mrb[0].mxu0
        %v965 = vpop.f32.mrb[0].mxu0
        %v966 = vadd.f32 0.0, %v965
        %v967 = vpop.f32.mrb[0].mxu0
        %968 = vmatprep.mubr.bf16.mxu0 0
        %969 = vmatmul.mubr.bf16.gmra.mrb[0].mxu0 %v896
        %v970 = vpop.f32.mrb[0].mxu0
        %v971 = vadd.f32 0.0, %v970
        %v972 = vpop.f32.mrb[0].mxu0
        %v973 = vpop.f32.mrb[0].mxu0
        %v974 = vadd.f32 0.0, %v973
        %v975 = vpop.f32.mrb[0].mxu0
        %976 = vmatprep.mubr.bf16.mxu0 0
        %977 = vmatmul.mubr.bf16.gmra.mrb[0].mxu0 %v899
        %v978 = vpop.f32.mrb[0].mxu0
        %v979 = vadd.f32 0.0, %v978
        %v980 = vpop.f32.mrb[0].mxu0
        %v981 = vpop.f32.mrb[0].mxu0
        %v982 = vadd.f32 0.0, %v981
        %v983 = vpop.f32.mrb[0].mxu0
        %984 = vmatprep.mubr.bf16.mxu0 0
        %985 = vmatmul.mubr.bf16.gmra.mrb[0].mxu0 %v902
        %v986 = vpop.f32.mrb[0].mxu0
        %v987 = vadd.f32 0.0, %v986
        %v988 = vpop.f32.mrb[0].mxu0
        %v989 = vpop.f32.mrb[0].mxu0
        %v990 = vadd.f32 0.0, %v989
        %v991 = vpop.f32.mrb[0].mxu0
        %992 = vdwg.mxu0
        %993 = vmax.xlane.f32.xlu0 %v802
        %v994 = vpop.xlane.xlu0 %993
        %995 = vmax.xlane.f32.xlu0 %v805
        %v996 = vpop.xlane.xlu0 %995
        %997 = vmax.xlane.f32.xlu0 %v810
        %v998 = vpop.xlane.xlu0 %997
        %999 = vmax.xlane.f32.xlu0 %v813
        %v1000 = vpop.xlane.xlu0 %999
        %1001 = vmax.xlane.f32.xlu0 %v818
        %v1002 = vpop.xlane.xlu0 %1001
        %1003 = vmax.xlane.f32.xlu0 %v821
        %v1004 = vpop.xlane.xlu0 %1003
        %1005 = vmax.xlane.f32.xlu0 %v826
        %v1006 = vpop.xlane.xlu0 %1005
        %1007 = vmax.xlane.f32.xlu0 %v829
        %v1008 = vpop.xlane.xlu0 %1007
        %1009 = vmax.xlane.f32.xlu0 %v963
        %v1010 = vpop.xlane.xlu0 %1009
        %1011 = vmax.xlane.f32.xlu0 %v966
        %v1012 = vpop.xlane.xlu0 %1011
        %1013 = vmax.xlane.f32.xlu0 %v971
        %v1014 = vpop.xlane.xlu0 %1013
        %1015 = vmax.xlane.f32.xlu0 %v974
        %v1016 = vpop.xlane.xlu0 %1015
        %1017 = vmax.xlane.f32.xlu0 %v979
        %v1018 = vpop.xlane.xlu0 %1017
        %1019 = vmax.xlane.f32.xlu0 %v982
        %v1020 = vpop.xlane.xlu0 %1019
        %1021 = vmax.xlane.f32.xlu0 %v987
        %v1022 = vpop.xlane.xlu0 %1021
        %1023 = vmax.xlane.f32.xlu0 %v990
        %v1024 = vpop.xlane.xlu0 %1023
        %v1025 = vsub.f32 %v802, %v994
        %v1026 = vsub.f32 %v805, %v996
        %v1027 = vsub.f32 %v810, %v998
        %v1028 = vsub.f32 %v813, %v1000
        %v1029 = vsub.f32 %v818, %v1002
        %v1030 = vsub.f32 %v821, %v1004
        %v1031 = vsub.f32 %v826, %v1006
        %v1032 = vsub.f32 %v829, %v1008
        %v1033 = vsub.f32 %v963, %v1010
        %v1034 = vsub.f32 %v966, %v1012
        %v1035 = vsub.f32 %v971, %v1014
        %v1036 = vsub.f32 %v974, %v1016
        %v1037 = vsub.f32 %v979, %v1018
        %v1038 = vsub.f32 %v982, %v1020
        %v1039 = vsub.f32 %v987, %v1022
        %v1040 = vsub.f32 %v990, %v1024
        %v1041 = vmul.f32 %v1025, 1.442695
        %v1042 = vpow.pop %v1041
        %v1043 = vmul.f32 %v1026, 1.442695
        %v1044 = vpow.pop %v1043
        %v1045 = vmul.f32 %v1027, 1.442695
        %v1046 = vpow.pop %v1045
        %v1047 = vmul.f32 %v1028, 1.442695
        %v1048 = vpow.pop %v1047
        %v1049 = vmul.f32 %v1029, 1.442695
        %v1050 = vpow.pop %v1049
        %v1051 = vmul.f32 %v1030, 1.442695
        %v1052 = vpow.pop %v1051
        %v1053 = vmul.f32 %v1031, 1.442695
        %v1054 = vpow.pop %v1053
        %v1055 = vmul.f32 %v1032, 1.442695
        %v1056 = vpow.pop %v1055
        %v1057 = vmul.f32 %v1033, 1.442695
        %v1058 = vpow.pop %v1057
        %v1059 = vmul.f32 %v1034, 1.442695
        %v1060 = vpow.pop %v1059
        %v1061 = vmul.f32 %v1035, 1.442695
        %v1062 = vpow.pop %v1061
        %v1063 = vmul.f32 %v1036, 1.442695
        %v1064 = vpow.pop %v1063
        %v1065 = vmul.f32 %v1037, 1.442695
        %v1066 = vpow.pop %v1065
        %v1067 = vmul.f32 %v1038, 1.442695
        %v1068 = vpow.pop %v1067
        %v1069 = vmul.f32 %v1039, 1.442695
        %v1070 = vpow.pop %v1069
        %v1071 = vmul.f32 %v1040, 1.442695
        %v1072 = vpow.pop %v1071
        %1073 = vadd.xlane.f32.xlu0 %v1042
        %v1074 = vpop.xlane.xlu0 %1073
        %1075 = vadd.xlane.f32.xlu0 %v1044
        %v1076 = vpop.xlane.xlu0 %1075
        %1077 = vadd.xlane.f32.xlu0 %v1046
        %v1078 = vpop.xlane.xlu0 %1077
        %1079 = vadd.xlane.f32.xlu0 %v1048
        %v1080 = vpop.xlane.xlu0 %1079
        %1081 = vadd.xlane.f32.xlu0 %v1050
        %v1082 = vpop.xlane.xlu0 %1081
        %1083 = vadd.xlane.f32.xlu0 %v1052
        %v1084 = vpop.xlane.xlu0 %1083
        %1085 = vadd.xlane.f32.xlu0 %v1054
        %v1086 = vpop.xlane.xlu0 %1085
        %1087 = vadd.xlane.f32.xlu0 %v1056
        %v1088 = vpop.xlane.xlu0 %1087
        %1089 = vadd.xlane.f32.xlu0 %v1058
        %v1090 = vpop.xlane.xlu0 %1089
        %1091 = vadd.xlane.f32.xlu0 %v1060
        %v1092 = vpop.xlane.xlu0 %1091
        %1093 = vadd.xlane.f32.xlu0 %v1062
        %v1094 = vpop.xlane.xlu0 %1093
        %1095 = vadd.xlane.f32.xlu0 %v1064
        %v1096 = vpop.xlane.xlu0 %1095
        %1097 = vadd.xlane.f32.xlu0 %v1066
        %v1098 = vpop.xlane.xlu0 %1097
        %1099 = vadd.xlane.f32.xlu0 %v1068
        %v1100 = vpop.xlane.xlu0 %1099
        %1101 = vadd.xlane.f32.xlu0 %v1070
        %v1102 = vpop.xlane.xlu0 %1101
        %1103 = vadd.xlane.f32.xlu0 %v1072
        %v1104 = vpop.xlane.xlu0 %1103
        %v1105 = vrcp.pop %v1074
        %v1106 = vrcp.pop %v1076
        %v1107 = vrcp.pop %v1078
        %v1108 = vrcp.pop %v1080
        %v1109 = vrcp.pop %v1082
        %v1110 = vrcp.pop %v1084
        %v1111 = vrcp.pop %v1086
        %v1112 = vrcp.pop %v1088
        %v1113 = vrcp.pop %v1090
        %v1114 = vrcp.pop %v1092
        %v1115 = vrcp.pop %v1094
        %v1116 = vrcp.pop %v1096
        %v1117 = vrcp.pop %v1098
        %v1118 = vrcp.pop %v1100
        %v1119 = vrcp.pop %v1102
        %v1120 = vrcp.pop %v1104
        %v1121 = vmul.f32 %v1042, %v1105
        %v1122 = vmul.f32 %v1044, %v1106
        %v1123 = vmul.f32 %v1046, %v1107
        %v1124 = vmul.f32 %v1048, %v1108
        %v1125 = vmul.f32 %v1050, %v1109
        %v1126 = vmul.f32 %v1052, %v1110
        %v1127 = vmul.f32 %v1054, %v1111
        %v1128 = vmul.f32 %v1056, %v1112
        %v1129 = vmul.f32 %v1058, %v1113
        %v1130 = vmul.f32 %v1060, %v1114
        %v1131 = vmul.f32 %v1062, %v1115
        %v1132 = vmul.f32 %v1064, %v1116
        %v1133 = vmul.f32 %v1066, %v1117
        %v1134 = vmul.f32 %v1068, %v1118
        %v1135 = vmul.f32 %v1070, %v1119
        %v1136 = vmul.f32 %v1072, %v1120
        %v1137 = vpack.c.bf16 %v1122, %v1121
        %v1138 = vpack.c.bf16 %v1124, %v1123
        %v1139 = vpack.c.bf16 %v1126, %v1125
        %v1140 = vpack.c.bf16 %v1128, %v1127
        %v1141 = vpack.c.bf16 %v1130, %v1129
        %v1142 = vpack.c.bf16 %v1132, %v1131
        %v1143 = vpack.c.bf16 %v1134, %v1133
        %v1144 = vpack.c.bf16 %v1136, %v1135
        %v1161 = vunpack.c.l.b16 %v638
        %v1162 = vunpack.c.l.b16 %v639
        %v1163 = vunpack.c.l.b16 %v640
        %v1164 = vunpack.c.l.b16 %v641
        %v1165 = vunpack.c.l.b16 %v642
        %v1166 = vunpack.c.l.b16 %v643
        %v1167 = vunpack.c.l.b16 %v644
        %v1168 = vunpack.c.l.b16 %v645
        %v1169 = vunpack.c.l.b16 %v646
        %v1170 = vunpack.c.l.b16 %v647
        %v1171 = vunpack.c.l.b16 %v648
        %v1172 = vunpack.c.l.b16 %v649
        %v1173 = vunpack.c.l.b16 %v650
        %v1174 = vunpack.c.l.b16 %v651
        %v1175 = vunpack.c.l.b16 %v652
        %v1176 = vunpack.c.l.b16 %v653
        %v1177 = vpack.c.b16 %v1162, %v1161
        %v1178 = vpack.c.b16 %v1164, %v1163
        %v1179 = vpack.c.b16 %v1166, %v1165
        %v1180 = vpack.c.b16 %v1168, %v1167
        %v1181 = vpack.c.b16 %v1170, %v1169
        %v1182 = vpack.c.b16 %v1172, %v1171
        %v1183 = vpack.c.b16 %v1174, %v1173
        %v1184 = vpack.c.b16 %v1176, %v1175
        %1193 = vmatprep.subr.bf16.mxu0 0
        %1194 = vmatpush1.bf16.msra.mxu0 %v1177
        %1195 = vmatprep.subr.bf16.mxu0 0
        %1196 = vmatpush1.bf16.msra.mxu0 %v1178
        %1197 = vmatprep.subr.bf16.mxu0 0
        %1198 = vmatpush1.bf16.msra.mxu0 %v1179
        %1199 = vmatprep.subr.bf16.mxu0 0
        %1200 = vmatpush1.bf16.msra.mxu0 %v1180
        %1201 = vmatprep.subr.bf16.mxu0 0
        %1202 = vmatpush1.bf16.msra.mxu0 %v1181
        %1203 = vmatprep.subr.bf16.mxu0 0
        %1204 = vmatpush1.bf16.msra.mxu0 %v1182
        %1205 = vmatprep.subr.bf16.mxu0 0
        %1206 = vmatpush1.bf16.msra.mxu0 %v1183
        %1207 = vmatprep.subr.bf16.mxu0 0
        %1208 = vmatpush1.bf16.msra.mxu0 %v1184
        %1209 = vmatprep.subr.bf16.mxu0 0
        %1210 = vmatpush1.bf16.msra.mxu0 0
        %1211 = vmatprep.subr.bf16.mxu0 0
        %1212 = vmatpush1.bf16.msra.mxu0 0
        %1213 = vmatprep.subr.bf16.mxu0 0
        %1214 = vmatpush1.bf16.msra.mxu0 0
        %1215 = vmatprep.subr.bf16.mxu0 0
        %1216 = vmatpush1.bf16.msra.mxu0 0
        %1217 = vmatprep.subr.bf16.mxu0 0
        %1218 = vmatpush1.bf16.msra.mxu0 0
        %1219 = vmatprep.subr.bf16.mxu0 0
        %1220 = vmatpush1.bf16.msra.mxu0 0
        %1221 = vmatprep.subr.bf16.mxu0 0
        %1222 = vmatpush1.bf16.msra.mxu0 0
        %1223 = vmatprep.subr.bf16.mxu0 0
        %1224 = vmatpush1.bf16.msra.mxu0 0
        %1225 = vmatprep.mubr.bf16.mxu0 0
        %1226 = vmatmul.mubr.bf16.gmra.mrb[0].mxu0 %v1137
        %v1227 = vpop.f32.mrb[0].mxu0
        %v1228 = vadd.f32 0.0, %v1227
        %v1229 = vpop.f32.mrb[0].mxu0
        %v1230 = vpop.f32.mrb[0].mxu0
        %v1231 = vadd.f32 0.0, %v1230
        %v1232 = vpop.f32.mrb[0].mxu0
        %1233 = vmatprep.mubr.bf16.mxu0 0
        %1234 = vmatmul.mubr.bf16.gmra.mrb[0].mxu0 %v1138
        %v1235 = vpop.f32.mrb[0].mxu0
        %v1236 = vadd.f32 0.0, %v1235
        %v1237 = vpop.f32.mrb[0].mxu0
        %v1238 = vpop.f32.mrb[0].mxu0
        %v1239 = vadd.f32 0.0, %v1238
        %v1240 = vpop.f32.mrb[0].mxu0
        %1241 = vmatprep.mubr.bf16.mxu0 0
        %1242 = vmatmul.mubr.bf16.gmra.mrb[0].mxu0 %v1139
        %v1243 = vpop.f32.mrb[0].mxu0
        %v1244 = vadd.f32 0.0, %v1243
        %v1245 = vpop.f32.mrb[0].mxu0
        %v1246 = vpop.f32.mrb[0].mxu0
        %v1247 = vadd.f32 0.0, %v1246
        %v1248 = vpop.f32.mrb[0].mxu0
        %1249 = vmatprep.mubr.bf16.mxu0 0
        %1250 = vmatmul.mubr.bf16.gmra.mrb[0].mxu0 %v1140
        %v1251 = vpop.f32.mrb[0].mxu0
        %v1252 = vadd.f32 0.0, %v1251
        %v1253 = vpop.f32.mrb[0].mxu0
        %v1254 = vpop.f32.mrb[0].mxu0
        %v1255 = vadd.f32 0.0, %v1254
        %v1256 = vpop.f32.mrb[0].mxu0
        %1257 = vdwg.mxu0
        %v1274 = vunpack.c.l.b16 %v654
        %v1275 = vunpack.c.l.b16 %v655
        %v1276 = vunpack.c.l.b16 %v656
        %v1277 = vunpack.c.l.b16 %v657
        %v1278 = vunpack.c.l.b16 %v658
        %v1279 = vunpack.c.l.b16 %v659
        %v1280 = vunpack.c.l.b16 %v660
        %v1281 = vunpack.c.l.b16 %v661
        %v1282 = vunpack.c.l.b16 %v662
        %v1283 = vunpack.c.l.b16 %v663
        %v1284 = vunpack.c.l.b16 %v664
        %v1285 = vunpack.c.l.b16 %v665
        %v1286 = vunpack.c.l.b16 %v666
        %v1287 = vunpack.c.l.b16 %v667
        %v1288 = vunpack.c.l.b16 %v668
        %v1289 = vunpack.c.l.b16 %v669
        %v1290 = vpack.c.b16 %v1275, %v1274
        %v1291 = vpack.c.b16 %v1277, %v1276
        %v1292 = vpack.c.b16 %v1279, %v1278
        %v1293 = vpack.c.b16 %v1281, %v1280
        %v1294 = vpack.c.b16 %v1283, %v1282
        %v1295 = vpack.c.b16 %v1285, %v1284
        %v1296 = vpack.c.b16 %v1287, %v1286
        %v1297 = vpack.c.b16 %v1289, %v1288
        %1306 = vmatprep.subr.bf16.mxu0 0
        %1307 = vmatpush1.bf16.msra.mxu0 %v1290
        %1308 = vmatprep.subr.bf16.mxu0 0
        %1309 = vmatpush1.bf16.msra.mxu0 %v1291
        %1310 = vmatprep.subr.bf16.mxu0 0
        %1311 = vmatpush1.bf16.msra.mxu0 %v1292
        %1312 = vmatprep.subr.bf16.mxu0 0
        %1313 = vmatpush1.bf16.msra.mxu0 %v1293
        %1314 = vmatprep.subr.bf16.mxu0 0
        %1315 = vmatpush1.bf16.msra.mxu0 %v1294
        %1316 = vmatprep.subr.bf16.mxu0 0
        %1317 = vmatpush1.bf16.msra.mxu0 %v1295
        %1318 = vmatprep.subr.bf16.mxu0 0
        %1319 = vmatpush1.bf16.msra.mxu0 %v1296
        %1320 = vmatprep.subr.bf16.mxu0 0
        %1321 = vmatpush1.bf16.msra.mxu0 %v1297
        %1322 = vmatprep.subr.bf16.mxu0 0
        %1323 = vmatpush1.bf16.msra.mxu0 0
        %1324 = vmatprep.subr.bf16.mxu0 0
        %1325 = vmatpush1.bf16.msra.mxu0 0
        %1326 = vmatprep.subr.bf16.mxu0 0
        %1327 = vmatpush1.bf16.msra.mxu0 0
        %1328 = vmatprep.subr.bf16.mxu0 0
        %1329 = vmatpush1.bf16.msra.mxu0 0
        %1330 = vmatprep.subr.bf16.mxu0 0
        %1331 = vmatpush1.bf16.msra.mxu0 0
        %1332 = vmatprep.subr.bf16.mxu0 0
        %1333 = vmatpush1.bf16.msra.mxu0 0
        %1334 = vmatprep.subr.bf16.mxu0 0
        %1335 = vmatpush1.bf16.msra.mxu0 0
        %1336 = vmatprep.subr.bf16.mxu0 0
        %1337 = vmatpush1.bf16.msra.mxu0 0
        %1338 = vmatprep.mubr.bf16.mxu0 0
        %1339 = vmatmul.mubr.bf16.gmra.mrb[0].mxu0 %v1141
        %v1340 = vpop.f32.mrb[0].mxu0
        %v1341 = vadd.f32 0.0, %v1340
        %v1342 = vpop.f32.mrb[0].mxu0
        %v1343 = vpop.f32.mrb[0].mxu0
        %v1344 = vadd.f32 0.0, %v1343
        %v1345 = vpop.f32.mrb[0].mxu0
        %1346 = vmatprep.mubr.bf16.mxu0 0
        %1347 = vmatmul.mubr.bf16.gmra.mrb[0].mxu0 %v1142
        %v1348 = vpop.f32.mrb[0].mxu0
        %v1349 = vadd.f32 0.0, %v1348
        %v1350 = vpop.f32.mrb[0].mxu0
        %v1351 = vpop.f32.mrb[0].mxu0
        %v1352 = vadd.f32 0.0, %v1351
        %v1353 = vpop.f32.mrb[0].mxu0
        %1354 = vmatprep.mubr.bf16.mxu0 0
        %1355 = vmatmul.mubr.bf16.gmra.mrb[0].mxu0 %v1143
        %v1356 = vpop.f32.mrb[0].mxu0
        %v1357 = vadd.f32 0.0, %v1356
        %v1358 = vpop.f32.mrb[0].mxu0
        %v1359 = vpop.f32.mrb[0].mxu0
        %v1360 = vadd.f32 0.0, %v1359
        %v1361 = vpop.f32.mrb[0].mxu0
        %1362 = vmatprep.mubr.bf16.mxu0 0
        %1363 = vmatmul.mubr.bf16.gmra.mrb[0].mxu0 %v1144
        %v1364 = vpop.f32.mrb[0].mxu0
        %v1365 = vadd.f32 0.0, %v1364
        %v1366 = vpop.f32.mrb[0].mxu0
        %v1367 = vpop.f32.mrb[0].mxu0
        %v1368 = vadd.f32 0.0, %v1367
        %v1369 = vpop.f32.mrb[0].mxu0
        %1370 = vdwg.mxu0
        %v1371 = vpack.c.bf16 %v1231, %v1228
        %v1372 = vpack.c.bf16 %v1239, %v1236
        %v1373 = vpack.c.bf16 %v1247, %v1244
        %v1374 = vpack.c.bf16 %v1255, %v1252
        %v1375 = vpack.c.bf16 %v1344, %v1341
        %v1376 = vpack.c.bf16 %v1352, %v1349
        %v1377 = vpack.c.bf16 %v1360, %v1357
        %v1378 = vpack.c.bf16 %v1368, %v1365
        %v1379 = vld [vmem:[#allocation3] sm:$0xf]
        %v1380 = vld [vmem:[#allocation3 + $0x4] sm:$0xf]
        %v1381 = vld [vmem:[#allocation3 + $0x8] sm:$0xf]
        %v1382 = vld [vmem:[#allocation3 + $0xc] sm:$0xf]
        %v1383 = vld [vmem:[#allocation3 + $0x10] sm:$0xf]
        %v1384 = vld [vmem:[#allocation3 + $0x14] sm:$0xf]
        %v1385 = vld [vmem:[#allocation3 + $0x18] sm:$0xf]
        %v1386 = vld [vmem:[#allocation3 + $0x1c] sm:$0xf]
        %v1387 = vld [vmem:[#allocation3 + $0x20] sm:$0xf]
        %v1388 = vld [vmem:[#allocation3 + $0x24] sm:$0xf]
        %v1389 = vld [vmem:[#allocation3 + $0x28] sm:$0xf]
        %v1390 = vld [vmem:[#allocation3 + $0x2c] sm:$0xf]
        %v1391 = vld [vmem:[#allocation3 + $0x30] sm:$0xf]
        %v1392 = vld [vmem:[#allocation3 + $0x34] sm:$0xf]
        %v1393 = vld [vmem:[#allocation3 + $0x38] sm:$0xf]
        %v1394 = vld [vmem:[#allocation3 + $0x3c] sm:$0xf]
        %v1403 = vunpack.c.l.b16 %v1379
        %v1404 = vunpack.c.l.b16 %v1380
        %v1405 = vunpack.c.l.b16 %v1381
        %v1406 = vunpack.c.l.b16 %v1382
        %v1407 = vunpack.c.l.b16 %v1383
        %v1408 = vunpack.c.l.b16 %v1384
        %v1409 = vunpack.c.l.b16 %v1385
        %v1410 = vunpack.c.l.b16 %v1386
        %v1411 = vpack.c.b16 %v1404, %v1403
        %v1412 = vpack.c.b16 %v1406, %v1405
        %v1413 = vpack.c.b16 %v1408, %v1407
        %v1414 = vpack.c.b16 %v1410, %v1409
        %v1420 = vsel %vm730, %v1371, 0
        %v1423 = vsel %vm730, %v1372, 0
        %v1426 = vsel %vm730, %v1373, 0
        %v1429 = vsel %vm730, %v1374, 0
        %1431 = vmatprep.subr.bf16.mxu0 0
        %1432 = vmatpush1.bf16.msra.mxu0 %v1411
        %1433 = vmatprep.subr.bf16.mxu0 0
        %1434 = vmatpush1.bf16.msra.mxu0 %v1412
        %1435 = vmatprep.subr.bf16.mxu0 0
        %1436 = vmatpush1.bf16.msra.mxu0 %v1413
        %1437 = vmatprep.subr.bf16.mxu0 0
        %1438 = vmatpush1.bf16.msra.mxu0 %v1414
        %1439 = vmatprep.subr.bf16.mxu0 0
        %1440 = vmatpush1.bf16.msra.mxu0 0
        %1441 = vmatprep.subr.bf16.mxu0 0
        %1442 = vmatpush1.bf16.msra.mxu0 0
        %1443 = vmatprep.subr.bf16.mxu0 0
        %1444 = vmatpush1.bf16.msra.mxu0 0
        %1445 = vmatprep.subr.bf16.mxu0 0
        %1446 = vmatpush1.bf16.msra.mxu0 0
        %1447 = vmatprep.subr.bf16.mxu0 0
        %1448 = vmatpush1.bf16.msra.mxu0 0
        %1449 = vmatprep.subr.bf16.mxu0 0
        %1450 = vmatpush1.bf16.msra.mxu0 0
        %1451 = vmatprep.subr.bf16.mxu0 0
        %1452 = vmatpush1.bf16.msra.mxu0 0
        %1453 = vmatprep.subr.bf16.mxu0 0
        %1454 = vmatpush1.bf16.msra.mxu0 0
        %1455 = vmatprep.subr.bf16.mxu0 0
        %1456 = vmatpush1.bf16.msra.mxu0 0
        %1457 = vmatprep.subr.bf16.mxu0 0
        %1458 = vmatpush1.bf16.msra.mxu0 0
        %1459 = vmatprep.subr.bf16.mxu0 0
        %1460 = vmatpush1.bf16.msra.mxu0 0
        %1461 = vmatprep.subr.bf16.mxu0 0
        %1462 = vmatpush1.bf16.msra.mxu0 0
        %1463 = vmatprep.mubr.bf16.mxu0 0
        %1464 = vmatmul.mubr.bf16.gmra.mrb[0].mxu0 %v1420
        %v1465 = vpop.f32.mrb[0].mxu0
        %v1466 = vadd.f32 0.0, %v1465
        %v1467 = vpop.f32.mrb[0].mxu0
        %v1468 = vpop.f32.mrb[0].mxu0
        %v1469 = vadd.f32 0.0, %v1468
        %v1470 = vpop.f32.mrb[0].mxu0
        %1471 = vmatprep.mubr.bf16.mxu0 0
        %1472 = vmatmul.mubr.bf16.gmra.mrb[0].mxu0 %v1423
        %v1473 = vpop.f32.mrb[0].mxu0
        %v1474 = vadd.f32 0.0, %v1473
        %v1475 = vpop.f32.mrb[0].mxu0
        %v1476 = vpop.f32.mrb[0].mxu0
        %v1477 = vadd.f32 0.0, %v1476
        %v1478 = vpop.f32.mrb[0].mxu0
        %1479 = vmatprep.mubr.bf16.mxu0 0
        %1480 = vmatmul.mubr.bf16.gmra.mrb[0].mxu0 %v1426
        %v1481 = vpop.f32.mrb[0].mxu0
        %v1482 = vadd.f32 0.0, %v1481
        %v1483 = vpop.f32.mrb[0].mxu0
        %v1484 = vpop.f32.mrb[0].mxu0
        %v1485 = vadd.f32 0.0, %v1484
        %v1486 = vpop.f32.mrb[0].mxu0
        %1487 = vmatprep.mubr.bf16.mxu0 0
        %1488 = vmatmul.mubr.bf16.gmra.mrb[0].mxu0 %v1429
        %v1489 = vpop.f32.mrb[0].mxu0
        %v1490 = vadd.f32 0.0, %v1489
        %v1491 = vpop.f32.mrb[0].mxu0
        %v1492 = vpop.f32.mrb[0].mxu0
        %v1493 = vadd.f32 0.0, %v1492
        %v1494 = vpop.f32.mrb[0].mxu0
        %1495 = vdwg.mxu0
        %v1504 = vunpack.c.l.b16 %v1387
        %v1505 = vunpack.c.l.b16 %v1388
        %v1506 = vunpack.c.l.b16 %v1389
        %v1507 = vunpack.c.l.b16 %v1390
        %v1508 = vunpack.c.l.b16 %v1391
        %v1509 = vunpack.c.l.b16 %v1392
        %v1510 = vunpack.c.l.b16 %v1393
        %v1511 = vunpack.c.l.b16 %v1394
        %v1512 = vpack.c.b16 %v1505, %v1504
        %v1513 = vpack.c.b16 %v1507, %v1506
        %v1514 = vpack.c.b16 %v1509, %v1508
        %v1515 = vpack.c.b16 %v1511, %v1510
        %v1521 = vsel %vm730, %v1375, 0
        %v1524 = vsel %vm730, %v1376, 0
        %v1527 = vsel %vm730, %v1377, 0
        %v1530 = vsel %vm730, %v1378, 0
        %1532 = vmatprep.subr.bf16.mxu0 0
        %1533 = vmatpush1.bf16.msra.mxu0 %v1512
        %1534 = vmatprep.subr.bf16.mxu0 0
        %1535 = vmatpush1.bf16.msra.mxu0 %v1513
        %1536 = vmatprep.subr.bf16.mxu0 0
        %1537 = vmatpush1.bf16.msra.mxu0 %v1514
        %1538 = vmatprep.subr.bf16.mxu0 0
        %1539 = vmatpush1.bf16.msra.mxu0 %v1515
        %1540 = vmatprep.subr.bf16.mxu0 0
        %1541 = vmatpush1.bf16.msra.mxu0 0
        %1542 = vmatprep.subr.bf16.mxu0 0
        %1543 = vmatpush1.bf16.msra.mxu0 0
        %1544 = vmatprep.subr.bf16.mxu0 0
        %1545 = vmatpush1.bf16.msra.mxu0 0
        %1546 = vmatprep.subr.bf16.mxu0 0
        %1547 = vmatpush1.bf16.msra.mxu0 0
        %1548 = vmatprep.subr.bf16.mxu0 0
        %1549 = vmatpush1.bf16.msra.mxu0 0
        %1550 = vmatprep.subr.bf16.mxu0 0
        %1551 = vmatpush1.bf16.msra.mxu0 0
        %1552 = vmatprep.subr.bf16.mxu0 0
        %1553 = vmatpush1.bf16.msra.mxu0 0
        %1554 = vmatprep.subr.bf16.mxu0 0
        %1555 = vmatpush1.bf16.msra.mxu0 0
        %1556 = vmatprep.subr.bf16.mxu0 0
        %1557 = vmatpush1.bf16.msra.mxu0 0
        %1558 = vmatprep.subr.bf16.mxu0 0
        %1559 = vmatpush1.bf16.msra.mxu0 0
        %1560 = vmatprep.subr.bf16.mxu0 0
        %1561 = vmatpush1.bf16.msra.mxu0 0
        %1562 = vmatprep.subr.bf16.mxu0 0
        %1563 = vmatpush1.bf16.msra.mxu0 0
        %1564 = vmatprep.mubr.bf16.mxu0 0
        %1565 = vmatmul.mubr.bf16.gmra.mrb[0].mxu0 %v1521
        %v1566 = vpop.f32.mrb[0].mxu0
        %v1567 = vadd.f32 0.0, %v1566
        %v1568 = vpop.f32.mrb[0].mxu0
        %v1569 = vpop.f32.mrb[0].mxu0
        %v1570 = vadd.f32 0.0, %v1569
        %v1571 = vpop.f32.mrb[0].mxu0
        %1572 = vmatprep.mubr.bf16.mxu0 0
        %1573 = vmatmul.mubr.bf16.gmra.mrb[0].mxu0 %v1524
        %v1574 = vpop.f32.mrb[0].mxu0
        %v1575 = vadd.f32 0.0, %v1574
        %v1576 = vpop.f32.mrb[0].mxu0
        %v1577 = vpop.f32.mrb[0].mxu0
        %v1578 = vadd.f32 0.0, %v1577
        %v1579 = vpop.f32.mrb[0].mxu0
        %1580 = vmatprep.mubr.bf16.mxu0 0
        %1581 = vmatmul.mubr.bf16.gmra.mrb[0].mxu0 %v1527
        %v1582 = vpop.f32.mrb[0].mxu0
        %v1583 = vadd.f32 0.0, %v1582
        %v1584 = vpop.f32.mrb[0].mxu0
        %v1585 = vpop.f32.mrb[0].mxu0
        %v1586 = vadd.f32 0.0, %v1585
        %v1587 = vpop.f32.mrb[0].mxu0
        %1588 = vmatprep.mubr.bf16.mxu0 0
        %1589 = vmatmul.mubr.bf16.gmra.mrb[0].mxu0 %v1530
        %v1590 = vpop.f32.mrb[0].mxu0
        %v1591 = vadd.f32 0.0, %v1590
        %v1592 = vpop.f32.mrb[0].mxu0
        %v1593 = vpop.f32.mrb[0].mxu0
        %v1594 = vadd.f32 0.0, %v1593
        %v1595 = vpop.f32.mrb[0].mxu0
        %1596 = vdwg.mxu0
        %v1597 = vadd.f32 %v1466, %v1567
        %v1598 = vadd.f32 %v1469, %v1570
        %v1599 = vadd.f32 %v1474, %v1575
        %v1600 = vadd.f32 %v1477, %v1578
        %v1601 = vadd.f32 %v1482, %v1583
        %v1602 = vadd.f32 %v1485, %v1586
        %v1603 = vadd.f32 %v1490, %v1591
        %v1604 = vadd.f32 %v1493, %v1594
        %v1605 = vld [vmem:[%s4] sm:$0x1]
        %1606 = vadd.xlane.f32.xlu0 %v1597
        %v1607 = vpop.xlane.xlu0 %1606
        %1608 = vadd.xlane.f32.xlu0 %v1598
        %v1609 = vpop.xlane.xlu0 %1608
        %1610 = vadd.xlane.f32.xlu0 %v1599
        %v1611 = vpop.xlane.xlu0 %1610
        %1612 = vadd.xlane.f32.xlu0 %v1600
        %v1613 = vpop.xlane.xlu0 %1612
        %1614 = vadd.xlane.f32.xlu0 %v1601
        %v1615 = vpop.xlane.xlu0 %1614
        %1616 = vadd.xlane.f32.xlu0 %v1602
        %v1617 = vpop.xlane.xlu0 %1616
        %1618 = vadd.xlane.f32.xlu0 %v1603
        %v1619 = vpop.xlane.xlu0 %1618
        %1620 = vadd.xlane.f32.xlu0 %v1604
        %v1621 = vpop.xlane.xlu0 %1620
        %v1622 = vrcp.pop 128.0
        %v1623 = vmul.f32 %v1607, %v1622
        %v1624 = vmul.f32 %v1609, %v1622
        %v1625 = vmul.f32 %v1611, %v1622
        %v1626 = vmul.f32 %v1613, %v1622
        %v1627 = vmul.f32 %v1615, %v1622
        %v1628 = vmul.f32 %v1617, %v1622
        %v1629 = vmul.f32 %v1619, %v1622
        %v1630 = vmul.f32 %v1621, %v1622
        %v1631 = vsub.f32 %v1597, %v1623
        %v1632 = vsub.f32 %v1598, %v1624
        %v1633 = vsub.f32 %v1599, %v1625
        %v1634 = vsub.f32 %v1600, %v1626
        %v1635 = vsub.f32 %v1601, %v1627
        %v1636 = vsub.f32 %v1602, %v1628
        %v1637 = vsub.f32 %v1603, %v1629
        %v1638 = vsub.f32 %v1604, %v1630
        %v1639 = vmul.f32 %v1631, %v1631
        %v1640 = vmul.f32 %v1632, %v1632
        %v1641 = vmul.f32 %v1633, %v1633
        %v1642 = vmul.f32 %v1634, %v1634
        %v1643 = vmul.f32 %v1635, %v1635
        %v1644 = vmul.f32 %v1636, %v1636
        %v1645 = vmul.f32 %v1637, %v1637
        %v1646 = vmul.f32 %v1638, %v1638
        %1647 = vadd.xlane.f32.xlu0 %v1639
        %v1648 = vpop.xlane.xlu0 %1647
        %1649 = vadd.xlane.f32.xlu0 %v1640
        %v1650 = vpop.xlane.xlu0 %1649
        %1651 = vadd.xlane.f32.xlu0 %v1641
        %v1652 = vpop.xlane.xlu0 %1651
        %1653 = vadd.xlane.f32.xlu0 %v1642
        %v1654 = vpop.xlane.xlu0 %1653
        %1655 = vadd.xlane.f32.xlu0 %v1643
        %v1656 = vpop.xlane.xlu0 %1655
        %1657 = vadd.xlane.f32.xlu0 %v1644
        %v1658 = vpop.xlane.xlu0 %1657
        %1659 = vadd.xlane.f32.xlu0 %v1645
        %v1660 = vpop.xlane.xlu0 %1659
        %1661 = vadd.xlane.f32.xlu0 %v1646
        %v1662 = vpop.xlane.xlu0 %1661
        %v1663 = vmul.f32 %v1648, %v1622
        %v1664 = vmul.f32 %v1650, %v1622
        %v1665 = vmul.f32 %v1652, %v1622
        %v1666 = vmul.f32 %v1654, %v1622
        %v1667 = vmul.f32 %v1656, %v1622
        %v1668 = vmul.f32 %v1658, %v1622
        %v1669 = vmul.f32 %v1660, %v1622
        %v1670 = vmul.f32 %v1662, %v1622
        %v1671 = vadd.f32 %v1663, 1e-05
        %v1672 = vadd.f32 %v1664, 1e-05
        %v1673 = vadd.f32 %v1665, 1e-05
        %v1674 = vadd.f32 %v1666, 1e-05
        %v1675 = vadd.f32 %v1667, 1e-05
        %v1676 = vadd.f32 %v1668, 1e-05
        %v1677 = vadd.f32 %v1669, 1e-05
        %v1678 = vadd.f32 %v1670, 1e-05
        %v1679 = vrsqrt.pop %v1671
        %v1680 = vrsqrt.pop %v1672
        %v1681 = vrsqrt.pop %v1673
        %v1682 = vrsqrt.pop %v1674
        %v1683 = vrsqrt.pop %v1675
        %v1684 = vrsqrt.pop %v1676
        %v1685 = vrsqrt.pop %v1677
        %v1686 = vrsqrt.pop %v1678
        %v1687 = vmul.f32 %v1631, %v1679
        %v1688 = vmul.f32 %v1632, %v1680
        %v1689 = vmul.f32 %v1633, %v1681
        %v1690 = vmul.f32 %v1634, %v1682
        %v1691 = vmul.f32 %v1635, %v1683
        %v1692 = vmul.f32 %v1636, %v1684
        %v1693 = vmul.f32 %v1637, %v1685
        %v1694 = vmul.f32 %v1638, %v1686
        %v1696 = vlaneseq
        %v1697 = vshrl.u32 %v1696, 7
        %v1698 = vsub.s32 0, %v1697
        %v1699 = vrot.slane %v1605, %v1698
        %v1701 = vmul.f32 %v1687, %v1699
        %v1702 = vmul.f32 %v1688, %v1699
        %v1703 = vmul.f32 %v1689, %v1699
        %v1704 = vmul.f32 %v1690, %v1699
        %v1705 = vmul.f32 %v1691, %v1699
        %v1706 = vmul.f32 %v1692, %v1699
        %v1707 = vmul.f32 %v1693, %v1699
        %v1708 = vmul.f32 %v1694, %v1699
        %v1709 = vadd.f32 %v582, %v1701
        %v1710 = vadd.f32 %v583, %v1702
        %v1711 = vadd.f32 %v584, %v1703
        %v1712 = vadd.f32 %v585, %v1704
        %v1713 = vadd.f32 %v586, %v1705
        %v1714 = vadd.f32 %v587, %v1706
        %v1715 = vadd.f32 %v588, %v1707
        %v1716 = vadd.f32 %v589, %v1708
        %v1717 = vld [vmem:[%s6] sm:$0x1]
        %1718 = vadd.xlane.f32.xlu0 %v1709
        %v1719 = vpop.xlane.xlu0 %1718
        %1720 = vadd.xlane.f32.xlu0 %v1710
        %v1721 = vpop.xlane.xlu0 %1720
        %1722 = vadd.xlane.f32.xlu0 %v1711
        %v1723 = vpop.xlane.xlu0 %1722
        %1724 = vadd.xlane.f32.xlu0 %v1712
        %v1725 = vpop.xlane.xlu0 %1724
        %1726 = vadd.xlane.f32.xlu0 %v1713
        %v1727 = vpop.xlane.xlu0 %1726
        %1728 = vadd.xlane.f32.xlu0 %v1714
        %v1729 = vpop.xlane.xlu0 %1728
        %1730 = vadd.xlane.f32.xlu0 %v1715
        %v1731 = vpop.xlane.xlu0 %1730
        %1732 = vadd.xlane.f32.xlu0 %v1716
        %v1733 = vpop.xlane.xlu0 %1732
        %v1734 = vmul.f32 %v1719, %v1622
        %v1735 = vmul.f32 %v1721, %v1622
        %v1736 = vmul.f32 %v1723, %v1622
        %v1737 = vmul.f32 %v1725, %v1622
        %v1738 = vmul.f32 %v1727, %v1622
        %v1739 = vmul.f32 %v1729, %v1622
        %v1740 = vmul.f32 %v1731, %v1622
        %v1741 = vmul.f32 %v1733, %v1622
        %v1742 = vsub.f32 %v1709, %v1734
        %v1743 = vsub.f32 %v1710, %v1735
        %v1744 = vsub.f32 %v1711, %v1736
        %v1745 = vsub.f32 %v1712, %v1737
        %v1746 = vsub.f32 %v1713, %v1738
        %v1747 = vsub.f32 %v1714, %v1739
        %v1748 = vsub.f32 %v1715, %v1740
        %v1749 = vsub.f32 %v1716, %v1741
        %v1750 = vmul.f32 %v1742, %v1742
        %v1751 = vmul.f32 %v1743, %v1743
        %v1752 = vmul.f32 %v1744, %v1744
        %v1753 = vmul.f32 %v1745, %v1745
        %v1754 = vmul.f32 %v1746, %v1746
        %v1755 = vmul.f32 %v1747, %v1747
        %v1756 = vmul.f32 %v1748, %v1748
        %v1757 = vmul.f32 %v1749, %v1749
        %1758 = vadd.xlane.f32.xlu0 %v1750
        %v1759 = vpop.xlane.xlu0 %1758
        %1760 = vadd.xlane.f32.xlu0 %v1751
        %v1761 = vpop.xlane.xlu0 %1760
        %1762 = vadd.xlane.f32.xlu0 %v1752
        %v1763 = vpop.xlane.xlu0 %1762
        %1764 = vadd.xlane.f32.xlu0 %v1753
        %v1765 = vpop.xlane.xlu0 %1764
        %1766 = vadd.xlane.f32.xlu0 %v1754
        %v1767 = vpop.xlane.xlu0 %1766
        %1768 = vadd.xlane.f32.xlu0 %v1755
        %v1769 = vpop.xlane.xlu0 %1768
        %1770 = vadd.xlane.f32.xlu0 %v1756
        %v1771 = vpop.xlane.xlu0 %1770
        %1772 = vadd.xlane.f32.xlu0 %v1757
        %v1773 = vpop.xlane.xlu0 %1772
        %v1774 = vmul.f32 %v1759, %v1622
        %v1775 = vmul.f32 %v1761, %v1622
        %v1776 = vmul.f32 %v1763, %v1622
        %v1777 = vmul.f32 %v1765, %v1622
        %v1778 = vmul.f32 %v1767, %v1622
        %v1779 = vmul.f32 %v1769, %v1622
        %v1780 = vmul.f32 %v1771, %v1622
        %v1781 = vmul.f32 %v1773, %v1622
        %v1782 = vadd.f32 %v1774, 1e-05
        %v1783 = vadd.f32 %v1775, 1e-05
        %v1784 = vadd.f32 %v1776, 1e-05
        %v1785 = vadd.f32 %v1777, 1e-05
        %v1786 = vadd.f32 %v1778, 1e-05
        %v1787 = vadd.f32 %v1779, 1e-05
        %v1788 = vadd.f32 %v1780, 1e-05
        %v1789 = vadd.f32 %v1781, 1e-05
        %v1790 = vrsqrt.pop %v1782
        %v1791 = vrsqrt.pop %v1783
        %v1792 = vrsqrt.pop %v1784
        %v1793 = vrsqrt.pop %v1785
        %v1794 = vrsqrt.pop %v1786
        %v1795 = vrsqrt.pop %v1787
        %v1796 = vrsqrt.pop %v1788
        %v1797 = vrsqrt.pop %v1789
        %v1798 = vmul.f32 %v1742, %v1790
        %v1799 = vmul.f32 %v1743, %v1791
        %v1800 = vmul.f32 %v1744, %v1792
        %v1801 = vmul.f32 %v1745, %v1793
        %v1802 = vmul.f32 %v1746, %v1794
        %v1803 = vmul.f32 %v1747, %v1795
        %v1804 = vmul.f32 %v1748, %v1796
        %v1805 = vmul.f32 %v1749, %v1797
        %v1807 = vlaneseq
        %v1808 = vshrl.u32 %v1807, 7
        %v1809 = vsub.s32 0, %v1808
        %v1810 = vrot.slane %v1717, %v1809
        %v1812 = vmul.f32 %v1798, %v1810
        %v1813 = vmul.f32 %v1799, %v1810
        %v1814 = vmul.f32 %v1800, %v1810
        %v1815 = vmul.f32 %v1801, %v1810
        %v1816 = vmul.f32 %v1802, %v1810
        %v1817 = vmul.f32 %v1803, %v1810
        %v1818 = vmul.f32 %v1804, %v1810
        %v1819 = vmul.f32 %v1805, %v1810
        %v1820 = vpack.c.bf16 %v1813, %v1812
        %v1821 = vpack.c.bf16 %v1815, %v1814
        %v1822 = vpack.c.bf16 %v1817, %v1816
        %v1823 = vpack.c.bf16 %v1819, %v1818
        %v1824 = vld [vmem:[%s7] sm:$0xff]
        %v1825 = vld [vmem:[%s7 + $0x8] sm:$0xff]
        %v1826 = vld [vmem:[%s7 + $0x10] sm:$0xff]
        %v1827 = vld [vmem:[%s7 + $0x18] sm:$0xff]
        %v1828 = vld [vmem:[%s7 + $0x20] sm:$0xff]
        %v1829 = vld [vmem:[%s7 + $0x28] sm:$0xff]
        %v1830 = vld [vmem:[%s7 + $0x30] sm:$0xff]
        %v1831 = vld [vmem:[%s7 + $0x38] sm:$0xff]
        %v1832 = vld [vmem:[%s7 + $0x40] sm:$0xff]
        %v1833 = vld [vmem:[%s7 + $0x48] sm:$0xff]
        %v1834 = vld [vmem:[%s7 + $0x50] sm:$0xff]
        %v1835 = vld [vmem:[%s7 + $0x58] sm:$0xff]
        %v1836 = vld [vmem:[%s7 + $0x60] sm:$0xff]
        %v1837 = vld [vmem:[%s7 + $0x68] sm:$0xff]
        %v1838 = vld [vmem:[%s7 + $0x70] sm:$0xff]
        %v1839 = vld [vmem:[%s7 + $0x78] sm:$0xff]
        %v1840 = vld [vmem:[%s7 + $0x80] sm:$0xff]
        %v1841 = vld [vmem:[%s7 + $0x88] sm:$0xff]
        %v1842 = vld [vmem:[%s7 + $0x90] sm:$0xff]
        %v1843 = vld [vmem:[%s7 + $0x98] sm:$0xff]
        %v1844 = vld [vmem:[%s7 + $0xa0] sm:$0xff]
        %v1845 = vld [vmem:[%s7 + $0xa8] sm:$0xff]
        %v1846 = vld [vmem:[%s7 + $0xb0] sm:$0xff]
        %v1847 = vld [vmem:[%s7 + $0xb8] sm:$0xff]
        %v1848 = vld [vmem:[%s7 + $0xc0] sm:$0xff]
        %v1849 = vld [vmem:[%s7 + $0xc8] sm:$0xff]
        %v1850 = vld [vmem:[%s7 + $0xd0] sm:$0xff]
        %v1851 = vld [vmem:[%s7 + $0xd8] sm:$0xff]
        %v1852 = vld [vmem:[%s7 + $0xe0] sm:$0xff]
        %v1853 = vld [vmem:[%s7 + $0xe8] sm:$0xff]
        %v1854 = vld [vmem:[%s7 + $0xf0] sm:$0xff]
        %v1855 = vld [vmem:[%s7 + $0xf8] sm:$0xff]
        %v1856 = vld [vmem:[%s7 + $0x100] sm:$0xff]
        %v1857 = vld [vmem:[%s7 + $0x108] sm:$0xff]
        %v1858 = vld [vmem:[%s7 + $0x110] sm:$0xff]
        %v1859 = vld [vmem:[%s7 + $0x118] sm:$0xff]
        %v1860 = vld [vmem:[%s7 + $0x120] sm:$0xff]
        %v1861 = vld [vmem:[%s7 + $0x128] sm:$0xff]
        %v1862 = vld [vmem:[%s7 + $0x130] sm:$0xff]
        %v1863 = vld [vmem:[%s7 + $0x138] sm:$0xff]
        %v1864 = vld [vmem:[%s7 + $0x140] sm:$0xff]
        %v1865 = vld [vmem:[%s7 + $0x148] sm:$0xff]
        %v1866 = vld [vmem:[%s7 + $0x150] sm:$0xff]
        %v1867 = vld [vmem:[%s7 + $0x158] sm:$0xff]
        %v1868 = vld [vmem:[%s7 + $0x160] sm:$0xff]
        %v1869 = vld [vmem:[%s7 + $0x168] sm:$0xff]
        %v1870 = vld [vmem:[%s7 + $0x170] sm:$0xff]
        %v1871 = vld [vmem:[%s7 + $0x178] sm:$0xff]
        %v1872 = vld [vmem:[%s7 + $0x180] sm:$0xff]
        %v1873 = vld [vmem:[%s7 + $0x188] sm:$0xff]
        %v1874 = vld [vmem:[%s7 + $0x190] sm:$0xff]
        %v1875 = vld [vmem:[%s7 + $0x198] sm:$0xff]
        %v1876 = vld [vmem:[%s7 + $0x1a0] sm:$0xff]
        %v1877 = vld [vmem:[%s7 + $0x1a8] sm:$0xff]
        %v1878 = vld [vmem:[%s7 + $0x1b0] sm:$0xff]
        %v1879 = vld [vmem:[%s7 + $0x1b8] sm:$0xff]
        %v1880 = vld [vmem:[%s7 + $0x1c0] sm:$0xff]
        %v1881 = vld [vmem:[%s7 + $0x1c8] sm:$0xff]
        %v1882 = vld [vmem:[%s7 + $0x1d0] sm:$0xff]
        %v1883 = vld [vmem:[%s7 + $0x1d8] sm:$0xff]
        %v1884 = vld [vmem:[%s7 + $0x1e0] sm:$0xff]
        %v1885 = vld [vmem:[%s7 + $0x1e8] sm:$0xff]
        %v1886 = vld [vmem:[%s7 + $0x1f0] sm:$0xff]
        %v1887 = vld [vmem:[%s7 + $0x1f8] sm:$0xff]
        %v1952 = vunpack.c.l.b16 %v1824
        %v1953 = vunpack.c.h.b16 %v1824
        %v1954 = vunpack.c.l.b16 %v1825
        %v1955 = vunpack.c.h.b16 %v1825
        %v1956 = vunpack.c.l.b16 %v1826
        %v1957 = vunpack.c.h.b16 %v1826
        %v1958 = vunpack.c.l.b16 %v1827
        %v1959 = vunpack.c.h.b16 %v1827
        %v1960 = vunpack.c.l.b16 %v1828
        %v1961 = vunpack.c.h.b16 %v1828
        %v1962 = vunpack.c.l.b16 %v1829
        %v1963 = vunpack.c.h.b16 %v1829
        %v1964 = vunpack.c.l.b16 %v1830
        %v1965 = vunpack.c.h.b16 %v1830
        %v1966 = vunpack.c.l.b16 %v1831
        %v1967 = vunpack.c.h.b16 %v1831
        %v1968 = vunpack.c.l.b16 %v1832
        %v1969 = vunpack.c.h.b16 %v1832
        %v1970 = vunpack.c.l.b16 %v1833
        %v1971 = vunpack.c.h.b16 %v1833
        %v1972 = vunpack.c.l.b16 %v1834
        %v1973 = vunpack.c.h.b16 %v1834
        %v1974 = vunpack.c.l.b16 %v1835
        %v1975 = vunpack.c.h.b16 %v1835
        %v1976 = vunpack.c.l.b16 %v1836
        %v1977 = vunpack.c.h.b16 %v1836
        %v1978 = vunpack.c.l.b16 %v1837
        %v1979 = vunpack.c.h.b16 %v1837
        %v1980 = vunpack.c.l.b16 %v1838
        %v1981 = vunpack.c.h.b16 %v1838
        %v1982 = vunpack.c.l.b16 %v1839
        %v1983 = vunpack.c.h.b16 %v1839
        %v1984 = vunpack.c.l.b16 %v1840
        %v1985 = vunpack.c.h.b16 %v1840
        %v1986 = vunpack.c.l.b16 %v1841
        %v1987 = vunpack.c.h.b16 %v1841
        %v1988 = vunpack.c.l.b16 %v1842
        %v1989 = vunpack.c.h.b16 %v1842
        %v1990 = vunpack.c.l.b16 %v1843
        %v1991 = vunpack.c.h.b16 %v1843
        %v1992 = vunpack.c.l.b16 %v1844
        %v1993 = vunpack.c.h.b16 %v1844
        %v1994 = vunpack.c.l.b16 %v1845
        %v1995 = vunpack.c.h.b16 %v1845
        %v1996 = vunpack.c.l.b16 %v1846
        %v1997 = vunpack.c.h.b16 %v1846
        %v1998 = vunpack.c.l.b16 %v1847
        %v1999 = vunpack.c.h.b16 %v1847
        %v2000 = vunpack.c.l.b16 %v1848
        %v2001 = vunpack.c.h.b16 %v1848
        %v2002 = vunpack.c.l.b16 %v1849
        %v2003 = vunpack.c.h.b16 %v1849
        %v2004 = vunpack.c.l.b16 %v1850
        %v2005 = vunpack.c.h.b16 %v1850
        %v2006 = vunpack.c.l.b16 %v1851
        %v2007 = vunpack.c.h.b16 %v1851
        %v2008 = vunpack.c.l.b16 %v1852
        %v2009 = vunpack.c.h.b16 %v1852
        %v2010 = vunpack.c.l.b16 %v1853
        %v2011 = vunpack.c.h.b16 %v1853
        %v2012 = vunpack.c.l.b16 %v1854
        %v2013 = vunpack.c.h.b16 %v1854
        %v2014 = vunpack.c.l.b16 %v1855
        %v2015 = vunpack.c.h.b16 %v1855
        %v2016 = vunpack.c.l.b16 %v1856
        %v2017 = vunpack.c.h.b16 %v1856
        %v2018 = vunpack.c.l.b16 %v1857
        %v2019 = vunpack.c.h.b16 %v1857
        %v2020 = vunpack.c.l.b16 %v1858
        %v2021 = vunpack.c.h.b16 %v1858
        %v2022 = vunpack.c.l.b16 %v1859
        %v2023 = vunpack.c.h.b16 %v1859
        %v2024 = vunpack.c.l.b16 %v1860
        %v2025 = vunpack.c.h.b16 %v1860
        %v2026 = vunpack.c.l.b16 %v1861
        %v2027 = vunpack.c.h.b16 %v1861
        %v2028 = vunpack.c.l.b16 %v1862
        %v2029 = vunpack.c.h.b16 %v1862
        %v2030 = vunpack.c.l.b16 %v1863
        %v2031 = vunpack.c.h.b16 %v1863
        %v2032 = vunpack.c.l.b16 %v1864
        %v2033 = vunpack.c.h.b16 %v1864
        %v2034 = vunpack.c.l.b16 %v1865
        %v2035 = vunpack.c.h.b16 %v1865
        %v2036 = vunpack.c.l.b16 %v1866
        %v2037 = vunpack.c.h.b16 %v1866
        %v2038 = vunpack.c.l.b16 %v1867
        %v2039 = vunpack.c.h.b16 %v1867
        %v2040 = vunpack.c.l.b16 %v1868
        %v2041 = vunpack.c.h.b16 %v1868
        %v2042 = vunpack.c.l.b16 %v1869
        %v2043 = vunpack.c.h.b16 %v1869
        %v2044 = vunpack.c.l.b16 %v1870
        %v2045 = vunpack.c.h.b16 %v1870
        %v2046 = vunpack.c.l.b16 %v1871
        %v2047 = vunpack.c.h.b16 %v1871
        %v2048 = vunpack.c.l.b16 %v1872
        %v2049 = vunpack.c.h.b16 %v1872
        %v2050 = vunpack.c.l.b16 %v1873
        %v2051 = vunpack.c.h.b16 %v1873
        %v2052 = vunpack.c.l.b16 %v1874
        %v2053 = vunpack.c.h.b16 %v1874
        %v2054 = vunpack.c.l.b16 %v1875
        %v2055 = vunpack.c.h.b16 %v1875
        %v2056 = vunpack.c.l.b16 %v1876
        %v2057 = vunpack.c.h.b16 %v1876
        %v2058 = vunpack.c.l.b16 %v1877
        %v2059 = vunpack.c.h.b16 %v1877
        %v2060 = vunpack.c.l.b16 %v1878
        %v2061 = vunpack.c.h.b16 %v1878
        %v2062 = vunpack.c.l.b16 %v1879
        %v2063 = vunpack.c.h.b16 %v1879
        %v2064 = vunpack.c.l.b16 %v1880
        %v2065 = vunpack.c.h.b16 %v1880
        %v2066 = vunpack.c.l.b16 %v1881
        %v2067 = vunpack.c.h.b16 %v1881
        %v2068 = vunpack.c.l.b16 %v1882
        %v2069 = vunpack.c.h.b16 %v1882
        %v2070 = vunpack.c.l.b16 %v1883
        %v2071 = vunpack.c.h.b16 %v1883
        %v2072 = vunpack.c.l.b16 %v1884
        %v2073 = vunpack.c.h.b16 %v1884
        %v2074 = vunpack.c.l.b16 %v1885
        %v2075 = vunpack.c.h.b16 %v1885
        %v2076 = vunpack.c.l.b16 %v1886
        %v2077 = vunpack.c.h.b16 %v1886
        %v2078 = vunpack.c.l.b16 %v1887
        %v2079 = vunpack.c.h.b16 %v1887
        %v2080 = vpack.c.b16 %v1960, %v1952
        %v2081 = vpack.c.b16 %v1961, %v1953
        %v2082 = vpack.c.b16 %v1962, %v1954
        %v2083 = vpack.c.b16 %v1963, %v1955
        %v2084 = vpack.c.b16 %v1964, %v1956
        %v2085 = vpack.c.b16 %v1965, %v1957
        %v2086 = vpack.c.b16 %v1966, %v1958
        %v2087 = vpack.c.b16 %v1967, %v1959
        %v2088 = vpack.c.b16 %v1976, %v1968
        %v2089 = vpack.c.b16 %v1977, %v1969
        %v2090 = vpack.c.b16 %v1978, %v1970
        %v2091 = vpack.c.b16 %v1979, %v1971
        %v2092 = vpack.c.b16 %v1980, %v1972
        %v2093 = vpack.c.b16 %v1981, %v1973
        %v2094 = vpack.c.b16 %v1982, %v1974
        %v2095 = vpack.c.b16 %v1983, %v1975
        %v2096 = vpack.c.b16 %v1992, %v1984
        %v2097 = vpack.c.b16 %v1993, %v1985
        %v2098 = vpack.c.b16 %v1994, %v1986
        %v2099 = vpack.c.b16 %v1995, %v1987
        %v2100 = vpack.c.b16 %v1996, %v1988
        %v2101 = vpack.c.b16 %v1997, %v1989
        %v2102 = vpack.c.b16 %v1998, %v1990
        %v2103 = vpack.c.b16 %v1999, %v1991
        %v2104 = vpack.c.b16 %v2008, %v2000
        %v2105 = vpack.c.b16 %v2009, %v2001
        %v2106 = vpack.c.b16 %v2010, %v2002
        %v2107 = vpack.c.b16 %v2011, %v2003
        %v2108 = vpack.c.b16 %v2012, %v2004
        %v2109 = vpack.c.b16 %v2013, %v2005
        %v2110 = vpack.c.b16 %v2014, %v2006
        %v2111 = vpack.c.b16 %v2015, %v2007
        %v2112 = vpack.c.b16 %v2024, %v2016
        %v2113 = vpack.c.b16 %v2025, %v2017
        %v2114 = vpack.c.b16 %v2026, %v2018
        %v2115 = vpack.c.b16 %v2027, %v2019
        %v2116 = vpack.c.b16 %v2028, %v2020
        %v2117 = vpack.c.b16 %v2029, %v2021
        %v2118 = vpack.c.b16 %v2030, %v2022
        %v2119 = vpack.c.b16 %v2031, %v2023
        %v2120 = vpack.c.b16 %v2040, %v2032
        %v2121 = vpack.c.b16 %v2041, %v2033
        %v2122 = vpack.c.b16 %v2042, %v2034
        %v2123 = vpack.c.b16 %v2043, %v2035
        %v2124 = vpack.c.b16 %v2044, %v2036
        %v2125 = vpack.c.b16 %v2045, %v2037
        %v2126 = vpack.c.b16 %v2046, %v2038
        %v2127 = vpack.c.b16 %v2047, %v2039
        %v2128 = vpack.c.b16 %v2056, %v2048
        %v2129 = vpack.c.b16 %v2057, %v2049
        %v2130 = vpack.c.b16 %v2058, %v2050
        %v2131 = vpack.c.b16 %v2059, %v2051
        %v2132 = vpack.c.b16 %v2060, %v2052
        %v2133 = vpack.c.b16 %v2061, %v2053
        %v2134 = vpack.c.b16 %v2062, %v2054
        %v2135 = vpack.c.b16 %v2063, %v2055
        %v2136 = vpack.c.b16 %v2072, %v2064
        %v2137 = vpack.c.b16 %v2073, %v2065
        %v2138 = vpack.c.b16 %v2074, %v2066
        %v2139 = vpack.c.b16 %v2075, %v2067
        %v2140 = vpack.c.b16 %v2076, %v2068
        %v2141 = vpack.c.b16 %v2077, %v2069
        %v2142 = vpack.c.b16 %v2078, %v2070
        %v2143 = vpack.c.b16 %v2079, %v2071
        %2208 = vmatprep.subr.bf16.mxu0 %v2081
        %2209 = vmatpush1.bf16.msra.mxu0 %v2080
        %2210 = vmatprep.subr.bf16.mxu0 %v2089
        %2211 = vmatpush1.bf16.msra.mxu0 %v2088
        %2212 = vmatprep.subr.bf16.mxu0 %v2097
        %2213 = vmatpush1.bf16.msra.mxu0 %v2096
        %2214 = vmatprep.subr.bf16.mxu0 %v2105
        %2215 = vmatpush1.bf16.msra.mxu0 %v2104
        %2216 = vmatprep.subr.bf16.mxu0 %v2113
        %2217 = vmatpush1.bf16.msra.mxu0 %v2112
        %2218 = vmatprep.subr.bf16.mxu0 %v2121
        %2219 = vmatpush1.bf16.msra.mxu0 %v2120
        %2220 = vmatprep.subr.bf16.mxu0 %v2129
        %2221 = vmatpush1.bf16.msra.mxu0 %v2128
        %2222 = vmatprep.subr.bf16.mxu0 %v2137
        %2223 = vmatpush1.bf16.msra.mxu0 %v2136
        %2224 = vmatprep.subr.bf16.mxu0 0
        %2225 = vmatpush1.bf16.msra.mxu0 0
        %2226 = vmatprep.subr.bf16.mxu0 0
        %2227 = vmatpush1.bf16.msra.mxu0 0
        %2228 = vmatprep.subr.bf16.mxu0 0
        %2229 = vmatpush1.bf16.msra.mxu0 0
        %2230 = vmatprep.subr.bf16.mxu0 0
        %2231 = vmatpush1.bf16.msra.mxu0 0
        %2232 = vmatprep.subr.bf16.mxu0 0
        %2233 = vmatpush1.bf16.msra.mxu0 0
        %2234 = vmatprep.subr.bf16.mxu0 0
        %2235 = vmatpush1.bf16.msra.mxu0 0
        %2236 = vmatprep.subr.bf16.mxu0 0
        %2237 = vmatpush1.bf16.msra.mxu0 0
        %2238 = vmatprep.subr.bf16.mxu0 0
        %2239 = vmatpush1.bf16.msra.mxu0 0
        %2240 = vmatprep.mubr.bf16.mxu0 0
        %2241 = vmatmul.mubr.bf16.gmra.mrb[0].mxu0 %v1820
        %v2242 = vpop.f32.mrb[0].mxu0
        %v2243 = vadd.f32 0.0, %v2242
        %v2244 = vpop.f32.mrb[0].mxu0
        %v2245 = vadd.f32 0.0, %v2244
        %v2246 = vpop.f32.mrb[0].mxu0
        %v2247 = vadd.f32 0.0, %v2246
        %v2248 = vpop.f32.mrb[0].mxu0
        %v2249 = vadd.f32 0.0, %v2248
        %2250 = vmatprep.mubr.bf16.mxu0 0
        %2251 = vmatmul.mubr.bf16.gmra.mrb[0].mxu0 %v1821
        %v2252 = vpop.f32.mrb[0].mxu0
        %v2253 = vadd.f32 0.0, %v2252
        %v2254 = vpop.f32.mrb[0].mxu0
        %v2255 = vadd.f32 0.0, %v2254
        %v2256 = vpop.f32.mrb[0].mxu0
        %v2257 = vadd.f32 0.0, %v2256
        %v2258 = vpop.f32.mrb[0].mxu0
        %v2259 = vadd.f32 0.0, %v2258
        %2260 = vmatprep.mubr.bf16.mxu0 0
        %2261 = vmatmul.mubr.bf16.gmra.mrb[0].mxu0 %v1822
        %v2262 = vpop.f32.mrb[0].mxu0
        %v2263 = vadd.f32 0.0, %v2262
        %v2264 = vpop.f32.mrb[0].mxu0
        %v2265 = vadd.f32 0.0, %v2264
        %v2266 = vpop.f32.mrb[0].mxu0
        %v2267 = vadd.f32 0.0, %v2266
        %v2268 = vpop.f32.mrb[0].mxu0
        %v2269 = vadd.f32 0.0, %v2268
        %2270 = vmatprep.mubr.bf16.mxu0 0
        %2271 = vmatmul.mubr.bf16.gmra.mrb[0].mxu0 %v1823
        %v2272 = vpop.f32.mrb[0].mxu0
        %v2273 = vadd.f32 0.0, %v2272
        %v2274 = vpop.f32.mrb[0].mxu0
        %v2275 = vadd.f32 0.0, %v2274
        %v2276 = vpop.f32.mrb[0].mxu0
        %v2277 = vadd.f32 0.0, %v2276
        %v2278 = vpop.f32.mrb[0].mxu0
        %v2279 = vadd.f32 0.0, %v2278
        %2280 = vdwg.mxu0
        %2281 = vmatprep.subr.bf16.mxu0 %v2083
        %2282 = vmatpush1.bf16.msra.mxu0 %v2082
        %2283 = vmatprep.subr.bf16.mxu0 %v2091
        %2284 = vmatpush1.bf16.msra.mxu0 %v2090
        %2285 = vmatprep.subr.bf16.mxu0 %v2099
        %2286 = vmatpush1.bf16.msra.mxu0 %v2098
        %2287 = vmatprep.subr.bf16.mxu0 %v2107
        %2288 = vmatpush1.bf16.msra.mxu0 %v2106
        %2289 = vmatprep.subr.bf16.mxu0 %v2115
        %2290 = vmatpush1.bf16.msra.mxu0 %v2114
        %2291 = vmatprep.subr.bf16.mxu0 %v2123
        %2292 = vmatpush1.bf16.msra.mxu0 %v2122
        %2293 = vmatprep.subr.bf16.mxu0 %v2131
        %2294 = vmatpush1.bf16.msra.mxu0 %v2130
        %2295 = vmatprep.subr.bf16.mxu0 %v2139
        %2296 = vmatpush1.bf16.msra.mxu0 %v2138
        %2297 = vmatprep.subr.bf16.mxu0 0
        %2298 = vmatpush1.bf16.msra.mxu0 0
        %2299 = vmatprep.subr.bf16.mxu0 0
        %2300 = vmatpush1.bf16.msra.mxu0 0
        %2301 = vmatprep.subr.bf16.mxu0 0
        %2302 = vmatpush1.bf16.msra.mxu0 0
        %2303 = vmatprep.subr.bf16.mxu0 0
        %2304 = vmatpush1.bf16.msra.mxu0 0
        %2305 = vmatprep.subr.bf16.mxu0 0
        %2306 = vmatpush1.bf16.msra.mxu0 0
        %2307 = vmatprep.subr.bf16.mxu0 0
        %2308 = vmatpush1.bf16.msra.mxu0 0
        %2309 = vmatprep.subr.bf16.mxu0 0
        %2310 = vmatpush1.bf16.msra.mxu0 0
        %2311 = vmatprep.subr.bf16.mxu0 0
        %2312 = vmatpush1.bf16.msra.mxu0 0
        %2313 = vmatprep.mubr.bf16.mxu0 0
        %2314 = vmatmul.mubr.bf16.gmra.mrb[0].mxu0 %v1820
        %v2315 = vpop.f32.mrb[0].mxu0
        %v2316 = vadd.f32 0.0, %v2315
        %v2317 = vpop.f32.mrb[0].mxu0
        %v2318 = vadd.f32 0.0, %v2317
        %v2319 = vpop.f32.mrb[0].mxu0
        %v2320 = vadd.f32 0.0, %v2319
        %v2321 = vpop.f32.mrb[0].mxu0
        %v2322 = vadd.f32 0.0, %v2321
        %2323 = vmatprep.mubr.bf16.mxu0 0
        %2324 = vmatmul.mubr.bf16.gmra.mrb[0].mxu0 %v1821
        %v2325 = vpop.f32.mrb[0].mxu0
        %v2326 = vadd.f32 0.0, %v2325
        %v2327 = vpop.f32.mrb[0].mxu0
        %v2328 = vadd.f32 0.0, %v2327
        %v2329 = vpop.f32.mrb[0].mxu0
        %v2330 = vadd.f32 0.0, %v2329
        %v2331 = vpop.f32.mrb[0].mxu0
        %v2332 = vadd.f32 0.0, %v2331
        %2333 = vmatprep.mubr.bf16.mxu0 0
        %2334 = vmatmul.mubr.bf16.gmra.mrb[0].mxu0 %v1822
        %v2335 = vpop.f32.mrb[0].mxu0
        %v2336 = vadd.f32 0.0, %v2335
        %v2337 = vpop.f32.mrb[0].mxu0
        %v2338 = vadd.f32 0.0, %v2337
        %v2339 = vpop.f32.mrb[0].mxu0
        %v2340 = vadd.f32 0.0, %v2339
        %v2341 = vpop.f32.mrb[0].mxu0
        %v2342 = vadd.f32 0.0, %v2341
        %2343 = vmatprep.mubr.bf16.mxu0 0
        %2344 = vmatmul.mubr.bf16.gmra.mrb[0].mxu0 %v1823
        %v2345 = vpop.f32.mrb[0].mxu0
        %v2346 = vadd.f32 0.0, %v2345
        %v2347 = vpop.f32.mrb[0].mxu0
        %v2348 = vadd.f32 0.0, %v2347
        %v2349 = vpop.f32.mrb[0].mxu0
        %v2350 = vadd.f32 0.0, %v2349
        %v2351 = vpop.f32.mrb[0].mxu0
        %v2352 = vadd.f32 0.0, %v2351
        %2353 = vdwg.mxu0
        %2354 = vmatprep.subr.bf16.mxu0 %v2085
        %2355 = vmatpush1.bf16.msra.mxu0 %v2084
        %2356 = vmatprep.subr.bf16.mxu0 %v2093
        %2357 = vmatpush1.bf16.msra.mxu0 %v2092
        %2358 = vmatprep.subr.bf16.mxu0 %v2101
        %2359 = vmatpush1.bf16.msra.mxu0 %v2100
        %2360 = vmatprep.subr.bf16.mxu0 %v2109
        %2361 = vmatpush1.bf16.msra.mxu0 %v2108
        %2362 = vmatprep.subr.bf16.mxu0 %v2117
        %2363 = vmatpush1.bf16.msra.mxu0 %v2116
        %2364 = vmatprep.subr.bf16.mxu0 %v2125
        %2365 = vmatpush1.bf16.msra.mxu0 %v2124
        %2366 = vmatprep.subr.bf16.mxu0 %v2133
        %2367 = vmatpush1.bf16.msra.mxu0 %v2132
        %2368 = vmatprep.subr.bf16.mxu0 %v2141
        %2369 = vmatpush1.bf16.msra.mxu0 %v2140
        %2370 = vmatprep.subr.bf16.mxu0 0
        %2371 = vmatpush1.bf16.msra.mxu0 0
        %2372 = vmatprep.subr.bf16.mxu0 0
        %2373 = vmatpush1.bf16.msra.mxu0 0
        %2374 = vmatprep.subr.bf16.mxu0 0
        %2375 = vmatpush1.bf16.msra.mxu0 0
        %2376 = vmatprep.subr.bf16.mxu0 0
        %2377 = vmatpush1.bf16.msra.mxu0 0
        %2378 = vmatprep.subr.bf16.mxu0 0
        %2379 = vmatpush1.bf16.msra.mxu0 0
        %2380 = vmatprep.subr.bf16.mxu0 0
        %2381 = vmatpush1.bf16.msra.mxu0 0
        %2382 = vmatprep.subr.bf16.mxu0 0
        %2383 = vmatpush1.bf16.msra.mxu0 0
        %2384 = vmatprep.subr.bf16.mxu0 0
        %2385 = vmatpush1.bf16.msra.mxu0 0
        %2386 = vmatprep.mubr.bf16.mxu0 0
        %2387 = vmatmul.mubr.bf16.gmra.mrb[0].mxu0 %v1820
        %v2388 = vpop.f32.mrb[0].mxu0
        %v2389 = vadd.f32 0.0, %v2388
        %v2390 = vpop.f32.mrb[0].mxu0
        %v2391 = vadd.f32 0.0, %v2390
        %v2392 = vpop.f32.mrb[0].mxu0
        %v2393 = vadd.f32 0.0, %v2392
        %v2394 = vpop.f32.mrb[0].mxu0
        %v2395 = vadd.f32 0.0, %v2394
        %2396 = vmatprep.mubr.bf16.mxu0 0
        %2397 = vmatmul.mubr.bf16.gmra.mrb[0].mxu0 %v1821
        %v2398 = vpop.f32.mrb[0].mxu0
        %v2399 = vadd.f32 0.0, %v2398
        %v2400 = vpop.f32.mrb[0].mxu0
        %v2401 = vadd.f32 0.0, %v2400
        %v2402 = vpop.f32.mrb[0].mxu0
        %v2403 = vadd.f32 0.0, %v2402
        %v2404 = vpop.f32.mrb[0].mxu0
        %v2405 = vadd.f32 0.0, %v2404
        %2406 = vmatprep.mubr.bf16.mxu0 0
        %2407 = vmatmul.mubr.bf16.gmra.mrb[0].mxu0 %v1822
        %v2408 = vpop.f32.mrb[0].mxu0
        %v2409 = vadd.f32 0.0, %v2408
        %v2410 = vpop.f32.mrb[0].mxu0
        %v2411 = vadd.f32 0.0, %v2410
        %v2412 = vpop.f32.mrb[0].mxu0
        %v2413 = vadd.f32 0.0, %v2412
        %v2414 = vpop.f32.mrb[0].mxu0
        %v2415 = vadd.f32 0.0, %v2414
        %2416 = vmatprep.mubr.bf16.mxu0 0
        %2417 = vmatmul.mubr.bf16.gmra.mrb[0].mxu0 %v1823
        %v2418 = vpop.f32.mrb[0].mxu0
        %v2419 = vadd.f32 0.0, %v2418
        %v2420 = vpop.f32.mrb[0].mxu0
        %v2421 = vadd.f32 0.0, %v2420
        %v2422 = vpop.f32.mrb[0].mxu0
        %v2423 = vadd.f32 0.0, %v2422
        %v2424 = vpop.f32.mrb[0].mxu0
        %v2425 = vadd.f32 0.0, %v2424
        %2426 = vdwg.mxu0
        %2427 = vmatprep.subr.bf16.mxu0 %v2087
        %2428 = vmatpush1.bf16.msra.mxu0 %v2086
        %2429 = vmatprep.subr.bf16.mxu0 %v2095
        %2430 = vmatpush1.bf16.msra.mxu0 %v2094
        %2431 = vmatprep.subr.bf16.mxu0 %v2103
        %2432 = vmatpush1.bf16.msra.mxu0 %v2102
        %2433 = vmatprep.subr.bf16.mxu0 %v2111
        %2434 = vmatpush1.bf16.msra.mxu0 %v2110
        %2435 = vmatprep.subr.bf16.mxu0 %v2119
        %2436 = vmatpush1.bf16.msra.mxu0 %v2118
        %2437 = vmatprep.subr.bf16.mxu0 %v2127
        %2438 = vmatpush1.bf16.msra.mxu0 %v2126
        %2439 = vmatprep.subr.bf16.mxu0 %v2135
        %2440 = vmatpush1.bf16.msra.mxu0 %v2134
        %2441 = vmatprep.subr.bf16.mxu0 %v2143
        %2442 = vmatpush1.bf16.msra.mxu0 %v2142
        %2443 = vmatprep.subr.bf16.mxu0 0
        %2444 = vmatpush1.bf16.msra.mxu0 0
        %2445 = vmatprep.subr.bf16.mxu0 0
        %2446 = vmatpush1.bf16.msra.mxu0 0
        %2447 = vmatprep.subr.bf16.mxu0 0
        %2448 = vmatpush1.bf16.msra.mxu0 0
        %2449 = vmatprep.subr.bf16.mxu0 0
        %2450 = vmatpush1.bf16.msra.mxu0 0
        %2451 = vmatprep.subr.bf16.mxu0 0
        %2452 = vmatpush1.bf16.msra.mxu0 0
        %2453 = vmatprep.subr.bf16.mxu0 0
        %2454 = vmatpush1.bf16.msra.mxu0 0
        %2455 = vmatprep.subr.bf16.mxu0 0
        %2456 = vmatpush1.bf16.msra.mxu0 0
        %2457 = vmatprep.subr.bf16.mxu0 0
        %2458 = vmatpush1.bf16.msra.mxu0 0
        %2459 = vmatprep.mubr.bf16.mxu0 0
        %2460 = vmatmul.mubr.bf16.gmra.mrb[0].mxu0 %v1820
        %v2461 = vpop.f32.mrb[0].mxu0
        %v2462 = vadd.f32 0.0, %v2461
        %v2463 = vpop.f32.mrb[0].mxu0
        %v2464 = vadd.f32 0.0, %v2463
        %v2465 = vpop.f32.mrb[0].mxu0
        %v2466 = vadd.f32 0.0, %v2465
        %v2467 = vpop.f32.mrb[0].mxu0
        %v2468 = vadd.f32 0.0, %v2467
        %2469 = vmatprep.mubr.bf16.mxu0 0
        %2470 = vmatmul.mubr.bf16.gmra.mrb[0].mxu0 %v1821
        %v2471 = vpop.f32.mrb[0].mxu0
        %v2472 = vadd.f32 0.0, %v2471
        %v2473 = vpop.f32.mrb[0].mxu0
        %v2474 = vadd.f32 0.0, %v2473
        %v2475 = vpop.f32.mrb[0].mxu0
        %v2476 = vadd.f32 0.0, %v2475
        %v2477 = vpop.f32.mrb[0].mxu0
        %v2478 = vadd.f32 0.0, %v2477
        %2479 = vmatprep.mubr.bf16.mxu0 0
        %2480 = vmatmul.mubr.bf16.gmra.mrb[0].mxu0 %v1822
        %v2481 = vpop.f32.mrb[0].mxu0
        %v2482 = vadd.f32 0.0, %v2481
        %v2483 = vpop.f32.mrb[0].mxu0
        %v2484 = vadd.f32 0.0, %v2483
        %v2485 = vpop.f32.mrb[0].mxu0
        %v2486 = vadd.f32 0.0, %v2485
        %v2487 = vpop.f32.mrb[0].mxu0
        %v2488 = vadd.f32 0.0, %v2487
        %2489 = vmatprep.mubr.bf16.mxu0 0
        %2490 = vmatmul.mubr.bf16.gmra.mrb[0].mxu0 %v1823
        %v2491 = vpop.f32.mrb[0].mxu0
        %v2492 = vadd.f32 0.0, %v2491
        %v2493 = vpop.f32.mrb[0].mxu0
        %v2494 = vadd.f32 0.0, %v2493
        %v2495 = vpop.f32.mrb[0].mxu0
        %v2496 = vadd.f32 0.0, %v2495
        %v2497 = vpop.f32.mrb[0].mxu0
        %v2498 = vadd.f32 0.0, %v2497
        %2499 = vdwg.mxu0
        %v2500 = vxor.u32 %v2389, 2147483648
        %v2501 = vxor.u32 %v2391, 2147483648
        %v2502 = vxor.u32 %v2462, 2147483648
        %v2503 = vxor.u32 %v2464, 2147483648
        %v2504 = vxor.u32 %v2393, 2147483648
        %v2505 = vxor.u32 %v2395, 2147483648
        %v2506 = vxor.u32 %v2466, 2147483648
        %v2507 = vxor.u32 %v2468, 2147483648
        %v2508 = vxor.u32 %v2399, 2147483648
        %v2509 = vxor.u32 %v2401, 2147483648
        %v2510 = vxor.u32 %v2472, 2147483648
        %v2511 = vxor.u32 %v2474, 2147483648
        %v2512 = vxor.u32 %v2403, 2147483648
        %v2513 = vxor.u32 %v2405, 2147483648
        %v2514 = vxor.u32 %v2476, 2147483648
        %v2515 = vxor.u32 %v2478, 2147483648
        %v2516 = vxor.u32 %v2409, 2147483648
        %v2517 = vxor.u32 %v2411, 2147483648
        %v2518 = vxor.u32 %v2482, 2147483648
        %v2519 = vxor.u32 %v2484, 2147483648
        %v2520 = vxor.u32 %v2413, 2147483648
        %v2521 = vxor.u32 %v2415, 2147483648
        %v2522 = vxor.u32 %v2486, 2147483648
        %v2523 = vxor.u32 %v2488, 2147483648
        %v2524 = vxor.u32 %v2419, 2147483648
        %v2525 = vxor.u32 %v2421, 2147483648
        %v2526 = vxor.u32 %v2492, 2147483648
        %v2527 = vxor.u32 %v2494, 2147483648
        %v2528 = vxor.u32 %v2423, 2147483648
        %v2529 = vxor.u32 %v2425, 2147483648
        %v2530 = vxor.u32 %v2496, 2147483648
        %v2531 = vxor.u32 %v2498, 2147483648
        %v2532 = vmul.f32 %v2500, 1.442695
        %v2533 = vpow.pop %v2532
        %v2534 = vmul.f32 %v2501, 1.442695
        %v2535 = vpow.pop %v2534
        %v2536 = vmul.f32 %v2502, 1.442695
        %v2537 = vpow.pop %v2536
        %v2538 = vmul.f32 %v2503, 1.442695
        %v2539 = vpow.pop %v2538
        %v2540 = vmul.f32 %v2504, 1.442695
        %v2541 = vpow.pop %v2540
        %v2542 = vmul.f32 %v2505, 1.442695
        %v2543 = vpow.pop %v2542
        %v2544 = vmul.f32 %v2506, 1.442695
        %v2545 = vpow.pop %v2544
        %v2546 = vmul.f32 %v2507, 1.442695
        %v2547 = vpow.pop %v2546
        %v2548 = vmul.f32 %v2508, 1.442695
        %v2549 = vpow.pop %v2548
        %v2550 = vmul.f32 %v2509, 1.442695
        %v2551 = vpow.pop %v2550
        %v2552 = vmul.f32 %v2510, 1.442695
        %v2553 = vpow.pop %v2552
        %v2554 = vmul.f32 %v2511, 1.442695
        %v2555 = vpow.pop %v2554
        %v2556 = vmul.f32 %v2512, 1.442695
        %v2557 = vpow.pop %v2556
        %v2558 = vmul.f32 %v2513, 1.442695
        %v2559 = vpow.pop %v2558
        %v2560 = vmul.f32 %v2514, 1.442695
        %v2561 = vpow.pop %v2560
        %v2562 = vmul.f32 %v2515, 1.442695
        %v2563 = vpow.pop %v2562
        %v2564 = vmul.f32 %v2516, 1.442695
        %v2565 = vpow.pop %v2564
        %v2566 = vmul.f32 %v2517, 1.442695
        %v2567 = vpow.pop %v2566
        %v2568 = vmul.f32 %v2518, 1.442695
        %v2569 = vpow.pop %v2568
        %v2570 = vmul.f32 %v2519, 1.442695
        %v2571 = vpow.pop %v2570
        %v2572 = vmul.f32 %v2520, 1.442695
        %v2573 = vpow.pop %v2572
        %v2574 = vmul.f32 %v2521, 1.442695
        %v2575 = vpow.pop %v2574
        %v2576 = vmul.f32 %v2522, 1.442695
        %v2577 = vpow.pop %v2576
        %v2578 = vmul.f32 %v2523, 1.442695
        %v2579 = vpow.pop %v2578
        %v2580 = vmul.f32 %v2524, 1.442695
        %v2581 = vpow.pop %v2580
        %v2582 = vmul.f32 %v2525, 1.442695
        %v2583 = vpow.pop %v2582
        %v2584 = vmul.f32 %v2526, 1.442695
        %v2585 = vpow.pop %v2584
        %v2586 = vmul.f32 %v2527, 1.442695
        %v2587 = vpow.pop %v2586
        %v2588 = vmul.f32 %v2528, 1.442695
        %v2589 = vpow.pop %v2588
        %v2590 = vmul.f32 %v2529, 1.442695
        %v2591 = vpow.pop %v2590
        %v2592 = vmul.f32 %v2530, 1.442695
        %v2593 = vpow.pop %v2592
        %v2594 = vmul.f32 %v2531, 1.442695
        %v2595 = vpow.pop %v2594
        %v2596 = vadd.f32 %v2533, 1.0
        %v2597 = vadd.f32 %v2535, 1.0
        %v2598 = vadd.f32 %v2537, 1.0
        %v2599 = vadd.f32 %v2539, 1.0
        %v2600 = vadd.f32 %v2541, 1.0
        %v2601 = vadd.f32 %v2543, 1.0
        %v2602 = vadd.f32 %v2545, 1.0
        %v2603 = vadd.f32 %v2547, 1.0
        %v2604 = vadd.f32 %v2549, 1.0
        %v2605 = vadd.f32 %v2551, 1.0
        %v2606 = vadd.f32 %v2553, 1.0
        %v2607 = vadd.f32 %v2555, 1.0
        %v2608 = vadd.f32 %v2557, 1.0
        %v2609 = vadd.f32 %v2559, 1.0
        %v2610 = vadd.f32 %v2561, 1.0
        %v2611 = vadd.f32 %v2563, 1.0
        %v2612 = vadd.f32 %v2565, 1.0
        %v2613 = vadd.f32 %v2567, 1.0
        %v2614 = vadd.f32 %v2569, 1.0
        %v2615 = vadd.f32 %v2571, 1.0
        %v2616 = vadd.f32 %v2573, 1.0
        %v2617 = vadd.f32 %v2575, 1.0
        %v2618 = vadd.f32 %v2577, 1.0
        %v2619 = vadd.f32 %v2579, 1.0
        %v2620 = vadd.f32 %v2581, 1.0
        %v2621 = vadd.f32 %v2583, 1.0
        %v2622 = vadd.f32 %v2585, 1.0
        %v2623 = vadd.f32 %v2587, 1.0
        %v2624 = vadd.f32 %v2589, 1.0
        %v2625 = vadd.f32 %v2591, 1.0
        %v2626 = vadd.f32 %v2593, 1.0
        %v2627 = vadd.f32 %v2595, 1.0
        %v2628 = vrcp.pop %v2596
        %v2629 = vmul.f32 1.0, %v2628
        %v2630 = vrcp.pop %v2597
        %v2631 = vmul.f32 1.0, %v2630
        %v2632 = vrcp.pop %v2598
        %v2633 = vmul.f32 1.0, %v2632
        %v2634 = vrcp.pop %v2599
        %v2635 = vmul.f32 1.0, %v2634
        %v2636 = vrcp.pop %v2600
        %v2637 = vmul.f32 1.0, %v2636
        %v2638 = vrcp.pop %v2601
        %v2639 = vmul.f32 1.0, %v2638
        %v2640 = vrcp.pop %v2602
        %v2641 = vmul.f32 1.0, %v2640
        %v2642 = vrcp.pop %v2603
        %v2643 = vmul.f32 1.0, %v2642
        %v2644 = vrcp.pop %v2604
        %v2645 = vmul.f32 1.0, %v2644
        %v2646 = vrcp.pop %v2605
        %v2647 = vmul.f32 1.0, %v2646
        %v2648 = vrcp.pop %v2606
        %v2649 = vmul.f32 1.0, %v2648
        %v2650 = vrcp.pop %v2607
        %v2651 = vmul.f32 1.0, %v2650
        %v2652 = vrcp.pop %v2608
        %v2653 = vmul.f32 1.0, %v2652
        %v2654 = vrcp.pop %v2609
        %v2655 = vmul.f32 1.0, %v2654
        %v2656 = vrcp.pop %v2610
        %v2657 = vmul.f32 1.0, %v2656
        %v2658 = vrcp.pop %v2611
        %v2659 = vmul.f32 1.0, %v2658
        %v2660 = vrcp.pop %v2612
        %v2661 = vmul.f32 1.0, %v2660
        %v2662 = vrcp.pop %v2613
        %v2663 = vmul.f32 1.0, %v2662
        %v2664 = vrcp.pop %v2614
        %v2665 = vmul.f32 1.0, %v2664
        %v2666 = vrcp.pop %v2615
        %v2667 = vmul.f32 1.0, %v2666
        %v2668 = vrcp.pop %v2616
        %v2669 = vmul.f32 1.0, %v2668
        %v2670 = vrcp.pop %v2617
        %v2671 = vmul.f32 1.0, %v2670
        %v2672 = vrcp.pop %v2618
        %v2673 = vmul.f32 1.0, %v2672
        %v2674 = vrcp.pop %v2619
        %v2675 = vmul.f32 1.0, %v2674
        %v2676 = vrcp.pop %v2620
        %v2677 = vmul.f32 1.0, %v2676
        %v2678 = vrcp.pop %v2621
        %v2679 = vmul.f32 1.0, %v2678
        %v2680 = vrcp.pop %v2622
        %v2681 = vmul.f32 1.0, %v2680
        %v2682 = vrcp.pop %v2623
        %v2683 = vmul.f32 1.0, %v2682
        %v2684 = vrcp.pop %v2624
        %v2685 = vmul.f32 1.0, %v2684
        %v2686 = vrcp.pop %v2625
        %v2687 = vmul.f32 1.0, %v2686
        %v2688 = vrcp.pop %v2626
        %v2689 = vmul.f32 1.0, %v2688
        %v2690 = vrcp.pop %v2627
        %v2691 = vmul.f32 1.0, %v2690
        %v2692 = vmul.f32 %v2389, %v2629
        %v2693 = vmul.f32 %v2391, %v2631
        %v2694 = vmul.f32 %v2462, %v2633
        %v2695 = vmul.f32 %v2464, %v2635
        %v2696 = vmul.f32 %v2393, %v2637
        %v2697 = vmul.f32 %v2395, %v2639
        %v2698 = vmul.f32 %v2466, %v2641
        %v2699 = vmul.f32 %v2468, %v2643
        %v2700 = vmul.f32 %v2399, %v2645
        %v2701 = vmul.f32 %v2401, %v2647
        %v2702 = vmul.f32 %v2472, %v2649
        %v2703 = vmul.f32 %v2474, %v2651
        %v2704 = vmul.f32 %v2403, %v2653
        %v2705 = vmul.f32 %v2405, %v2655
        %v2706 = vmul.f32 %v2476, %v2657
        %v2707 = vmul.f32 %v2478, %v2659
        %v2708 = vmul.f32 %v2409, %v2661
        %v2709 = vmul.f32 %v2411, %v2663
        %v2710 = vmul.f32 %v2482, %v2665
        %v2711 = vmul.f32 %v2484, %v2667
        %v2712 = vmul.f32 %v2413, %v2669
        %v2713 = vmul.f32 %v2415, %v2671
        %v2714 = vmul.f32 %v2486, %v2673
        %v2715 = vmul.f32 %v2488, %v2675
        %v2716 = vmul.f32 %v2419, %v2677
        %v2717 = vmul.f32 %v2421, %v2679
        %v2718 = vmul.f32 %v2492, %v2681
        %v2719 = vmul.f32 %v2494, %v2683
        %v2720 = vmul.f32 %v2423, %v2685
        %v2721 = vmul.f32 %v2425, %v2687
        %v2722 = vmul.f32 %v2496, %v2689
        %v2723 = vmul.f32 %v2498, %v2691
        %v2724 = vmul.f32 %v2243, %v2692
        %v2725 = vmul.f32 %v2245, %v2693
        %v2726 = vmul.f32 %v2316, %v2694
        %v2727 = vmul.f32 %v2318, %v2695
        %v2728 = vmul.f32 %v2247, %v2696
        %v2729 = vmul.f32 %v2249, %v2697
        %v2730 = vmul.f32 %v2320, %v2698
        %v2731 = vmul.f32 %v2322, %v2699
        %v2732 = vmul.f32 %v2253, %v2700
        %v2733 = vmul.f32 %v2255, %v2701
        %v2734 = vmul.f32 %v2326, %v2702
        %v2735 = vmul.f32 %v2328, %v2703
        %v2736 = vmul.f32 %v2257, %v2704
        %v2737 = vmul.f32 %v2259, %v2705
        %v2738 = vmul.f32 %v2330, %v2706
        %v2739 = vmul.f32 %v2332, %v2707
        %v2740 = vmul.f32 %v2263, %v2708
        %v2741 = vmul.f32 %v2265, %v2709
        %v2742 = vmul.f32 %v2336, %v2710
        %v2743 = vmul.f32 %v2338, %v2711
        %v2744 = vmul.f32 %v2267, %v2712
        %v2745 = vmul.f32 %v2269, %v2713
        %v2746 = vmul.f32 %v2340, %v2714
        %v2747 = vmul.f32 %v2342, %v2715
        %v2748 = vmul.f32 %v2273, %v2716
        %v2749 = vmul.f32 %v2275, %v2717
        %v2750 = vmul.f32 %v2346, %v2718
        %v2751 = vmul.f32 %v2348, %v2719
        %v2752 = vmul.f32 %v2277, %v2720
        %v2753 = vmul.f32 %v2279, %v2721
        %v2754 = vmul.f32 %v2350, %v2722
        %v2755 = vmul.f32 %v2352, %v2723
        %v2756 = vld [vmem:[%s8] sm:$0xf]
        %v2757 = vadd.f32 %v2724, %v2725
        %v2758 = vadd.f32 %v2757, %v2726
        %v2759 = vadd.f32 %v2758, %v2727
        %2760 = vadd.xlane.f32.xlu0 %v2759
        %v2761 = vpop.xlane.xlu0 %2760
        %v2762 = vadd.f32 %v2728, %v2729
        %v2763 = vadd.f32 %v2762, %v2730
        %v2764 = vadd.f32 %v2763, %v2731
        %2765 = vadd.xlane.f32.xlu0 %v2764
        %v2766 = vpop.xlane.xlu0 %2765
        %v2767 = vadd.f32 %v2732, %v2733
        %v2768 = vadd.f32 %v2767, %v2734
        %v2769 = vadd.f32 %v2768, %v2735
        %2770 = vadd.xlane.f32.xlu0 %v2769
        %v2771 = vpop.xlane.xlu0 %2770
        %v2772 = vadd.f32 %v2736, %v2737
        %v2773 = vadd.f32 %v2772, %v2738
        %v2774 = vadd.f32 %v2773, %v2739
        %2775 = vadd.xlane.f32.xlu0 %v2774
        %v2776 = vpop.xlane.xlu0 %2775
        %v2777 = vadd.f32 %v2740, %v2741
        %v2778 = vadd.f32 %v2777, %v2742
        %v2779 = vadd.f32 %v2778, %v2743
        %2780 = vadd.xlane.f32.xlu0 %v2779
        %v2781 = vpop.xlane.xlu0 %2780
        %v2782 = vadd.f32 %v2744, %v2745
        %v2783 = vadd.f32 %v2782, %v2746
        %v2784 = vadd.f32 %v2783, %v2747
        %2785 = vadd.xlane.f32.xlu0 %v2784
        %v2786 = vpop.xlane.xlu0 %2785
        %v2787 = vadd.f32 %v2748, %v2749
        %v2788 = vadd.f32 %v2787, %v2750
        %v2789 = vadd.f32 %v2788, %v2751
        %2790 = vadd.xlane.f32.xlu0 %v2789
        %v2791 = vpop.xlane.xlu0 %2790
        %v2792 = vadd.f32 %v2752, %v2753
        %v2793 = vadd.f32 %v2792, %v2754
        %v2794 = vadd.f32 %v2793, %v2755
        %2795 = vadd.xlane.f32.xlu0 %v2794
        %v2796 = vpop.xlane.xlu0 %2795
        %v2797 = vrcp.pop 512.0
        %v2798 = vmul.f32 %v2761, %v2797
        %v2799 = vmul.f32 %v2766, %v2797
        %v2800 = vmul.f32 %v2771, %v2797
        %v2801 = vmul.f32 %v2776, %v2797
        %v2802 = vmul.f32 %v2781, %v2797
        %v2803 = vmul.f32 %v2786, %v2797
        %v2804 = vmul.f32 %v2791, %v2797
        %v2805 = vmul.f32 %v2796, %v2797
        %v2806 = vsub.f32 %v2724, %v2798
        %v2807 = vsub.f32 %v2725, %v2798
        %v2808 = vsub.f32 %v2726, %v2798
        %v2809 = vsub.f32 %v2727, %v2798
        %v2810 = vsub.f32 %v2728, %v2799
        %v2811 = vsub.f32 %v2729, %v2799
        %v2812 = vsub.f32 %v2730, %v2799
        %v2813 = vsub.f32 %v2731, %v2799
        %v2814 = vsub.f32 %v2732, %v2800
        %v2815 = vsub.f32 %v2733, %v2800
        %v2816 = vsub.f32 %v2734, %v2800
        %v2817 = vsub.f32 %v2735, %v2800
        %v2818 = vsub.f32 %v2736, %v2801
        %v2819 = vsub.f32 %v2737, %v2801
        %v2820 = vsub.f32 %v2738, %v2801
        %v2821 = vsub.f32 %v2739, %v2801
        %v2822 = vsub.f32 %v2740, %v2802
        %v2823 = vsub.f32 %v2741, %v2802
        %v2824 = vsub.f32 %v2742, %v2802
        %v2825 = vsub.f32 %v2743, %v2802
        %v2826 = vsub.f32 %v2744, %v2803
        %v2827 = vsub.f32 %v2745, %v2803
        %v2828 = vsub.f32 %v2746, %v2803
        %v2829 = vsub.f32 %v2747, %v2803
        %v2830 = vsub.f32 %v2748, %v2804
        %v2831 = vsub.f32 %v2749, %v2804
        %v2832 = vsub.f32 %v2750, %v2804
        %v2833 = vsub.f32 %v2751, %v2804
        %v2834 = vsub.f32 %v2752, %v2805
        %v2835 = vsub.f32 %v2753, %v2805
        %v2836 = vsub.f32 %v2754, %v2805
        %v2837 = vsub.f32 %v2755, %v2805
        %v2838 = vmul.f32 %v2806, %v2806
        %v2839 = vmul.f32 %v2807, %v2807
        %v2840 = vmul.f32 %v2808, %v2808
        %v2841 = vmul.f32 %v2809, %v2809
        %v2842 = vmul.f32 %v2810, %v2810
        %v2843 = vmul.f32 %v2811, %v2811
        %v2844 = vmul.f32 %v2812, %v2812
        %v2845 = vmul.f32 %v2813, %v2813
        %v2846 = vmul.f32 %v2814, %v2814
        %v2847 = vmul.f32 %v2815, %v2815
        %v2848 = vmul.f32 %v2816, %v2816
        %v2849 = vmul.f32 %v2817, %v2817
        %v2850 = vmul.f32 %v2818, %v2818
        %v2851 = vmul.f32 %v2819, %v2819
        %v2852 = vmul.f32 %v2820, %v2820
        %v2853 = vmul.f32 %v2821, %v2821
        %v2854 = vmul.f32 %v2822, %v2822
        %v2855 = vmul.f32 %v2823, %v2823
        %v2856 = vmul.f32 %v2824, %v2824
        %v2857 = vmul.f32 %v2825, %v2825
        %v2858 = vmul.f32 %v2826, %v2826
        %v2859 = vmul.f32 %v2827, %v2827
        %v2860 = vmul.f32 %v2828, %v2828
        %v2861 = vmul.f32 %v2829, %v2829
        %v2862 = vmul.f32 %v2830, %v2830
        %v2863 = vmul.f32 %v2831, %v2831
        %v2864 = vmul.f32 %v2832, %v2832
        %v2865 = vmul.f32 %v2833, %v2833
        %v2866 = vmul.f32 %v2834, %v2834
        %v2867 = vmul.f32 %v2835, %v2835
        %v2868 = vmul.f32 %v2836, %v2836
        %v2869 = vmul.f32 %v2837, %v2837
        %v2870 = vadd.f32 %v2838, %v2839
        %v2871 = vadd.f32 %v2870, %v2840
        %v2872 = vadd.f32 %v2871, %v2841
        %2873 = vadd.xlane.f32.xlu0 %v2872
        %v2874 = vpop.xlane.xlu0 %2873
        %v2875 = vadd.f32 %v2842, %v2843
        %v2876 = vadd.f32 %v2875, %v2844
        %v2877 = vadd.f32 %v2876, %v2845
        %2878 = vadd.xlane.f32.xlu0 %v2877
        %v2879 = vpop.xlane.xlu0 %2878
        %v2880 = vadd.f32 %v2846, %v2847
        %v2881 = vadd.f32 %v2880, %v2848
        %v2882 = vadd.f32 %v2881, %v2849
        %2883 = vadd.xlane.f32.xlu0 %v2882
        %v2884 = vpop.xlane.xlu0 %2883
        %v2885 = vadd.f32 %v2850, %v2851
        %v2886 = vadd.f32 %v2885, %v2852
        %v2887 = vadd.f32 %v2886, %v2853
        %2888 = vadd.xlane.f32.xlu0 %v2887
        %v2889 = vpop.xlane.xlu0 %2888
        %v2890 = vadd.f32 %v2854, %v2855
        %v2891 = vadd.f32 %v2890, %v2856
        %v2892 = vadd.f32 %v2891, %v2857
        %2893 = vadd.xlane.f32.xlu0 %v2892
        %v2894 = vpop.xlane.xlu0 %2893
        %v2895 = vadd.f32 %v2858, %v2859
        %v2896 = vadd.f32 %v2895, %v2860
        %v2897 = vadd.f32 %v2896, %v2861
        %2898 = vadd.xlane.f32.xlu0 %v2897
        %v2899 = vpop.xlane.xlu0 %2898
        %v2900 = vadd.f32 %v2862, %v2863
        %v2901 = vadd.f32 %v2900, %v2864
        %v2902 = vadd.f32 %v2901, %v2865
        %2903 = vadd.xlane.f32.xlu0 %v2902
        %v2904 = vpop.xlane.xlu0 %2903
        %v2905 = vadd.f32 %v2866, %v2867
        %v2906 = vadd.f32 %v2905, %v2868
        %v2907 = vadd.f32 %v2906, %v2869
        %2908 = vadd.xlane.f32.xlu0 %v2907
        %v2909 = vpop.xlane.xlu0 %2908
        %v2910 = vmul.f32 %v2874, %v2797
        %v2911 = vmul.f32 %v2879, %v2797
        %v2912 = vmul.f32 %v2884, %v2797
        %v2913 = vmul.f32 %v2889, %v2797
        %v2914 = vmul.f32 %v2894, %v2797
        %v2915 = vmul.f32 %v2899, %v2797
        %v2916 = vmul.f32 %v2904, %v2797
        %v2917 = vmul.f32 %v2909, %v2797
        %v2918 = vadd.f32 %v2910, 1e-05
        %v2919 = vadd.f32 %v2911, 1e-05
        %v2920 = vadd.f32 %v2912, 1e-05
        %v2921 = vadd.f32 %v2913, 1e-05
        %v2922 = vadd.f32 %v2914, 1e-05
        %v2923 = vadd.f32 %v2915, 1e-05
        %v2924 = vadd.f32 %v2916, 1e-05
        %v2925 = vadd.f32 %v2917, 1e-05
        %v2926 = vrsqrt.pop %v2918
        %v2927 = vrsqrt.pop %v2919
        %v2928 = vrsqrt.pop %v2920
        %v2929 = vrsqrt.pop %v2921
        %v2930 = vrsqrt.pop %v2922
        %v2931 = vrsqrt.pop %v2923
        %v2932 = vrsqrt.pop %v2924
        %v2933 = vrsqrt.pop %v2925
        %v2934 = vmul.f32 %v2806, %v2926
        %v2935 = vmul.f32 %v2807, %v2926
        %v2936 = vmul.f32 %v2808, %v2926
        %v2937 = vmul.f32 %v2809, %v2926
        %v2938 = vmul.f32 %v2810, %v2927
        %v2939 = vmul.f32 %v2811, %v2927
        %v2940 = vmul.f32 %v2812, %v2927
        %v2941 = vmul.f32 %v2813, %v2927
        %v2942 = vmul.f32 %v2814, %v2928
        %v2943 = vmul.f32 %v2815, %v2928
        %v2944 = vmul.f32 %v2816, %v2928
        %v2945 = vmul.f32 %v2817, %v2928
        %v2946 = vmul.f32 %v2818, %v2929
        %v2947 = vmul.f32 %v2819, %v2929
        %v2948 = vmul.f32 %v2820, %v2929
        %v2949 = vmul.f32 %v2821, %v2929
        %v2950 = vmul.f32 %v2822, %v2930
        %v2951 = vmul.f32 %v2823, %v2930
        %v2952 = vmul.f32 %v2824, %v2930
        %v2953 = vmul.f32 %v2825, %v2930
        %v2954 = vmul.f32 %v2826, %v2931
        %v2955 = vmul.f32 %v2827, %v2931
        %v2956 = vmul.f32 %v2828, %v2931
        %v2957 = vmul.f32 %v2829, %v2931
        %v2958 = vmul.f32 %v2830, %v2932
        %v2959 = vmul.f32 %v2831, %v2932
        %v2960 = vmul.f32 %v2832, %v2932
        %v2961 = vmul.f32 %v2833, %v2932
        %v2962 = vmul.f32 %v2834, %v2933
        %v2963 = vmul.f32 %v2835, %v2933
        %v2964 = vmul.f32 %v2836, %v2933
        %v2965 = vmul.f32 %v2837, %v2933
        %v2967 = vlaneseq
        %v2968 = vshrl.u32 %v2967, 7
        %v2969 = vsub.s32 0, %v2968
        %v2970 = vrot.slane %v2756, %v2969
        %v2971 = vlaneseq
        %v2972 = vshrl.u32 %v2971, 7
        %v2973 = vsub.s32 1, %v2972
        %v2974 = vrot.slane %v2756, %v2973
        %v2975 = vlaneseq
        %v2976 = vshrl.u32 %v2975, 7
        %v2977 = vsub.s32 2, %v2976
        %v2978 = vrot.slane %v2756, %v2977
        %v2979 = vlaneseq
        %v2980 = vshrl.u32 %v2979, 7
        %v2981 = vsub.s32 3, %v2980
        %v2982 = vrot.slane %v2756, %v2981
        %v2987 = vmul.f32 %v2934, %v2970
        %v2988 = vmul.f32 %v2935, %v2974
        %v2989 = vmul.f32 %v2936, %v2978
        %v2990 = vmul.f32 %v2937, %v2982
        %v2991 = vmul.f32 %v2938, %v2970
        %v2992 = vmul.f32 %v2939, %v2974
        %v2993 = vmul.f32 %v2940, %v2978
        %v2994 = vmul.f32 %v2941, %v2982
        %v2995 = vmul.f32 %v2942, %v2970
        %v2996 = vmul.f32 %v2943, %v2974
        %v2997 = vmul.f32 %v2944, %v2978
        %v2998 = vmul.f32 %v2945, %v2982
        %v2999 = vmul.f32 %v2946, %v2970
        %v3000 = vmul.f32 %v2947, %v2974
        %v3001 = vmul.f32 %v2948, %v2978
        %v3002 = vmul.f32 %v2949, %v2982
        %v3003 = vmul.f32 %v2950, %v2970
        %v3004 = vmul.f32 %v2951, %v2974
        %v3005 = vmul.f32 %v2952, %v2978
        %v3006 = vmul.f32 %v2953, %v2982
        %v3007 = vmul.f32 %v2954, %v2970
        %v3008 = vmul.f32 %v2955, %v2974
        %v3009 = vmul.f32 %v2956, %v2978
        %v3010 = vmul.f32 %v2957, %v2982
        %v3011 = vmul.f32 %v2958, %v2970
        %v3012 = vmul.f32 %v2959, %v2974
        %v3013 = vmul.f32 %v2960, %v2978
        %v3014 = vmul.f32 %v2961, %v2982
        %v3015 = vmul.f32 %v2962, %v2970
        %v3016 = vmul.f32 %v2963, %v2974
        %v3017 = vmul.f32 %v2964, %v2978
        %v3018 = vmul.f32 %v2965, %v2982
        %v3019 = vpack.c.bf16 %v2991, %v2987
        %v3020 = vpack.c.bf16 %v2992, %v2988
        %v3021 = vpack.c.bf16 %v2993, %v2989
        %v3022 = vpack.c.bf16 %v2994, %v2990
        %v3023 = vpack.c.bf16 %v2999, %v2995
        %v3024 = vpack.c.bf16 %v3000, %v2996
        %v3025 = vpack.c.bf16 %v3001, %v2997
        %v3026 = vpack.c.bf16 %v3002, %v2998
        %v3027 = vpack.c.bf16 %v3007, %v3003
        %v3028 = vpack.c.bf16 %v3008, %v3004
        %v3029 = vpack.c.bf16 %v3009, %v3005
        %v3030 = vpack.c.bf16 %v3010, %v3006
        %v3031 = vpack.c.bf16 %v3015, %v3011
        %v3032 = vpack.c.bf16 %v3016, %v3012
        %v3033 = vpack.c.bf16 %v3017, %v3013
        %v3034 = vpack.c.bf16 %v3018, %v3014
        %v3035 = vld [vmem:[%s9] sm:$0xf]
        %v3036 = vld [vmem:[%s9 + $0x4] sm:$0xf]
        %v3037 = vld [vmem:[%s9 + $0x8] sm:$0xf]
        %v3038 = vld [vmem:[%s9 + $0xc] sm:$0xf]
        %v3039 = vld [vmem:[%s9 + $0x10] sm:$0xf]
        %v3040 = vld [vmem:[%s9 + $0x14] sm:$0xf]
        %v3041 = vld [vmem:[%s9 + $0x18] sm:$0xf]
        %v3042 = vld [vmem:[%s9 + $0x1c] sm:$0xf]
        %v3043 = vld [vmem:[%s9 + $0x20] sm:$0xf]
        %v3044 = vld [vmem:[%s9 + $0x24] sm:$0xf]
        %v3045 = vld [vmem:[%s9 + $0x28] sm:$0xf]
        %v3046 = vld [vmem:[%s9 + $0x2c] sm:$0xf]
        %v3047 = vld [vmem:[%s9 + $0x30] sm:$0xf]
        %v3048 = vld [vmem:[%s9 + $0x34] sm:$0xf]
        %v3049 = vld [vmem:[%s9 + $0x38] sm:$0xf]
        %v3050 = vld [vmem:[%s9 + $0x3c] sm:$0xf]
        %v3051 = vld [vmem:[%s9 + $0x40] sm:$0xf]
        %v3052 = vld [vmem:[%s9 + $0x44] sm:$0xf]
        %v3053 = vld [vmem:[%s9 + $0x48] sm:$0xf]
        %v3054 = vld [vmem:[%s9 + $0x4c] sm:$0xf]
        %v3055 = vld [vmem:[%s9 + $0x50] sm:$0xf]
        %v3056 = vld [vmem:[%s9 + $0x54] sm:$0xf]
        %v3057 = vld [vmem:[%s9 + $0x58] sm:$0xf]
        %v3058 = vld [vmem:[%s9 + $0x5c] sm:$0xf]
        %v3059 = vld [vmem:[%s9 + $0x60] sm:$0xf]
        %v3060 = vld [vmem:[%s9 + $0x64] sm:$0xf]
        %v3061 = vld [vmem:[%s9 + $0x68] sm:$0xf]
        %v3062 = vld [vmem:[%s9 + $0x6c] sm:$0xf]
        %v3063 = vld [vmem:[%s9 + $0x70] sm:$0xf]
        %v3064 = vld [vmem:[%s9 + $0x74] sm:$0xf]
        %v3065 = vld [vmem:[%s9 + $0x78] sm:$0xf]
        %v3066 = vld [vmem:[%s9 + $0x7c] sm:$0xf]
        %v3067 = vld [vmem:[%s9 + $0x80] sm:$0xf]
        %v3068 = vld [vmem:[%s9 + $0x84] sm:$0xf]
        %v3069 = vld [vmem:[%s9 + $0x88] sm:$0xf]
        %v3070 = vld [vmem:[%s9 + $0x8c] sm:$0xf]
        %v3071 = vld [vmem:[%s9 + $0x90] sm:$0xf]
        %v3072 = vld [vmem:[%s9 + $0x94] sm:$0xf]
        %v3073 = vld [vmem:[%s9 + $0x98] sm:$0xf]
        %v3074 = vld [vmem:[%s9 + $0x9c] sm:$0xf]
        %v3075 = vld [vmem:[%s9 + $0xa0] sm:$0xf]
        %v3076 = vld [vmem:[%s9 + $0xa4] sm:$0xf]
        %v3077 = vld [vmem:[%s9 + $0xa8] sm:$0xf]
        %v3078 = vld [vmem:[%s9 + $0xac] sm:$0xf]
        %v3079 = vld [vmem:[%s9 + $0xb0] sm:$0xf]
        %v3080 = vld [vmem:[%s9 + $0xb4] sm:$0xf]
        %v3081 = vld [vmem:[%s9 + $0xb8] sm:$0xf]
        %v3082 = vld [vmem:[%s9 + $0xbc] sm:$0xf]
        %v3083 = vld [vmem:[%s9 + $0xc0] sm:$0xf]
        %v3084 = vld [vmem:[%s9 + $0xc4] sm:$0xf]
        %v3085 = vld [vmem:[%s9 + $0xc8] sm:$0xf]
        %v3086 = vld [vmem:[%s9 + $0xcc] sm:$0xf]
        %v3087 = vld [vmem:[%s9 + $0xd0] sm:$0xf]
        %v3088 = vld [vmem:[%s9 + $0xd4] sm:$0xf]
        %v3089 = vld [vmem:[%s9 + $0xd8] sm:$0xf]
        %v3090 = vld [vmem:[%s9 + $0xdc] sm:$0xf]
        %v3091 = vld [vmem:[%s9 + $0xe0] sm:$0xf]
        %v3092 = vld [vmem:[%s9 + $0xe4] sm:$0xf]
        %v3093 = vld [vmem:[%s9 + $0xe8] sm:$0xf]
        %v3094 = vld [vmem:[%s9 + $0xec] sm:$0xf]
        %v3095 = vld [vmem:[%s9 + $0xf0] sm:$0xf]
        %v3096 = vld [vmem:[%s9 + $0xf4] sm:$0xf]
        %v3097 = vld [vmem:[%s9 + $0xf8] sm:$0xf]
        %v3098 = vld [vmem:[%s9 + $0xfc] sm:$0xf]
        %v3163 = vunpack.c.l.b16 %v3035
        %v3164 = vunpack.c.l.b16 %v3036
        %v3165 = vunpack.c.l.b16 %v3037
        %v3166 = vunpack.c.l.b16 %v3038
        %v3167 = vunpack.c.l.b16 %v3039
        %v3168 = vunpack.c.l.b16 %v3040
        %v3169 = vunpack.c.l.b16 %v3041
        %v3170 = vunpack.c.l.b16 %v3042
        %v3171 = vunpack.c.l.b16 %v3043
        %v3172 = vunpack.c.l.b16 %v3044
        %v3173 = vunpack.c.l.b16 %v3045
        %v3174 = vunpack.c.l.b16 %v3046
        %v3175 = vunpack.c.l.b16 %v3047
        %v3176 = vunpack.c.l.b16 %v3048
        %v3177 = vunpack.c.l.b16 %v3049
        %v3178 = vunpack.c.l.b16 %v3050
        %v3179 = vunpack.c.l.b16 %v3051
        %v3180 = vunpack.c.l.b16 %v3052
        %v3181 = vunpack.c.l.b16 %v3053
        %v3182 = vunpack.c.l.b16 %v3054
        %v3183 = vunpack.c.l.b16 %v3055
        %v3184 = vunpack.c.l.b16 %v3056
        %v3185 = vunpack.c.l.b16 %v3057
        %v3186 = vunpack.c.l.b16 %v3058
        %v3187 = vunpack.c.l.b16 %v3059
        %v3188 = vunpack.c.l.b16 %v3060
        %v3189 = vunpack.c.l.b16 %v3061
        %v3190 = vunpack.c.l.b16 %v3062
        %v3191 = vunpack.c.l.b16 %v3063
        %v3192 = vunpack.c.l.b16 %v3064
        %v3193 = vunpack.c.l.b16 %v3065
        %v3194 = vunpack.c.l.b16 %v3066
        %v3195 = vunpack.c.l.b16 %v3067
        %v3196 = vunpack.c.l.b16 %v3068
        %v3197 = vunpack.c.l.b16 %v3069
        %v3198 = vunpack.c.l.b16 %v3070
        %v3199 = vunpack.c.l.b16 %v3071
        %v3200 = vunpack.c.l.b16 %v3072
        %v3201 = vunpack.c.l.b16 %v3073
        %v3202 = vunpack.c.l.b16 %v3074
        %v3203 = vunpack.c.l.b16 %v3075
        %v3204 = vunpack.c.l.b16 %v3076
        %v3205 = vunpack.c.l.b16 %v3077
        %v3206 = vunpack.c.l.b16 %v3078
        %v3207 = vunpack.c.l.b16 %v3079
        %v3208 = vunpack.c.l.b16 %v3080
        %v3209 = vunpack.c.l.b16 %v3081
        %v3210 = vunpack.c.l.b16 %v3082
        %v3211 = vunpack.c.l.b16 %v3083
        %v3212 = vunpack.c.l.b16 %v3084
        %v3213 = vunpack.c.l.b16 %v3085
        %v3214 = vunpack.c.l.b16 %v3086
        %v3215 = vunpack.c.l.b16 %v3087
        %v3216 = vunpack.c.l.b16 %v3088
        %v3217 = vunpack.c.l.b16 %v3089
        %v3218 = vunpack.c.l.b16 %v3090
        %v3219 = vunpack.c.l.b16 %v3091
        %v3220 = vunpack.c.l.b16 %v3092
        %v3221 = vunpack.c.l.b16 %v3093
        %v3222 = vunpack.c.l.b16 %v3094
        %v3223 = vunpack.c.l.b16 %v3095
        %v3224 = vunpack.c.l.b16 %v3096
        %v3225 = vunpack.c.l.b16 %v3097
        %v3226 = vunpack.c.l.b16 %v3098
        %v3227 = vpack.c.b16 %v3164, %v3163
        %v3228 = vpack.c.b16 %v3166, %v3165
        %v3229 = vpack.c.b16 %v3168, %v3167
        %v3230 = vpack.c.b16 %v3170, %v3169
        %v3231 = vpack.c.b16 %v3172, %v3171
        %v3232 = vpack.c.b16 %v3174, %v3173
        %v3233 = vpack.c.b16 %v3176, %v3175
        %v3234 = vpack.c.b16 %v3178, %v3177
        %v3235 = vpack.c.b16 %v3180, %v3179
        %v3236 = vpack.c.b16 %v3182, %v3181
        %v3237 = vpack.c.b16 %v3184, %v3183
        %v3238 = vpack.c.b16 %v3186, %v3185
        %v3239 = vpack.c.b16 %v3188, %v3187
        %v3240 = vpack.c.b16 %v3190, %v3189
        %v3241 = vpack.c.b16 %v3192, %v3191
        %v3242 = vpack.c.b16 %v3194, %v3193
        %v3243 = vpack.c.b16 %v3196, %v3195
        %v3244 = vpack.c.b16 %v3198, %v3197
        %v3245 = vpack.c.b16 %v3200, %v3199
        %v3246 = vpack.c.b16 %v3202, %v3201
        %v3247 = vpack.c.b16 %v3204, %v3203
        %v3248 = vpack.c.b16 %v3206, %v3205
        %v3249 = vpack.c.b16 %v3208, %v3207
        %v3250 = vpack.c.b16 %v3210, %v3209
        %v3251 = vpack.c.b16 %v3212, %v3211
        %v3252 = vpack.c.b16 %v3214, %v3213
        %v3253 = vpack.c.b16 %v3216, %v3215
        %v3254 = vpack.c.b16 %v3218, %v3217
        %v3255 = vpack.c.b16 %v3220, %v3219
        %v3256 = vpack.c.b16 %v3222, %v3221
        %v3257 = vpack.c.b16 %v3224, %v3223
        %v3258 = vpack.c.b16 %v3226, %v3225
        %3291 = vmatprep.subr.bf16.mxu0 0
        %3292 = vmatpush1.bf16.msra.mxu0 %v3227
        %3293 = vmatprep.subr.bf16.mxu0 0
        %3294 = vmatpush1.bf16.msra.mxu0 %v3228
        %3295 = vmatprep.subr.bf16.mxu0 0
        %3296 = vmatpush1.bf16.msra.mxu0 %v3229
        %3297 = vmatprep.subr.bf16.mxu0 0
        %3298 = vmatpush1.bf16.msra.mxu0 %v3230
        %3299 = vmatprep.subr.bf16.mxu0 0
        %3300 = vmatpush1.bf16.msra.mxu0 %v3231
        %3301 = vmatprep.subr.bf16.mxu0 0
        %3302 = vmatpush1.bf16.msra.mxu0 %v3232
        %3303 = vmatprep.subr.bf16.mxu0 0
        %3304 = vmatpush1.bf16.msra.mxu0 %v3233
        %3305 = vmatprep.subr.bf16.mxu0 0
        %3306 = vmatpush1.bf16.msra.mxu0 %v3234
        %3307 = vmatprep.subr.bf16.mxu0 0
        %3308 = vmatpush1.bf16.msra.mxu0 %v3235
        %3309 = vmatprep.subr.bf16.mxu0 0
        %3310 = vmatpush1.bf16.msra.mxu0 %v3236
        %3311 = vmatprep.subr.bf16.mxu0 0
        %3312 = vmatpush1.bf16.msra.mxu0 %v3237
        %3313 = vmatprep.subr.bf16.mxu0 0
        %3314 = vmatpush1.bf16.msra.mxu0 %v3238
        %3315 = vmatprep.subr.bf16.mxu0 0
        %3316 = vmatpush1.bf16.msra.mxu0 %v3239
        %3317 = vmatprep.subr.bf16.mxu0 0
        %3318 = vmatpush1.bf16.msra.mxu0 %v3240
        %3319 = vmatprep.subr.bf16.mxu0 0
        %3320 = vmatpush1.bf16.msra.mxu0 %v3241
        %3321 = vmatprep.subr.bf16.mxu0 0
        %3322 = vmatpush1.bf16.msra.mxu0 %v3242
        %3323 = vmatprep.mubr.bf16.mxu0 %v3020
        %3324 = vmatmul.mubr.bf16.gmra.mrb[0].mxu0 %v3019
        %v3325 = vpop.f32.mrb[0].mxu0
        %v3326 = vadd.f32 0.0, %v3325
        %v3327 = vpop.f32.mrb[0].mxu0
        %v3328 = vpop.f32.mrb[0].mxu0
        %v3329 = vadd.f32 0.0, %v3328
        %v3330 = vpop.f32.mrb[0].mxu0
        %3331 = vmatprep.mubr.bf16.mxu0 %v3024
        %3332 = vmatmul.mubr.bf16.gmra.mrb[0].mxu0 %v3023
        %v3333 = vpop.f32.mrb[0].mxu0
        %v3334 = vadd.f32 0.0, %v3333
        %v3335 = vpop.f32.mrb[0].mxu0
        %v3336 = vpop.f32.mrb[0].mxu0
        %v3337 = vadd.f32 0.0, %v3336
        %v3338 = vpop.f32.mrb[0].mxu0
        %3339 = vmatprep.mubr.bf16.mxu0 %v3028
        %3340 = vmatmul.mubr.bf16.gmra.mrb[0].mxu0 %v3027
        %v3341 = vpop.f32.mrb[0].mxu0
        %v3342 = vadd.f32 0.0, %v3341
        %v3343 = vpop.f32.mrb[0].mxu0
        %v3344 = vpop.f32.mrb[0].mxu0
        %v3345 = vadd.f32 0.0, %v3344
        %v3346 = vpop.f32.mrb[0].mxu0
        %3347 = vmatprep.mubr.bf16.mxu0 %v3032
        %3348 = vmatmul.mubr.bf16.gmra.mrb[0].mxu0 %v3031
        %v3349 = vpop.f32.mrb[0].mxu0
        %v3350 = vadd.f32 0.0, %v3349
        %v3351 = vpop.f32.mrb[0].mxu0
        %v3352 = vpop.f32.mrb[0].mxu0
        %v3353 = vadd.f32 0.0, %v3352
        %v3354 = vpop.f32.mrb[0].mxu0
        %3355 = vdwg.mxu0
        %3356 = vmatprep.subr.bf16.mxu0 0
        %3357 = vmatpush1.bf16.msra.mxu0 %v3243
        %3358 = vmatprep.subr.bf16.mxu0 0
        %3359 = vmatpush1.bf16.msra.mxu0 %v3244
        %3360 = vmatprep.subr.bf16.mxu0 0
        %3361 = vmatpush1.bf16.msra.mxu0 %v3245
        %3362 = vmatprep.subr.bf16.mxu0 0
        %3363 = vmatpush1.bf16.msra.mxu0 %v3246
        %3364 = vmatprep.subr.bf16.mxu0 0
        %3365 = vmatpush1.bf16.msra.mxu0 %v3247
        %3366 = vmatprep.subr.bf16.mxu0 0
        %3367 = vmatpush1.bf16.msra.mxu0 %v3248
        %3368 = vmatprep.subr.bf16.mxu0 0
        %3369 = vmatpush1.bf16.msra.mxu0 %v3249
        %3370 = vmatprep.subr.bf16.mxu0 0
        %3371 = vmatpush1.bf16.msra.mxu0 %v3250
        %3372 = vmatprep.subr.bf16.mxu0 0
        %3373 = vmatpush1.bf16.msra.mxu0 %v3251
        %3374 = vmatprep.subr.bf16.mxu0 0
        %3375 = vmatpush1.bf16.msra.mxu0 %v3252
        %3376 = vmatprep.subr.bf16.mxu0 0
        %3377 = vmatpush1.bf16.msra.mxu0 %v3253
        %3378 = vmatprep.subr.bf16.mxu0 0
        %3379 = vmatpush1.bf16.msra.mxu0 %v3254
        %3380 = vmatprep.subr.bf16.mxu0 0
        %3381 = vmatpush1.bf16.msra.mxu0 %v3255
        %3382 = vmatprep.subr.bf16.mxu0 0
        %3383 = vmatpush1.bf16.msra.mxu0 %v3256
        %3384 = vmatprep.subr.bf16.mxu0 0
        %3385 = vmatpush1.bf16.msra.mxu0 %v3257
        %3386 = vmatprep.subr.bf16.mxu0 0
        %3387 = vmatpush1.bf16.msra.mxu0 %v3258
        %3388 = vmatprep.mubr.bf16.mxu0 %v3022
        %3389 = vmatmul.mubr.bf16.gmra.mrb[0].mxu0 %v3021
        %v3390 = vpop.f32.mrb[0].mxu0
        %v3391 = vadd.f32 %v3326, %v3390
        %v3392 = vpop.f32.mrb[0].mxu0
        %v3393 = vpop.f32.mrb[0].mxu0
        %v3394 = vadd.f32 %v3329, %v3393
        %v3395 = vpop.f32.mrb[0].mxu0
        %3396 = vmatprep.mubr.bf16.mxu0 %v3026
        %3397 = vmatmul.mubr.bf16.gmra.mrb[0].mxu0 %v3025
        %v3398 = vpop.f32.mrb[0].mxu0
        %v3399 = vadd.f32 %v3334, %v3398
        %v3400 = vpop.f32.mrb[0].mxu0
        %v3401 = vpop.f32.mrb[0].mxu0
        %v3402 = vadd.f32 %v3337, %v3401
        %v3403 = vpop.f32.mrb[0].mxu0
        %3404 = vmatprep.mubr.bf16.mxu0 %v3030
        %3405 = vmatmul.mubr.bf16.gmra.mrb[0].mxu0 %v3029
        %v3406 = vpop.f32.mrb[0].mxu0
        %v3407 = vadd.f32 %v3342, %v3406
        %v3408 = vpop.f32.mrb[0].mxu0
        %v3409 = vpop.f32.mrb[0].mxu0
        %v3410 = vadd.f32 %v3345, %v3409
        %v3411 = vpop.f32.mrb[0].mxu0
        %3412 = vmatprep.mubr.bf16.mxu0 %v3034
        %3413 = vmatmul.mubr.bf16.gmra.mrb[0].mxu0 %v3033
        %v3414 = vpop.f32.mrb[0].mxu0
        %v3415 = vadd.f32 %v3350, %v3414
        %v3416 = vpop.f32.mrb[0].mxu0
        %v3417 = vpop.f32.mrb[0].mxu0
        %v3418 = vadd.f32 %v3353, %v3417
        %v3419 = vpop.f32.mrb[0].mxu0
        %3420 = vdwg.mxu0
        %v3421 = vadd.f32 %v1709, %v3391
        %v3422 = vadd.f32 %v1710, %v3394
        %v3423 = vadd.f32 %v1711, %v3399
        %v3424 = vadd.f32 %v1712, %v3402
        %v3425 = vadd.f32 %v1713, %v3407
        %v3426 = vadd.f32 %v1714, %v3410
        %v3427 = vadd.f32 %v1715, %v3415
        %v3428 = vadd.f32 %v1716, %v3418
        %3429 = vst [vmem:[%s579] sm:$0xff] %v3421
        %3430 = vst [vmem:[%s579 + $0x8] sm:$0xff] %v3422
        %3431 = vst [vmem:[%s579 + $0x10] sm:$0xff] %v3423
        %3432 = vst [vmem:[%s579 + $0x18] sm:$0xff] %v3424
        %3433 = vst [vmem:[%s579 + $0x20] sm:$0xff] %v3425
        %3434 = vst [vmem:[%s579 + $0x28] sm:$0xff] %v3426
        %3435 = vst [vmem:[%s579 + $0x30] sm:$0xff] %v3427
        %3436 = vst [vmem:[%s579 + $0x38] sm:$0xff] %v3428
        %s3437 = smul.u32 8, %s27
        %p3438 = scmp.lt.s32.totalorder %s26, 1
        %s3439 = scalar_select %p3438, %s26, 1
        %p3440 = scmp.lt.s32.totalorder %s3437, 15
        %s3441 = scalar_select %p3440, %s3437, 15
        %s3442 = smul.addr %s3439, 16
        %s3443 = sadd.s32 %s3441, %s3442
        %s3444 = smul.addr %s3443, 8
        %s3445 = scalar_lea.vmem %s10, %s3444
        // Predicated region
        $region106: #{_lambda_.5} parent=96 // pred_check
          %p3446 = pneg %p288
        $region107: #{_lambda_.5} parent=96 // pred_check_branch
          %3448 = sbr.rel (%p3446) target = $region109
        $region108: #{_lambda_.5} parent=96 // pred_region
          %s3449 = smul.u32 8, %s27
        $region109: #{_lambda_.5} parent=96 // pred_fallthru
          _
      $region97: #{_lambda_.5} parent=5 // pred_fallthru
        _
      %p3450 = scmp.le.s32.totalorder 2, %s17
      // Predicated region
      $region110: #{_lambda_.5} parent=5 // pred_check
        %p3451 = pneg %p3450
      $region111: #{_lambda_.5} parent=5 // pred_check_branch
        %3453 = sbr.rel (%p3451) target = $region113
      $region112: #{_lambda_.5} parent=5 // pred_region
        %s3454 = ssub.s32 %s17, 2
        // Predicated region
        $region114: #{_lambda_.5} parent=112 // pred_check
          %p3455 = pneg %p294
        $region115: #{_lambda_.5} parent=112 // pred_check_branch
          %3457 = sbr.rel (%p3455) target = $region117
        $region116: #{_lambda_.5} parent=112 // pred_region
          %s3458 = smul.u32 8, %s29
          %p3459 = scmp.lt.s32.totalorder %s28, 1
          %s3460 = scalar_select %p3459, %s28, 1
          %p3461 = scmp.lt.s32.totalorder %s3458, 15
          %s3462 = scalar_select %p3461, %s3458, 15
          %s3463 = smul.addr %s3460, 16
          %s3464 = sadd.s32 %s3462, %s3463
          %s3465 = smul.addr %s3464, 8
          %s3466 = scalar_lea.vmem %s10, %s3465
        $region117: #{_lambda_.5} parent=112 // pred_fallthru
          _
      $region113: #{_lambda_.5} parent=5 // pred_fallthru
        _
    $region6: #{_lambda_.5} parent=1 // loop_footer
      %s21 = sadd.s32 1, %s17
    $region7: #{_lambda_.5} parent=1 // loop_footer_branch
      %16 = sbr.rel target = $region3
    $region8: #{_lambda_.5} parent=1 // loop_exit
      _
    %3467 = vsyncpa [#allocation4], 1
    %s3468 = scalar_lea.sflag [#allocation4], 1
    %3469 = vsyncpa %s3468, 1

// kernel: _lambda_.7
$region0: #{_lambda_.7}
  #allocation0 [shape = 'u32[]', space=smem, size = 0x4, offset = 0x4, fixed_abs, tag = 'smem constant byte address 0x4 - core index']
  #allocation1 [shape = 'u32[144,128]{1,0:T(1,128)}', space=vmem, size = 0x12000, scoped, tag = 'internal scratch']
  %s0 = inlined_call_operand.hbm [shape: f32[2,128,128], index: 0, kind: input, shape index: {}, may-alias: {0,11}]
  %s1 = inlined_call_operand.vmem [shape: bf16[2,2,128,64], index: 1, kind: input, shape index: {}]
  %s2 = inlined_call_operand.vmem [shape: bf16[2,2,128,64], index: 2, kind: input, shape index: {}]
  %s3 = inlined_call_operand.vmem [shape: bf16[2,2,128,64], index: 3, kind: input, shape index: {}]
  %s4 = inlined_call_operand.vmem [shape: f32[1,128], index: 4, kind: input, shape index: {}]
  %s5 = inlined_call_operand.vmem [shape: bf16[2,64,128], index: 5, kind: input, shape index: {}]
  %s6 = inlined_call_operand.vmem [shape: f32[1,128], index: 6, kind: input, shape index: {}]
  %s7 = inlined_call_operand.vmem [shape: bf16[128,1024], index: 7, kind: input, shape index: {}]
  %s8 = inlined_call_operand.vmem [shape: f32[1,512], index: 8, kind: input, shape index: {}]
  %s9 = inlined_call_operand.vmem [shape: bf16[512,128], index: 9, kind: input, shape index: {}]
  %s10 = inlined_call_operand.vmem [shape: f32[1,128], index: 10, kind: input, shape index: {}]
  %s11 = inlined_call_operand.hbm [shape: f32[2,128,128], index: 11, kind: output, shape index: {}, may-alias: {0,11}]
  %s12 = sld [smem:[#allocation0]]
  $region122: #{_lambda_.7} parent=0
    _
  %s14 = ssub.s32 1, %s12
  %s15 = scalar_select 0, %s14, %s12
  $region1: #{_lambda_.7} parent=0
    #allocation2 [shape = 'u8[65536]{0}', space=vmem, size = 0x10000, scoped, tag = 'input window, operand 0']
    #allocation3 [shape = 's32[2]{0}', space=sflag, size = 0x8, scoped, tag = 'scoped memory for _lambda_.7']
    #allocation4 [shape = 's32[2]{0}', space=sflag, size = 0x8, scoped, tag = 'scoped memory for _lambda_.7']
    #allocation5 [shape = 'u8[65536]{0}', space=vmem, size = 0x10000, scoped, tag = 'input window, operand 1']
    #allocation6 [shape = 'u8[65536]{0}', space=vmem, size = 0x10000, scoped, tag = 'output window, operand 0']
    %16 = vsyncpa [#allocation3], 0
    %s17 = scalar_lea.sflag [#allocation3], 1
    %18 = vsyncpa %s17, 0
    %19 = vsyncpa [#allocation4], 0
    %s20 = scalar_lea.sflag [#allocation4], 1
    %21 = vsyncpa %s20, 0
    loop: start=0, step=1, limit=6
    $region2: #{_lambda_.7} parent=1 // loop_pre_header
      _
    $region3: #{_lambda_.7} parent=1 // loop_header
      %s23 = sphi 0, %s27
      %p24 = scmp.ge.s32.totalorder %s23, 6
      %s30 = sphi 0, %s42
      %s31 = sphi 0, %s38
      %s32 = sphi 0, %s30
      %s33 = sphi 0, %s31
      %s34 = sphi 0, %s32
      %s35 = sphi 0, %s33
      %s47 = sphi 0, %s49
      %s50 = sphi 0, %s47
      %s51 = sphi 0, %s50
      %s67 = sphi 0, %s51
      %s75 = sphi 0, %s77
      %s78 = sphi 0, %s75
      %s79 = sphi 0, %s78
      %s95 = sphi 0, %s79
      %s101 = sphi 0, %s103
      %s104 = sphi 0, %s101
      %s105 = sphi 0, %s104
      %s121 = sphi 0, %s105
      %s127 = sphi 0, %s129
      %s130 = sphi 0, %s127
      %s131 = sphi 0, %s130
      %s147 = sphi 0, %s131
      %s151 = sphi 0, %s151
      %s153 = sphi 0, %s151
      %s154 = sphi 0, %s153
      %s168 = sphi 0, %s154
      %s172 = sphi 0, %s172
      %s174 = sphi 0, %s172
      %s175 = sphi 0, %s174
      %s189 = sphi 0, %s175
      %s193 = sphi 0, %s193
      %s195 = sphi 0, %s193
      %s196 = sphi 0, %s195
      %s210 = sphi 0, %s196
      %s214 = sphi 0, %s214
      %s216 = sphi 0, %s214
      %s217 = sphi 0, %s216
      %s231 = sphi 0, %s217
      %s235 = sphi 0, %s235
      %s237 = sphi 0, %s235
      %s238 = sphi 0, %s237
      %s252 = sphi 0, %s238
      %s256 = sphi 0, %s256
      %s258 = sphi 0, %s256
      %s259 = sphi 0, %s258
      %s273 = sphi 0, %s259
      %s277 = sphi 0, %s277
      %s279 = sphi 0, %s277
      %s280 = sphi 0, %s279
      %s294 = sphi 0, %s280
      %s302 = sphi 0, %s304
      %s305 = sphi 0, %s302
      %s306 = sphi 0, %s305
      %s322 = sphi 0, %s306
    $region4: #{_lambda_.7} parent=1 // loop_header_branch
      %26 = sbr.rel (%p24) target = $region8
    $region5: #{_lambda_.7} parent=1 // loop_body
      %s28 = ssub.s32 %s23, 1
      %s29 = ssub.s32 %s23, 2
      %s36 = sadd.s32 1, %s31
      %p37 = scmp.ge.s32.totalorder %s36, 2
      %s38 = scalar_select %p37, 0, %s36
      %s39 = sadd.s32 1, %s30
      %s40 = scalar_select %p37, %s39, %s30
      %p41 = scmp.ge.s32.totalorder %s40, 2
      %s42 = scalar_select %p41, 0, %s40
      %s43 = ssub.s32 %s30, %s42
      %s44 = ssub.s32 %s31, %s38
      %s45 = sor.u32 %s43, %s44
      %p46 = scmp.eq.s32.totalorder %s45, 0
      %s48 = sadd.s32 %s47, 1
      %s49 = scalar_select %p46, %s47, %s48
      %p52 = pneg %p46
      %p53 = scmp.eq.s32.totalorder %s23, 3
      %p54 = por %p52, %p53
      %p55 = scmp.ne.s32.totalorder %s47, %s50
      %p56 = scmp.eq.s32.totalorder %s23, 0
      %p57 = por %p55, %p56
      %p58 = scmp.ne.s32.totalorder %s47, %s50
      %p59 = scmp.eq.s32.totalorder %s28, 3
      %p60 = por %p58, %p59
      %p61 = scmp.ne.s32.totalorder %s50, %s51
      %p62 = scmp.eq.s32.totalorder %s28, 0
      %p63 = por %p61, %p62
      %p64 = scmp.ne.s32.totalorder %s50, %s51
      %p65 = scmp.eq.s32.totalorder %s29, 3
      %p66 = por %p64, %p65
      %p68 = scmp.ne.s32.totalorder %s51, %s67
      %p69 = scmp.eq.s32.totalorder %s29, 0
      %p70 = por %p68, %p69
      %s71 = ssub.s32 %s30, %s42
      %s72 = ssub.s32 %s31, %s38
      %s73 = sor.u32 %s71, %s72
      %p74 = scmp.eq.s32.totalorder %s73, 0
      %s76 = sadd.s32 %s75, 1
      %s77 = scalar_select %p74, %s75, %s76
      %p80 = pneg %p74
      %p81 = scmp.eq.s32.totalorder %s23, 3
      %p82 = por %p80, %p81
      %p83 = scmp.ne.s32.totalorder %s75, %s78
      %p84 = scmp.eq.s32.totalorder %s23, 0
      %p85 = por %p83, %p84
      %p86 = scmp.ne.s32.totalorder %s75, %s78
      %p87 = scmp.eq.s32.totalorder %s28, 3
      %p88 = por %p86, %p87
      %p89 = scmp.ne.s32.totalorder %s78, %s79
      %p90 = scmp.eq.s32.totalorder %s28, 0
      %p91 = por %p89, %p90
      %p92 = scmp.ne.s32.totalorder %s78, %s79
      %p93 = scmp.eq.s32.totalorder %s29, 3
      %p94 = por %p92, %p93
      %p96 = scmp.ne.s32.totalorder %s79, %s95
      %p97 = scmp.eq.s32.totalorder %s29, 0
      %p98 = por %p96, %p97
      %s99 = ssub.s32 %s30, %s42
      %p100 = scmp.eq.s32.totalorder %s99, 0
      %s102 = sadd.s32 %s101, 1
      %s103 = scalar_select %p100, %s101, %s102
      %p106 = pneg %p100
      %p107 = scmp.eq.s32.totalorder %s23, 3
      %p108 = por %p106, %p107
      %p109 = scmp.ne.s32.totalorder %s101, %s104
      %p110 = scmp.eq.s32.totalorder %s23, 0
      %p111 = por %p109, %p110
      %p112 = scmp.ne.s32.totalorder %s101, %s104
      %p113 = scmp.eq.s32.totalorder %s28, 3
      %p114 = por %p112, %p113
      %p115 = scmp.ne.s32.totalorder %s104, %s105
      %p116 = scmp.eq.s32.totalorder %s28, 0
      %p117 = por %p115, %p116
      %p118 = scmp.ne.s32.totalorder %s104, %s105
      %p119 = scmp.eq.s32.totalorder %s29, 3
      %p120 = por %p118, %p119
      %p122 = scmp.ne.s32.totalorder %s105, %s121
      %p123 = scmp.eq.s32.totalorder %s29, 0
      %p124 = por %p122, %p123
      %s125 = ssub.s32 %s30, %s42
      %p126 = scmp.eq.s32.totalorder %s125, 0
      %s128 = sadd.s32 %s127, 1
      %s129 = scalar_select %p126, %s127, %s128
      %p132 = pneg %p126
      %p133 = scmp.eq.s32.totalorder %s23, 3
      %p134 = por %p132, %p133
      %p135 = scmp.ne.s32.totalorder %s127, %s130
      %p136 = scmp.eq.s32.totalorder %s23, 0
      %p137 = por %p135, %p136
      %p138 = scmp.ne.s32.totalorder %s127, %s130
      %p139 = scmp.eq.s32.totalorder %s28, 3
      %p140 = por %p138, %p139
      %p141 = scmp.ne.s32.totalorder %s130, %s131
      %p142 = scmp.eq.s32.totalorder %s28, 0
      %p143 = por %p141, %p142
      %p144 = scmp.ne.s32.totalorder %s130, %s131
      %p145 = scmp.eq.s32.totalorder %s29, 3
      %p146 = por %p144, %p145
      %p148 = scmp.ne.s32.totalorder %s131, %s147
      %p149 = scmp.eq.s32.totalorder %s29, 0
      %p150 = por %p148, %p149
      %s152 = sadd.s32 %s151, 1
      %p155 = scmp.eq.s32.totalorder %s23, 3
      %p156 = scmp.ne.s32.totalorder %s151, %s153
      %p157 = scmp.eq.s32.totalorder %s23, 0
      %p158 = por %p156, %p157
      %p159 = scmp.ne.s32.totalorder %s151, %s153
      %p160 = scmp.eq.s32.totalorder %s28, 3
      %p161 = por %p159, %p160
      %p162 = scmp.ne.s32.totalorder %s153, %s154
      %p163 = scmp.eq.s32.totalorder %s28, 0
      %p164 = por %p162, %p163
      %p165 = scmp.ne.s32.totalorder %s153, %s154
      %p166 = scmp.eq.s32.totalorder %s29, 3
      %p167 = por %p165, %p166
      %p169 = scmp.ne.s32.totalorder %s154, %s168
      %p170 = scmp.eq.s32.totalorder %s29, 0
      %p171 = por %p169, %p170
      %s173 = sadd.s32 %s172, 1
      %p176 = scmp.eq.s32.totalorder %s23, 3
      %p177 = scmp.ne.s32.totalorder %s172, %s174
      %p178 = scmp.eq.s32.totalorder %s23, 0
      %p179 = por %p177, %p178
      %p180 = scmp.ne.s32.totalorder %s172, %s174
      %p181 = scmp.eq.s32.totalorder %s28, 3
      %p182 = por %p180, %p181
      %p183 = scmp.ne.s32.totalorder %s174, %s175
      %p184 = scmp.eq.s32.totalorder %s28, 0
      %p185 = por %p183, %p184
      %p186 = scmp.ne.s32.totalorder %s174, %s175
      %p187 = scmp.eq.s32.totalorder %s29, 3
      %p188 = por %p186, %p187
      %p190 = scmp.ne.s32.totalorder %s175, %s189
      %p191 = scmp.eq.s32.totalorder %s29, 0
      %p192 = por %p190, %p191
      %s194 = sadd.s32 %s193, 1
      %p197 = scmp.eq.s32.totalorder %s23, 3
      %p198 = scmp.ne.s32.totalorder %s193, %s195
      %p199 = scmp.eq.s32.totalorder %s23, 0
      %p200 = por %p198, %p199
      %p201 = scmp.ne.s32.totalorder %s193, %s195
      %p202 = scmp.eq.s32.totalorder %s28, 3
      %p203 = por %p201, %p202
      %p204 = scmp.ne.s32.totalorder %s195, %s196
      %p205 = scmp.eq.s32.totalorder %s28, 0
      %p206 = por %p204, %p205
      %p207 = scmp.ne.s32.totalorder %s195, %s196
      %p208 = scmp.eq.s32.totalorder %s29, 3
      %p209 = por %p207, %p208
      %p211 = scmp.ne.s32.totalorder %s196, %s210
      %p212 = scmp.eq.s32.totalorder %s29, 0
      %p213 = por %p211, %p212
      %s215 = sadd.s32 %s214, 1
      %p218 = scmp.eq.s32.totalorder %s23, 3
      %p219 = scmp.ne.s32.totalorder %s214, %s216
      %p220 = scmp.eq.s32.totalorder %s23, 0
      %p221 = por %p219, %p220
      %p222 = scmp.ne.s32.totalorder %s214, %s216
      %p223 = scmp.eq.s32.totalorder %s28, 3
      %p224 = por %p222, %p223
      %p225 = scmp.ne.s32.totalorder %s216, %s217
      %p226 = scmp.eq.s32.totalorder %s28, 0
      %p227 = por %p225, %p226
      %p228 = scmp.ne.s32.totalorder %s216, %s217
      %p229 = scmp.eq.s32.totalorder %s29, 3
      %p230 = por %p228, %p229
      %p232 = scmp.ne.s32.totalorder %s217, %s231
      %p233 = scmp.eq.s32.totalorder %s29, 0
      %p234 = por %p232, %p233
      %s236 = sadd.s32 %s235, 1
      %p239 = scmp.eq.s32.totalorder %s23, 3
      %p240 = scmp.ne.s32.totalorder %s235, %s237
      %p241 = scmp.eq.s32.totalorder %s23, 0
      %p242 = por %p240, %p241
      %p243 = scmp.ne.s32.totalorder %s235, %s237
      %p244 = scmp.eq.s32.totalorder %s28, 3
      %p245 = por %p243, %p244
      %p246 = scmp.ne.s32.totalorder %s237, %s238
      %p247 = scmp.eq.s32.totalorder %s28, 0
      %p248 = por %p246, %p247
      %p249 = scmp.ne.s32.totalorder %s237, %s238
      %p250 = scmp.eq.s32.totalorder %s29, 3
      %p251 = por %p249, %p250
      %p253 = scmp.ne.s32.totalorder %s238, %s252
      %p254 = scmp.eq.s32.totalorder %s29, 0
      %p255 = por %p253, %p254
      %s257 = sadd.s32 %s256, 1
      %p260 = scmp.eq.s32.totalorder %s23, 3
      %p261 = scmp.ne.s32.totalorder %s256, %s258
      %p262 = scmp.eq.s32.totalorder %s23, 0
      %p263 = por %p261, %p262
      %p264 = scmp.ne.s32.totalorder %s256, %s258
      %p265 = scmp.eq.s32.totalorder %s28, 3
      %p266 = por %p264, %p265
      %p267 = scmp.ne.s32.totalorder %s258, %s259
      %p268 = scmp.eq.s32.totalorder %s28, 0
      %p269 = por %p267, %p268
      %p270 = scmp.ne.s32.totalorder %s258, %s259
      %p271 = scmp.eq.s32.totalorder %s29, 3
      %p272 = por %p270, %p271
      %p274 = scmp.ne.s32.totalorder %s259, %s273
      %p275 = scmp.eq.s32.totalorder %s29, 0
      %p276 = por %p274, %p275
      %s278 = sadd.s32 %s277, 1
      %p281 = scmp.eq.s32.totalorder %s23, 3
      %p282 = scmp.ne.s32.totalorder %s277, %s279
      %p283 = scmp.eq.s32.totalorder %s23, 0
      %p284 = por %p282, %p283
      %p285 = scmp.ne.s32.totalorder %s277, %s279
      %p286 = scmp.eq.s32.totalorder %s28, 3
      %p287 = por %p285, %p286
      %p288 = scmp.ne.s32.totalorder %s279, %s280
      %p289 = scmp.eq.s32.totalorder %s28, 0
      %p290 = por %p288, %p289
      %p291 = scmp.ne.s32.totalorder %s279, %s280
      %p292 = scmp.eq.s32.totalorder %s29, 3
      %p293 = por %p291, %p292
      %p295 = scmp.ne.s32.totalorder %s280, %s294
      %p296 = scmp.eq.s32.totalorder %s29, 0
      %p297 = por %p295, %p296
      %s298 = ssub.s32 %s30, %s42
      %s299 = ssub.s32 %s31, %s38
      %s300 = sor.u32 %s298, %s299
      %p301 = scmp.eq.s32.totalorder %s300, 0
      %s303 = sadd.s32 %s302, 1
      %s304 = scalar_select %p301, %s302, %s303
      %p307 = pneg %p301
      %p308 = scmp.eq.s32.totalorder %s23, 3
      %p309 = por %p307, %p308
      %p310 = scmp.ne.s32.totalorder %s302, %s305
      %p311 = scmp.eq.s32.totalorder %s23, 0
      %p312 = por %p310, %p311
      %p313 = scmp.ne.s32.totalorder %s302, %s305
      %p314 = scmp.eq.s32.totalorder %s28, 3
      %p315 = por %p313, %p314
      %p316 = scmp.ne.s32.totalorder %s305, %s306
      %p317 = scmp.eq.s32.totalorder %s28, 0
      %p318 = por %p316, %p317
      %p319 = scmp.ne.s32.totalorder %s305, %s306
      %p320 = scmp.eq.s32.totalorder %s29, 3
      %p321 = por %p319, %p320
      %p323 = scmp.ne.s32.totalorder %s306, %s322
      %p324 = scmp.eq.s32.totalorder %s29, 0
      %p325 = por %p323, %p324
      %p326 = scmp.le.s32.totalorder 1, %s23
      %p327 = scmp.lt.s32.totalorder %s23, 5
      %p328 = pnand %p326, %p327
      %p329 = pneg %p328
      // Predicated region
      $region9: #{_lambda_.7} parent=5 // pred_check
        _
      $region10: #{_lambda_.7} parent=5 // pred_check_branch
        %331 = sbr.rel (%p328) target = $region12
      $region11: #{_lambda_.7} parent=5 // pred_region
        %s332 = ssub.s32 %s23, 1
        // Predicated region
        $region13: #{_lambda_.7} parent=11 // pred_check
          %p333 = pneg %p164
        $region14: #{_lambda_.7} parent=11 // pred_check_branch
          %335 = sbr.rel (%p333) target = $region16
        $region15: #{_lambda_.7} parent=11 // pred_region
          _
        $region16: #{_lambda_.7} parent=11 // pred_fallthru
          _
        // Predicated region
        $region17: #{_lambda_.7} parent=11 // pred_check
          %p336 = pneg %p185
        $region18: #{_lambda_.7} parent=11 // pred_check_branch
          %338 = sbr.rel (%p336) target = $region20
        $region19: #{_lambda_.7} parent=11 // pred_region
          _
        $region20: #{_lambda_.7} parent=11 // pred_fallthru
          _
        // Predicated region
        $region21: #{_lambda_.7} parent=11 // pred_check
          %p339 = pneg %p206
        $region22: #{_lambda_.7} parent=11 // pred_check_branch
          %341 = sbr.rel (%p339) target = $region24
        $region23: #{_lambda_.7} parent=11 // pred_region
          _
        $region24: #{_lambda_.7} parent=11 // pred_fallthru
          _
        // Predicated region
        $region25: #{_lambda_.7} parent=11 // pred_check
          %p342 = pneg %p227
        $region26: #{_lambda_.7} parent=11 // pred_check_branch
          %344 = sbr.rel (%p342) target = $region28
        $region27: #{_lambda_.7} parent=11 // pred_region
          _
        $region28: #{_lambda_.7} parent=11 // pred_fallthru
          _
        // Predicated region
        $region29: #{_lambda_.7} parent=11 // pred_check
          %p345 = pneg %p248
        $region30: #{_lambda_.7} parent=11 // pred_check_branch
          %347 = sbr.rel (%p345) target = $region32
        $region31: #{_lambda_.7} parent=11 // pred_region
          _
        $region32: #{_lambda_.7} parent=11 // pred_fallthru
          _
        // Predicated region
        $region33: #{_lambda_.7} parent=11 // pred_check
          %p348 = pneg %p269
        $region34: #{_lambda_.7} parent=11 // pred_check_branch
          %350 = sbr.rel (%p348) target = $region36
        $region35: #{_lambda_.7} parent=11 // pred_region
          _
        $region36: #{_lambda_.7} parent=11 // pred_fallthru
          _
        // Predicated region
        $region37: #{_lambda_.7} parent=11 // pred_check
          %p351 = pneg %p290
        $region38: #{_lambda_.7} parent=11 // pred_check_branch
          %353 = sbr.rel (%p351) target = $region40
        $region39: #{_lambda_.7} parent=11 // pred_region
          _
        $region40: #{_lambda_.7} parent=11 // pred_fallthru
          _
      $region12: #{_lambda_.7} parent=5 // pred_fallthru
        _
      %p354 = scmp.lt.s32.totalorder %s23, 4
      // Predicated region
      $region41: #{_lambda_.7} parent=5 // pred_check
        %p355 = pneg %p354
      $region42: #{_lambda_.7} parent=5 // pred_check_branch
        %357 = sbr.rel (%p355) target = $region44
      $region43: #{_lambda_.7} parent=5 // pred_region
        // Predicated region
        $region45: #{_lambda_.7} parent=43 // pred_check
          %p358 = pneg %p57
        $region46: #{_lambda_.7} parent=43 // pred_check_branch
          %360 = sbr.rel (%p358) target = $region48
        $region47: #{_lambda_.7} parent=43 // pred_region
          %s361 = sand.u32 %s47, 1
          %s362 = scalar_lea.sflag [#allocation3], %s361
          %s363 = sand.u32 %s47, 1
          %s364 = smul.addr %s363, 64
          %s365 = scalar_lea.vmem [#allocation2], %s364
          %s366 = smul.u32 8, %s31
          %s368 = ssub.s32 1024, 1024
          %369 = vsyncadd %s362, %s368
          %s370 = smul.addr %s30, 16
          %s371 = sadd.s32 %s366, %s370
          %s372 = smul.addr %s371, 128
          %s373 = scalar_lea.hbm %s0, %s372
          %s374 = sshll.u32 %s365, 4
          %s375 = int_to_ptr.vmem [resolvable:$true] %s374
          %380 = dma.hbm_to_vmem [thread:$0]  %s373, 1024, %s375, %s362, 128, 128, 8
        $region48: #{_lambda_.7} parent=43 // pred_fallthru
          _
        // Predicated region
        $region49: #{_lambda_.7} parent=43 // pred_check
          %p381 = pneg %p85
        $region50: #{_lambda_.7} parent=43 // pred_check_branch
          %383 = sbr.rel (%p381) target = $region52
        $region51: #{_lambda_.7} parent=43 // pred_region
          %s384 = sand.u32 %s75, 1
          %s385 = sand.u32 %s75, 1
          %s386 = smul.addr %s385, 64
          %s387 = scalar_lea.vmem [#allocation5], %s386
          %s388 = smul.u32 8, %s31
          %s389 = smul.addr %s30, 32
          %s390 = sadd.s32 %s388, %s389
          %s391 = smul.addr %s390, 4
          %s392 = scalar_lea.vmem %s1, %s391
          // Predicated region
          $region53: #{_lambda_.7} parent=51 // pred_check
            _
          $region54: #{_lambda_.7} parent=51 // pred_check_branch
            %394 = sbr.rel (0) target = $region56
          $region55: #{_lambda_.7} parent=51 // pred_region
            // Predicated region
            $region57: #{_lambda_.7} parent=55 // pred_check
              _
            $region58: #{_lambda_.7} parent=55 // pred_check_branch
              %396 = sbr.rel target = $region60
            $region59: #{_lambda_.7} parent=55 // pred_region
              // Predicated region
              $region72: #{_lambda_.7} parent=59 // pred_check
                _
              $region73: #{_lambda_.7} parent=59 // pred_check_branch
                %441 = sbr.rel (0) target = $region75
              $region74: #{_lambda_.7} parent=59 // pred_region
                loop: start=0, step=1, limit=1
                $region76: #{_lambda_.7} parent=74 // loop_pre_header
                  _
                $region77: #{_lambda_.7} parent=74 // loop_header
                  %s443 = sphi 0, %s447
                  %p444 = scmp.ge.s32.totalorder %s443, 1
                  %s448 = sphi %s392, %s392
                  %s449 = sphi %s387, %s387
                $region78: #{_lambda_.7} parent=74 // loop_header_branch
                  %446 = sbr.rel (%p444) target = $region82
                $region79: #{_lambda_.7} parent=74 // loop_body
                  _
                $region80: #{_lambda_.7} parent=74 // loop_footer
                  %s447 = sadd.s32 1, %s443
                $region81: #{_lambda_.7} parent=74 // loop_footer_branch
                  %442 = sbr.rel target = $region77
                $region82: #{_lambda_.7} parent=74 // loop_exit
                  _
                loop: start=0, step=1, limit=1
                $region83: #{_lambda_.7} parent=74 // loop_pre_header
                  _
                $region84: #{_lambda_.7} parent=74 // loop_header
                  %s452 = sphi 0, %s456
                  %p453 = scmp.ge.s32.totalorder %s452, 1
                  %s457 = sphi %s392, %s392
                  %s458 = sphi %s387, %s387
                $region85: #{_lambda_.7} parent=74 // loop_header_branch
                  %455 = sbr.rel (%p453) target = $region89
                $region86: #{_lambda_.7} parent=74 // loop_body
                  %v459 = vld [vmem:[%s457] sm:$0xf]
                  %460 = vst [vmem:[%s458] sm:$0xf] %v459
                  %v461 = vld [vmem:[%s457 + $0x4] sm:$0xf]
                  %462 = vst [vmem:[%s458 + $0x4] sm:$0xf] %v461
                  %v463 = vld [vmem:[%s457 + $0x8] sm:$0xf]
                  %464 = vst [vmem:[%s458 + $0x8] sm:$0xf] %v463
                  %v465 = vld [vmem:[%s457 + $0xc] sm:$0xf]
                  %466 = vst [vmem:[%s458 + $0xc] sm:$0xf] %v465
                  %v467 = vld [vmem:[%s457 + $0x10] sm:$0xf]
                  %468 = vst [vmem:[%s458 + $0x10] sm:$0xf] %v467
                  %v469 = vld [vmem:[%s457 + $0x14] sm:$0xf]
                  %470 = vst [vmem:[%s458 + $0x14] sm:$0xf] %v469
                  %v471 = vld [vmem:[%s457 + $0x18] sm:$0xf]
                  %472 = vst [vmem:[%s458 + $0x18] sm:$0xf] %v471
                  %v473 = vld [vmem:[%s457 + $0x1c] sm:$0xf]
                  %474 = vst [vmem:[%s458 + $0x1c] sm:$0xf] %v473
                  %v475 = vld [vmem:[%s457 + $0x40] sm:$0xf]
                  %476 = vst [vmem:[%s458 + $0x20] sm:$0xf] %v475
                  %v477 = vld [vmem:[%s457 + $0x44] sm:$0xf]
                  %478 = vst [vmem:[%s458 + $0x24] sm:$0xf] %v477
                  %v479 = vld [vmem:[%s457 + $0x48] sm:$0xf]
                  %480 = vst [vmem:[%s458 + $0x28] sm:$0xf] %v479
                  %v481 = vld [vmem:[%s457 + $0x4c] sm:$0xf]
                  %482 = vst [vmem:[%s458 + $0x2c] sm:$0xf] %v481
                  %v483 = vld [vmem:[%s457 + $0x50] sm:$0xf]
                  %484 = vst [vmem:[%s458 + $0x30] sm:$0xf] %v483
                  %v485 = vld [vmem:[%s457 + $0x54] sm:$0xf]
                  %486 = vst [vmem:[%s458 + $0x34] sm:$0xf] %v485
                  %v487 = vld [vmem:[%s457 + $0x58] sm:$0xf]
                  %488 = vst [vmem:[%s458 + $0x38] sm:$0xf] %v487
                  %v489 = vld [vmem:[%s457 + $0x5c] sm:$0xf]
                  %490 = vst [vmem:[%s458 + $0x3c] sm:$0xf] %v489
                $region87: #{_lambda_.7} parent=74 // loop_footer
                  %s456 = sadd.s32 1, %s452
                $region88: #{_lambda_.7} parent=74 // loop_footer_branch
                  %451 = sbr.rel target = $region84
                $region89: #{_lambda_.7} parent=74 // loop_exit
                  _
              $region75: #{_lambda_.7} parent=59 // pred_fallthru
                _
            $region60: #{_lambda_.7} parent=55 // pred_fallthru
              _
            // Predicated region
            $region61: #{_lambda_.7} parent=55 // pred_check
              _
            $region62: #{_lambda_.7} parent=55 // pred_check_branch
              %398 = sbr.rel (0) target = $region64
            $region63: #{_lambda_.7} parent=55 // pred_region
              loop: start=0, step=1, limit=1
              $region65: #{_lambda_.7} parent=63 // loop_pre_header
                _
              $region66: #{_lambda_.7} parent=63 // loop_header
                %s401 = sphi 0, %s405
                %p402 = scmp.ge.s32.totalorder %s401, 1
                %s406 = sphi %s392, %s392
                %s407 = sphi %s387, %s387
              $region67: #{_lambda_.7} parent=63 // loop_header_branch
                %404 = sbr.rel (%p402) target = $region71
              $region68: #{_lambda_.7} parent=63 // loop_body
                %v408 = vld [vmem:[%s406] sm:$0xf]
                %409 = vst [vmem:[%s407] sm:$0xf] %v408
                %v410 = vld [vmem:[%s406 + $0x4] sm:$0xf]
                %411 = vst [vmem:[%s407 + $0x4] sm:$0xf] %v410
                %v412 = vld [vmem:[%s406 + $0x8] sm:$0xf]
                %413 = vst [vmem:[%s407 + $0x8] sm:$0xf] %v412
                %v414 = vld [vmem:[%s406 + $0xc] sm:$0xf]
                %415 = vst [vmem:[%s407 + $0xc] sm:$0xf] %v414
                %v416 = vld [vmem:[%s406 + $0x10] sm:$0xf]
                %417 = vst [vmem:[%s407 + $0x10] sm:$0xf] %v416
                %v418 = vld [vmem:[%s406 + $0x14] sm:$0xf]
                %419 = vst [vmem:[%s407 + $0x14] sm:$0xf] %v418
                %v420 = vld [vmem:[%s406 + $0x18] sm:$0xf]
                %421 = vst [vmem:[%s407 + $0x18] sm:$0xf] %v420
                %v422 = vld [vmem:[%s406 + $0x1c] sm:$0xf]
                %423 = vst [vmem:[%s407 + $0x1c] sm:$0xf] %v422
                %v424 = vld [vmem:[%s406 + $0x40] sm:$0xf]
                %425 = vst [vmem:[%s407 + $0x20] sm:$0xf] %v424
                %v426 = vld [vmem:[%s406 + $0x44] sm:$0xf]
                %427 = vst [vmem:[%s407 + $0x24] sm:$0xf] %v426
                %v428 = vld [vmem:[%s406 + $0x48] sm:$0xf]
                %429 = vst [vmem:[%s407 + $0x28] sm:$0xf] %v428
                %v430 = vld [vmem:[%s406 + $0x4c] sm:$0xf]
                %431 = vst [vmem:[%s407 + $0x2c] sm:$0xf] %v430
                %v432 = vld [vmem:[%s406 + $0x50] sm:$0xf]
                %433 = vst [vmem:[%s407 + $0x30] sm:$0xf] %v432
                %v434 = vld [vmem:[%s406 + $0x54] sm:$0xf]
                %435 = vst [vmem:[%s407 + $0x34] sm:$0xf] %v434
                %v436 = vld [vmem:[%s406 + $0x58] sm:$0xf]
                %437 = vst [vmem:[%s407 + $0x38] sm:$0xf] %v436
                %v438 = vld [vmem:[%s406 + $0x5c] sm:$0xf]
                %439 = vst [vmem:[%s407 + $0x3c] sm:$0xf] %v438
              $region69: #{_lambda_.7} parent=63 // loop_footer
                %s405 = sadd.s32 1, %s401
              $region70: #{_lambda_.7} parent=63 // loop_footer_branch
                %400 = sbr.rel target = $region66
              $region71: #{_lambda_.7} parent=63 // loop_exit
                _
            $region64: #{_lambda_.7} parent=55 // pred_fallthru
              _
          $region56: #{_lambda_.7} parent=51 // pred_fallthru
            _
          %491 = vnop
        $region52: #{_lambda_.7} parent=43 // pred_fallthru
          _
        // Predicated region
        $region90: #{_lambda_.7} parent=43 // pred_check
          %p492 = pneg %p111
        $region91: #{_lambda_.7} parent=43 // pred_check_branch
          %494 = sbr.rel (%p492) target = $region93
        $region92: #{_lambda_.7} parent=43 // pred_region
          %p495 = scmp.lt.s32.totalorder %s30, 1
          %s496 = scalar_select %p495, %s30, 1
          %s497 = smul.addr %s496, 32
          %s498 = smul.addr %s497, 4
          %s499 = scalar_lea.vmem %s2, %s498
        $region93: #{_lambda_.7} parent=43 // pred_fallthru
          _
        // Predicated region
        $region94: #{_lambda_.7} parent=43 // pred_check
          %p500 = pneg %p137
        $region95: #{_lambda_.7} parent=43 // pred_check_branch
          %502 = sbr.rel (%p500) target = $region97
        $region96: #{_lambda_.7} parent=43 // pred_region
          %p503 = scmp.lt.s32.totalorder %s30, 1
          %s504 = scalar_select %p503, %s30, 1
          %s505 = smul.addr %s504, 32
          %s506 = smul.addr %s505, 4
          %s507 = scalar_lea.vmem %s3, %s506
        $region97: #{_lambda_.7} parent=43 // pred_fallthru
          _
      $region44: #{_lambda_.7} parent=5 // pred_fallthru
        _
      %p508 = scmp.le.s32.totalorder 1, %s23
      %p509 = scmp.lt.s32.totalorder %s23, 5
      %p510 = pnand %p508, %p509
      %p511 = pneg %p510
      // Predicated region
      $region98: #{_lambda_.7} parent=5 // pred_check
        _
      $region99: #{_lambda_.7} parent=5 // pred_check_branch
        %513 = sbr.rel (%p510) target = $region101
      $region100: #{_lambda_.7} parent=5 // pred_region
        %s514 = ssub.s32 %s23, 1
        %s515 = sand.u32 %s50, 1
        %s516 = scalar_lea.sflag [#allocation3], %s515
        %s517 = sand.u32 %s50, 1
        %s518 = smul.addr %s517, 64
        %s519 = scalar_lea.vmem [#allocation2], %s518
        // Predicated region
        $region102: #{_lambda_.7} parent=100 // pred_check
          %p520 = pneg %p63
        $region103: #{_lambda_.7} parent=100 // pred_check_branch
          %522 = sbr.rel (%p520) target = $region105
        $region104: #{_lambda_.7} parent=100 // pred_region
          %523 = dma.done %s516, 1024
        $region105: #{_lambda_.7} parent=100 // pred_fallthru
          _
        %s524 = sand.u32 %s78, 1
        %s525 = sand.u32 %s78, 1
        %s526 = smul.addr %s525, 64
        %s527 = scalar_lea.vmem [#allocation5], %s526
        // Predicated region
        $region106: #{_lambda_.7} parent=100 // pred_check
          %p528 = pneg %p91
        $region107: #{_lambda_.7} parent=100 // pred_check_branch
          %530 = sbr.rel (%p528) target = $region109
        $region108: #{_lambda_.7} parent=100 // pred_region
          _
        $region109: #{_lambda_.7} parent=100 // pred_fallthru
          _
        %s531 = sand.u32 %s50, 1
        %s532 = scalar_lea.sflag [#allocation3], %s531
        %s533 = sand.u32 %s50, 1
        %s534 = smul.addr %s533, 64
        %s535 = scalar_lea.vmem [#allocation2], %s534
        %p536 = pneg %p63
        %p537 = pneg %p60
        %s538 = sand.u32 %s78, 1
        %s539 = sand.u32 %s78, 1
        %s540 = smul.addr %s539, 64
        %s541 = scalar_lea.vmem [#allocation5], %s540
        %p542 = pneg %p91
        %p543 = pneg %p88
        %p544 = scmp.lt.s32.totalorder %s32, 1
        %s545 = scalar_select %p544, %s32, 1
        %s546 = smul.addr %s545, 32
        %s547 = smul.addr %s546, 4
        %s548 = scalar_lea.vmem %s2, %s547
        %p549 = pneg %p117
        %p550 = pneg %p114
        %p551 = scmp.lt.s32.totalorder %s32, 1
        %s552 = scalar_select %p551, %s32, 1
        %s553 = smul.addr %s552, 32
        %s554 = smul.addr %s553, 4
        %s555 = scalar_lea.vmem %s3, %s554
        %p556 = pneg %p143
        %p557 = pneg %p140
        %p558 = pneg %p164
        %p559 = pneg %p161
        %p560 = pneg %p185
        %p561 = pneg %p182
        %p562 = pneg %p206
        %p563 = pneg %p203
        %p564 = pneg %p227
        %p565 = pneg %p224
        %p566 = pneg %p248
        %p567 = pneg %p245
        %p568 = pneg %p269
        %p569 = pneg %p266
        %p570 = pneg %p290
        %p571 = pneg %p287
        %p572 = pneg %p318
        %p573 = pneg %p315
        %s574 = sand.u32 %s305, 1
        %s575 = scalar_lea.sflag [#allocation4], %s574
        %s576 = sand.u32 %s305, 1
        %s577 = smul.addr %s576, 64
        %s578 = scalar_lea.vmem [#allocation6], %s577
        %s579 = smul.u32 8, %s33
        %s580 = smul.u32 8, %s33
        %p581 = scmp.lt.s32.totalorder %s32, 1
        %s582 = scalar_select %p581, %s32, 1
        %s583 = smul.addr %s582, 32
        %s584 = smul.addr %s583, 4
        %s585 = scalar_lea.vmem %s2, %s584
        %p586 = scmp.lt.s32.totalorder %s32, 1
        %s587 = scalar_select %p586, %s32, 1
        %s588 = smul.addr %s587, 32
        %s589 = smul.addr %s588, 4
        %s590 = scalar_lea.vmem %s3, %s589
        %s591 = smul.u32 8, %s33
        %v593 = vld [vmem:[%s519] sm:$0xff]
        %v594 = vld [vmem:[%s519 + $0x8] sm:$0xff]
        %v595 = vld [vmem:[%s519 + $0x10] sm:$0xff]
        %v596 = vld [vmem:[%s519 + $0x18] sm:$0xff]
        %v597 = vld [vmem:[%s519 + $0x20] sm:$0xff]
        %v598 = vld [vmem:[%s519 + $0x28] sm:$0xff]
        %v599 = vld [vmem:[%s519 + $0x30] sm:$0xff]
        %v600 = vld [vmem:[%s519 + $0x38] sm:$0xff]
        %v601 = vld [vmem:[%s527] sm:$0xf]
        %v602 = vld [vmem:[%s527 + $0x4] sm:$0xf]
        %v603 = vld [vmem:[%s527 + $0x8] sm:$0xf]
        %v604 = vld [vmem:[%s527 + $0xc] sm:$0xf]
        %v605 = vld [vmem:[%s527 + $0x10] sm:$0xf]
        %v606 = vld [vmem:[%s527 + $0x14] sm:$0xf]
        %v607 = vld [vmem:[%s527 + $0x18] sm:$0xf]
        %v608 = vld [vmem:[%s527 + $0x1c] sm:$0xf]
        %v609 = vld [vmem:[%s527 + $0x20] sm:$0xf]
        %v610 = vld [vmem:[%s527 + $0x24] sm:$0xf]
        %v611 = vld [vmem:[%s527 + $0x28] sm:$0xf]
        %v612 = vld [vmem:[%s527 + $0x2c] sm:$0xf]
        %v613 = vld [vmem:[%s527 + $0x30] sm:$0xf]
        %v614 = vld [vmem:[%s527 + $0x34] sm:$0xf]
        %v615 = vld [vmem:[%s527 + $0x38] sm:$0xf]
        %v616 = vld [vmem:[%s527 + $0x3c] sm:$0xf]
        %v617 = vld [vmem:[%s585] sm:$0xf]
        %v618 = vld [vmem:[%s585 + $0x4] sm:$0xf]
        %v619 = vld [vmem:[%s585 + $0x8] sm:$0xf]
        %v620 = vld [vmem:[%s585 + $0xc] sm:$0xf]
        %v621 = vld [vmem:[%s585 + $0x10] sm:$0xf]
        %v622 = vld [vmem:[%s585 + $0x14] sm:$0xf]
        %v623 = vld [vmem:[%s585 + $0x18] sm:$0xf]
        %v624 = vld [vmem:[%s585 + $0x1c] sm:$0xf]
        %v625 = vld [vmem:[%s585 + $0x20] sm:$0xf]
        %v626 = vld [vmem:[%s585 + $0x24] sm:$0xf]
        %v627 = vld [vmem:[%s585 + $0x28] sm:$0xf]
        %v628 = vld [vmem:[%s585 + $0x2c] sm:$0xf]
        %v629 = vld [vmem:[%s585 + $0x30] sm:$0xf]
        %v630 = vld [vmem:[%s585 + $0x34] sm:$0xf]
        %v631 = vld [vmem:[%s585 + $0x38] sm:$0xf]
        %v632 = vld [vmem:[%s585 + $0x3c] sm:$0xf]
        %v633 = vld [vmem:[%s585 + $0x40] sm:$0xf]
        %v634 = vld [vmem:[%s585 + $0x44] sm:$0xf]
        %v635 = vld [vmem:[%s585 + $0x48] sm:$0xf]
        %v636 = vld [vmem:[%s585 + $0x4c] sm:$0xf]
        %v637 = vld [vmem:[%s585 + $0x50] sm:$0xf]
        %v638 = vld [vmem:[%s585 + $0x54] sm:$0xf]
        %v639 = vld [vmem:[%s585 + $0x58] sm:$0xf]
        %v640 = vld [vmem:[%s585 + $0x5c] sm:$0xf]
        %v641 = vld [vmem:[%s585 + $0x60] sm:$0xf]
        %v642 = vld [vmem:[%s585 + $0x64] sm:$0xf]
        %v643 = vld [vmem:[%s585 + $0x68] sm:$0xf]
        %v644 = vld [vmem:[%s585 + $0x6c] sm:$0xf]
        %v645 = vld [vmem:[%s585 + $0x70] sm:$0xf]
        %v646 = vld [vmem:[%s585 + $0x74] sm:$0xf]
        %v647 = vld [vmem:[%s585 + $0x78] sm:$0xf]
        %v648 = vld [vmem:[%s585 + $0x7c] sm:$0xf]
        %v649 = vld [vmem:[%s590] sm:$0xf]
        %v650 = vld [vmem:[%s590 + $0x4] sm:$0xf]
        %v651 = vld [vmem:[%s590 + $0x8] sm:$0xf]
        %v652 = vld [vmem:[%s590 + $0xc] sm:$0xf]
        %v653 = vld [vmem:[%s590 + $0x10] sm:$0xf]
        %v654 = vld [vmem:[%s590 + $0x14] sm:$0xf]
        %v655 = vld [vmem:[%s590 + $0x18] sm:$0xf]
        %v656 = vld [vmem:[%s590 + $0x1c] sm:$0xf]
        %v657 = vld [vmem:[%s590 + $0x20] sm:$0xf]
        %v658 = vld [vmem:[%s590 + $0x24] sm:$0xf]
        %v659 = vld [vmem:[%s590 + $0x28] sm:$0xf]
        %v660 = vld [vmem:[%s590 + $0x2c] sm:$0xf]
        %v661 = vld [vmem:[%s590 + $0x30] sm:$0xf]
        %v662 = vld [vmem:[%s590 + $0x34] sm:$0xf]
        %v663 = vld [vmem:[%s590 + $0x38] sm:$0xf]
        %v664 = vld [vmem:[%s590 + $0x3c] sm:$0xf]
        %v665 = vld [vmem:[%s590 + $0x40] sm:$0xf]
        %v666 = vld [vmem:[%s590 + $0x44] sm:$0xf]
        %v667 = vld [vmem:[%s590 + $0x48] sm:$0xf]
        %v668 = vld [vmem:[%s590 + $0x4c] sm:$0xf]
        %v669 = vld [vmem:[%s590 + $0x50] sm:$0xf]
        %v670 = vld [vmem:[%s590 + $0x54] sm:$0xf]
        %v671 = vld [vmem:[%s590 + $0x58] sm:$0xf]
        %v672 = vld [vmem:[%s590 + $0x5c] sm:$0xf]
        %v673 = vld [vmem:[%s590 + $0x60] sm:$0xf]
        %v674 = vld [vmem:[%s590 + $0x64] sm:$0xf]
        %v675 = vld [vmem:[%s590 + $0x68] sm:$0xf]
        %v676 = vld [vmem:[%s590 + $0x6c] sm:$0xf]
        %v677 = vld [vmem:[%s590 + $0x70] sm:$0xf]
        %v678 = vld [vmem:[%s590 + $0x74] sm:$0xf]
        %v679 = vld [vmem:[%s590 + $0x78] sm:$0xf]
        %v680 = vld [vmem:[%s590 + $0x7c] sm:$0xf]
        %v689 = vunpack.c.l.b16 %v601
        %v690 = vunpack.c.l.b16 %v602
        %v691 = vunpack.c.l.b16 %v603
        %v692 = vunpack.c.l.b16 %v604
        %v693 = vunpack.c.l.b16 %v605
        %v694 = vunpack.c.l.b16 %v606
        %v695 = vunpack.c.l.b16 %v607
        %v696 = vunpack.c.l.b16 %v608
        %v697 = vpack.c.b16 %v690, %v689
        %v698 = vpack.c.b16 %v692, %v691
        %v699 = vpack.c.b16 %v694, %v693
        %v700 = vpack.c.b16 %v696, %v695
        %v717 = vunpack.c.l.b16 %v617
        %v718 = vunpack.c.l.b16 %v618
        %v719 = vunpack.c.l.b16 %v619
        %v720 = vunpack.c.l.b16 %v620
        %v721 = vunpack.c.l.b16 %v621
        %v722 = vunpack.c.l.b16 %v622
        %v723 = vunpack.c.l.b16 %v623
        %v724 = vunpack.c.l.b16 %v624
        %v725 = vunpack.c.l.b16 %v625
        %v726 = vunpack.c.l.b16 %v626
        %v727 = vunpack.c.l.b16 %v627
        %v728 = vunpack.c.l.b16 %v628
        %v729 = vunpack.c.l.b16 %v629
        %v730 = vunpack.c.l.b16 %v630
        %v731 = vunpack.c.l.b16 %v631
        %v732 = vunpack.c.l.b16 %v632
        %v733 = vpack.c.b16 %v718, %v717
        %v734 = vpack.c.b16 %v720, %v719
        %v735 = vpack.c.b16 %v722, %v721
        %v736 = vpack.c.b16 %v724, %v723
        %v737 = vpack.c.b16 %v726, %v725
        %v738 = vpack.c.b16 %v728, %v727
        %v739 = vpack.c.b16 %v730, %v729
        %v740 = vpack.c.b16 %v732, %v731
        %vm741 = vcmask 523264
        %v743 = vsel %vm741, %v697, 0
        %v746 = vsel %vm741, %v698, 0
        %v749 = vsel %vm741, %v699, 0
        %v752 = vsel %vm741, %v700, 0
        %v755 = vsel %vm741, %v733, 0
        %v758 = vsel %vm741, %v734, 0
        %v761 = vsel %vm741, %v735, 0
        %v764 = vsel %vm741, %v736, 0
        %v767 = vsel %vm741, %v737, 0
        %v770 = vsel %vm741, %v738, 0
        %v773 = vsel %vm741, %v739, 0
        %v776 = vsel %vm741, %v740, 0
        %778 = vmatprep.subr.bf16.mxu0 0
        %779 = vmatpush1.bf16.xpose.msra.mxu0 %v755
        %780 = vmatprep.subr.bf16.mxu0 0
        %781 = vmatpush1.bf16.xpose.msra.mxu0 %v758
        %782 = vmatprep.subr.bf16.mxu0 0
        %783 = vmatpush1.bf16.xpose.msra.mxu0 %v761
        %784 = vmatprep.subr.bf16.mxu0 0
        %785 = vmatpush1.bf16.xpose.msra.mxu0 %v764
        %786 = vmatprep.subr.bf16.mxu0 0
        %787 = vmatpush1.bf16.xpose.msra.mxu0 %v767
        %788 = vmatprep.subr.bf16.mxu0 0
        %789 = vmatpush1.bf16.xpose.msra.mxu0 %v770
        %790 = vmatprep.subr.bf16.mxu0 0
        %791 = vmatpush1.bf16.xpose.msra.mxu0 %v773
        %792 = vmatprep.subr.bf16.mxu0 0
        %793 = vmatpush1.bf16.xpose.msra.mxu0 %v776
        %794 = vmatprep.subr.bf16.mxu0 0
        %795 = vmatpush1.bf16.xpose.msra.mxu0 0
        %796 = vmatprep.subr.bf16.mxu0 0
        %797 = vmatpush1.bf16.xpose.msra.mxu0 0
        %798 = vmatprep.subr.bf16.mxu0 0
        %799 = vmatpush1.bf16.xpose.msra.mxu0 0
        %800 = vmatprep.subr.bf16.mxu0 0
        %801 = vmatpush1.bf16.xpose.msra.mxu0 0
        %802 = vmatprep.subr.bf16.mxu0 0
        %803 = vmatpush1.bf16.xpose.msra.mxu0 0
        %804 = vmatprep.subr.bf16.mxu0 0
        %805 = vmatpush1.bf16.xpose.msra.mxu0 0
        %806 = vmatprep.subr.bf16.mxu0 0
        %807 = vmatpush1.bf16.xpose.msra.mxu0 0
        %808 = vmatprep.subr.bf16.mxu0 0
        %809 = vmatpush1.bf16.xpose.msra.mxu0 0
        %810 = vmatprep.mubr.bf16.mxu0 0
        %811 = vmatmul.mubr.bf16.gmra.mrb[0].mxu0 %v743
        %v812 = vpop.f32.mrb[0].mxu0
        %v813 = vadd.f32 0.0, %v812
        %v814 = vpop.f32.mrb[0].mxu0
        %v815 = vpop.f32.mrb[0].mxu0
        %v816 = vadd.f32 0.0, %v815
        %v817 = vpop.f32.mrb[0].mxu0
        %818 = vmatprep.mubr.bf16.mxu0 0
        %819 = vmatmul.mubr.bf16.gmra.mrb[0].mxu0 %v746
        %v820 = vpop.f32.mrb[0].mxu0
        %v821 = vadd.f32 0.0, %v820
        %v822 = vpop.f32.mrb[0].mxu0
        %v823 = vpop.f32.mrb[0].mxu0
        %v824 = vadd.f32 0.0, %v823
        %v825 = vpop.f32.mrb[0].mxu0
        %826 = vmatprep.mubr.bf16.mxu0 0
        %827 = vmatmul.mubr.bf16.gmra.mrb[0].mxu0 %v749
        %v828 = vpop.f32.mrb[0].mxu0
        %v829 = vadd.f32 0.0, %v828
        %v830 = vpop.f32.mrb[0].mxu0
        %v831 = vpop.f32.mrb[0].mxu0
        %v832 = vadd.f32 0.0, %v831
        %v833 = vpop.f32.mrb[0].mxu0
        %834 = vmatprep.mubr.bf16.mxu0 0
        %835 = vmatmul.mubr.bf16.gmra.mrb[0].mxu0 %v752
        %v836 = vpop.f32.mrb[0].mxu0
        %v837 = vadd.f32 0.0, %v836
        %v838 = vpop.f32.mrb[0].mxu0
        %v839 = vpop.f32.mrb[0].mxu0
        %v840 = vadd.f32 0.0, %v839
        %v841 = vpop.f32.mrb[0].mxu0
        %842 = vdwg.mxu0
        %v851 = vunpack.c.l.b16 %v609
        %v852 = vunpack.c.l.b16 %v610
        %v853 = vunpack.c.l.b16 %v611
        %v854 = vunpack.c.l.b16 %v612
        %v855 = vunpack.c.l.b16 %v613
        %v856 = vunpack.c.l.b16 %v614
        %v857 = vunpack.c.l.b16 %v615
        %v858 = vunpack.c.l.b16 %v616
        %v859 = vpack.c.b16 %v852, %v851
        %v860 = vpack.c.b16 %v854, %v853
        %v861 = vpack.c.b16 %v856, %v855
        %v862 = vpack.c.b16 %v858, %v857
        %v879 = vunpack.c.l.b16 %v633
        %v880 = vunpack.c.l.b16 %v634
        %v881 = vunpack.c.l.b16 %v635
        %v882 = vunpack.c.l.b16 %v636
        %v883 = vunpack.c.l.b16 %v637
        %v884 = vunpack.c.l.b16 %v638
        %v885 = vunpack.c.l.b16 %v639
        %v886 = vunpack.c.l.b16 %v640
        %v887 = vunpack.c.l.b16 %v641
        %v888 = vunpack.c.l.b16 %v642
        %v889 = vunpack.c.l.b16 %v643
        %v890 = vunpack.c.l.b16 %v644
        %v891 = vunpack.c.l.b16 %v645
        %v892 = vunpack.c.l.b16 %v646
        %v893 = vunpack.c.l.b16 %v647
        %v894 = vunpack.c.l.b16 %v648
        %v895 = vpack.c.b16 %v880, %v879
        %v896 = vpack.c.b16 %v882, %v881
        %v897 = vpack.c.b16 %v884, %v883
        %v898 = vpack.c.b16 %v886, %v885
        %v899 = vpack.c.b16 %v888, %v887
        %v900 = vpack.c.b16 %v890, %v889
        %v901 = vpack.c.b16 %v892, %v891
        %v902 = vpack.c.b16 %v894, %v893
        %v904 = vsel %vm741, %v859, 0
        %v907 = vsel %vm741, %v860, 0
        %v910 = vsel %vm741, %v861, 0
        %v913 = vsel %vm741, %v862, 0
        %v916 = vsel %vm741, %v895, 0
        %v919 = vsel %vm741, %v896, 0
        %v922 = vsel %vm741, %v897, 0
        %v925 = vsel %vm741, %v898, 0
        %v928 = vsel %vm741, %v899, 0
        %v931 = vsel %vm741, %v900, 0
        %v934 = vsel %vm741, %v901, 0
        %v937 = vsel %vm741, %v902, 0
        %939 = vmatprep.subr.bf16.mxu0 0
        %940 = vmatpush1.bf16.xpose.msra.mxu0 %v916
        %941 = vmatprep.subr.bf16.mxu0 0
        %942 = vmatpush1.bf16.xpose.msra.mxu0 %v919
        %943 = vmatprep.subr.bf16.mxu0 0
        %944 = vmatpush1.bf16.xpose.msra.mxu0 %v922
        %945 = vmatprep.subr.bf16.mxu0 0
        %946 = vmatpush1.bf16.xpose.msra.mxu0 %v925
        %947 = vmatprep.subr.bf16.mxu0 0
        %948 = vmatpush1.bf16.xpose.msra.mxu0 %v928
        %949 = vmatprep.subr.bf16.mxu0 0
        %950 = vmatpush1.bf16.xpose.msra.mxu0 %v931
        %951 = vmatprep.subr.bf16.mxu0 0
        %952 = vmatpush1.bf16.xpose.msra.mxu0 %v934
        %953 = vmatprep.subr.bf16.mxu0 0
        %954 = vmatpush1.bf16.xpose.msra.mxu0 %v937
        %955 = vmatprep.subr.bf16.mxu0 0
        %956 = vmatpush1.bf16.xpose.msra.mxu0 0
        %957 = vmatprep.subr.bf16.mxu0 0
        %958 = vmatpush1.bf16.xpose.msra.mxu0 0
        %959 = vmatprep.subr.bf16.mxu0 0
        %960 = vmatpush1.bf16.xpose.msra.mxu0 0
        %961 = vmatprep.subr.bf16.mxu0 0
        %962 = vmatpush1.bf16.xpose.msra.mxu0 0
        %963 = vmatprep.subr.bf16.mxu0 0
        %964 = vmatpush1.bf16.xpose.msra.mxu0 0
        %965 = vmatprep.subr.bf16.mxu0 0
        %966 = vmatpush1.bf16.xpose.msra.mxu0 0
        %967 = vmatprep.subr.bf16.mxu0 0
        %968 = vmatpush1.bf16.xpose.msra.mxu0 0
        %969 = vmatprep.subr.bf16.mxu0 0
        %970 = vmatpush1.bf16.xpose.msra.mxu0 0
        %971 = vmatprep.mubr.bf16.mxu0 0
        %972 = vmatmul.mubr.bf16.gmra.mrb[0].mxu0 %v904
        %v973 = vpop.f32.mrb[0].mxu0
        %v974 = vadd.f32 0.0, %v973
        %v975 = vpop.f32.mrb[0].mxu0
        %v976 = vpop.f32.mrb[0].mxu0
        %v977 = vadd.f32 0.0, %v976
        %v978 = vpop.f32.mrb[0].mxu0
        %979 = vmatprep.mubr.bf16.mxu0 0
        %980 = vmatmul.mubr.bf16.gmra.mrb[0].mxu0 %v907
        %v981 = vpop.f32.mrb[0].mxu0
        %v982 = vadd.f32 0.0, %v981
        %v983 = vpop.f32.mrb[0].mxu0
        %v984 = vpop.f32.mrb[0].mxu0
        %v985 = vadd.f32 0.0, %v984
        %v986 = vpop.f32.mrb[0].mxu0
        %987 = vmatprep.mubr.bf16.mxu0 0
        %988 = vmatmul.mubr.bf16.gmra.mrb[0].mxu0 %v910
        %v989 = vpop.f32.mrb[0].mxu0
        %v990 = vadd.f32 0.0, %v989
        %v991 = vpop.f32.mrb[0].mxu0
        %v992 = vpop.f32.mrb[0].mxu0
        %v993 = vadd.f32 0.0, %v992
        %v994 = vpop.f32.mrb[0].mxu0
        %995 = vmatprep.mubr.bf16.mxu0 0
        %996 = vmatmul.mubr.bf16.gmra.mrb[0].mxu0 %v913
        %v997 = vpop.f32.mrb[0].mxu0
        %v998 = vadd.f32 0.0, %v997
        %v999 = vpop.f32.mrb[0].mxu0
        %v1000 = vpop.f32.mrb[0].mxu0
        %v1001 = vadd.f32 0.0, %v1000
        %v1002 = vpop.f32.mrb[0].mxu0
        %1003 = vdwg.mxu0
        %1004 = vmax.xlane.f32.xlu0 %v813
        %v1005 = vpop.xlane.xlu0 %1004
        %1006 = vmax.xlane.f32.xlu0 %v816
        %v1007 = vpop.xlane.xlu0 %1006
        %1008 = vmax.xlane.f32.xlu0 %v821
        %v1009 = vpop.xlane.xlu0 %1008
        %1010 = vmax.xlane.f32.xlu0 %v824
        %v1011 = vpop.xlane.xlu0 %1010
        %1012 = vmax.xlane.f32.xlu0 %v829
        %v1013 = vpop.xlane.xlu0 %1012
        %1014 = vmax.xlane.f32.xlu0 %v832
        %v1015 = vpop.xlane.xlu0 %1014
        %1016 = vmax.xlane.f32.xlu0 %v837
        %v1017 = vpop.xlane.xlu0 %1016
        %1018 = vmax.xlane.f32.xlu0 %v840
        %v1019 = vpop.xlane.xlu0 %1018
        %1020 = vmax.xlane.f32.xlu0 %v974
        %v1021 = vpop.xlane.xlu0 %1020
        %1022 = vmax.xlane.f32.xlu0 %v977
        %v1023 = vpop.xlane.xlu0 %1022
        %1024 = vmax.xlane.f32.xlu0 %v982
        %v1025 = vpop.xlane.xlu0 %1024
        %1026 = vmax.xlane.f32.xlu0 %v985
        %v1027 = vpop.xlane.xlu0 %1026
        %1028 = vmax.xlane.f32.xlu0 %v990
        %v1029 = vpop.xlane.xlu0 %1028
        %1030 = vmax.xlane.f32.xlu0 %v993
        %v1031 = vpop.xlane.xlu0 %1030
        %1032 = vmax.xlane.f32.xlu0 %v998
        %v1033 = vpop.xlane.xlu0 %1032
        %1034 = vmax.xlane.f32.xlu0 %v1001
        %v1035 = vpop.xlane.xlu0 %1034
        %v1036 = vsub.f32 %v813, %v1005
        %v1037 = vsub.f32 %v816, %v1007
        %v1038 = vsub.f32 %v821, %v1009
        %v1039 = vsub.f32 %v824, %v1011
        %v1040 = vsub.f32 %v829, %v1013
        %v1041 = vsub.f32 %v832, %v1015
        %v1042 = vsub.f32 %v837, %v1017
        %v1043 = vsub.f32 %v840, %v1019
        %v1044 = vsub.f32 %v974, %v1021
        %v1045 = vsub.f32 %v977, %v1023
        %v1046 = vsub.f32 %v982, %v1025
        %v1047 = vsub.f32 %v985, %v1027
        %v1048 = vsub.f32 %v990, %v1029
        %v1049 = vsub.f32 %v993, %v1031
        %v1050 = vsub.f32 %v998, %v1033
        %v1051 = vsub.f32 %v1001, %v1035
        %v1052 = vmul.f32 %v1036, 1.442695
        %v1053 = vpow.pop %v1052
        %v1054 = vmul.f32 %v1037, 1.442695
        %v1055 = vpow.pop %v1054
        %v1056 = vmul.f32 %v1038, 1.442695
        %v1057 = vpow.pop %v1056
        %v1058 = vmul.f32 %v1039, 1.442695
        %v1059 = vpow.pop %v1058
        %v1060 = vmul.f32 %v1040, 1.442695
        %v1061 = vpow.pop %v1060
        %v1062 = vmul.f32 %v1041, 1.442695
        %v1063 = vpow.pop %v1062
        %v1064 = vmul.f32 %v1042, 1.442695
        %v1065 = vpow.pop %v1064
        %v1066 = vmul.f32 %v1043, 1.442695
        %v1067 = vpow.pop %v1066
        %v1068 = vmul.f32 %v1044, 1.442695
        %v1069 = vpow.pop %v1068
        %v1070 = vmul.f32 %v1045, 1.442695
        %v1071 = vpow.pop %v1070
        %v1072 = vmul.f32 %v1046, 1.442695
        %v1073 = vpow.pop %v1072
        %v1074 = vmul.f32 %v1047, 1.442695
        %v1075 = vpow.pop %v1074
        %v1076 = vmul.f32 %v1048, 1.442695
        %v1077 = vpow.pop %v1076
        %v1078 = vmul.f32 %v1049, 1.442695
        %v1079 = vpow.pop %v1078
        %v1080 = vmul.f32 %v1050, 1.442695
        %v1081 = vpow.pop %v1080
        %v1082 = vmul.f32 %v1051, 1.442695
        %v1083 = vpow.pop %v1082
        %1084 = vadd.xlane.f32.xlu0 %v1053
        %v1085 = vpop.xlane.xlu0 %1084
        %1086 = vadd.xlane.f32.xlu0 %v1055
        %v1087 = vpop.xlane.xlu0 %1086
        %1088 = vadd.xlane.f32.xlu0 %v1057
        %v1089 = vpop.xlane.xlu0 %1088
        %1090 = vadd.xlane.f32.xlu0 %v1059
        %v1091 = vpop.xlane.xlu0 %1090
        %1092 = vadd.xlane.f32.xlu0 %v1061
        %v1093 = vpop.xlane.xlu0 %1092
        %1094 = vadd.xlane.f32.xlu0 %v1063
        %v1095 = vpop.xlane.xlu0 %1094
        %1096 = vadd.xlane.f32.xlu0 %v1065
        %v1097 = vpop.xlane.xlu0 %1096
        %1098 = vadd.xlane.f32.xlu0 %v1067
        %v1099 = vpop.xlane.xlu0 %1098
        %1100 = vadd.xlane.f32.xlu0 %v1069
        %v1101 = vpop.xlane.xlu0 %1100
        %1102 = vadd.xlane.f32.xlu0 %v1071
        %v1103 = vpop.xlane.xlu0 %1102
        %1104 = vadd.xlane.f32.xlu0 %v1073
        %v1105 = vpop.xlane.xlu0 %1104
        %1106 = vadd.xlane.f32.xlu0 %v1075
        %v1107 = vpop.xlane.xlu0 %1106
        %1108 = vadd.xlane.f32.xlu0 %v1077
        %v1109 = vpop.xlane.xlu0 %1108
        %1110 = vadd.xlane.f32.xlu0 %v1079
        %v1111 = vpop.xlane.xlu0 %1110
        %1112 = vadd.xlane.f32.xlu0 %v1081
        %v1113 = vpop.xlane.xlu0 %1112
        %1114 = vadd.xlane.f32.xlu0 %v1083
        %v1115 = vpop.xlane.xlu0 %1114
        %v1116 = vrcp.pop %v1085
        %v1117 = vrcp.pop %v1087
        %v1118 = vrcp.pop %v1089
        %v1119 = vrcp.pop %v1091
        %v1120 = vrcp.pop %v1093
        %v1121 = vrcp.pop %v1095
        %v1122 = vrcp.pop %v1097
        %v1123 = vrcp.pop %v1099
        %v1124 = vrcp.pop %v1101
        %v1125 = vrcp.pop %v1103
        %v1126 = vrcp.pop %v1105
        %v1127 = vrcp.pop %v1107
        %v1128 = vrcp.pop %v1109
        %v1129 = vrcp.pop %v1111
        %v1130 = vrcp.pop %v1113
        %v1131 = vrcp.pop %v1115
        %v1132 = vmul.f32 %v1053, %v1116
        %v1133 = vmul.f32 %v1055, %v1117
        %v1134 = vmul.f32 %v1057, %v1118
        %v1135 = vmul.f32 %v1059, %v1119
        %v1136 = vmul.f32 %v1061, %v1120
        %v1137 = vmul.f32 %v1063, %v1121
        %v1138 = vmul.f32 %v1065, %v1122
        %v1139 = vmul.f32 %v1067, %v1123
        %v1140 = vmul.f32 %v1069, %v1124
        %v1141 = vmul.f32 %v1071, %v1125
        %v1142 = vmul.f32 %v1073, %v1126
        %v1143 = vmul.f32 %v1075, %v1127
        %v1144 = vmul.f32 %v1077, %v1128
        %v1145 = vmul.f32 %v1079, %v1129
        %v1146 = vmul.f32 %v1081, %v1130
        %v1147 = vmul.f32 %v1083, %v1131
        %v1148 = vpack.c.bf16 %v1133, %v1132
        %v1149 = vpack.c.bf16 %v1135, %v1134
        %v1150 = vpack.c.bf16 %v1137, %v1136
        %v1151 = vpack.c.bf16 %v1139, %v1138
        %v1152 = vpack.c.bf16 %v1141, %v1140
        %v1153 = vpack.c.bf16 %v1143, %v1142
        %v1154 = vpack.c.bf16 %v1145, %v1144
        %v1155 = vpack.c.bf16 %v1147, %v1146
        %v1172 = vunpack.c.l.b16 %v649
        %v1173 = vunpack.c.l.b16 %v650
        %v1174 = vunpack.c.l.b16 %v651
        %v1175 = vunpack.c.l.b16 %v652
        %v1176 = vunpack.c.l.b16 %v653
        %v1177 = vunpack.c.l.b16 %v654
        %v1178 = vunpack.c.l.b16 %v655
        %v1179 = vunpack.c.l.b16 %v656
        %v1180 = vunpack.c.l.b16 %v657
        %v1181 = vunpack.c.l.b16 %v658
        %v1182 = vunpack.c.l.b16 %v659
        %v1183 = vunpack.c.l.b16 %v660
        %v1184 = vunpack.c.l.b16 %v661
        %v1185 = vunpack.c.l.b16 %v662
        %v1186 = vunpack.c.l.b16 %v663
        %v1187 = vunpack.c.l.b16 %v664
        %v1188 = vpack.c.b16 %v1173, %v1172
        %v1189 = vpack.c.b16 %v1175, %v1174
        %v1190 = vpack.c.b16 %v1177, %v1176
        %v1191 = vpack.c.b16 %v1179, %v1178
        %v1192 = vpack.c.b16 %v1181, %v1180
        %v1193 = vpack.c.b16 %v1183, %v1182
        %v1194 = vpack.c.b16 %v1185, %v1184
        %v1195 = vpack.c.b16 %v1187, %v1186
        %1204 = vmatprep.subr.bf16.mxu0 0
        %1205 = vmatpush1.bf16.msra.mxu0 %v1188
        %1206 = vmatprep.subr.bf16.mxu0 0
        %1207 = vmatpush1.bf16.msra.mxu0 %v1189
        %1208 = vmatprep.subr.bf16.mxu0 0
        %1209 = vmatpush1.bf16.msra.mxu0 %v1190
        %1210 = vmatprep.subr.bf16.mxu0 0
        %1211 = vmatpush1.bf16.msra.mxu0 %v1191
        %1212 = vmatprep.subr.bf16.mxu0 0
        %1213 = vmatpush1.bf16.msra.mxu0 %v1192
        %1214 = vmatprep.subr.bf16.mxu0 0
        %1215 = vmatpush1.bf16.msra.mxu0 %v1193
        %1216 = vmatprep.subr.bf16.mxu0 0
        %1217 = vmatpush1.bf16.msra.mxu0 %v1194
        %1218 = vmatprep.subr.bf16.mxu0 0
        %1219 = vmatpush1.bf16.msra.mxu0 %v1195
        %1220 = vmatprep.subr.bf16.mxu0 0
        %1221 = vmatpush1.bf16.msra.mxu0 0
        %1222 = vmatprep.subr.bf16.mxu0 0
        %1223 = vmatpush1.bf16.msra.mxu0 0
        %1224 = vmatprep.subr.bf16.mxu0 0
        %1225 = vmatpush1.bf16.msra.mxu0 0
        %1226 = vmatprep.subr.bf16.mxu0 0
        %1227 = vmatpush1.bf16.msra.mxu0 0
        %1228 = vmatprep.subr.bf16.mxu0 0
        %1229 = vmatpush1.bf16.msra.mxu0 0
        %1230 = vmatprep.subr.bf16.mxu0 0
        %1231 = vmatpush1.bf16.msra.mxu0 0
        %1232 = vmatprep.subr.bf16.mxu0 0
        %1233 = vmatpush1.bf16.msra.mxu0 0
        %1234 = vmatprep.subr.bf16.mxu0 0
        %1235 = vmatpush1.bf16.msra.mxu0 0
        %1236 = vmatprep.mubr.bf16.mxu0 0
        %1237 = vmatmul.mubr.bf16.gmra.mrb[0].mxu0 %v1148
        %v1238 = vpop.f32.mrb[0].mxu0
        %v1239 = vadd.f32 0.0, %v1238
        %v1240 = vpop.f32.mrb[0].mxu0
        %v1241 = vpop.f32.mrb[0].mxu0
        %v1242 = vadd.f32 0.0, %v1241
        %v1243 = vpop.f32.mrb[0].mxu0
        %1244 = vmatprep.mubr.bf16.mxu0 0
        %1245 = vmatmul.mubr.bf16.gmra.mrb[0].mxu0 %v1149
        %v1246 = vpop.f32.mrb[0].mxu0
        %v1247 = vadd.f32 0.0, %v1246
        %v1248 = vpop.f32.mrb[0].mxu0
        %v1249 = vpop.f32.mrb[0].mxu0
        %v1250 = vadd.f32 0.0, %v1249
        %v1251 = vpop.f32.mrb[0].mxu0
        %1252 = vmatprep.mubr.bf16.mxu0 0
        %1253 = vmatmul.mubr.bf16.gmra.mrb[0].mxu0 %v1150
        %v1254 = vpop.f32.mrb[0].mxu0
        %v1255 = vadd.f32 0.0, %v1254
        %v1256 = vpop.f32.mrb[0].mxu0
        %v1257 = vpop.f32.mrb[0].mxu0
        %v1258 = vadd.f32 0.0, %v1257
        %v1259 = vpop.f32.mrb[0].mxu0
        %1260 = vmatprep.mubr.bf16.mxu0 0
        %1261 = vmatmul.mubr.bf16.gmra.mrb[0].mxu0 %v1151
        %v1262 = vpop.f32.mrb[0].mxu0
        %v1263 = vadd.f32 0.0, %v1262
        %v1264 = vpop.f32.mrb[0].mxu0
        %v1265 = vpop.f32.mrb[0].mxu0
        %v1266 = vadd.f32 0.0, %v1265
        %v1267 = vpop.f32.mrb[0].mxu0
        %1268 = vdwg.mxu0
        %v1285 = vunpack.c.l.b16 %v665
        %v1286 = vunpack.c.l.b16 %v666
        %v1287 = vunpack.c.l.b16 %v667
        %v1288 = vunpack.c.l.b16 %v668
        %v1289 = vunpack.c.l.b16 %v669
        %v1290 = vunpack.c.l.b16 %v670
        %v1291 = vunpack.c.l.b16 %v671
        %v1292 = vunpack.c.l.b16 %v672
        %v1293 = vunpack.c.l.b16 %v673
        %v1294 = vunpack.c.l.b16 %v674
        %v1295 = vunpack.c.l.b16 %v675
        %v1296 = vunpack.c.l.b16 %v676
        %v1297 = vunpack.c.l.b16 %v677
        %v1298 = vunpack.c.l.b16 %v678
        %v1299 = vunpack.c.l.b16 %v679
        %v1300 = vunpack.c.l.b16 %v680
        %v1301 = vpack.c.b16 %v1286, %v1285
        %v1302 = vpack.c.b16 %v1288, %v1287
        %v1303 = vpack.c.b16 %v1290, %v1289
        %v1304 = vpack.c.b16 %v1292, %v1291
        %v1305 = vpack.c.b16 %v1294, %v1293
        %v1306 = vpack.c.b16 %v1296, %v1295
        %v1307 = vpack.c.b16 %v1298, %v1297
        %v1308 = vpack.c.b16 %v1300, %v1299
        %1317 = vmatprep.subr.bf16.mxu0 0
        %1318 = vmatpush1.bf16.msra.mxu0 %v1301
        %1319 = vmatprep.subr.bf16.mxu0 0
        %1320 = vmatpush1.bf16.msra.mxu0 %v1302
        %1321 = vmatprep.subr.bf16.mxu0 0
        %1322 = vmatpush1.bf16.msra.mxu0 %v1303
        %1323 = vmatprep.subr.bf16.mxu0 0
        %1324 = vmatpush1.bf16.msra.mxu0 %v1304
        %1325 = vmatprep.subr.bf16.mxu0 0
        %1326 = vmatpush1.bf16.msra.mxu0 %v1305
        %1327 = vmatprep.subr.bf16.mxu0 0
        %1328 = vmatpush1.bf16.msra.mxu0 %v1306
        %1329 = vmatprep.subr.bf16.mxu0 0
        %1330 = vmatpush1.bf16.msra.mxu0 %v1307
        %1331 = vmatprep.subr.bf16.mxu0 0
        %1332 = vmatpush1.bf16.msra.mxu0 %v1308
        %1333 = vmatprep.subr.bf16.mxu0 0
        %1334 = vmatpush1.bf16.msra.mxu0 0
        %1335 = vmatprep.subr.bf16.mxu0 0
        %1336 = vmatpush1.bf16.msra.mxu0 0
        %1337 = vmatprep.subr.bf16.mxu0 0
        %1338 = vmatpush1.bf16.msra.mxu0 0
        %1339 = vmatprep.subr.bf16.mxu0 0
        %1340 = vmatpush1.bf16.msra.mxu0 0
        %1341 = vmatprep.subr.bf16.mxu0 0
        %1342 = vmatpush1.bf16.msra.mxu0 0
        %1343 = vmatprep.subr.bf16.mxu0 0
        %1344 = vmatpush1.bf16.msra.mxu0 0
        %1345 = vmatprep.subr.bf16.mxu0 0
        %1346 = vmatpush1.bf16.msra.mxu0 0
        %1347 = vmatprep.subr.bf16.mxu0 0
        %1348 = vmatpush1.bf16.msra.mxu0 0
        %1349 = vmatprep.mubr.bf16.mxu0 0
        %1350 = vmatmul.mubr.bf16.gmra.mrb[0].mxu0 %v1152
        %v1351 = vpop.f32.mrb[0].mxu0
        %v1352 = vadd.f32 0.0, %v1351
        %v1353 = vpop.f32.mrb[0].mxu0
        %v1354 = vpop.f32.mrb[0].mxu0
        %v1355 = vadd.f32 0.0, %v1354
        %v1356 = vpop.f32.mrb[0].mxu0
        %1357 = vmatprep.mubr.bf16.mxu0 0
        %1358 = vmatmul.mubr.bf16.gmra.mrb[0].mxu0 %v1153
        %v1359 = vpop.f32.mrb[0].mxu0
        %v1360 = vadd.f32 0.0, %v1359
        %v1361 = vpop.f32.mrb[0].mxu0
        %v1362 = vpop.f32.mrb[0].mxu0
        %v1363 = vadd.f32 0.0, %v1362
        %v1364 = vpop.f32.mrb[0].mxu0
        %1365 = vmatprep.mubr.bf16.mxu0 0
        %1366 = vmatmul.mubr.bf16.gmra.mrb[0].mxu0 %v1154
        %v1367 = vpop.f32.mrb[0].mxu0
        %v1368 = vadd.f32 0.0, %v1367
        %v1369 = vpop.f32.mrb[0].mxu0
        %v1370 = vpop.f32.mrb[0].mxu0
        %v1371 = vadd.f32 0.0, %v1370
        %v1372 = vpop.f32.mrb[0].mxu0
        %1373 = vmatprep.mubr.bf16.mxu0 0
        %1374 = vmatmul.mubr.bf16.gmra.mrb[0].mxu0 %v1155
        %v1375 = vpop.f32.mrb[0].mxu0
        %v1376 = vadd.f32 0.0, %v1375
        %v1377 = vpop.f32.mrb[0].mxu0
        %v1378 = vpop.f32.mrb[0].mxu0
        %v1379 = vadd.f32 0.0, %v1378
        %v1380 = vpop.f32.mrb[0].mxu0
        %1381 = vdwg.mxu0
        %v1382 = vpack.c.bf16 %v1242, %v1239
        %v1383 = vpack.c.bf16 %v1250, %v1247
        %v1384 = vpack.c.bf16 %v1258, %v1255
        %v1385 = vpack.c.bf16 %v1266, %v1263
        %v1386 = vpack.c.bf16 %v1355, %v1352
        %v1387 = vpack.c.bf16 %v1363, %v1360
        %v1388 = vpack.c.bf16 %v1371, %v1368
        %v1389 = vpack.c.bf16 %v1379, %v1376
        %v1390 = vld [vmem:[%s5] sm:$0xf]
        %v1391 = vld [vmem:[%s5 + $0x4] sm:$0xf]
        %v1392 = vld [vmem:[%s5 + $0x8] sm:$0xf]
        %v1393 = vld [vmem:[%s5 + $0xc] sm:$0xf]
        %v1394 = vld [vmem:[%s5 + $0x10] sm:$0xf]
        %v1395 = vld [vmem:[%s5 + $0x14] sm:$0xf]
        %v1396 = vld [vmem:[%s5 + $0x18] sm:$0xf]
        %v1397 = vld [vmem:[%s5 + $0x1c] sm:$0xf]
        %v1398 = vld [vmem:[%s5 + $0x20] sm:$0xf]
        %v1399 = vld [vmem:[%s5 + $0x24] sm:$0xf]
        %v1400 = vld [vmem:[%s5 + $0x28] sm:$0xf]
        %v1401 = vld [vmem:[%s5 + $0x2c] sm:$0xf]
        %v1402 = vld [vmem:[%s5 + $0x30] sm:$0xf]
        %v1403 = vld [vmem:[%s5 + $0x34] sm:$0xf]
        %v1404 = vld [vmem:[%s5 + $0x38] sm:$0xf]
        %v1405 = vld [vmem:[%s5 + $0x3c] sm:$0xf]
        %v1414 = vunpack.c.l.b16 %v1390
        %v1415 = vunpack.c.l.b16 %v1391
        %v1416 = vunpack.c.l.b16 %v1392
        %v1417 = vunpack.c.l.b16 %v1393
        %v1418 = vunpack.c.l.b16 %v1394
        %v1419 = vunpack.c.l.b16 %v1395
        %v1420 = vunpack.c.l.b16 %v1396
        %v1421 = vunpack.c.l.b16 %v1397
        %v1422 = vpack.c.b16 %v1415, %v1414
        %v1423 = vpack.c.b16 %v1417, %v1416
        %v1424 = vpack.c.b16 %v1419, %v1418
        %v1425 = vpack.c.b16 %v1421, %v1420
        %v1431 = vsel %vm741, %v1382, 0
        %v1434 = vsel %vm741, %v1383, 0
        %v1437 = vsel %vm741, %v1384, 0
        %v1440 = vsel %vm741, %v1385, 0
        %1442 = vmatprep.subr.bf16.mxu0 0
        %1443 = vmatpush1.bf16.msra.mxu0 %v1422
        %1444 = vmatprep.subr.bf16.mxu0 0
        %1445 = vmatpush1.bf16.msra.mxu0 %v1423
        %1446 = vmatprep.subr.bf16.mxu0 0
        %1447 = vmatpush1.bf16.msra.mxu0 %v1424
        %1448 = vmatprep.subr.bf16.mxu0 0
        %1449 = vmatpush1.bf16.msra.mxu0 %v1425
        %1450 = vmatprep.subr.bf16.mxu0 0
        %1451 = vmatpush1.bf16.msra.mxu0 0
        %1452 = vmatprep.subr.bf16.mxu0 0
        %1453 = vmatpush1.bf16.msra.mxu0 0
        %1454 = vmatprep.subr.bf16.mxu0 0
        %1455 = vmatpush1.bf16.msra.mxu0 0
        %1456 = vmatprep.subr.bf16.mxu0 0
        %1457 = vmatpush1.bf16.msra.mxu0 0
        %1458 = vmatprep.subr.bf16.mxu0 0
        %1459 = vmatpush1.bf16.msra.mxu0 0
        %1460 = vmatprep.subr.bf16.mxu0 0
        %1461 = vmatpush1.bf16.msra.mxu0 0
        %1462 = vmatprep.subr.bf16.mxu0 0
        %1463 = vmatpush1.bf16.msra.mxu0 0
        %1464 = vmatprep.subr.bf16.mxu0 0
        %1465 = vmatpush1.bf16.msra.mxu0 0
        %1466 = vmatprep.subr.bf16.mxu0 0
        %1467 = vmatpush1.bf16.msra.mxu0 0
        %1468 = vmatprep.subr.bf16.mxu0 0
        %1469 = vmatpush1.bf16.msra.mxu0 0
        %1470 = vmatprep.subr.bf16.mxu0 0
        %1471 = vmatpush1.bf16.msra.mxu0 0
        %1472 = vmatprep.subr.bf16.mxu0 0
        %1473 = vmatpush1.bf16.msra.mxu0 0
        %1474 = vmatprep.mubr.bf16.mxu0 0
        %1475 = vmatmul.mubr.bf16.gmra.mrb[0].mxu0 %v1431
        %v1476 = vpop.f32.mrb[0].mxu0
        %v1477 = vadd.f32 0.0, %v1476
        %v1478 = vpop.f32.mrb[0].mxu0
        %v1479 = vpop.f32.mrb[0].mxu0
        %v1480 = vadd.f32 0.0, %v1479
        %v1481 = vpop.f32.mrb[0].mxu0
        %1482 = vmatprep.mubr.bf16.mxu0 0
        %1483 = vmatmul.mubr.bf16.gmra.mrb[0].mxu0 %v1434
        %v1484 = vpop.f32.mrb[0].mxu0
        %v1485 = vadd.f32 0.0, %v1484
        %v1486 = vpop.f32.mrb[0].mxu0
        %v1487 = vpop.f32.mrb[0].mxu0
        %v1488 = vadd.f32 0.0, %v1487
        %v1489 = vpop.f32.mrb[0].mxu0
        %1490 = vmatprep.mubr.bf16.mxu0 0
        %1491 = vmatmul.mubr.bf16.gmra.mrb[0].mxu0 %v1437
        %v1492 = vpop.f32.mrb[0].mxu0
        %v1493 = vadd.f32 0.0, %v1492
        %v1494 = vpop.f32.mrb[0].mxu0
        %v1495 = vpop.f32.mrb[0].mxu0
        %v1496 = vadd.f32 0.0, %v1495
        %v1497 = vpop.f32.mrb[0].mxu0
        %1498 = vmatprep.mubr.bf16.mxu0 0
        %1499 = vmatmul.mubr.bf16.gmra.mrb[0].mxu0 %v1440
        %v1500 = vpop.f32.mrb[0].mxu0
        %v1501 = vadd.f32 0.0, %v1500
        %v1502 = vpop.f32.mrb[0].mxu0
        %v1503 = vpop.f32.mrb[0].mxu0
        %v1504 = vadd.f32 0.0, %v1503
        %v1505 = vpop.f32.mrb[0].mxu0
        %1506 = vdwg.mxu0
        %v1515 = vunpack.c.l.b16 %v1398
        %v1516 = vunpack.c.l.b16 %v1399
        %v1517 = vunpack.c.l.b16 %v1400
        %v1518 = vunpack.c.l.b16 %v1401
        %v1519 = vunpack.c.l.b16 %v1402
        %v1520 = vunpack.c.l.b16 %v1403
        %v1521 = vunpack.c.l.b16 %v1404
        %v1522 = vunpack.c.l.b16 %v1405
        %v1523 = vpack.c.b16 %v1516, %v1515
        %v1524 = vpack.c.b16 %v1518, %v1517
        %v1525 = vpack.c.b16 %v1520, %v1519
        %v1526 = vpack.c.b16 %v1522, %v1521
        %v1532 = vsel %vm741, %v1386, 0
        %v1535 = vsel %vm741, %v1387, 0
        %v1538 = vsel %vm741, %v1388, 0
        %v1541 = vsel %vm741, %v1389, 0
        %1543 = vmatprep.subr.bf16.mxu0 0
        %1544 = vmatpush1.bf16.msra.mxu0 %v1523
        %1545 = vmatprep.subr.bf16.mxu0 0
        %1546 = vmatpush1.bf16.msra.mxu0 %v1524
        %1547 = vmatprep.subr.bf16.mxu0 0
        %1548 = vmatpush1.bf16.msra.mxu0 %v1525
        %1549 = vmatprep.subr.bf16.mxu0 0
        %1550 = vmatpush1.bf16.msra.mxu0 %v1526
        %1551 = vmatprep.subr.bf16.mxu0 0
        %1552 = vmatpush1.bf16.msra.mxu0 0
        %1553 = vmatprep.subr.bf16.mxu0 0
        %1554 = vmatpush1.bf16.msra.mxu0 0
        %1555 = vmatprep.subr.bf16.mxu0 0
        %1556 = vmatpush1.bf16.msra.mxu0 0
        %1557 = vmatprep.subr.bf16.mxu0 0
        %1558 = vmatpush1.bf16.msra.mxu0 0
        %1559 = vmatprep.subr.bf16.mxu0 0
        %1560 = vmatpush1.bf16.msra.mxu0 0
        %1561 = vmatprep.subr.bf16.mxu0 0
        %1562 = vmatpush1.bf16.msra.mxu0 0
        %1563 = vmatprep.subr.bf16.mxu0 0
        %1564 = vmatpush1.bf16.msra.mxu0 0
        %1565 = vmatprep.subr.bf16.mxu0 0
        %1566 = vmatpush1.bf16.msra.mxu0 0
        %1567 = vmatprep.subr.bf16.mxu0 0
        %1568 = vmatpush1.bf16.msra.mxu0 0
        %1569 = vmatprep.subr.bf16.mxu0 0
        %1570 = vmatpush1.bf16.msra.mxu0 0
        %1571 = vmatprep.subr.bf16.mxu0 0
        %1572 = vmatpush1.bf16.msra.mxu0 0
        %1573 = vmatprep.subr.bf16.mxu0 0
        %1574 = vmatpush1.bf16.msra.mxu0 0
        %1575 = vmatprep.mubr.bf16.mxu0 0
        %1576 = vmatmul.mubr.bf16.gmra.mrb[0].mxu0 %v1532
        %v1577 = vpop.f32.mrb[0].mxu0
        %v1578 = vadd.f32 0.0, %v1577
        %v1579 = vpop.f32.mrb[0].mxu0
        %v1580 = vpop.f32.mrb[0].mxu0
        %v1581 = vadd.f32 0.0, %v1580
        %v1582 = vpop.f32.mrb[0].mxu0
        %1583 = vmatprep.mubr.bf16.mxu0 0
        %1584 = vmatmul.mubr.bf16.gmra.mrb[0].mxu0 %v1535
        %v1585 = vpop.f32.mrb[0].mxu0
        %v1586 = vadd.f32 0.0, %v1585
        %v1587 = vpop.f32.mrb[0].mxu0
        %v1588 = vpop.f32.mrb[0].mxu0
        %v1589 = vadd.f32 0.0, %v1588
        %v1590 = vpop.f32.mrb[0].mxu0
        %1591 = vmatprep.mubr.bf16.mxu0 0
        %1592 = vmatmul.mubr.bf16.gmra.mrb[0].mxu0 %v1538
        %v1593 = vpop.f32.mrb[0].mxu0
        %v1594 = vadd.f32 0.0, %v1593
        %v1595 = vpop.f32.mrb[0].mxu0
        %v1596 = vpop.f32.mrb[0].mxu0
        %v1597 = vadd.f32 0.0, %v1596
        %v1598 = vpop.f32.mrb[0].mxu0
        %1599 = vmatprep.mubr.bf16.mxu0 0
        %1600 = vmatmul.mubr.bf16.gmra.mrb[0].mxu0 %v1541
        %v1601 = vpop.f32.mrb[0].mxu0
        %v1602 = vadd.f32 0.0, %v1601
        %v1603 = vpop.f32.mrb[0].mxu0
        %v1604 = vpop.f32.mrb[0].mxu0
        %v1605 = vadd.f32 0.0, %v1604
        %v1606 = vpop.f32.mrb[0].mxu0
        %1607 = vdwg.mxu0
        %v1608 = vadd.f32 %v1477, %v1578
        %v1609 = vadd.f32 %v1480, %v1581
        %v1610 = vadd.f32 %v1485, %v1586
        %v1611 = vadd.f32 %v1488, %v1589
        %v1612 = vadd.f32 %v1493, %v1594
        %v1613 = vadd.f32 %v1496, %v1597
        %v1614 = vadd.f32 %v1501, %v1602
        %v1615 = vadd.f32 %v1504, %v1605
        %v1616 = vld [vmem:[%s4] sm:$0x1]
        %1617 = vadd.xlane.f32.xlu0 %v1608
        %v1618 = vpop.xlane.xlu0 %1617
        %1619 = vadd.xlane.f32.xlu0 %v1609
        %v1620 = vpop.xlane.xlu0 %1619
        %1621 = vadd.xlane.f32.xlu0 %v1610
        %v1622 = vpop.xlane.xlu0 %1621
        %1623 = vadd.xlane.f32.xlu0 %v1611
        %v1624 = vpop.xlane.xlu0 %1623
        %1625 = vadd.xlane.f32.xlu0 %v1612
        %v1626 = vpop.xlane.xlu0 %1625
        %1627 = vadd.xlane.f32.xlu0 %v1613
        %v1628 = vpop.xlane.xlu0 %1627
        %1629 = vadd.xlane.f32.xlu0 %v1614
        %v1630 = vpop.xlane.xlu0 %1629
        %1631 = vadd.xlane.f32.xlu0 %v1615
        %v1632 = vpop.xlane.xlu0 %1631
        %v1633 = vrcp.pop 128.0
        %v1634 = vmul.f32 %v1618, %v1633
        %v1635 = vmul.f32 %v1620, %v1633
        %v1636 = vmul.f32 %v1622, %v1633
        %v1637 = vmul.f32 %v1624, %v1633
        %v1638 = vmul.f32 %v1626, %v1633
        %v1639 = vmul.f32 %v1628, %v1633
        %v1640 = vmul.f32 %v1630, %v1633
        %v1641 = vmul.f32 %v1632, %v1633
        %v1642 = vsub.f32 %v1608, %v1634
        %v1643 = vsub.f32 %v1609, %v1635
        %v1644 = vsub.f32 %v1610, %v1636
        %v1645 = vsub.f32 %v1611, %v1637
        %v1646 = vsub.f32 %v1612, %v1638
        %v1647 = vsub.f32 %v1613, %v1639
        %v1648 = vsub.f32 %v1614, %v1640
        %v1649 = vsub.f32 %v1615, %v1641
        %v1650 = vmul.f32 %v1642, %v1642
        %v1651 = vmul.f32 %v1643, %v1643
        %v1652 = vmul.f32 %v1644, %v1644
        %v1653 = vmul.f32 %v1645, %v1645
        %v1654 = vmul.f32 %v1646, %v1646
        %v1655 = vmul.f32 %v1647, %v1647
        %v1656 = vmul.f32 %v1648, %v1648
        %v1657 = vmul.f32 %v1649, %v1649
        %1658 = vadd.xlane.f32.xlu0 %v1650
        %v1659 = vpop.xlane.xlu0 %1658
        %1660 = vadd.xlane.f32.xlu0 %v1651
        %v1661 = vpop.xlane.xlu0 %1660
        %1662 = vadd.xlane.f32.xlu0 %v1652
        %v1663 = vpop.xlane.xlu0 %1662
        %1664 = vadd.xlane.f32.xlu0 %v1653
        %v1665 = vpop.xlane.xlu0 %1664
        %1666 = vadd.xlane.f32.xlu0 %v1654
        %v1667 = vpop.xlane.xlu0 %1666
        %1668 = vadd.xlane.f32.xlu0 %v1655
        %v1669 = vpop.xlane.xlu0 %1668
        %1670 = vadd.xlane.f32.xlu0 %v1656
        %v1671 = vpop.xlane.xlu0 %1670
        %1672 = vadd.xlane.f32.xlu0 %v1657
        %v1673 = vpop.xlane.xlu0 %1672
        %v1674 = vmul.f32 %v1659, %v1633
        %v1675 = vmul.f32 %v1661, %v1633
        %v1676 = vmul.f32 %v1663, %v1633
        %v1677 = vmul.f32 %v1665, %v1633
        %v1678 = vmul.f32 %v1667, %v1633
        %v1679 = vmul.f32 %v1669, %v1633
        %v1680 = vmul.f32 %v1671, %v1633
        %v1681 = vmul.f32 %v1673, %v1633
        %v1682 = vadd.f32 %v1674, 1e-05
        %v1683 = vadd.f32 %v1675, 1e-05
        %v1684 = vadd.f32 %v1676, 1e-05
        %v1685 = vadd.f32 %v1677, 1e-05
        %v1686 = vadd.f32 %v1678, 1e-05
        %v1687 = vadd.f32 %v1679, 1e-05
        %v1688 = vadd.f32 %v1680, 1e-05
        %v1689 = vadd.f32 %v1681, 1e-05
        %v1690 = vrsqrt.pop %v1682
        %v1691 = vrsqrt.pop %v1683
        %v1692 = vrsqrt.pop %v1684
        %v1693 = vrsqrt.pop %v1685
        %v1694 = vrsqrt.pop %v1686
        %v1695 = vrsqrt.pop %v1687
        %v1696 = vrsqrt.pop %v1688
        %v1697 = vrsqrt.pop %v1689
        %v1698 = vmul.f32 %v1642, %v1690
        %v1699 = vmul.f32 %v1643, %v1691
        %v1700 = vmul.f32 %v1644, %v1692
        %v1701 = vmul.f32 %v1645, %v1693
        %v1702 = vmul.f32 %v1646, %v1694
        %v1703 = vmul.f32 %v1647, %v1695
        %v1704 = vmul.f32 %v1648, %v1696
        %v1705 = vmul.f32 %v1649, %v1697
        %v1707 = vlaneseq
        %v1708 = vshrl.u32 %v1707, 7
        %v1709 = vsub.s32 0, %v1708
        %v1710 = vrot.slane %v1616, %v1709
        %v1712 = vmul.f32 %v1698, %v1710
        %v1713 = vmul.f32 %v1699, %v1710
        %v1714 = vmul.f32 %v1700, %v1710
        %v1715 = vmul.f32 %v1701, %v1710
        %v1716 = vmul.f32 %v1702, %v1710
        %v1717 = vmul.f32 %v1703, %v1710
        %v1718 = vmul.f32 %v1704, %v1710
        %v1719 = vmul.f32 %v1705, %v1710
        %v1720 = vadd.f32 %v593, %v1712
        %v1721 = vadd.f32 %v594, %v1713
        %v1722 = vadd.f32 %v595, %v1714
        %v1723 = vadd.f32 %v596, %v1715
        %v1724 = vadd.f32 %v597, %v1716
        %v1725 = vadd.f32 %v598, %v1717
        %v1726 = vadd.f32 %v599, %v1718
        %v1727 = vadd.f32 %v600, %v1719
        %v1728 = vld [vmem:[%s6] sm:$0x1]
        %1729 = vadd.xlane.f32.xlu0 %v1720
        %v1730 = vpop.xlane.xlu0 %1729
        %1731 = vadd.xlane.f32.xlu0 %v1721
        %v1732 = vpop.xlane.xlu0 %1731
        %1733 = vadd.xlane.f32.xlu0 %v1722
        %v1734 = vpop.xlane.xlu0 %1733
        %1735 = vadd.xlane.f32.xlu0 %v1723
        %v1736 = vpop.xlane.xlu0 %1735
        %1737 = vadd.xlane.f32.xlu0 %v1724
        %v1738 = vpop.xlane.xlu0 %1737
        %1739 = vadd.xlane.f32.xlu0 %v1725
        %v1740 = vpop.xlane.xlu0 %1739
        %1741 = vadd.xlane.f32.xlu0 %v1726
        %v1742 = vpop.xlane.xlu0 %1741
        %1743 = vadd.xlane.f32.xlu0 %v1727
        %v1744 = vpop.xlane.xlu0 %1743
        %v1745 = vmul.f32 %v1730, %v1633
        %v1746 = vmul.f32 %v1732, %v1633
        %v1747 = vmul.f32 %v1734, %v1633
        %v1748 = vmul.f32 %v1736, %v1633
        %v1749 = vmul.f32 %v1738, %v1633
        %v1750 = vmul.f32 %v1740, %v1633
        %v1751 = vmul.f32 %v1742, %v1633
        %v1752 = vmul.f32 %v1744, %v1633
        %v1753 = vsub.f32 %v1720, %v1745
        %v1754 = vsub.f32 %v1721, %v1746
        %v1755 = vsub.f32 %v1722, %v1747
        %v1756 = vsub.f32 %v1723, %v1748
        %v1757 = vsub.f32 %v1724, %v1749
        %v1758 = vsub.f32 %v1725, %v1750
        %v1759 = vsub.f32 %v1726, %v1751
        %v1760 = vsub.f32 %v1727, %v1752
        %v1761 = vmul.f32 %v1753, %v1753
        %v1762 = vmul.f32 %v1754, %v1754
        %v1763 = vmul.f32 %v1755, %v1755
        %v1764 = vmul.f32 %v1756, %v1756
        %v1765 = vmul.f32 %v1757, %v1757
        %v1766 = vmul.f32 %v1758, %v1758
        %v1767 = vmul.f32 %v1759, %v1759
        %v1768 = vmul.f32 %v1760, %v1760
        %1769 = vadd.xlane.f32.xlu0 %v1761
        %v1770 = vpop.xlane.xlu0 %1769
        %1771 = vadd.xlane.f32.xlu0 %v1762
        %v1772 = vpop.xlane.xlu0 %1771
        %1773 = vadd.xlane.f32.xlu0 %v1763
        %v1774 = vpop.xlane.xlu0 %1773
        %1775 = vadd.xlane.f32.xlu0 %v1764
        %v1776 = vpop.xlane.xlu0 %1775
        %1777 = vadd.xlane.f32.xlu0 %v1765
        %v1778 = vpop.xlane.xlu0 %1777
        %1779 = vadd.xlane.f32.xlu0 %v1766
        %v1780 = vpop.xlane.xlu0 %1779
        %1781 = vadd.xlane.f32.xlu0 %v1767
        %v1782 = vpop.xlane.xlu0 %1781
        %1783 = vadd.xlane.f32.xlu0 %v1768
        %v1784 = vpop.xlane.xlu0 %1783
        %v1785 = vmul.f32 %v1770, %v1633
        %v1786 = vmul.f32 %v1772, %v1633
        %v1787 = vmul.f32 %v1774, %v1633
        %v1788 = vmul.f32 %v1776, %v1633
        %v1789 = vmul.f32 %v1778, %v1633
        %v1790 = vmul.f32 %v1780, %v1633
        %v1791 = vmul.f32 %v1782, %v1633
        %v1792 = vmul.f32 %v1784, %v1633
        %v1793 = vadd.f32 %v1785, 1e-05
        %v1794 = vadd.f32 %v1786, 1e-05
        %v1795 = vadd.f32 %v1787, 1e-05
        %v1796 = vadd.f32 %v1788, 1e-05
        %v1797 = vadd.f32 %v1789, 1e-05
        %v1798 = vadd.f32 %v1790, 1e-05
        %v1799 = vadd.f32 %v1791, 1e-05
        %v1800 = vadd.f32 %v1792, 1e-05
        %v1801 = vrsqrt.pop %v1793
        %v1802 = vrsqrt.pop %v1794
        %v1803 = vrsqrt.pop %v1795
        %v1804 = vrsqrt.pop %v1796
        %v1805 = vrsqrt.pop %v1797
        %v1806 = vrsqrt.pop %v1798
        %v1807 = vrsqrt.pop %v1799
        %v1808 = vrsqrt.pop %v1800
        %v1809 = vmul.f32 %v1753, %v1801
        %v1810 = vmul.f32 %v1754, %v1802
        %v1811 = vmul.f32 %v1755, %v1803
        %v1812 = vmul.f32 %v1756, %v1804
        %v1813 = vmul.f32 %v1757, %v1805
        %v1814 = vmul.f32 %v1758, %v1806
        %v1815 = vmul.f32 %v1759, %v1807
        %v1816 = vmul.f32 %v1760, %v1808
        %v1818 = vlaneseq
        %v1819 = vshrl.u32 %v1818, 7
        %v1820 = vsub.s32 0, %v1819
        %v1821 = vrot.slane %v1728, %v1820
        %v1823 = vmul.f32 %v1809, %v1821
        %v1824 = vmul.f32 %v1810, %v1821
        %v1825 = vmul.f32 %v1811, %v1821
        %v1826 = vmul.f32 %v1812, %v1821
        %v1827 = vmul.f32 %v1813, %v1821
        %v1828 = vmul.f32 %v1814, %v1821
        %v1829 = vmul.f32 %v1815, %v1821
        %v1830 = vmul.f32 %v1816, %v1821
        %v1831 = vpack.c.bf16 %v1824, %v1823
        %v1832 = vpack.c.bf16 %v1826, %v1825
        %v1833 = vpack.c.bf16 %v1828, %v1827
        %v1834 = vpack.c.bf16 %v1830, %v1829
        %v1835 = vld [vmem:[%s7] sm:$0xff]
        %v1836 = vld [vmem:[%s7 + $0x8] sm:$0xff]
        %v1837 = vld [vmem:[%s7 + $0x10] sm:$0xff]
        %v1838 = vld [vmem:[%s7 + $0x18] sm:$0xff]
        %v1839 = vld [vmem:[%s7 + $0x20] sm:$0xff]
        %v1840 = vld [vmem:[%s7 + $0x28] sm:$0xff]
        %v1841 = vld [vmem:[%s7 + $0x30] sm:$0xff]
        %v1842 = vld [vmem:[%s7 + $0x38] sm:$0xff]
        %v1843 = vld [vmem:[%s7 + $0x40] sm:$0xff]
        %v1844 = vld [vmem:[%s7 + $0x48] sm:$0xff]
        %v1845 = vld [vmem:[%s7 + $0x50] sm:$0xff]
        %v1846 = vld [vmem:[%s7 + $0x58] sm:$0xff]
        %v1847 = vld [vmem:[%s7 + $0x60] sm:$0xff]
        %v1848 = vld [vmem:[%s7 + $0x68] sm:$0xff]
        %v1849 = vld [vmem:[%s7 + $0x70] sm:$0xff]
        %v1850 = vld [vmem:[%s7 + $0x78] sm:$0xff]
        %v1851 = vld [vmem:[%s7 + $0x80] sm:$0xff]
        %v1852 = vld [vmem:[%s7 + $0x88] sm:$0xff]
        %v1853 = vld [vmem:[%s7 + $0x90] sm:$0xff]
        %v1854 = vld [vmem:[%s7 + $0x98] sm:$0xff]
        %v1855 = vld [vmem:[%s7 + $0xa0] sm:$0xff]
        %v1856 = vld [vmem:[%s7 + $0xa8] sm:$0xff]
        %v1857 = vld [vmem:[%s7 + $0xb0] sm:$0xff]
        %v1858 = vld [vmem:[%s7 + $0xb8] sm:$0xff]
        %v1859 = vld [vmem:[%s7 + $0xc0] sm:$0xff]
        %v1860 = vld [vmem:[%s7 + $0xc8] sm:$0xff]
        %v1861 = vld [vmem:[%s7 + $0xd0] sm:$0xff]
        %v1862 = vld [vmem:[%s7 + $0xd8] sm:$0xff]
        %v1863 = vld [vmem:[%s7 + $0xe0] sm:$0xff]
        %v1864 = vld [vmem:[%s7 + $0xe8] sm:$0xff]
        %v1865 = vld [vmem:[%s7 + $0xf0] sm:$0xff]
        %v1866 = vld [vmem:[%s7 + $0xf8] sm:$0xff]
        %v1867 = vld [vmem:[%s7 + $0x100] sm:$0xff]
        %v1868 = vld [vmem:[%s7 + $0x108] sm:$0xff]
        %v1869 = vld [vmem:[%s7 + $0x110] sm:$0xff]
        %v1870 = vld [vmem:[%s7 + $0x118] sm:$0xff]
        %v1871 = vld [vmem:[%s7 + $0x120] sm:$0xff]
        %v1872 = vld [vmem:[%s7 + $0x128] sm:$0xff]
        %v1873 = vld [vmem:[%s7 + $0x130] sm:$0xff]
        %v1874 = vld [vmem:[%s7 + $0x138] sm:$0xff]
        %v1875 = vld [vmem:[%s7 + $0x140] sm:$0xff]
        %v1876 = vld [vmem:[%s7 + $0x148] sm:$0xff]
        %v1877 = vld [vmem:[%s7 + $0x150] sm:$0xff]
        %v1878 = vld [vmem:[%s7 + $0x158] sm:$0xff]
        %v1879 = vld [vmem:[%s7 + $0x160] sm:$0xff]
        %v1880 = vld [vmem:[%s7 + $0x168] sm:$0xff]
        %v1881 = vld [vmem:[%s7 + $0x170] sm:$0xff]
        %v1882 = vld [vmem:[%s7 + $0x178] sm:$0xff]
        %v1883 = vld [vmem:[%s7 + $0x180] sm:$0xff]
        %v1884 = vld [vmem:[%s7 + $0x188] sm:$0xff]
        %v1885 = vld [vmem:[%s7 + $0x190] sm:$0xff]
        %v1886 = vld [vmem:[%s7 + $0x198] sm:$0xff]
        %v1887 = vld [vmem:[%s7 + $0x1a0] sm:$0xff]
        %v1888 = vld [vmem:[%s7 + $0x1a8] sm:$0xff]
        %v1889 = vld [vmem:[%s7 + $0x1b0] sm:$0xff]
        %v1890 = vld [vmem:[%s7 + $0x1b8] sm:$0xff]
        %v1891 = vld [vmem:[%s7 + $0x1c0] sm:$0xff]
        %v1892 = vld [vmem:[%s7 + $0x1c8] sm:$0xff]
        %v1893 = vld [vmem:[%s7 + $0x1d0] sm:$0xff]
        %v1894 = vld [vmem:[%s7 + $0x1d8] sm:$0xff]
        %v1895 = vld [vmem:[%s7 + $0x1e0] sm:$0xff]
        %v1896 = vld [vmem:[%s7 + $0x1e8] sm:$0xff]
        %v1897 = vld [vmem:[%s7 + $0x1f0] sm:$0xff]
        %v1898 = vld [vmem:[%s7 + $0x1f8] sm:$0xff]
        %v1963 = vunpack.c.l.b16 %v1835
        %v1964 = vunpack.c.h.b16 %v1835
        %v1965 = vunpack.c.l.b16 %v1836
        %v1966 = vunpack.c.h.b16 %v1836
        %v1967 = vunpack.c.l.b16 %v1837
        %v1968 = vunpack.c.h.b16 %v1837
        %v1969 = vunpack.c.l.b16 %v1838
        %v1970 = vunpack.c.h.b16 %v1838
        %v1971 = vunpack.c.l.b16 %v1839
        %v1972 = vunpack.c.h.b16 %v1839
        %v1973 = vunpack.c.l.b16 %v1840
        %v1974 = vunpack.c.h.b16 %v1840
        %v1975 = vunpack.c.l.b16 %v1841
        %v1976 = vunpack.c.h.b16 %v1841
        %v1977 = vunpack.c.l.b16 %v1842
        %v1978 = vunpack.c.h.b16 %v1842
        %v1979 = vunpack.c.l.b16 %v1843
        %v1980 = vunpack.c.h.b16 %v1843
        %v1981 = vunpack.c.l.b16 %v1844
        %v1982 = vunpack.c.h.b16 %v1844
        %v1983 = vunpack.c.l.b16 %v1845
        %v1984 = vunpack.c.h.b16 %v1845
        %v1985 = vunpack.c.l.b16 %v1846
        %v1986 = vunpack.c.h.b16 %v1846
        %v1987 = vunpack.c.l.b16 %v1847
        %v1988 = vunpack.c.h.b16 %v1847
        %v1989 = vunpack.c.l.b16 %v1848
        %v1990 = vunpack.c.h.b16 %v1848
        %v1991 = vunpack.c.l.b16 %v1849
        %v1992 = vunpack.c.h.b16 %v1849
        %v1993 = vunpack.c.l.b16 %v1850
        %v1994 = vunpack.c.h.b16 %v1850
        %v1995 = vunpack.c.l.b16 %v1851
        %v1996 = vunpack.c.h.b16 %v1851
        %v1997 = vunpack.c.l.b16 %v1852
        %v1998 = vunpack.c.h.b16 %v1852
        %v1999 = vunpack.c.l.b16 %v1853
        %v2000 = vunpack.c.h.b16 %v1853
        %v2001 = vunpack.c.l.b16 %v1854
        %v2002 = vunpack.c.h.b16 %v1854
        %v2003 = vunpack.c.l.b16 %v1855
        %v2004 = vunpack.c.h.b16 %v1855
        %v2005 = vunpack.c.l.b16 %v1856
        %v2006 = vunpack.c.h.b16 %v1856
        %v2007 = vunpack.c.l.b16 %v1857
        %v2008 = vunpack.c.h.b16 %v1857
        %v2009 = vunpack.c.l.b16 %v1858
        %v2010 = vunpack.c.h.b16 %v1858
        %v2011 = vunpack.c.l.b16 %v1859
        %v2012 = vunpack.c.h.b16 %v1859
        %v2013 = vunpack.c.l.b16 %v1860
        %v2014 = vunpack.c.h.b16 %v1860
        %v2015 = vunpack.c.l.b16 %v1861
        %v2016 = vunpack.c.h.b16 %v1861
        %v2017 = vunpack.c.l.b16 %v1862
        %v2018 = vunpack.c.h.b16 %v1862
        %v2019 = vunpack.c.l.b16 %v1863
        %v2020 = vunpack.c.h.b16 %v1863
        %v2021 = vunpack.c.l.b16 %v1864
        %v2022 = vunpack.c.h.b16 %v1864
        %v2023 = vunpack.c.l.b16 %v1865
        %v2024 = vunpack.c.h.b16 %v1865
        %v2025 = vunpack.c.l.b16 %v1866
        %v2026 = vunpack.c.h.b16 %v1866
        %v2027 = vunpack.c.l.b16 %v1867
        %v2028 = vunpack.c.h.b16 %v1867
        %v2029 = vunpack.c.l.b16 %v1868
        %v2030 = vunpack.c.h.b16 %v1868
        %v2031 = vunpack.c.l.b16 %v1869
        %v2032 = vunpack.c.h.b16 %v1869
        %v2033 = vunpack.c.l.b16 %v1870
        %v2034 = vunpack.c.h.b16 %v1870
        %v2035 = vunpack.c.l.b16 %v1871
        %v2036 = vunpack.c.h.b16 %v1871
        %v2037 = vunpack.c.l.b16 %v1872
        %v2038 = vunpack.c.h.b16 %v1872
        %v2039 = vunpack.c.l.b16 %v1873
        %v2040 = vunpack.c.h.b16 %v1873
        %v2041 = vunpack.c.l.b16 %v1874
        %v2042 = vunpack.c.h.b16 %v1874
        %v2043 = vunpack.c.l.b16 %v1875
        %v2044 = vunpack.c.h.b16 %v1875
        %v2045 = vunpack.c.l.b16 %v1876
        %v2046 = vunpack.c.h.b16 %v1876
        %v2047 = vunpack.c.l.b16 %v1877
        %v2048 = vunpack.c.h.b16 %v1877
        %v2049 = vunpack.c.l.b16 %v1878
        %v2050 = vunpack.c.h.b16 %v1878
        %v2051 = vunpack.c.l.b16 %v1879
        %v2052 = vunpack.c.h.b16 %v1879
        %v2053 = vunpack.c.l.b16 %v1880
        %v2054 = vunpack.c.h.b16 %v1880
        %v2055 = vunpack.c.l.b16 %v1881
        %v2056 = vunpack.c.h.b16 %v1881
        %v2057 = vunpack.c.l.b16 %v1882
        %v2058 = vunpack.c.h.b16 %v1882
        %v2059 = vunpack.c.l.b16 %v1883
        %v2060 = vunpack.c.h.b16 %v1883
        %v2061 = vunpack.c.l.b16 %v1884
        %v2062 = vunpack.c.h.b16 %v1884
        %v2063 = vunpack.c.l.b16 %v1885
        %v2064 = vunpack.c.h.b16 %v1885
        %v2065 = vunpack.c.l.b16 %v1886
        %v2066 = vunpack.c.h.b16 %v1886
        %v2067 = vunpack.c.l.b16 %v1887
        %v2068 = vunpack.c.h.b16 %v1887
        %v2069 = vunpack.c.l.b16 %v1888
        %v2070 = vunpack.c.h.b16 %v1888
        %v2071 = vunpack.c.l.b16 %v1889
        %v2072 = vunpack.c.h.b16 %v1889
        %v2073 = vunpack.c.l.b16 %v1890
        %v2074 = vunpack.c.h.b16 %v1890
        %v2075 = vunpack.c.l.b16 %v1891
        %v2076 = vunpack.c.h.b16 %v1891
        %v2077 = vunpack.c.l.b16 %v1892
        %v2078 = vunpack.c.h.b16 %v1892
        %v2079 = vunpack.c.l.b16 %v1893
        %v2080 = vunpack.c.h.b16 %v1893
        %v2081 = vunpack.c.l.b16 %v1894
        %v2082 = vunpack.c.h.b16 %v1894
        %v2083 = vunpack.c.l.b16 %v1895
        %v2084 = vunpack.c.h.b16 %v1895
        %v2085 = vunpack.c.l.b16 %v1896
        %v2086 = vunpack.c.h.b16 %v1896
        %v2087 = vunpack.c.l.b16 %v1897
        %v2088 = vunpack.c.h.b16 %v1897
        %v2089 = vunpack.c.l.b16 %v1898
        %v2090 = vunpack.c.h.b16 %v1898
        %v2091 = vpack.c.b16 %v1971, %v1963
        %v2092 = vpack.c.b16 %v1972, %v1964
        %v2093 = vpack.c.b16 %v1973, %v1965
        %v2094 = vpack.c.b16 %v1974, %v1966
        %v2095 = vpack.c.b16 %v1975, %v1967
        %v2096 = vpack.c.b16 %v1976, %v1968
        %v2097 = vpack.c.b16 %v1977, %v1969
        %v2098 = vpack.c.b16 %v1978, %v1970
        %v2099 = vpack.c.b16 %v1987, %v1979
        %v2100 = vpack.c.b16 %v1988, %v1980
        %v2101 = vpack.c.b16 %v1989, %v1981
        %v2102 = vpack.c.b16 %v1990, %v1982
        %v2103 = vpack.c.b16 %v1991, %v1983
        %v2104 = vpack.c.b16 %v1992, %v1984
        %v2105 = vpack.c.b16 %v1993, %v1985
        %v2106 = vpack.c.b16 %v1994, %v1986
        %v2107 = vpack.c.b16 %v2003, %v1995
        %v2108 = vpack.c.b16 %v2004, %v1996
        %v2109 = vpack.c.b16 %v2005, %v1997
        %v2110 = vpack.c.b16 %v2006, %v1998
        %v2111 = vpack.c.b16 %v2007, %v1999
        %v2112 = vpack.c.b16 %v2008, %v2000
        %v2113 = vpack.c.b16 %v2009, %v2001
        %v2114 = vpack.c.b16 %v2010, %v2002
        %v2115 = vpack.c.b16 %v2019, %v2011
        %v2116 = vpack.c.b16 %v2020, %v2012
        %v2117 = vpack.c.b16 %v2021, %v2013
        %v2118 = vpack.c.b16 %v2022, %v2014
        %v2119 = vpack.c.b16 %v2023, %v2015
        %v2120 = vpack.c.b16 %v2024, %v2016
        %v2121 = vpack.c.b16 %v2025, %v2017
        %v2122 = vpack.c.b16 %v2026, %v2018
        %v2123 = vpack.c.b16 %v2035, %v2027
        %v2124 = vpack.c.b16 %v2036, %v2028
        %v2125 = vpack.c.b16 %v2037, %v2029
        %v2126 = vpack.c.b16 %v2038, %v2030
        %v2127 = vpack.c.b16 %v2039, %v2031
        %v2128 = vpack.c.b16 %v2040, %v2032
        %v2129 = vpack.c.b16 %v2041, %v2033
        %v2130 = vpack.c.b16 %v2042, %v2034
        %v2131 = vpack.c.b16 %v2051, %v2043
        %v2132 = vpack.c.b16 %v2052, %v2044
        %v2133 = vpack.c.b16 %v2053, %v2045
        %v2134 = vpack.c.b16 %v2054, %v2046
        %v2135 = vpack.c.b16 %v2055, %v2047
        %v2136 = vpack.c.b16 %v2056, %v2048
        %v2137 = vpack.c.b16 %v2057, %v2049
        %v2138 = vpack.c.b16 %v2058, %v2050
        %v2139 = vpack.c.b16 %v2067, %v2059
        %v2140 = vpack.c.b16 %v2068, %v2060
        %v2141 = vpack.c.b16 %v2069, %v2061
        %v2142 = vpack.c.b16 %v2070, %v2062
        %v2143 = vpack.c.b16 %v2071, %v2063
        %v2144 = vpack.c.b16 %v2072, %v2064
        %v2145 = vpack.c.b16 %v2073, %v2065
        %v2146 = vpack.c.b16 %v2074, %v2066
        %v2147 = vpack.c.b16 %v2083, %v2075
        %v2148 = vpack.c.b16 %v2084, %v2076
        %v2149 = vpack.c.b16 %v2085, %v2077
        %v2150 = vpack.c.b16 %v2086, %v2078
        %v2151 = vpack.c.b16 %v2087, %v2079
        %v2152 = vpack.c.b16 %v2088, %v2080
        %v2153 = vpack.c.b16 %v2089, %v2081
        %v2154 = vpack.c.b16 %v2090, %v2082
        %2219 = vmatprep.subr.bf16.mxu0 %v2092
        %2220 = vmatpush1.bf16.msra.mxu0 %v2091
        %2221 = vmatprep.subr.bf16.mxu0 %v2100
        %2222 = vmatpush1.bf16.msra.mxu0 %v2099
        %2223 = vmatprep.subr.bf16.mxu0 %v2108
        %2224 = vmatpush1.bf16.msra.mxu0 %v2107
        %2225 = vmatprep.subr.bf16.mxu0 %v2116
        %2226 = vmatpush1.bf16.msra.mxu0 %v2115
        %2227 = vmatprep.subr.bf16.mxu0 %v2124
        %2228 = vmatpush1.bf16.msra.mxu0 %v2123
        %2229 = vmatprep.subr.bf16.mxu0 %v2132
        %2230 = vmatpush1.bf16.msra.mxu0 %v2131
        %2231 = vmatprep.subr.bf16.mxu0 %v2140
        %2232 = vmatpush1.bf16.msra.mxu0 %v2139
        %2233 = vmatprep.subr.bf16.mxu0 %v2148
        %2234 = vmatpush1.bf16.msra.mxu0 %v2147
        %2235 = vmatprep.subr.bf16.mxu0 0
        %2236 = vmatpush1.bf16.msra.mxu0 0
        %2237 = vmatprep.subr.bf16.mxu0 0
        %2238 = vmatpush1.bf16.msra.mxu0 0
        %2239 = vmatprep.subr.bf16.mxu0 0
        %2240 = vmatpush1.bf16.msra.mxu0 0
        %2241 = vmatprep.subr.bf16.mxu0 0
        %2242 = vmatpush1.bf16.msra.mxu0 0
        %2243 = vmatprep.subr.bf16.mxu0 0
        %2244 = vmatpush1.bf16.msra.mxu0 0
        %2245 = vmatprep.subr.bf16.mxu0 0
        %2246 = vmatpush1.bf16.msra.mxu0 0
        %2247 = vmatprep.subr.bf16.mxu0 0
        %2248 = vmatpush1.bf16.msra.mxu0 0
        %2249 = vmatprep.subr.bf16.mxu0 0
        %2250 = vmatpush1.bf16.msra.mxu0 0
        %2251 = vmatprep.mubr.bf16.mxu0 0
        %2252 = vmatmul.mubr.bf16.gmra.mrb[0].mxu0 %v1831
        %v2253 = vpop.f32.mrb[0].mxu0
        %v2254 = vadd.f32 0.0, %v2253
        %v2255 = vpop.f32.mrb[0].mxu0
        %v2256 = vadd.f32 0.0, %v2255
        %v2257 = vpop.f32.mrb[0].mxu0
        %v2258 = vadd.f32 0.0, %v2257
        %v2259 = vpop.f32.mrb[0].mxu0
        %v2260 = vadd.f32 0.0, %v2259
        %2261 = vmatprep.mubr.bf16.mxu0 0
        %2262 = vmatmul.mubr.bf16.gmra.mrb[0].mxu0 %v1832
        %v2263 = vpop.f32.mrb[0].mxu0
        %v2264 = vadd.f32 0.0, %v2263
        %v2265 = vpop.f32.mrb[0].mxu0
        %v2266 = vadd.f32 0.0, %v2265
        %v2267 = vpop.f32.mrb[0].mxu0
        %v2268 = vadd.f32 0.0, %v2267
        %v2269 = vpop.f32.mrb[0].mxu0
        %v2270 = vadd.f32 0.0, %v2269
        %2271 = vmatprep.mubr.bf16.mxu0 0
        %2272 = vmatmul.mubr.bf16.gmra.mrb[0].mxu0 %v1833
        %v2273 = vpop.f32.mrb[0].mxu0
        %v2274 = vadd.f32 0.0, %v2273
        %v2275 = vpop.f32.mrb[0].mxu0
        %v2276 = vadd.f32 0.0, %v2275
        %v2277 = vpop.f32.mrb[0].mxu0
        %v2278 = vadd.f32 0.0, %v2277
        %v2279 = vpop.f32.mrb[0].mxu0
        %v2280 = vadd.f32 0.0, %v2279
        %2281 = vmatprep.mubr.bf16.mxu0 0
        %2282 = vmatmul.mubr.bf16.gmra.mrb[0].mxu0 %v1834
        %v2283 = vpop.f32.mrb[0].mxu0
        %v2284 = vadd.f32 0.0, %v2283
        %v2285 = vpop.f32.mrb[0].mxu0
        %v2286 = vadd.f32 0.0, %v2285
        %v2287 = vpop.f32.mrb[0].mxu0
        %v2288 = vadd.f32 0.0, %v2287
        %v2289 = vpop.f32.mrb[0].mxu0
        %v2290 = vadd.f32 0.0, %v2289
        %2291 = vdwg.mxu0
        %2292 = vmatprep.subr.bf16.mxu0 %v2094
        %2293 = vmatpush1.bf16.msra.mxu0 %v2093
        %2294 = vmatprep.subr.bf16.mxu0 %v2102
        %2295 = vmatpush1.bf16.msra.mxu0 %v2101
        %2296 = vmatprep.subr.bf16.mxu0 %v2110
        %2297 = vmatpush1.bf16.msra.mxu0 %v2109
        %2298 = vmatprep.subr.bf16.mxu0 %v2118
        %2299 = vmatpush1.bf16.msra.mxu0 %v2117
        %2300 = vmatprep.subr.bf16.mxu0 %v2126
        %2301 = vmatpush1.bf16.msra.mxu0 %v2125
        %2302 = vmatprep.subr.bf16.mxu0 %v2134
        %2303 = vmatpush1.bf16.msra.mxu0 %v2133
        %2304 = vmatprep.subr.bf16.mxu0 %v2142
        %2305 = vmatpush1.bf16.msra.mxu0 %v2141
        %2306 = vmatprep.subr.bf16.mxu0 %v2150
        %2307 = vmatpush1.bf16.msra.mxu0 %v2149
        %2308 = vmatprep.subr.bf16.mxu0 0
        %2309 = vmatpush1.bf16.msra.mxu0 0
        %2310 = vmatprep.subr.bf16.mxu0 0
        %2311 = vmatpush1.bf16.msra.mxu0 0
        %2312 = vmatprep.subr.bf16.mxu0 0
        %2313 = vmatpush1.bf16.msra.mxu0 0
        %2314 = vmatprep.subr.bf16.mxu0 0
        %2315 = vmatpush1.bf16.msra.mxu0 0
        %2316 = vmatprep.subr.bf16.mxu0 0
        %2317 = vmatpush1.bf16.msra.mxu0 0
        %2318 = vmatprep.subr.bf16.mxu0 0
        %2319 = vmatpush1.bf16.msra.mxu0 0
        %2320 = vmatprep.subr.bf16.mxu0 0
        %2321 = vmatpush1.bf16.msra.mxu0 0
        %2322 = vmatprep.subr.bf16.mxu0 0
        %2323 = vmatpush1.bf16.msra.mxu0 0
        %2324 = vmatprep.mubr.bf16.mxu0 0
        %2325 = vmatmul.mubr.bf16.gmra.mrb[0].mxu0 %v1831
        %v2326 = vpop.f32.mrb[0].mxu0
        %v2327 = vadd.f32 0.0, %v2326
        %v2328 = vpop.f32.mrb[0].mxu0
        %v2329 = vadd.f32 0.0, %v2328
        %v2330 = vpop.f32.mrb[0].mxu0
        %v2331 = vadd.f32 0.0, %v2330
        %v2332 = vpop.f32.mrb[0].mxu0
        %v2333 = vadd.f32 0.0, %v2332
        %2334 = vmatprep.mubr.bf16.mxu0 0
        %2335 = vmatmul.mubr.bf16.gmra.mrb[0].mxu0 %v1832
        %v2336 = vpop.f32.mrb[0].mxu0
        %v2337 = vadd.f32 0.0, %v2336
        %v2338 = vpop.f32.mrb[0].mxu0
        %v2339 = vadd.f32 0.0, %v2338
        %v2340 = vpop.f32.mrb[0].mxu0
        %v2341 = vadd.f32 0.0, %v2340
        %v2342 = vpop.f32.mrb[0].mxu0
        %v2343 = vadd.f32 0.0, %v2342
        %2344 = vmatprep.mubr.bf16.mxu0 0
        %2345 = vmatmul.mubr.bf16.gmra.mrb[0].mxu0 %v1833
        %v2346 = vpop.f32.mrb[0].mxu0
        %v2347 = vadd.f32 0.0, %v2346
        %v2348 = vpop.f32.mrb[0].mxu0
        %v2349 = vadd.f32 0.0, %v2348
        %v2350 = vpop.f32.mrb[0].mxu0
        %v2351 = vadd.f32 0.0, %v2350
        %v2352 = vpop.f32.mrb[0].mxu0
        %v2353 = vadd.f32 0.0, %v2352
        %2354 = vmatprep.mubr.bf16.mxu0 0
        %2355 = vmatmul.mubr.bf16.gmra.mrb[0].mxu0 %v1834
        %v2356 = vpop.f32.mrb[0].mxu0
        %v2357 = vadd.f32 0.0, %v2356
        %v2358 = vpop.f32.mrb[0].mxu0
        %v2359 = vadd.f32 0.0, %v2358
        %v2360 = vpop.f32.mrb[0].mxu0
        %v2361 = vadd.f32 0.0, %v2360
        %v2362 = vpop.f32.mrb[0].mxu0
        %v2363 = vadd.f32 0.0, %v2362
        %2364 = vdwg.mxu0
        %2365 = vmatprep.subr.bf16.mxu0 %v2096
        %2366 = vmatpush1.bf16.msra.mxu0 %v2095
        %2367 = vmatprep.subr.bf16.mxu0 %v2104
        %2368 = vmatpush1.bf16.msra.mxu0 %v2103
        %2369 = vmatprep.subr.bf16.mxu0 %v2112
        %2370 = vmatpush1.bf16.msra.mxu0 %v2111
        %2371 = vmatprep.subr.bf16.mxu0 %v2120
        %2372 = vmatpush1.bf16.msra.mxu0 %v2119
        %2373 = vmatprep.subr.bf16.mxu0 %v2128
        %2374 = vmatpush1.bf16.msra.mxu0 %v2127
        %2375 = vmatprep.subr.bf16.mxu0 %v2136
        %2376 = vmatpush1.bf16.msra.mxu0 %v2135
        %2377 = vmatprep.subr.bf16.mxu0 %v2144
        %2378 = vmatpush1.bf16.msra.mxu0 %v2143
        %2379 = vmatprep.subr.bf16.mxu0 %v2152
        %2380 = vmatpush1.bf16.msra.mxu0 %v2151
        %2381 = vmatprep.subr.bf16.mxu0 0
        %2382 = vmatpush1.bf16.msra.mxu0 0
        %2383 = vmatprep.subr.bf16.mxu0 0
        %2384 = vmatpush1.bf16.msra.mxu0 0
        %2385 = vmatprep.subr.bf16.mxu0 0
        %2386 = vmatpush1.bf16.msra.mxu0 0
        %2387 = vmatprep.subr.bf16.mxu0 0
        %2388 = vmatpush1.bf16.msra.mxu0 0
        %2389 = vmatprep.subr.bf16.mxu0 0
        %2390 = vmatpush1.bf16.msra.mxu0 0
        %2391 = vmatprep.subr.bf16.mxu0 0
        %2392 = vmatpush1.bf16.msra.mxu0 0
        %2393 = vmatprep.subr.bf16.mxu0 0
        %2394 = vmatpush1.bf16.msra.mxu0 0
        %2395 = vmatprep.subr.bf16.mxu0 0
        %2396 = vmatpush1.bf16.msra.mxu0 0
        %2397 = vmatprep.mubr.bf16.mxu0 0
        %2398 = vmatmul.mubr.bf16.gmra.mrb[0].mxu0 %v1831
        %v2399 = vpop.f32.mrb[0].mxu0
        %v2400 = vadd.f32 0.0, %v2399
        %v2401 = vpop.f32.mrb[0].mxu0
        %v2402 = vadd.f32 0.0, %v2401
        %v2403 = vpop.f32.mrb[0].mxu0
        %v2404 = vadd.f32 0.0, %v2403
        %v2405 = vpop.f32.mrb[0].mxu0
        %v2406 = vadd.f32 0.0, %v2405
        %2407 = vmatprep.mubr.bf16.mxu0 0
        %2408 = vmatmul.mubr.bf16.gmra.mrb[0].mxu0 %v1832
        %v2409 = vpop.f32.mrb[0].mxu0
        %v2410 = vadd.f32 0.0, %v2409
        %v2411 = vpop.f32.mrb[0].mxu0
        %v2412 = vadd.f32 0.0, %v2411
        %v2413 = vpop.f32.mrb[0].mxu0
        %v2414 = vadd.f32 0.0, %v2413
        %v2415 = vpop.f32.mrb[0].mxu0
        %v2416 = vadd.f32 0.0, %v2415
        %2417 = vmatprep.mubr.bf16.mxu0 0
        %2418 = vmatmul.mubr.bf16.gmra.mrb[0].mxu0 %v1833
        %v2419 = vpop.f32.mrb[0].mxu0
        %v2420 = vadd.f32 0.0, %v2419
        %v2421 = vpop.f32.mrb[0].mxu0
        %v2422 = vadd.f32 0.0, %v2421
        %v2423 = vpop.f32.mrb[0].mxu0
        %v2424 = vadd.f32 0.0, %v2423
        %v2425 = vpop.f32.mrb[0].mxu0
        %v2426 = vadd.f32 0.0, %v2425
        %2427 = vmatprep.mubr.bf16.mxu0 0
        %2428 = vmatmul.mubr.bf16.gmra.mrb[0].mxu0 %v1834
        %v2429 = vpop.f32.mrb[0].mxu0
        %v2430 = vadd.f32 0.0, %v2429
        %v2431 = vpop.f32.mrb[0].mxu0
        %v2432 = vadd.f32 0.0, %v2431
        %v2433 = vpop.f32.mrb[0].mxu0
        %v2434 = vadd.f32 0.0, %v2433
        %v2435 = vpop.f32.mrb[0].mxu0
        %v2436 = vadd.f32 0.0, %v2435
        %2437 = vdwg.mxu0
        %2438 = vmatprep.subr.bf16.mxu0 %v2098
        %2439 = vmatpush1.bf16.msra.mxu0 %v2097
        %2440 = vmatprep.subr.bf16.mxu0 %v2106
        %2441 = vmatpush1.bf16.msra.mxu0 %v2105
        %2442 = vmatprep.subr.bf16.mxu0 %v2114
        %2443 = vmatpush1.bf16.msra.mxu0 %v2113
        %2444 = vmatprep.subr.bf16.mxu0 %v2122
        %2445 = vmatpush1.bf16.msra.mxu0 %v2121
        %2446 = vmatprep.subr.bf16.mxu0 %v2130
        %2447 = vmatpush1.bf16.msra.mxu0 %v2129
        %2448 = vmatprep.subr.bf16.mxu0 %v2138
        %2449 = vmatpush1.bf16.msra.mxu0 %v2137
        %2450 = vmatprep.subr.bf16.mxu0 %v2146
        %2451 = vmatpush1.bf16.msra.mxu0 %v2145
        %2452 = vmatprep.subr.bf16.mxu0 %v2154
        %2453 = vmatpush1.bf16.msra.mxu0 %v2153
        %2454 = vmatprep.subr.bf16.mxu0 0
        %2455 = vmatpush1.bf16.msra.mxu0 0
        %2456 = vmatprep.subr.bf16.mxu0 0
        %2457 = vmatpush1.bf16.msra.mxu0 0
        %2458 = vmatprep.subr.bf16.mxu0 0
        %2459 = vmatpush1.bf16.msra.mxu0 0
        %2460 = vmatprep.subr.bf16.mxu0 0
        %2461 = vmatpush1.bf16.msra.mxu0 0
        %2462 = vmatprep.subr.bf16.mxu0 0
        %2463 = vmatpush1.bf16.msra.mxu0 0
        %2464 = vmatprep.subr.bf16.mxu0 0
        %2465 = vmatpush1.bf16.msra.mxu0 0
        %2466 = vmatprep.subr.bf16.mxu0 0
        %2467 = vmatpush1.bf16.msra.mxu0 0
        %2468 = vmatprep.subr.bf16.mxu0 0
        %2469 = vmatpush1.bf16.msra.mxu0 0
        %2470 = vmatprep.mubr.bf16.mxu0 0
        %2471 = vmatmul.mubr.bf16.gmra.mrb[0].mxu0 %v1831
        %v2472 = vpop.f32.mrb[0].mxu0
        %v2473 = vadd.f32 0.0, %v2472
        %v2474 = vpop.f32.mrb[0].mxu0
        %v2475 = vadd.f32 0.0, %v2474
        %v2476 = vpop.f32.mrb[0].mxu0
        %v2477 = vadd.f32 0.0, %v2476
        %v2478 = vpop.f32.mrb[0].mxu0
        %v2479 = vadd.f32 0.0, %v2478
        %2480 = vmatprep.mubr.bf16.mxu0 0
        %2481 = vmatmul.mubr.bf16.gmra.mrb[0].mxu0 %v1832
        %v2482 = vpop.f32.mrb[0].mxu0
        %v2483 = vadd.f32 0.0, %v2482
        %v2484 = vpop.f32.mrb[0].mxu0
        %v2485 = vadd.f32 0.0, %v2484
        %v2486 = vpop.f32.mrb[0].mxu0
        %v2487 = vadd.f32 0.0, %v2486
        %v2488 = vpop.f32.mrb[0].mxu0
        %v2489 = vadd.f32 0.0, %v2488
        %2490 = vmatprep.mubr.bf16.mxu0 0
        %2491 = vmatmul.mubr.bf16.gmra.mrb[0].mxu0 %v1833
        %v2492 = vpop.f32.mrb[0].mxu0
        %v2493 = vadd.f32 0.0, %v2492
        %v2494 = vpop.f32.mrb[0].mxu0
        %v2495 = vadd.f32 0.0, %v2494
        %v2496 = vpop.f32.mrb[0].mxu0
        %v2497 = vadd.f32 0.0, %v2496
        %v2498 = vpop.f32.mrb[0].mxu0
        %v2499 = vadd.f32 0.0, %v2498
        %2500 = vmatprep.mubr.bf16.mxu0 0
        %2501 = vmatmul.mubr.bf16.gmra.mrb[0].mxu0 %v1834
        %v2502 = vpop.f32.mrb[0].mxu0
        %v2503 = vadd.f32 0.0, %v2502
        %v2504 = vpop.f32.mrb[0].mxu0
        %v2505 = vadd.f32 0.0, %v2504
        %v2506 = vpop.f32.mrb[0].mxu0
        %v2507 = vadd.f32 0.0, %v2506
        %v2508 = vpop.f32.mrb[0].mxu0
        %v2509 = vadd.f32 0.0, %v2508
        %2510 = vdwg.mxu0
        %v2511 = vxor.u32 %v2400, 2147483648
        %v2512 = vxor.u32 %v2402, 2147483648
        %v2513 = vxor.u32 %v2473, 2147483648
        %v2514 = vxor.u32 %v2475, 2147483648
        %v2515 = vxor.u32 %v2404, 2147483648
        %v2516 = vxor.u32 %v2406, 2147483648
        %v2517 = vxor.u32 %v2477, 2147483648
        %v2518 = vxor.u32 %v2479, 2147483648
        %v2519 = vxor.u32 %v2410, 2147483648
        %v2520 = vxor.u32 %v2412, 2147483648
        %v2521 = vxor.u32 %v2483, 2147483648
        %v2522 = vxor.u32 %v2485, 2147483648
        %v2523 = vxor.u32 %v2414, 2147483648
        %v2524 = vxor.u32 %v2416, 2147483648
        %v2525 = vxor.u32 %v2487, 2147483648
        %v2526 = vxor.u32 %v2489, 2147483648
        %v2527 = vxor.u32 %v2420, 2147483648
        %v2528 = vxor.u32 %v2422, 2147483648
        %v2529 = vxor.u32 %v2493, 2147483648
        %v2530 = vxor.u32 %v2495, 2147483648
        %v2531 = vxor.u32 %v2424, 2147483648
        %v2532 = vxor.u32 %v2426, 2147483648
        %v2533 = vxor.u32 %v2497, 2147483648
        %v2534 = vxor.u32 %v2499, 2147483648
        %v2535 = vxor.u32 %v2430, 2147483648
        %v2536 = vxor.u32 %v2432, 2147483648
        %v2537 = vxor.u32 %v2503, 2147483648
        %v2538 = vxor.u32 %v2505, 2147483648
        %v2539 = vxor.u32 %v2434, 2147483648
        %v2540 = vxor.u32 %v2436, 2147483648
        %v2541 = vxor.u32 %v2507, 2147483648
        %v2542 = vxor.u32 %v2509, 2147483648
        %v2543 = vmul.f32 %v2511, 1.442695
        %v2544 = vpow.pop %v2543
        %v2545 = vmul.f32 %v2512, 1.442695
        %v2546 = vpow.pop %v2545
        %v2547 = vmul.f32 %v2513, 1.442695
        %v2548 = vpow.pop %v2547
        %v2549 = vmul.f32 %v2514, 1.442695
        %v2550 = vpow.pop %v2549
        %v2551 = vmul.f32 %v2515, 1.442695
        %v2552 = vpow.pop %v2551
        %v2553 = vmul.f32 %v2516, 1.442695
        %v2554 = vpow.pop %v2553
        %v2555 = vmul.f32 %v2517, 1.442695
        %v2556 = vpow.pop %v2555
        %v2557 = vmul.f32 %v2518, 1.442695
        %v2558 = vpow.pop %v2557
        %v2559 = vmul.f32 %v2519, 1.442695
        %v2560 = vpow.pop %v2559
        %v2561 = vmul.f32 %v2520, 1.442695
        %v2562 = vpow.pop %v2561
        %v2563 = vmul.f32 %v2521, 1.442695
        %v2564 = vpow.pop %v2563
        %v2565 = vmul.f32 %v2522, 1.442695
        %v2566 = vpow.pop %v2565
        %v2567 = vmul.f32 %v2523, 1.442695
        %v2568 = vpow.pop %v2567
        %v2569 = vmul.f32 %v2524, 1.442695
        %v2570 = vpow.pop %v2569
        %v2571 = vmul.f32 %v2525, 1.442695
        %v2572 = vpow.pop %v2571
        %v2573 = vmul.f32 %v2526, 1.442695
        %v2574 = vpow.pop %v2573
        %v2575 = vmul.f32 %v2527, 1.442695
        %v2576 = vpow.pop %v2575
        %v2577 = vmul.f32 %v2528, 1.442695
        %v2578 = vpow.pop %v2577
        %v2579 = vmul.f32 %v2529, 1.442695
        %v2580 = vpow.pop %v2579
        %v2581 = vmul.f32 %v2530, 1.442695
        %v2582 = vpow.pop %v2581
        %v2583 = vmul.f32 %v2531, 1.442695
        %v2584 = vpow.pop %v2583
        %v2585 = vmul.f32 %v2532, 1.442695
        %v2586 = vpow.pop %v2585
        %v2587 = vmul.f32 %v2533, 1.442695
        %v2588 = vpow.pop %v2587
        %v2589 = vmul.f32 %v2534, 1.442695
        %v2590 = vpow.pop %v2589
        %v2591 = vmul.f32 %v2535, 1.442695
        %v2592 = vpow.pop %v2591
        %v2593 = vmul.f32 %v2536, 1.442695
        %v2594 = vpow.pop %v2593
        %v2595 = vmul.f32 %v2537, 1.442695
        %v2596 = vpow.pop %v2595
        %v2597 = vmul.f32 %v2538, 1.442695
        %v2598 = vpow.pop %v2597
        %v2599 = vmul.f32 %v2539, 1.442695
        %v2600 = vpow.pop %v2599
        %v2601 = vmul.f32 %v2540, 1.442695
        %v2602 = vpow.pop %v2601
        %v2603 = vmul.f32 %v2541, 1.442695
        %v2604 = vpow.pop %v2603
        %v2605 = vmul.f32 %v2542, 1.442695
        %v2606 = vpow.pop %v2605
        %v2607 = vadd.f32 %v2544, 1.0
        %v2608 = vadd.f32 %v2546, 1.0
        %v2609 = vadd.f32 %v2548, 1.0
        %v2610 = vadd.f32 %v2550, 1.0
        %v2611 = vadd.f32 %v2552, 1.0
        %v2612 = vadd.f32 %v2554, 1.0
        %v2613 = vadd.f32 %v2556, 1.0
        %v2614 = vadd.f32 %v2558, 1.0
        %v2615 = vadd.f32 %v2560, 1.0
        %v2616 = vadd.f32 %v2562, 1.0
        %v2617 = vadd.f32 %v2564, 1.0
        %v2618 = vadd.f32 %v2566, 1.0
        %v2619 = vadd.f32 %v2568, 1.0
        %v2620 = vadd.f32 %v2570, 1.0
        %v2621 = vadd.f32 %v2572, 1.0
        %v2622 = vadd.f32 %v2574, 1.0
        %v2623 = vadd.f32 %v2576, 1.0
        %v2624 = vadd.f32 %v2578, 1.0
        %v2625 = vadd.f32 %v2580, 1.0
        %v2626 = vadd.f32 %v2582, 1.0
        %v2627 = vadd.f32 %v2584, 1.0
        %v2628 = vadd.f32 %v2586, 1.0
        %v2629 = vadd.f32 %v2588, 1.0
        %v2630 = vadd.f32 %v2590, 1.0
        %v2631 = vadd.f32 %v2592, 1.0
        %v2632 = vadd.f32 %v2594, 1.0
        %v2633 = vadd.f32 %v2596, 1.0
        %v2634 = vadd.f32 %v2598, 1.0
        %v2635 = vadd.f32 %v2600, 1.0
        %v2636 = vadd.f32 %v2602, 1.0
        %v2637 = vadd.f32 %v2604, 1.0
        %v2638 = vadd.f32 %v2606, 1.0
        %v2639 = vrcp.pop %v2607
        %v2640 = vmul.f32 1.0, %v2639
        %v2641 = vrcp.pop %v2608
        %v2642 = vmul.f32 1.0, %v2641
        %v2643 = vrcp.pop %v2609
        %v2644 = vmul.f32 1.0, %v2643
        %v2645 = vrcp.pop %v2610
        %v2646 = vmul.f32 1.0, %v2645
        %v2647 = vrcp.pop %v2611
        %v2648 = vmul.f32 1.0, %v2647
        %v2649 = vrcp.pop %v2612
        %v2650 = vmul.f32 1.0, %v2649
        %v2651 = vrcp.pop %v2613
        %v2652 = vmul.f32 1.0, %v2651
        %v2653 = vrcp.pop %v2614
        %v2654 = vmul.f32 1.0, %v2653
        %v2655 = vrcp.pop %v2615
        %v2656 = vmul.f32 1.0, %v2655
        %v2657 = vrcp.pop %v2616
        %v2658 = vmul.f32 1.0, %v2657
        %v2659 = vrcp.pop %v2617
        %v2660 = vmul.f32 1.0, %v2659
        %v2661 = vrcp.pop %v2618
        %v2662 = vmul.f32 1.0, %v2661
        %v2663 = vrcp.pop %v2619
        %v2664 = vmul.f32 1.0, %v2663
        %v2665 = vrcp.pop %v2620
        %v2666 = vmul.f32 1.0, %v2665
        %v2667 = vrcp.pop %v2621
        %v2668 = vmul.f32 1.0, %v2667
        %v2669 = vrcp.pop %v2622
        %v2670 = vmul.f32 1.0, %v2669
        %v2671 = vrcp.pop %v2623
        %v2672 = vmul.f32 1.0, %v2671
        %v2673 = vrcp.pop %v2624
        %v2674 = vmul.f32 1.0, %v2673
        %v2675 = vrcp.pop %v2625
        %v2676 = vmul.f32 1.0, %v2675
        %v2677 = vrcp.pop %v2626
        %v2678 = vmul.f32 1.0, %v2677
        %v2679 = vrcp.pop %v2627
        %v2680 = vmul.f32 1.0, %v2679
        %v2681 = vrcp.pop %v2628
        %v2682 = vmul.f32 1.0, %v2681
        %v2683 = vrcp.pop %v2629
        %v2684 = vmul.f32 1.0, %v2683
        %v2685 = vrcp.pop %v2630
        %v2686 = vmul.f32 1.0, %v2685
        %v2687 = vrcp.pop %v2631
        %v2688 = vmul.f32 1.0, %v2687
        %v2689 = vrcp.pop %v2632
        %v2690 = vmul.f32 1.0, %v2689
        %v2691 = vrcp.pop %v2633
        %v2692 = vmul.f32 1.0, %v2691
        %v2693 = vrcp.pop %v2634
        %v2694 = vmul.f32 1.0, %v2693
        %v2695 = vrcp.pop %v2635
        %v2696 = vmul.f32 1.0, %v2695
        %v2697 = vrcp.pop %v2636
        %v2698 = vmul.f32 1.0, %v2697
        %v2699 = vrcp.pop %v2637
        %v2700 = vmul.f32 1.0, %v2699
        %v2701 = vrcp.pop %v2638
        %v2702 = vmul.f32 1.0, %v2701
        %v2703 = vmul.f32 %v2400, %v2640
        %v2704 = vmul.f32 %v2402, %v2642
        %v2705 = vmul.f32 %v2473, %v2644
        %v2706 = vmul.f32 %v2475, %v2646
        %v2707 = vmul.f32 %v2404, %v2648
        %v2708 = vmul.f32 %v2406, %v2650
        %v2709 = vmul.f32 %v2477, %v2652
        %v2710 = vmul.f32 %v2479, %v2654
        %v2711 = vmul.f32 %v2410, %v2656
        %v2712 = vmul.f32 %v2412, %v2658
        %v2713 = vmul.f32 %v2483, %v2660
        %v2714 = vmul.f32 %v2485, %v2662
        %v2715 = vmul.f32 %v2414, %v2664
        %v2716 = vmul.f32 %v2416, %v2666
        %v2717 = vmul.f32 %v2487, %v2668
        %v2718 = vmul.f32 %v2489, %v2670
        %v2719 = vmul.f32 %v2420, %v2672
        %v2720 = vmul.f32 %v2422, %v2674
        %v2721 = vmul.f32 %v2493, %v2676
        %v2722 = vmul.f32 %v2495, %v2678
        %v2723 = vmul.f32 %v2424, %v2680
        %v2724 = vmul.f32 %v2426, %v2682
        %v2725 = vmul.f32 %v2497, %v2684
        %v2726 = vmul.f32 %v2499, %v2686
        %v2727 = vmul.f32 %v2430, %v2688
        %v2728 = vmul.f32 %v2432, %v2690
        %v2729 = vmul.f32 %v2503, %v2692
        %v2730 = vmul.f32 %v2505, %v2694
        %v2731 = vmul.f32 %v2434, %v2696
        %v2732 = vmul.f32 %v2436, %v2698
        %v2733 = vmul.f32 %v2507, %v2700
        %v2734 = vmul.f32 %v2509, %v2702
        %v2735 = vmul.f32 %v2254, %v2703
        %v2736 = vmul.f32 %v2256, %v2704
        %v2737 = vmul.f32 %v2327, %v2705
        %v2738 = vmul.f32 %v2329, %v2706
        %v2739 = vmul.f32 %v2258, %v2707
        %v2740 = vmul.f32 %v2260, %v2708
        %v2741 = vmul.f32 %v2331, %v2709
        %v2742 = vmul.f32 %v2333, %v2710
        %v2743 = vmul.f32 %v2264, %v2711
        %v2744 = vmul.f32 %v2266, %v2712
        %v2745 = vmul.f32 %v2337, %v2713
        %v2746 = vmul.f32 %v2339, %v2714
        %v2747 = vmul.f32 %v2268, %v2715
        %v2748 = vmul.f32 %v2270, %v2716
        %v2749 = vmul.f32 %v2341, %v2717
        %v2750 = vmul.f32 %v2343, %v2718
        %v2751 = vmul.f32 %v2274, %v2719
        %v2752 = vmul.f32 %v2276, %v2720
        %v2753 = vmul.f32 %v2347, %v2721
        %v2754 = vmul.f32 %v2349, %v2722
        %v2755 = vmul.f32 %v2278, %v2723
        %v2756 = vmul.f32 %v2280, %v2724
        %v2757 = vmul.f32 %v2351, %v2725
        %v2758 = vmul.f32 %v2353, %v2726
        %v2759 = vmul.f32 %v2284, %v2727
        %v2760 = vmul.f32 %v2286, %v2728
        %v2761 = vmul.f32 %v2357, %v2729
        %v2762 = vmul.f32 %v2359, %v2730
        %v2763 = vmul.f32 %v2288, %v2731
        %v2764 = vmul.f32 %v2290, %v2732
        %v2765 = vmul.f32 %v2361, %v2733
        %v2766 = vmul.f32 %v2363, %v2734
        %v2767 = vld [vmem:[%s8] sm:$0xf]
        %v2768 = vadd.f32 %v2735, %v2736
        %v2769 = vadd.f32 %v2768, %v2737
        %v2770 = vadd.f32 %v2769, %v2738
        %2771 = vadd.xlane.f32.xlu0 %v2770
        %v2772 = vpop.xlane.xlu0 %2771
        %v2773 = vadd.f32 %v2739, %v2740
        %v2774 = vadd.f32 %v2773, %v2741
        %v2775 = vadd.f32 %v2774, %v2742
        %2776 = vadd.xlane.f32.xlu0 %v2775
        %v2777 = vpop.xlane.xlu0 %2776
        %v2778 = vadd.f32 %v2743, %v2744
        %v2779 = vadd.f32 %v2778, %v2745
        %v2780 = vadd.f32 %v2779, %v2746
        %2781 = vadd.xlane.f32.xlu0 %v2780
        %v2782 = vpop.xlane.xlu0 %2781
        %v2783 = vadd.f32 %v2747, %v2748
        %v2784 = vadd.f32 %v2783, %v2749
        %v2785 = vadd.f32 %v2784, %v2750
        %2786 = vadd.xlane.f32.xlu0 %v2785
        %v2787 = vpop.xlane.xlu0 %2786
        %v2788 = vadd.f32 %v2751, %v2752
        %v2789 = vadd.f32 %v2788, %v2753
        %v2790 = vadd.f32 %v2789, %v2754
        %2791 = vadd.xlane.f32.xlu0 %v2790
        %v2792 = vpop.xlane.xlu0 %2791
        %v2793 = vadd.f32 %v2755, %v2756
        %v2794 = vadd.f32 %v2793, %v2757
        %v2795 = vadd.f32 %v2794, %v2758
        %2796 = vadd.xlane.f32.xlu0 %v2795
        %v2797 = vpop.xlane.xlu0 %2796
        %v2798 = vadd.f32 %v2759, %v2760
        %v2799 = vadd.f32 %v2798, %v2761
        %v2800 = vadd.f32 %v2799, %v2762
        %2801 = vadd.xlane.f32.xlu0 %v2800
        %v2802 = vpop.xlane.xlu0 %2801
        %v2803 = vadd.f32 %v2763, %v2764
        %v2804 = vadd.f32 %v2803, %v2765
        %v2805 = vadd.f32 %v2804, %v2766
        %2806 = vadd.xlane.f32.xlu0 %v2805
        %v2807 = vpop.xlane.xlu0 %2806
        %v2808 = vrcp.pop 512.0
        %v2809 = vmul.f32 %v2772, %v2808
        %v2810 = vmul.f32 %v2777, %v2808
        %v2811 = vmul.f32 %v2782, %v2808
        %v2812 = vmul.f32 %v2787, %v2808
        %v2813 = vmul.f32 %v2792, %v2808
        %v2814 = vmul.f32 %v2797, %v2808
        %v2815 = vmul.f32 %v2802, %v2808
        %v2816 = vmul.f32 %v2807, %v2808
        %v2817 = vsub.f32 %v2735, %v2809
        %v2818 = vsub.f32 %v2736, %v2809
        %v2819 = vsub.f32 %v2737, %v2809
        %v2820 = vsub.f32 %v2738, %v2809
        %v2821 = vsub.f32 %v2739, %v2810
        %v2822 = vsub.f32 %v2740, %v2810
        %v2823 = vsub.f32 %v2741, %v2810
        %v2824 = vsub.f32 %v2742, %v2810
        %v2825 = vsub.f32 %v2743, %v2811
        %v2826 = vsub.f32 %v2744, %v2811
        %v2827 = vsub.f32 %v2745, %v2811
        %v2828 = vsub.f32 %v2746, %v2811
        %v2829 = vsub.f32 %v2747, %v2812
        %v2830 = vsub.f32 %v2748, %v2812
        %v2831 = vsub.f32 %v2749, %v2812
        %v2832 = vsub.f32 %v2750, %v2812
        %v2833 = vsub.f32 %v2751, %v2813
        %v2834 = vsub.f32 %v2752, %v2813
        %v2835 = vsub.f32 %v2753, %v2813
        %v2836 = vsub.f32 %v2754, %v2813
        %v2837 = vsub.f32 %v2755, %v2814
        %v2838 = vsub.f32 %v2756, %v2814
        %v2839 = vsub.f32 %v2757, %v2814
        %v2840 = vsub.f32 %v2758, %v2814
        %v2841 = vsub.f32 %v2759, %v2815
        %v2842 = vsub.f32 %v2760, %v2815
        %v2843 = vsub.f32 %v2761, %v2815
        %v2844 = vsub.f32 %v2762, %v2815
        %v2845 = vsub.f32 %v2763, %v2816
        %v2846 = vsub.f32 %v2764, %v2816
        %v2847 = vsub.f32 %v2765, %v2816
        %v2848 = vsub.f32 %v2766, %v2816
        %v2849 = vmul.f32 %v2817, %v2817
        %v2850 = vmul.f32 %v2818, %v2818
        %v2851 = vmul.f32 %v2819, %v2819
        %v2852 = vmul.f32 %v2820, %v2820
        %v2853 = vmul.f32 %v2821, %v2821
        %v2854 = vmul.f32 %v2822, %v2822
        %v2855 = vmul.f32 %v2823, %v2823
        %v2856 = vmul.f32 %v2824, %v2824
        %v2857 = vmul.f32 %v2825, %v2825
        %v2858 = vmul.f32 %v2826, %v2826
        %v2859 = vmul.f32 %v2827, %v2827
        %v2860 = vmul.f32 %v2828, %v2828
        %v2861 = vmul.f32 %v2829, %v2829
        %v2862 = vmul.f32 %v2830, %v2830
        %v2863 = vmul.f32 %v2831, %v2831
        %v2864 = vmul.f32 %v2832, %v2832
        %v2865 = vmul.f32 %v2833, %v2833
        %v2866 = vmul.f32 %v2834, %v2834
        %v2867 = vmul.f32 %v2835, %v2835
        %v2868 = vmul.f32 %v2836, %v2836
        %v2869 = vmul.f32 %v2837, %v2837
        %v2870 = vmul.f32 %v2838, %v2838
        %v2871 = vmul.f32 %v2839, %v2839
        %v2872 = vmul.f32 %v2840, %v2840
        %v2873 = vmul.f32 %v2841, %v2841
        %v2874 = vmul.f32 %v2842, %v2842
        %v2875 = vmul.f32 %v2843, %v2843
        %v2876 = vmul.f32 %v2844, %v2844
        %v2877 = vmul.f32 %v2845, %v2845
        %v2878 = vmul.f32 %v2846, %v2846
        %v2879 = vmul.f32 %v2847, %v2847
        %v2880 = vmul.f32 %v2848, %v2848
        %v2881 = vadd.f32 %v2849, %v2850
        %v2882 = vadd.f32 %v2881, %v2851
        %v2883 = vadd.f32 %v2882, %v2852
        %2884 = vadd.xlane.f32.xlu0 %v2883
        %v2885 = vpop.xlane.xlu0 %2884
        %v2886 = vadd.f32 %v2853, %v2854
        %v2887 = vadd.f32 %v2886, %v2855
        %v2888 = vadd.f32 %v2887, %v2856
        %2889 = vadd.xlane.f32.xlu0 %v2888
        %v2890 = vpop.xlane.xlu0 %2889
        %v2891 = vadd.f32 %v2857, %v2858
        %v2892 = vadd.f32 %v2891, %v2859
        %v2893 = vadd.f32 %v2892, %v2860
        %2894 = vadd.xlane.f32.xlu0 %v2893
        %v2895 = vpop.xlane.xlu0 %2894
        %v2896 = vadd.f32 %v2861, %v2862
        %v2897 = vadd.f32 %v2896, %v2863
        %v2898 = vadd.f32 %v2897, %v2864
        %2899 = vadd.xlane.f32.xlu0 %v2898
        %v2900 = vpop.xlane.xlu0 %2899
        %v2901 = vadd.f32 %v2865, %v2866
        %v2902 = vadd.f32 %v2901, %v2867
        %v2903 = vadd.f32 %v2902, %v2868
        %2904 = vadd.xlane.f32.xlu0 %v2903
        %v2905 = vpop.xlane.xlu0 %2904
        %v2906 = vadd.f32 %v2869, %v2870
        %v2907 = vadd.f32 %v2906, %v2871
        %v2908 = vadd.f32 %v2907, %v2872
        %2909 = vadd.xlane.f32.xlu0 %v2908
        %v2910 = vpop.xlane.xlu0 %2909
        %v2911 = vadd.f32 %v2873, %v2874
        %v2912 = vadd.f32 %v2911, %v2875
        %v2913 = vadd.f32 %v2912, %v2876
        %2914 = vadd.xlane.f32.xlu0 %v2913
        %v2915 = vpop.xlane.xlu0 %2914
        %v2916 = vadd.f32 %v2877, %v2878
        %v2917 = vadd.f32 %v2916, %v2879
        %v2918 = vadd.f32 %v2917, %v2880
        %2919 = vadd.xlane.f32.xlu0 %v2918
        %v2920 = vpop.xlane.xlu0 %2919
        %v2921 = vmul.f32 %v2885, %v2808
        %v2922 = vmul.f32 %v2890, %v2808
        %v2923 = vmul.f32 %v2895, %v2808
        %v2924 = vmul.f32 %v2900, %v2808
        %v2925 = vmul.f32 %v2905, %v2808
        %v2926 = vmul.f32 %v2910, %v2808
        %v2927 = vmul.f32 %v2915, %v2808
        %v2928 = vmul.f32 %v2920, %v2808
        %v2929 = vadd.f32 %v2921, 1e-05
        %v2930 = vadd.f32 %v2922, 1e-05
        %v2931 = vadd.f32 %v2923, 1e-05
        %v2932 = vadd.f32 %v2924, 1e-05
        %v2933 = vadd.f32 %v2925, 1e-05
        %v2934 = vadd.f32 %v2926, 1e-05
        %v2935 = vadd.f32 %v2927, 1e-05
        %v2936 = vadd.f32 %v2928, 1e-05
        %v2937 = vrsqrt.pop %v2929
        %v2938 = vrsqrt.pop %v2930
        %v2939 = vrsqrt.pop %v2931
        %v2940 = vrsqrt.pop %v2932
        %v2941 = vrsqrt.pop %v2933
        %v2942 = vrsqrt.pop %v2934
        %v2943 = vrsqrt.pop %v2935
        %v2944 = vrsqrt.pop %v2936
        %v2945 = vmul.f32 %v2817, %v2937
        %v2946 = vmul.f32 %v2818, %v2937
        %v2947 = vmul.f32 %v2819, %v2937
        %v2948 = vmul.f32 %v2820, %v2937
        %v2949 = vmul.f32 %v2821, %v2938
        %v2950 = vmul.f32 %v2822, %v2938
        %v2951 = vmul.f32 %v2823, %v2938
        %v2952 = vmul.f32 %v2824, %v2938
        %v2953 = vmul.f32 %v2825, %v2939
        %v2954 = vmul.f32 %v2826, %v2939
        %v2955 = vmul.f32 %v2827, %v2939
        %v2956 = vmul.f32 %v2828, %v2939
        %v2957 = vmul.f32 %v2829, %v2940
        %v2958 = vmul.f32 %v2830, %v2940
        %v2959 = vmul.f32 %v2831, %v2940
        %v2960 = vmul.f32 %v2832, %v2940
        %v2961 = vmul.f32 %v2833, %v2941
        %v2962 = vmul.f32 %v2834, %v2941
        %v2963 = vmul.f32 %v2835, %v2941
        %v2964 = vmul.f32 %v2836, %v2941
        %v2965 = vmul.f32 %v2837, %v2942
        %v2966 = vmul.f32 %v2838, %v2942
        %v2967 = vmul.f32 %v2839, %v2942
        %v2968 = vmul.f32 %v2840, %v2942
        %v2969 = vmul.f32 %v2841, %v2943
        %v2970 = vmul.f32 %v2842, %v2943
        %v2971 = vmul.f32 %v2843, %v2943
        %v2972 = vmul.f32 %v2844, %v2943
        %v2973 = vmul.f32 %v2845, %v2944
        %v2974 = vmul.f32 %v2846, %v2944
        %v2975 = vmul.f32 %v2847, %v2944
        %v2976 = vmul.f32 %v2848, %v2944
        %v2978 = vlaneseq
        %v2979 = vshrl.u32 %v2978, 7
        %v2980 = vsub.s32 0, %v2979
        %v2981 = vrot.slane %v2767, %v2980
        %v2982 = vlaneseq
        %v2983 = vshrl.u32 %v2982, 7
        %v2984 = vsub.s32 1, %v2983
        %v2985 = vrot.slane %v2767, %v2984
        %v2986 = vlaneseq
        %v2987 = vshrl.u32 %v2986, 7
        %v2988 = vsub.s32 2, %v2987
        %v2989 = vrot.slane %v2767, %v2988
        %v2990 = vlaneseq
        %v2991 = vshrl.u32 %v2990, 7
        %v2992 = vsub.s32 3, %v2991
        %v2993 = vrot.slane %v2767, %v2992
        %v2998 = vmul.f32 %v2945, %v2981
        %v2999 = vmul.f32 %v2946, %v2985
        %v3000 = vmul.f32 %v2947, %v2989
        %v3001 = vmul.f32 %v2948, %v2993
        %v3002 = vmul.f32 %v2949, %v2981
        %v3003 = vmul.f32 %v2950, %v2985
        %v3004 = vmul.f32 %v2951, %v2989
        %v3005 = vmul.f32 %v2952, %v2993
        %v3006 = vmul.f32 %v2953, %v2981
        %v3007 = vmul.f32 %v2954, %v2985
        %v3008 = vmul.f32 %v2955, %v2989
        %v3009 = vmul.f32 %v2956, %v2993
        %v3010 = vmul.f32 %v2957, %v2981
        %v3011 = vmul.f32 %v2958, %v2985
        %v3012 = vmul.f32 %v2959, %v2989
        %v3013 = vmul.f32 %v2960, %v2993
        %v3014 = vmul.f32 %v2961, %v2981
        %v3015 = vmul.f32 %v2962, %v2985
        %v3016 = vmul.f32 %v2963, %v2989
        %v3017 = vmul.f32 %v2964, %v2993
        %v3018 = vmul.f32 %v2965, %v2981
        %v3019 = vmul.f32 %v2966, %v2985
        %v3020 = vmul.f32 %v2967, %v2989
        %v3021 = vmul.f32 %v2968, %v2993
        %v3022 = vmul.f32 %v2969, %v2981
        %v3023 = vmul.f32 %v2970, %v2985
        %v3024 = vmul.f32 %v2971, %v2989
        %v3025 = vmul.f32 %v2972, %v2993
        %v3026 = vmul.f32 %v2973, %v2981
        %v3027 = vmul.f32 %v2974, %v2985
        %v3028 = vmul.f32 %v2975, %v2989
        %v3029 = vmul.f32 %v2976, %v2993
        %v3030 = vpack.c.bf16 %v3002, %v2998
        %v3031 = vpack.c.bf16 %v3003, %v2999
        %v3032 = vpack.c.bf16 %v3004, %v3000
        %v3033 = vpack.c.bf16 %v3005, %v3001
        %v3034 = vpack.c.bf16 %v3010, %v3006
        %v3035 = vpack.c.bf16 %v3011, %v3007
        %v3036 = vpack.c.bf16 %v3012, %v3008
        %v3037 = vpack.c.bf16 %v3013, %v3009
        %v3038 = vpack.c.bf16 %v3018, %v3014
        %v3039 = vpack.c.bf16 %v3019, %v3015
        %v3040 = vpack.c.bf16 %v3020, %v3016
        %v3041 = vpack.c.bf16 %v3021, %v3017
        %v3042 = vpack.c.bf16 %v3026, %v3022
        %v3043 = vpack.c.bf16 %v3027, %v3023
        %v3044 = vpack.c.bf16 %v3028, %v3024
        %v3045 = vpack.c.bf16 %v3029, %v3025
        %v3046 = vld [vmem:[%s9] sm:$0xf]
        %v3047 = vld [vmem:[%s9 + $0x4] sm:$0xf]
        %v3048 = vld [vmem:[%s9 + $0x8] sm:$0xf]
        %v3049 = vld [vmem:[%s9 + $0xc] sm:$0xf]
        %v3050 = vld [vmem:[%s9 + $0x10] sm:$0xf]
        %v3051 = vld [vmem:[%s9 + $0x14] sm:$0xf]
        %v3052 = vld [vmem:[%s9 + $0x18] sm:$0xf]
        %v3053 = vld [vmem:[%s9 + $0x1c] sm:$0xf]
        %v3054 = vld [vmem:[%s9 + $0x20] sm:$0xf]
        %v3055 = vld [vmem:[%s9 + $0x24] sm:$0xf]
        %v3056 = vld [vmem:[%s9 + $0x28] sm:$0xf]
        %v3057 = vld [vmem:[%s9 + $0x2c] sm:$0xf]
        %v3058 = vld [vmem:[%s9 + $0x30] sm:$0xf]
        %v3059 = vld [vmem:[%s9 + $0x34] sm:$0xf]
        %v3060 = vld [vmem:[%s9 + $0x38] sm:$0xf]
        %v3061 = vld [vmem:[%s9 + $0x3c] sm:$0xf]
        %v3062 = vld [vmem:[%s9 + $0x40] sm:$0xf]
        %v3063 = vld [vmem:[%s9 + $0x44] sm:$0xf]
        %v3064 = vld [vmem:[%s9 + $0x48] sm:$0xf]
        %v3065 = vld [vmem:[%s9 + $0x4c] sm:$0xf]
        %v3066 = vld [vmem:[%s9 + $0x50] sm:$0xf]
        %v3067 = vld [vmem:[%s9 + $0x54] sm:$0xf]
        %v3068 = vld [vmem:[%s9 + $0x58] sm:$0xf]
        %v3069 = vld [vmem:[%s9 + $0x5c] sm:$0xf]
        %v3070 = vld [vmem:[%s9 + $0x60] sm:$0xf]
        %v3071 = vld [vmem:[%s9 + $0x64] sm:$0xf]
        %v3072 = vld [vmem:[%s9 + $0x68] sm:$0xf]
        %v3073 = vld [vmem:[%s9 + $0x6c] sm:$0xf]
        %v3074 = vld [vmem:[%s9 + $0x70] sm:$0xf]
        %v3075 = vld [vmem:[%s9 + $0x74] sm:$0xf]
        %v3076 = vld [vmem:[%s9 + $0x78] sm:$0xf]
        %v3077 = vld [vmem:[%s9 + $0x7c] sm:$0xf]
        %v3078 = vld [vmem:[%s9 + $0x80] sm:$0xf]
        %v3079 = vld [vmem:[%s9 + $0x84] sm:$0xf]
        %v3080 = vld [vmem:[%s9 + $0x88] sm:$0xf]
        %v3081 = vld [vmem:[%s9 + $0x8c] sm:$0xf]
        %v3082 = vld [vmem:[%s9 + $0x90] sm:$0xf]
        %v3083 = vld [vmem:[%s9 + $0x94] sm:$0xf]
        %v3084 = vld [vmem:[%s9 + $0x98] sm:$0xf]
        %v3085 = vld [vmem:[%s9 + $0x9c] sm:$0xf]
        %v3086 = vld [vmem:[%s9 + $0xa0] sm:$0xf]
        %v3087 = vld [vmem:[%s9 + $0xa4] sm:$0xf]
        %v3088 = vld [vmem:[%s9 + $0xa8] sm:$0xf]
        %v3089 = vld [vmem:[%s9 + $0xac] sm:$0xf]
        %v3090 = vld [vmem:[%s9 + $0xb0] sm:$0xf]
        %v3091 = vld [vmem:[%s9 + $0xb4] sm:$0xf]
        %v3092 = vld [vmem:[%s9 + $0xb8] sm:$0xf]
        %v3093 = vld [vmem:[%s9 + $0xbc] sm:$0xf]
        %v3094 = vld [vmem:[%s9 + $0xc0] sm:$0xf]
        %v3095 = vld [vmem:[%s9 + $0xc4] sm:$0xf]
        %v3096 = vld [vmem:[%s9 + $0xc8] sm:$0xf]
        %v3097 = vld [vmem:[%s9 + $0xcc] sm:$0xf]
        %v3098 = vld [vmem:[%s9 + $0xd0] sm:$0xf]
        %v3099 = vld [vmem:[%s9 + $0xd4] sm:$0xf]
        %v3100 = vld [vmem:[%s9 + $0xd8] sm:$0xf]
        %v3101 = vld [vmem:[%s9 + $0xdc] sm:$0xf]
        %v3102 = vld [vmem:[%s9 + $0xe0] sm:$0xf]
        %v3103 = vld [vmem:[%s9 + $0xe4] sm:$0xf]
        %v3104 = vld [vmem:[%s9 + $0xe8] sm:$0xf]
        %v3105 = vld [vmem:[%s9 + $0xec] sm:$0xf]
        %v3106 = vld [vmem:[%s9 + $0xf0] sm:$0xf]
        %v3107 = vld [vmem:[%s9 + $0xf4] sm:$0xf]
        %v3108 = vld [vmem:[%s9 + $0xf8] sm:$0xf]
        %v3109 = vld [vmem:[%s9 + $0xfc] sm:$0xf]
        %v3174 = vunpack.c.l.b16 %v3046
        %v3175 = vunpack.c.l.b16 %v3047
        %v3176 = vunpack.c.l.b16 %v3048
        %v3177 = vunpack.c.l.b16 %v3049
        %v3178 = vunpack.c.l.b16 %v3050
        %v3179 = vunpack.c.l.b16 %v3051
        %v3180 = vunpack.c.l.b16 %v3052
        %v3181 = vunpack.c.l.b16 %v3053
        %v3182 = vunpack.c.l.b16 %v3054
        %v3183 = vunpack.c.l.b16 %v3055
        %v3184 = vunpack.c.l.b16 %v3056
        %v3185 = vunpack.c.l.b16 %v3057
        %v3186 = vunpack.c.l.b16 %v3058
        %v3187 = vunpack.c.l.b16 %v3059
        %v3188 = vunpack.c.l.b16 %v3060
        %v3189 = vunpack.c.l.b16 %v3061
        %v3190 = vunpack.c.l.b16 %v3062
        %v3191 = vunpack.c.l.b16 %v3063
        %v3192 = vunpack.c.l.b16 %v3064
        %v3193 = vunpack.c.l.b16 %v3065
        %v3194 = vunpack.c.l.b16 %v3066
        %v3195 = vunpack.c.l.b16 %v3067
        %v3196 = vunpack.c.l.b16 %v3068
        %v3197 = vunpack.c.l.b16 %v3069
        %v3198 = vunpack.c.l.b16 %v3070
        %v3199 = vunpack.c.l.b16 %v3071
        %v3200 = vunpack.c.l.b16 %v3072
        %v3201 = vunpack.c.l.b16 %v3073
        %v3202 = vunpack.c.l.b16 %v3074
        %v3203 = vunpack.c.l.b16 %v3075
        %v3204 = vunpack.c.l.b16 %v3076
        %v3205 = vunpack.c.l.b16 %v3077
        %v3206 = vunpack.c.l.b16 %v3078
        %v3207 = vunpack.c.l.b16 %v3079
        %v3208 = vunpack.c.l.b16 %v3080
        %v3209 = vunpack.c.l.b16 %v3081
        %v3210 = vunpack.c.l.b16 %v3082
        %v3211 = vunpack.c.l.b16 %v3083
        %v3212 = vunpack.c.l.b16 %v3084
        %v3213 = vunpack.c.l.b16 %v3085
        %v3214 = vunpack.c.l.b16 %v3086
        %v3215 = vunpack.c.l.b16 %v3087
        %v3216 = vunpack.c.l.b16 %v3088
        %v3217 = vunpack.c.l.b16 %v3089
        %v3218 = vunpack.c.l.b16 %v3090
        %v3219 = vunpack.c.l.b16 %v3091
        %v3220 = vunpack.c.l.b16 %v3092
        %v3221 = vunpack.c.l.b16 %v3093
        %v3222 = vunpack.c.l.b16 %v3094
        %v3223 = vunpack.c.l.b16 %v3095
        %v3224 = vunpack.c.l.b16 %v3096
        %v3225 = vunpack.c.l.b16 %v3097
        %v3226 = vunpack.c.l.b16 %v3098
        %v3227 = vunpack.c.l.b16 %v3099
        %v3228 = vunpack.c.l.b16 %v3100
        %v3229 = vunpack.c.l.b16 %v3101
        %v3230 = vunpack.c.l.b16 %v3102
        %v3231 = vunpack.c.l.b16 %v3103
        %v3232 = vunpack.c.l.b16 %v3104
        %v3233 = vunpack.c.l.b16 %v3105
        %v3234 = vunpack.c.l.b16 %v3106
        %v3235 = vunpack.c.l.b16 %v3107
        %v3236 = vunpack.c.l.b16 %v3108
        %v3237 = vunpack.c.l.b16 %v3109
        %v3238 = vpack.c.b16 %v3175, %v3174
        %v3239 = vpack.c.b16 %v3177, %v3176
        %v3240 = vpack.c.b16 %v3179, %v3178
        %v3241 = vpack.c.b16 %v3181, %v3180
        %v3242 = vpack.c.b16 %v3183, %v3182
        %v3243 = vpack.c.b16 %v3185, %v3184
        %v3244 = vpack.c.b16 %v3187, %v3186
        %v3245 = vpack.c.b16 %v3189, %v3188
        %v3246 = vpack.c.b16 %v3191, %v3190
        %v3247 = vpack.c.b16 %v3193, %v3192
        %v3248 = vpack.c.b16 %v3195, %v3194
        %v3249 = vpack.c.b16 %v3197, %v3196
        %v3250 = vpack.c.b16 %v3199, %v3198
        %v3251 = vpack.c.b16 %v3201, %v3200
        %v3252 = vpack.c.b16 %v3203, %v3202
        %v3253 = vpack.c.b16 %v3205, %v3204
        %v3254 = vpack.c.b16 %v3207, %v3206
        %v3255 = vpack.c.b16 %v3209, %v3208
        %v3256 = vpack.c.b16 %v3211, %v3210
        %v3257 = vpack.c.b16 %v3213, %v3212
        %v3258 = vpack.c.b16 %v3215, %v3214
        %v3259 = vpack.c.b16 %v3217, %v3216
        %v3260 = vpack.c.b16 %v3219, %v3218
        %v3261 = vpack.c.b16 %v3221, %v3220
        %v3262 = vpack.c.b16 %v3223, %v3222
        %v3263 = vpack.c.b16 %v3225, %v3224
        %v3264 = vpack.c.b16 %v3227, %v3226
        %v3265 = vpack.c.b16 %v3229, %v3228
        %v3266 = vpack.c.b16 %v3231, %v3230
        %v3267 = vpack.c.b16 %v3233, %v3232
        %v3268 = vpack.c.b16 %v3235, %v3234
        %v3269 = vpack.c.b16 %v3237, %v3236
        %3302 = vmatprep.subr.bf16.mxu0 0
        %3303 = vmatpush1.bf16.msra.mxu0 %v3238
        %3304 = vmatprep.subr.bf16.mxu0 0
        %3305 = vmatpush1.bf16.msra.mxu0 %v3239
        %3306 = vmatprep.subr.bf16.mxu0 0
        %3307 = vmatpush1.bf16.msra.mxu0 %v3240
        %3308 = vmatprep.subr.bf16.mxu0 0
        %3309 = vmatpush1.bf16.msra.mxu0 %v3241
        %3310 = vmatprep.subr.bf16.mxu0 0
        %3311 = vmatpush1.bf16.msra.mxu0 %v3242
        %3312 = vmatprep.subr.bf16.mxu0 0
        %3313 = vmatpush1.bf16.msra.mxu0 %v3243
        %3314 = vmatprep.subr.bf16.mxu0 0
        %3315 = vmatpush1.bf16.msra.mxu0 %v3244
        %3316 = vmatprep.subr.bf16.mxu0 0
        %3317 = vmatpush1.bf16.msra.mxu0 %v3245
        %3318 = vmatprep.subr.bf16.mxu0 0
        %3319 = vmatpush1.bf16.msra.mxu0 %v3246
        %3320 = vmatprep.subr.bf16.mxu0 0
        %3321 = vmatpush1.bf16.msra.mxu0 %v3247
        %3322 = vmatprep.subr.bf16.mxu0 0
        %3323 = vmatpush1.bf16.msra.mxu0 %v3248
        %3324 = vmatprep.subr.bf16.mxu0 0
        %3325 = vmatpush1.bf16.msra.mxu0 %v3249
        %3326 = vmatprep.subr.bf16.mxu0 0
        %3327 = vmatpush1.bf16.msra.mxu0 %v3250
        %3328 = vmatprep.subr.bf16.mxu0 0
        %3329 = vmatpush1.bf16.msra.mxu0 %v3251
        %3330 = vmatprep.subr.bf16.mxu0 0
        %3331 = vmatpush1.bf16.msra.mxu0 %v3252
        %3332 = vmatprep.subr.bf16.mxu0 0
        %3333 = vmatpush1.bf16.msra.mxu0 %v3253
        %3334 = vmatprep.mubr.bf16.mxu0 %v3031
        %3335 = vmatmul.mubr.bf16.gmra.mrb[0].mxu0 %v3030
        %v3336 = vpop.f32.mrb[0].mxu0
        %v3337 = vadd.f32 0.0, %v3336
        %v3338 = vpop.f32.mrb[0].mxu0
        %v3339 = vpop.f32.mrb[0].mxu0
        %v3340 = vadd.f32 0.0, %v3339
        %v3341 = vpop.f32.mrb[0].mxu0
        %3342 = vmatprep.mubr.bf16.mxu0 %v3035
        %3343 = vmatmul.mubr.bf16.gmra.mrb[0].mxu0 %v3034
        %v3344 = vpop.f32.mrb[0].mxu0
        %v3345 = vadd.f32 0.0, %v3344
        %v3346 = vpop.f32.mrb[0].mxu0
        %v3347 = vpop.f32.mrb[0].mxu0
        %v3348 = vadd.f32 0.0, %v3347
        %v3349 = vpop.f32.mrb[0].mxu0
        %3350 = vmatprep.mubr.bf16.mxu0 %v3039
        %3351 = vmatmul.mubr.bf16.gmra.mrb[0].mxu0 %v3038
        %v3352 = vpop.f32.mrb[0].mxu0
        %v3353 = vadd.f32 0.0, %v3352
        %v3354 = vpop.f32.mrb[0].mxu0
        %v3355 = vpop.f32.mrb[0].mxu0
        %v3356 = vadd.f32 0.0, %v3355
        %v3357 = vpop.f32.mrb[0].mxu0
        %3358 = vmatprep.mubr.bf16.mxu0 %v3043
        %3359 = vmatmul.mubr.bf16.gmra.mrb[0].mxu0 %v3042
        %v3360 = vpop.f32.mrb[0].mxu0
        %v3361 = vadd.f32 0.0, %v3360
        %v3362 = vpop.f32.mrb[0].mxu0
        %v3363 = vpop.f32.mrb[0].mxu0
        %v3364 = vadd.f32 0.0, %v3363
        %v3365 = vpop.f32.mrb[0].mxu0
        %3366 = vdwg.mxu0
        %3367 = vmatprep.subr.bf16.mxu0 0
        %3368 = vmatpush1.bf16.msra.mxu0 %v3254
        %3369 = vmatprep.subr.bf16.mxu0 0
        %3370 = vmatpush1.bf16.msra.mxu0 %v3255
        %3371 = vmatprep.subr.bf16.mxu0 0
        %3372 = vmatpush1.bf16.msra.mxu0 %v3256
        %3373 = vmatprep.subr.bf16.mxu0 0
        %3374 = vmatpush1.bf16.msra.mxu0 %v3257
        %3375 = vmatprep.subr.bf16.mxu0 0
        %3376 = vmatpush1.bf16.msra.mxu0 %v3258
        %3377 = vmatprep.subr.bf16.mxu0 0
        %3378 = vmatpush1.bf16.msra.mxu0 %v3259
        %3379 = vmatprep.subr.bf16.mxu0 0
        %3380 = vmatpush1.bf16.msra.mxu0 %v3260
        %3381 = vmatprep.subr.bf16.mxu0 0
        %3382 = vmatpush1.bf16.msra.mxu0 %v3261
        %3383 = vmatprep.subr.bf16.mxu0 0
        %3384 = vmatpush1.bf16.msra.mxu0 %v3262
        %3385 = vmatprep.subr.bf16.mxu0 0
        %3386 = vmatpush1.bf16.msra.mxu0 %v3263
        %3387 = vmatprep.subr.bf16.mxu0 0
        %3388 = vmatpush1.bf16.msra.mxu0 %v3264
        %3389 = vmatprep.subr.bf16.mxu0 0
        %3390 = vmatpush1.bf16.msra.mxu0 %v3265
        %3391 = vmatprep.subr.bf16.mxu0 0
        %3392 = vmatpush1.bf16.msra.mxu0 %v3266
        %3393 = vmatprep.subr.bf16.mxu0 0
        %3394 = vmatpush1.bf16.msra.mxu0 %v3267
        %3395 = vmatprep.subr.bf16.mxu0 0
        %3396 = vmatpush1.bf16.msra.mxu0 %v3268
        %3397 = vmatprep.subr.bf16.mxu0 0
        %3398 = vmatpush1.bf16.msra.mxu0 %v3269
        %3399 = vmatprep.mubr.bf16.mxu0 %v3033
        %3400 = vmatmul.mubr.bf16.gmra.mrb[0].mxu0 %v3032
        %v3401 = vpop.f32.mrb[0].mxu0
        %v3402 = vadd.f32 %v3337, %v3401
        %v3403 = vpop.f32.mrb[0].mxu0
        %v3404 = vpop.f32.mrb[0].mxu0
        %v3405 = vadd.f32 %v3340, %v3404
        %v3406 = vpop.f32.mrb[0].mxu0
        %3407 = vmatprep.mubr.bf16.mxu0 %v3037
        %3408 = vmatmul.mubr.bf16.gmra.mrb[0].mxu0 %v3036
        %v3409 = vpop.f32.mrb[0].mxu0
        %v3410 = vadd.f32 %v3345, %v3409
        %v3411 = vpop.f32.mrb[0].mxu0
        %v3412 = vpop.f32.mrb[0].mxu0
        %v3413 = vadd.f32 %v3348, %v3412
        %v3414 = vpop.f32.mrb[0].mxu0
        %3415 = vmatprep.mubr.bf16.mxu0 %v3041
        %3416 = vmatmul.mubr.bf16.gmra.mrb[0].mxu0 %v3040
        %v3417 = vpop.f32.mrb[0].mxu0
        %v3418 = vadd.f32 %v3353, %v3417
        %v3419 = vpop.f32.mrb[0].mxu0
        %v3420 = vpop.f32.mrb[0].mxu0
        %v3421 = vadd.f32 %v3356, %v3420
        %v3422 = vpop.f32.mrb[0].mxu0
        %3423 = vmatprep.mubr.bf16.mxu0 %v3045
        %3424 = vmatmul.mubr.bf16.gmra.mrb[0].mxu0 %v3044
        %v3425 = vpop.f32.mrb[0].mxu0
        %v3426 = vadd.f32 %v3361, %v3425
        %v3427 = vpop.f32.mrb[0].mxu0
        %v3428 = vpop.f32.mrb[0].mxu0
        %v3429 = vadd.f32 %v3364, %v3428
        %v3430 = vpop.f32.mrb[0].mxu0
        %3431 = vdwg.mxu0
        %v3432 = vadd.f32 %v1720, %v3402
        %v3433 = vadd.f32 %v1721, %v3405
        %v3434 = vadd.f32 %v1722, %v3410
        %v3435 = vadd.f32 %v1723, %v3413
        %v3436 = vadd.f32 %v1724, %v3418
        %v3437 = vadd.f32 %v1725, %v3421
        %v3438 = vadd.f32 %v1726, %v3426
        %v3439 = vadd.f32 %v1727, %v3429
        %v3440 = vld [vmem:[%s10] sm:$0x1]
        %3441 = vadd.xlane.f32.xlu0 %v3432
        %v3442 = vpop.xlane.xlu0 %3441
        %3443 = vadd.xlane.f32.xlu0 %v3433
        %v3444 = vpop.xlane.xlu0 %3443
        %3445 = vadd.xlane.f32.xlu0 %v3434
        %v3446 = vpop.xlane.xlu0 %3445
        %3447 = vadd.xlane.f32.xlu0 %v3435
        %v3448 = vpop.xlane.xlu0 %3447
        %3449 = vadd.xlane.f32.xlu0 %v3436
        %v3450 = vpop.xlane.xlu0 %3449
        %3451 = vadd.xlane.f32.xlu0 %v3437
        %v3452 = vpop.xlane.xlu0 %3451
        %3453 = vadd.xlane.f32.xlu0 %v3438
        %v3454 = vpop.xlane.xlu0 %3453
        %3455 = vadd.xlane.f32.xlu0 %v3439
        %v3456 = vpop.xlane.xlu0 %3455
        %v3457 = vmul.f32 %v3442, %v1633
        %v3458 = vmul.f32 %v3444, %v1633
        %v3459 = vmul.f32 %v3446, %v1633
        %v3460 = vmul.f32 %v3448, %v1633
        %v3461 = vmul.f32 %v3450, %v1633
        %v3462 = vmul.f32 %v3452, %v1633
        %v3463 = vmul.f32 %v3454, %v1633
        %v3464 = vmul.f32 %v3456, %v1633
        %v3465 = vsub.f32 %v3432, %v3457
        %v3466 = vsub.f32 %v3433, %v3458
        %v3467 = vsub.f32 %v3434, %v3459
        %v3468 = vsub.f32 %v3435, %v3460
        %v3469 = vsub.f32 %v3436, %v3461
        %v3470 = vsub.f32 %v3437, %v3462
        %v3471 = vsub.f32 %v3438, %v3463
        %v3472 = vsub.f32 %v3439, %v3464
        %v3473 = vmul.f32 %v3465, %v3465
        %v3474 = vmul.f32 %v3466, %v3466
        %v3475 = vmul.f32 %v3467, %v3467
        %v3476 = vmul.f32 %v3468, %v3468
        %v3477 = vmul.f32 %v3469, %v3469
        %v3478 = vmul.f32 %v3470, %v3470
        %v3479 = vmul.f32 %v3471, %v3471
        %v3480 = vmul.f32 %v3472, %v3472
        %3481 = vadd.xlane.f32.xlu0 %v3473
        %v3482 = vpop.xlane.xlu0 %3481
        %3483 = vadd.xlane.f32.xlu0 %v3474
        %v3484 = vpop.xlane.xlu0 %3483
        %3485 = vadd.xlane.f32.xlu0 %v3475
        %v3486 = vpop.xlane.xlu0 %3485
        %3487 = vadd.xlane.f32.xlu0 %v3476
        %v3488 = vpop.xlane.xlu0 %3487
        %3489 = vadd.xlane.f32.xlu0 %v3477
        %v3490 = vpop.xlane.xlu0 %3489
        %3491 = vadd.xlane.f32.xlu0 %v3478
        %v3492 = vpop.xlane.xlu0 %3491
        %3493 = vadd.xlane.f32.xlu0 %v3479
        %v3494 = vpop.xlane.xlu0 %3493
        %3495 = vadd.xlane.f32.xlu0 %v3480
        %v3496 = vpop.xlane.xlu0 %3495
        %v3497 = vmul.f32 %v3482, %v1633
        %v3498 = vmul.f32 %v3484, %v1633
        %v3499 = vmul.f32 %v3486, %v1633
        %v3500 = vmul.f32 %v3488, %v1633
        %v3501 = vmul.f32 %v3490, %v1633
        %v3502 = vmul.f32 %v3492, %v1633
        %v3503 = vmul.f32 %v3494, %v1633
        %v3504 = vmul.f32 %v3496, %v1633
        %v3505 = vadd.f32 %v3497, 1e-05
        %v3506 = vadd.f32 %v3498, 1e-05
        %v3507 = vadd.f32 %v3499, 1e-05
        %v3508 = vadd.f32 %v3500, 1e-05
        %v3509 = vadd.f32 %v3501, 1e-05
        %v3510 = vadd.f32 %v3502, 1e-05
        %v3511 = vadd.f32 %v3503, 1e-05
        %v3512 = vadd.f32 %v3504, 1e-05
        %v3513 = vrsqrt.pop %v3505
        %v3514 = vrsqrt.pop %v3506
        %v3515 = vrsqrt.pop %v3507
        %v3516 = vrsqrt.pop %v3508
        %v3517 = vrsqrt.pop %v3509
        %v3518 = vrsqrt.pop %v3510
        %v3519 = vrsqrt.pop %v3511
        %v3520 = vrsqrt.pop %v3512
        %v3521 = vmul.f32 %v3465, %v3513
        %v3522 = vmul.f32 %v3466, %v3514
        %v3523 = vmul.f32 %v3467, %v3515
        %v3524 = vmul.f32 %v3468, %v3516
        %v3525 = vmul.f32 %v3469, %v3517
        %v3526 = vmul.f32 %v3470, %v3518
        %v3527 = vmul.f32 %v3471, %v3519
        %v3528 = vmul.f32 %v3472, %v3520
        %v3530 = vlaneseq
        %v3531 = vshrl.u32 %v3530, 7
        %v3532 = vsub.s32 0, %v3531
        %v3533 = vrot.slane %v3440, %v3532
        %v3535 = vmul.f32 %v3521, %v3533
        %v3536 = vmul.f32 %v3522, %v3533
        %v3537 = vmul.f32 %v3523, %v3533
        %v3538 = vmul.f32 %v3524, %v3533
        %v3539 = vmul.f32 %v3525, %v3533
        %v3540 = vmul.f32 %v3526, %v3533
        %v3541 = vmul.f32 %v3527, %v3533
        %v3542 = vmul.f32 %v3528, %v3533
        %3543 = vst [vmem:[%s578] sm:$0xff] %v3535
        %3544 = vst [vmem:[%s578 + $0x8] sm:$0xff] %v3536
        %3545 = vst [vmem:[%s578 + $0x10] sm:$0xff] %v3537
        %3546 = vst [vmem:[%s578 + $0x18] sm:$0xff] %v3538
        %3547 = vst [vmem:[%s578 + $0x20] sm:$0xff] %v3539
        %3548 = vst [vmem:[%s578 + $0x28] sm:$0xff] %v3540
        %3549 = vst [vmem:[%s578 + $0x30] sm:$0xff] %v3541
        %3550 = vst [vmem:[%s578 + $0x38] sm:$0xff] %v3542
        %s3551 = sand.u32 %s305, 1
        %s3552 = scalar_lea.sflag [#allocation4], %s3551
        %s3553 = sand.u32 %s305, 1
        %s3554 = smul.addr %s3553, 64
        %s3555 = scalar_lea.vmem [#allocation6], %s3554
        // Predicated region
        $region110: #{_lambda_.7} parent=100 // pred_check
          %p3556 = pneg %p315
        $region111: #{_lambda_.7} parent=100 // pred_check_branch
          %3558 = sbr.rel (%p3556) target = $region113
        $region112: #{_lambda_.7} parent=100 // pred_region
          %s3559 = smul.u32 8, %s33
          %s3561 = ssub.s32 1024, 1024
          %3562 = vsyncadd %s3552, %s3561
          %s3563 = smul.addr %s32, 16
          %s3564 = sadd.s32 %s3559, %s3563
          %s3565 = smul.addr %s3564, 128
          %s3566 = scalar_lea.hbm %s11, %s3565
          %s3567 = sshll.u32 %s3555, 4
          %s3568 = int_to_ptr.vmem [resolvable:$true] %s3567
          %3573 = dma.vmem_to_hbm [thread:$0]  %s3568, 1024, %s3566, %s3552, 128, 128, 8
        $region113: #{_lambda_.7} parent=100 // pred_fallthru
          _
      $region101: #{_lambda_.7} parent=5 // pred_fallthru
        _
      %p3574 = scmp.le.s32.totalorder 2, %s23
      // Predicated region
      $region114: #{_lambda_.7} parent=5 // pred_check
        %p3575 = pneg %p3574
      $region115: #{_lambda_.7} parent=5 // pred_check_branch
        %3577 = sbr.rel (%p3575) target = $region117
      $region116: #{_lambda_.7} parent=5 // pred_region
        %s3578 = ssub.s32 %s23, 2
        // Predicated region
        $region118: #{_lambda_.7} parent=116 // pred_check
          %p3579 = pneg %p321
        $region119: #{_lambda_.7} parent=116 // pred_check_branch
          %3581 = sbr.rel (%p3579) target = $region121
        $region120: #{_lambda_.7} parent=116 // pred_region
          %s3582 = sand.u32 %s306, 1
          %s3583 = scalar_lea.sflag [#allocation4], %s3582
          %s3584 = sand.u32 %s306, 1
          %s3585 = smul.addr %s3584, 64
          %s3586 = scalar_lea.vmem [#allocation6], %s3585
          %3587 = dma.done %s3583, 1024
        $region121: #{_lambda_.7} parent=116 // pred_fallthru
          _
      $region117: #{_lambda_.7} parent=5 // pred_fallthru
        _
    $region6: #{_lambda_.7} parent=1 // loop_footer
      %s27 = sadd.s32 1, %s23
    $region7: #{_lambda_.7} parent=1 // loop_footer_branch
      %22 = sbr.rel target = $region3
    $region8: #{_lambda_.7} parent=1 // loop_exit
      _
    %3588 = vsyncpa [#allocation3], 1
    %s3589 = scalar_lea.sflag [#allocation3], 1
    %3590 = vsyncpa %s3589, 1
    %3591 = vsyncpa [#allocation4], 1
    %s3592 = scalar_lea.sflag [#allocation4], 1
    %3593 = vsyncpa %s3592, 1

</llo_original>
